<compile_context>
chip_gen: v5e
topology: v5e:2x2
jax: 0.10.0
libtpu: 0.0.40
codegen_flags: <defaults>
</compile_context>

<pallas_src>
import jax
import jax.numpy as jnp
from jax.experimental import pallas as pl
from jax.experimental.pallas import tpu as pltpu

BN_EPS = 1e-5
LRELU_SLOPE = 0.2
HIDDEN = (1024, 512, 256)


def _linear_bn_lrelu(h, w_ref, g_ref, beta_ref):
    """Linear (bf16 MXU, f32 acc) -> BatchNorm1d (batch stats) -> LeakyReLU(0.2)."""
    z = jnp.dot(h.astype(jnp.bfloat16), w_ref[...],
                preferred_element_type=jnp.float32)          # (N, F) f32
    inv_n = 1.0 / z.shape[0]
    mu = jnp.sum(z, axis=0, keepdims=True) * inv_n            # E[z]
    msq = jnp.sum(z * z, axis=0, keepdims=True) * inv_n       # E[z^2]  (fused pass)
    var = jnp.maximum(msq - mu * mu, 0.0)                     # biased var (PyTorch BN)
    zn = (z - mu) * jax.lax.rsqrt(var + BN_EPS)
    zn = zn * g_ref[...] + beta_ref[...]
    return jnp.maximum(zn, LRELU_SLOPE * zn)                  # LeakyReLU(0.2)


def bn_discriminator_kernel(
    x_ref,
    w1_ref, g1_ref, be1_ref,
    w2_ref, g2_ref, be2_ref,
    w3_ref, g3_ref, be3_ref,
    w4_ref, b4_ref,
    o_ref,
):
    h = x_ref[...].astype(jnp.float32)
    h = _linear_bn_lrelu(h, w1_ref, g1_ref, be1_ref)   # (N, 1024)
    h = _linear_bn_lrelu(h, w2_ref, g2_ref, be2_ref)   # (N, 512)
    h = _linear_bn_lrelu(h, w3_ref, g3_ref, be3_ref)   # (N, 256)
    z4 = jnp.dot(h.astype(jnp.bfloat16), w4_ref[...],
                 preferred_element_type=jnp.float32) + b4_ref[...]
    o_ref[...] = jnp.tanh(z4).astype(o_ref.dtype)


def _footprint_bytes(n, x_size, y_size):
    """Approximate VMEM footprint of the kernel (inputs + output + live activations)."""
    f32, bf16 = 4, 2
    h1, h2, h3 = HIDDEN
    weights = (x_size * h1 + h1 * h2 + h2 * h3 + h3 * y_size) * bf16
    vectors = (3 * (h1 + h2 + h3) + y_size) * f32            # gamma/beta + b4 (generous)
    acts = n * (x_size + h1 + h2 + h3 + y_size) * f32         # f32 activations
    acts_bf16 = n * (x_size + h1 + h2 + h3) * bf16            # bf16 copies fed to the MXU
    return weights + vectors + acts + acts_bf16 + n * y_size * f32


def bn_discriminator(x, params):
    """x: (N, x_size) float32. params: dict of weights (see init_params)."""
    n, x_size = x.shape
    y_size = params["w4"].shape[1]
    h1, h2, h3 = HIDDEN

    args = (
        x,
        params["w1"], params["g1"], params["be1"],
        params["w2"], params["g2"], params["be2"],
        params["w3"], params["g3"], params["be3"],
        params["w4"], params["b4"],
    )

    # Tight VMEM request: ~2x footprint + headroom, never the whole v7x VMEM (64 MiB).
    vmem_bytes = min(max(2 * _footprint_bytes(n, x_size, y_size) + (4 << 20), 16 << 20),
                     32 << 20)

    flops = 2 * n * (x_size * h1 + h1 * h2 + h2 * h3 + h3 * y_size)
    transcendentals = n * y_size + (h1 + h2 + h3)             # tanh + per-feature rsqrt
    bytes_accessed = (n * x_size * 4
                      + (x_size * h1 + h1 * h2 + h2 * h3 + h3 * y_size) * 2
                      + (2 * (h1 + h2 + h3) + y_size) * 4
                      + n * y_size * 4)

    return pl.pallas_call(
        bn_discriminator_kernel,
        out_shape=jax.ShapeDtypeStruct((n, y_size), jnp.float32),
        # no grid: the whole (small) problem lives in VMEM; each array is one block.
        in_specs=[pl.BlockSpec(memory_space=pltpu.MemorySpace.VMEM)] * len(args),
        out_specs=pl.BlockSpec(memory_space=pltpu.MemorySpace.VMEM),
        compiler_params=pltpu.CompilerParams(vmem_limit_bytes=int(vmem_bytes)),
        cost_estimate=pl.CostEstimate(flops=flops,
                                      transcendentals=transcendentals,
                                      bytes_accessed=bytes_accessed),
    )(*args)


def init_params(key, x_size, y_size, std=0.02):
    """Deterministic synthetic init: Linear weights ~ N(0, std) stored as bf16, BN gamma=1,
    beta=0, fc4 bias=0 (PyTorch defaults). Pre-BN biases are omitted: they are exactly
    cancelled by BatchNorm's mean subtraction."""
    dims = [x_size, *HIDDEN, y_size]
    params = {}
    keys = jax.random.split(key, 4)
    for i in range(4):
        fin, fout = dims[i], dims[i + 1]
        w = std * jax.random.normal(keys[i], (fin, fout), dtype=jnp.float32)
        params[f"w{i+1}"] = w.astype(jnp.bfloat16)
        if i < 3:  # BN layers: gamma/beta only (bias dropped — cancelled by BN)
            params[f"g{i+1}"] = jnp.ones((1, fout), jnp.float32)
            params[f"be{i+1}"] = jnp.zeros((1, fout), jnp.float32)
        else:      # tanh head keeps its bias
            params[f"b{i+1}"] = jnp.zeros((1, fout), jnp.float32)
    return params


if __name__ == "__main__":
    key = jax.random.PRNGKey(0)
    k_x, k_p = jax.random.split(key)

    # N=256 keeps everything comfortably in VMEM while filling the MXU's M dimension
    # (>=256 rows on v6e/v7x, >=128 on v5e) instead of running at M=8.
    batch, x_size, y_size = 256, 32, 8
    x = jax.random.normal(k_x, (batch, x_size), dtype=jnp.float32)
    params = init_params(k_p, x_size, y_size)

    y = bn_discriminator(x, params)
    jax.block_until_ready(y)
    assert y.shape == (batch, y_size)
    assert bool(jnp.all(jnp.isfinite(y)))
    assert bool(jnp.all(jnp.abs(y) <= 1.0))   # tanh output range
    print("KERNEL_OK")
</pallas_src>

<mosaic_0001>
module attributes {stable_mosaic.version = 11 : i64} {
  func.func @bn_discriminator_kernel(%arg0: memref<256x32xf32, #tpu.memory_space<vmem>>, %arg1: memref<32x1024xbf16, #tpu.memory_space<vmem>>, %arg2: memref<1x1024xf32, #tpu.memory_space<vmem>>, %arg3: memref<1x1024xf32, #tpu.memory_space<vmem>>, %arg4: memref<1024x512xbf16, #tpu.memory_space<vmem>>, %arg5: memref<1x512xf32, #tpu.memory_space<vmem>>, %arg6: memref<1x512xf32, #tpu.memory_space<vmem>>, %arg7: memref<512x256xbf16, #tpu.memory_space<vmem>>, %arg8: memref<1x256xf32, #tpu.memory_space<vmem>>, %arg9: memref<1x256xf32, #tpu.memory_space<vmem>>, %arg10: memref<256x8xbf16, #tpu.memory_space<vmem>>, %arg11: memref<1x8xf32, #tpu.memory_space<vmem>>, %arg12: memref<256x8xf32, #tpu.memory_space<vmem>>) attributes {dimension_semantics = [], scalar_prefetch = 0 : i64, scratch_operands = 0 : i64, tpu.core_type = #tpu.core_type<tc>} {
    %c0 = arith.constant 0 : index
    %c0_0 = arith.constant 0 : index
    %0 = vector.load %arg0[%c0, %c0_0] : memref<256x32xf32, #tpu.memory_space<vmem>>, vector<256x32xf32>
    %1 = arith.truncf %0 : vector<256x32xf32> to vector<256x32xbf16>
    %c0_1 = arith.constant 0 : index
    %c0_2 = arith.constant 0 : index
    %2 = vector.load %arg1[%c0_1, %c0_2] : memref<32x1024xbf16, #tpu.memory_space<vmem>>, vector<32x1024xbf16>
    %cst = arith.constant dense<0.000000e+00> : vector<256x1024xf32>
    %3 = tpu.matmul %1, %2, %cst {dimension_numbers = #tpu.dot_dimension_numbers<[1], [0], [0], [1], [0, 0, 1, 1], [], []>} : vector<256x32xbf16>, vector<32x1024xbf16>, vector<256x1024xf32> -> vector<256x1024xf32>
    %cst_3 = arith.constant dense<0.000000e+00> : vector<1024xf32>
    %4 = vector.multi_reduction <add>, %3, %cst_3 [0] : vector<256x1024xf32> to vector<1024xf32>
    %5 = vector.shape_cast %4 : vector<1024xf32> to vector<1x1024xf32>
    %cst_4 = arith.constant 3.906250e-03 : f32
    %6 = vector.broadcast %cst_4 : f32 to vector<1x1024xf32>
    %7 = arith.mulf %5, %6 : vector<1x1024xf32>
    %8 = arith.mulf %3, %3 : vector<256x1024xf32>
    %cst_5 = arith.constant dense<0.000000e+00> : vector<1024xf32>
    %9 = vector.multi_reduction <add>, %8, %cst_5 [0] : vector<256x1024xf32> to vector<1024xf32>
    %10 = vector.shape_cast %9 : vector<1024xf32> to vector<1x1024xf32>
    %cst_6 = arith.constant 3.906250e-03 : f32
    %11 = vector.broadcast %cst_6 : f32 to vector<1x1024xf32>
    %12 = arith.mulf %10, %11 : vector<1x1024xf32>
    %13 = arith.mulf %7, %7 : vector<1x1024xf32>
    %14 = arith.subf %12, %13 : vector<1x1024xf32>
    %cst_7 = arith.constant 0.000000e+00 : f32
    %15 = vector.broadcast %cst_7 : f32 to vector<1x1024xf32>
    %16 = arith.maximumf %14, %15 : vector<1x1024xf32>
    %17 = vector.broadcast %7 : vector<1x1024xf32> to vector<256x1024xf32>
    %18 = arith.subf %3, %17 : vector<256x1024xf32>
    %cst_8 = arith.constant 9.99999974E-6 : f32
    %19 = vector.broadcast %cst_8 : f32 to vector<1x1024xf32>
    %20 = arith.addf %16, %19 : vector<1x1024xf32>
    %21 = math.rsqrt %20 : vector<1x1024xf32>
    %22 = vector.broadcast %21 : vector<1x1024xf32> to vector<256x1024xf32>
    %23 = arith.mulf %18, %22 : vector<256x1024xf32>
    %c0_9 = arith.constant 0 : index
    %c0_10 = arith.constant 0 : index
    %24 = vector.load %arg2[%c0_9, %c0_10] : memref<1x1024xf32, #tpu.memory_space<vmem>>, vector<1x1024xf32>
    %25 = vector.broadcast %24 : vector<1x1024xf32> to vector<256x1024xf32>
    %26 = arith.mulf %23, %25 : vector<256x1024xf32>
    %c0_11 = arith.constant 0 : index
    %c0_12 = arith.constant 0 : index
    %27 = vector.load %arg3[%c0_11, %c0_12] : memref<1x1024xf32, #tpu.memory_space<vmem>>, vector<1x1024xf32>
    %28 = vector.broadcast %27 : vector<1x1024xf32> to vector<256x1024xf32>
    %29 = arith.addf %26, %28 : vector<256x1024xf32>
    %cst_13 = arith.constant 2.000000e-01 : f32
    %30 = vector.broadcast %cst_13 : f32 to vector<256x1024xf32>
    %31 = arith.mulf %30, %29 : vector<256x1024xf32>
    %32 = arith.maximumf %29, %31 : vector<256x1024xf32>
    %33 = arith.truncf %32 : vector<256x1024xf32> to vector<256x1024xbf16>
    %c0_14 = arith.constant 0 : index
    %c0_15 = arith.constant 0 : index
    %34 = vector.load %arg4[%c0_14, %c0_15] : memref<1024x512xbf16, #tpu.memory_space<vmem>>, vector<1024x512xbf16>
    %cst_16 = arith.constant dense<0.000000e+00> : vector<256x512xf32>
    %35 = tpu.matmul %33, %34, %cst_16 {dimension_numbers = #tpu.dot_dimension_numbers<[1], [0], [0], [1], [0, 0, 1, 1], [], []>} : vector<256x1024xbf16>, vector<1024x512xbf16>, vector<256x512xf32> -> vector<256x512xf32>
    %cst_17 = arith.constant dense<0.000000e+00> : vector<512xf32>
    %36 = vector.multi_reduction <add>, %35, %cst_17 [0] : vector<256x512xf32> to vector<512xf32>
    %37 = vector.shape_cast %36 : vector<512xf32> to vector<1x512xf32>
    %cst_18 = arith.constant 3.906250e-03 : f32
    %38 = vector.broadcast %cst_18 : f32 to vector<1x512xf32>
    %39 = arith.mulf %37, %38 : vector<1x512xf32>
    %40 = arith.mulf %35, %35 : vector<256x512xf32>
    %cst_19 = arith.constant dense<0.000000e+00> : vector<512xf32>
    %41 = vector.multi_reduction <add>, %40, %cst_19 [0] : vector<256x512xf32> to vector<512xf32>
    %42 = vector.shape_cast %41 : vector<512xf32> to vector<1x512xf32>
    %cst_20 = arith.constant 3.906250e-03 : f32
    %43 = vector.broadcast %cst_20 : f32 to vector<1x512xf32>
    %44 = arith.mulf %42, %43 : vector<1x512xf32>
    %45 = arith.mulf %39, %39 : vector<1x512xf32>
    %46 = arith.subf %44, %45 : vector<1x512xf32>
    %cst_21 = arith.constant 0.000000e+00 : f32
    %47 = vector.broadcast %cst_21 : f32 to vector<1x512xf32>
    %48 = arith.maximumf %46, %47 : vector<1x512xf32>
    %49 = vector.broadcast %39 : vector<1x512xf32> to vector<256x512xf32>
    %50 = arith.subf %35, %49 : vector<256x512xf32>
    %cst_22 = arith.constant 9.99999974E-6 : f32
    %51 = vector.broadcast %cst_22 : f32 to vector<1x512xf32>
    %52 = arith.addf %48, %51 : vector<1x512xf32>
    %53 = math.rsqrt %52 : vector<1x512xf32>
    %54 = vector.broadcast %53 : vector<1x512xf32> to vector<256x512xf32>
    %55 = arith.mulf %50, %54 : vector<256x512xf32>
    %c0_23 = arith.constant 0 : index
    %c0_24 = arith.constant 0 : index
    %56 = vector.load %arg5[%c0_23, %c0_24] : memref<1x512xf32, #tpu.memory_space<vmem>>, vector<1x512xf32>
    %57 = vector.broadcast %56 : vector<1x512xf32> to vector<256x512xf32>
    %58 = arith.mulf %55, %57 : vector<256x512xf32>
    %c0_25 = arith.constant 0 : index
    %c0_26 = arith.constant 0 : index
    %59 = vector.load %arg6[%c0_25, %c0_26] : memref<1x512xf32, #tpu.memory_space<vmem>>, vector<1x512xf32>
    %60 = vector.broadcast %59 : vector<1x512xf32> to vector<256x512xf32>
    %61 = arith.addf %58, %60 : vector<256x512xf32>
    %cst_27 = arith.constant 2.000000e-01 : f32
    %62 = vector.broadcast %cst_27 : f32 to vector<256x512xf32>
    %63 = arith.mulf %62, %61 : vector<256x512xf32>
    %64 = arith.maximumf %61, %63 : vector<256x512xf32>
    %65 = arith.truncf %64 : vector<256x512xf32> to vector<256x512xbf16>
    %c0_28 = arith.constant 0 : index
    %c0_29 = arith.constant 0 : index
    %66 = vector.load %arg7[%c0_28, %c0_29] : memref<512x256xbf16, #tpu.memory_space<vmem>>, vector<512x256xbf16>
    %cst_30 = arith.constant dense<0.000000e+00> : vector<256x256xf32>
    %67 = tpu.matmul %65, %66, %cst_30 {dimension_numbers = #tpu.dot_dimension_numbers<[1], [0], [0], [1], [0, 0, 1, 1], [], []>} : vector<256x512xbf16>, vector<512x256xbf16>, vector<256x256xf32> -> vector<256x256xf32>
    %cst_31 = arith.constant dense<0.000000e+00> : vector<256xf32>
    %68 = vector.multi_reduction <add>, %67, %cst_31 [0] : vector<256x256xf32> to vector<256xf32>
    %69 = vector.shape_cast %68 : vector<256xf32> to vector<1x256xf32>
    %cst_32 = arith.constant 3.906250e-03 : f32
    %70 = vector.broadcast %cst_32 : f32 to vector<1x256xf32>
    %71 = arith.mulf %69, %70 : vector<1x256xf32>
    %72 = arith.mulf %67, %67 : vector<256x256xf32>
    %cst_33 = arith.constant dense<0.000000e+00> : vector<256xf32>
    %73 = vector.multi_reduction <add>, %72, %cst_33 [0] : vector<256x256xf32> to vector<256xf32>
    %74 = vector.shape_cast %73 : vector<256xf32> to vector<1x256xf32>
    %cst_34 = arith.constant 3.906250e-03 : f32
    %75 = vector.broadcast %cst_34 : f32 to vector<1x256xf32>
    %76 = arith.mulf %74, %75 : vector<1x256xf32>
    %77 = arith.mulf %71, %71 : vector<1x256xf32>
    %78 = arith.subf %76, %77 : vector<1x256xf32>
    %cst_35 = arith.constant 0.000000e+00 : f32
    %79 = vector.broadcast %cst_35 : f32 to vector<1x256xf32>
    %80 = arith.maximumf %78, %79 : vector<1x256xf32>
    %81 = vector.broadcast %71 : vector<1x256xf32> to vector<256x256xf32>
    %82 = arith.subf %67, %81 : vector<256x256xf32>
    %cst_36 = arith.constant 9.99999974E-6 : f32
    %83 = vector.broadcast %cst_36 : f32 to vector<1x256xf32>
    %84 = arith.addf %80, %83 : vector<1x256xf32>
    %85 = math.rsqrt %84 : vector<1x256xf32>
    %86 = vector.broadcast %85 : vector<1x256xf32> to vector<256x256xf32>
    %87 = arith.mulf %82, %86 : vector<256x256xf32>
    %c0_37 = arith.constant 0 : index
    %c0_38 = arith.constant 0 : index
    %88 = vector.load %arg8[%c0_37, %c0_38] : memref<1x256xf32, #tpu.memory_space<vmem>>, vector<1x256xf32>
    %89 = vector.broadcast %88 : vector<1x256xf32> to vector<256x256xf32>
    %90 = arith.mulf %87, %89 : vector<256x256xf32>
    %c0_39 = arith.constant 0 : index
    %c0_40 = arith.constant 0 : index
    %91 = vector.load %arg9[%c0_39, %c0_40] : memref<1x256xf32, #tpu.memory_space<vmem>>, vector<1x256xf32>
    %92 = vector.broadcast %91 : vector<1x256xf32> to vector<256x256xf32>
    %93 = arith.addf %90, %92 : vector<256x256xf32>
    %cst_41 = arith.constant 2.000000e-01 : f32
    %94 = vector.broadcast %cst_41 : f32 to vector<256x256xf32>
    %95 = arith.mulf %94, %93 : vector<256x256xf32>
    %96 = arith.maximumf %93, %95 : vector<256x256xf32>
    %97 = arith.truncf %96 : vector<256x256xf32> to vector<256x256xbf16>
    %c0_42 = arith.constant 0 : index
    %c0_43 = arith.constant 0 : index
    %98 = vector.load %arg10[%c0_42, %c0_43] : memref<256x8xbf16, #tpu.memory_space<vmem>>, vector<256x8xbf16>
    %cst_44 = arith.constant dense<0.000000e+00> : vector<256x8xf32>
    %99 = tpu.matmul %97, %98, %cst_44 {dimension_numbers = #tpu.dot_dimension_numbers<[1], [0], [0], [1], [0, 0, 1, 1], [], []>} : vector<256x256xbf16>, vector<256x8xbf16>, vector<256x8xf32> -> vector<256x8xf32>
    %c0_45 = arith.constant 0 : index
    %c0_46 = arith.constant 0 : index
    %100 = vector.load %arg11[%c0_45, %c0_46] : memref<1x8xf32, #tpu.memory_space<vmem>>, vector<1x8xf32>
    %101 = vector.broadcast %100 : vector<1x8xf32> to vector<256x8xf32>
    %102 = arith.addf %99, %101 : vector<256x8xf32>
    %103 = math.tanh %102 : vector<256x8xf32>
    %c0_47 = arith.constant 0 : index
    %c0_48 = arith.constant 0 : index
    %104 = vector.load %arg12[%c0_47, %c0_48] : memref<256x8xf32, #tpu.memory_space<vmem>>, vector<256x8xf32>
    tpu.vector_store %arg12[%c0_47, %c0_48], %103 {strides = array<i32>} : memref<256x8xf32, #tpu.memory_space<vmem>>, vector<256x8xf32>,
    return
  }
}

</mosaic_0001>

<llo_original>
// kernel: tpu_custom_call.1
$region0: #{tpu_custom_call.1}
  #allocation0 [shape = 'u32[]', space=smem, size = 0x4, offset = 0x4, fixed_abs, tag = 'smem constant byte address 0x4 - core index']
  #allocation1 [shape = 'u32[72,128]{1,0:T(1,128)}', space=vmem, size = 0x9000, scoped, tag = 'internal scratch']
  %s0 = inlined_call_operand.vmem [shape: f32[256,32], index: 0, kind: input, shape index: {}]
  %s1 = inlined_call_operand.vmem [shape: bf16[32,1024], index: 1, kind: input, shape index: {}]
  %s2 = inlined_call_operand.vmem [shape: f32[1,1024], index: 2, kind: input, shape index: {}]
  %s3 = inlined_call_operand.vmem [shape: f32[1,1024], index: 3, kind: input, shape index: {}]
  %s4 = inlined_call_operand.hbm [shape: bf16[1024,512], index: 4, kind: input, shape index: {}]
  %s5 = inlined_call_operand.vmem [shape: f32[1,512], index: 5, kind: input, shape index: {}]
  %s6 = inlined_call_operand.vmem [shape: f32[1,512], index: 6, kind: input, shape index: {}]
  %s7 = inlined_call_operand.hbm [shape: bf16[512,256], index: 7, kind: input, shape index: {}]
  %s8 = inlined_call_operand.vmem [shape: f32[1,256], index: 8, kind: input, shape index: {}]
  %s9 = inlined_call_operand.vmem [shape: f32[1,256], index: 9, kind: input, shape index: {}]
  %s10 = inlined_call_operand.vmem [shape: bf16[256,8], index: 10, kind: input, shape index: {}]
  %s11 = inlined_call_operand.vmem [shape: f32[1,8], index: 11, kind: input, shape index: {}]
  %s12 = inlined_call_operand.vmem [shape: f32[256,8], index: 12, kind: output, shape index: {}]
  %s13 = sld [smem:[#allocation0]]
  $region66: #{tpu_custom_call.1} parent=0
    _
  %s15 = ssub.s32 1, %s13
  %s16 = scalar_select 0, %s15, %s13
  $region1: #{tpu_custom_call.1} parent=0
    #allocation2 [shape = 'u8[1048576]{0}', space=vmem, size = 0x100000, scoped, tag = 'input window, operand 4, single buffered']
    #allocation3 [shape = 's32[1]{0}', space=sflag, size = 0x4, scoped, tag = 'scoped memory for tpu_custom_call.1']
    #allocation4 [shape = 'u8[262144]{0}', space=vmem, size = 0x40000, scoped, tag = 'input window, operand 7, single buffered']
    #allocation5 [shape = 's32[1]{0}', space=sflag, size = 0x4, scoped, tag = 'scoped memory for tpu_custom_call.1']
    %17 = vsyncpa [#allocation3], 0
    %18 = vsyncpa [#allocation5], 0
    // Predicated region
    $region2: #{tpu_custom_call.1} parent=1 // pred_check
      _
    $region3: #{tpu_custom_call.1} parent=1 // pred_check_branch
      %20 = sbr.rel (0) target = $region5
    $region4: #{tpu_custom_call.1} parent=1 // pred_region
      _
    $region5: #{tpu_custom_call.1} parent=1 // pred_fallthru
      _
    // Predicated region
    $region6: #{tpu_custom_call.1} parent=1 // pred_check
      _
    $region7: #{tpu_custom_call.1} parent=1 // pred_check_branch
      %22 = sbr.rel (0) target = $region9
    $region8: #{tpu_custom_call.1} parent=1 // pred_region
      _
    $region9: #{tpu_custom_call.1} parent=1 // pred_fallthru
      _
    // Predicated region
    $region10: #{tpu_custom_call.1} parent=1 // pred_check
      _
    $region11: #{tpu_custom_call.1} parent=1 // pred_check_branch
      %24 = sbr.rel (0) target = $region13
    $region12: #{tpu_custom_call.1} parent=1 // pred_region
      _
    $region13: #{tpu_custom_call.1} parent=1 // pred_fallthru
      _
    // Predicated region
    $region14: #{tpu_custom_call.1} parent=1 // pred_check
      _
    $region15: #{tpu_custom_call.1} parent=1 // pred_check_branch
      %26 = sbr.rel (0) target = $region17
    $region16: #{tpu_custom_call.1} parent=1 // pred_region
      _
    $region17: #{tpu_custom_call.1} parent=1 // pred_fallthru
      _
    // Predicated region
    $region18: #{tpu_custom_call.1} parent=1 // pred_check
      _
    $region19: #{tpu_custom_call.1} parent=1 // pred_check_branch
      %28 = sbr.rel (0) target = $region21
    $region20: #{tpu_custom_call.1} parent=1 // pred_region
      %30 = vsyncadd [#allocation3], 0
      %s31 = sshll.u32 %s4, 4
      %s32 = int_to_ptr.hbm [resolvable:$true] %s31
      %s33 = sshll.u32 [#allocation2], 4
      %s34 = int_to_ptr.vmem [resolvable:$true] %s33
      %39 = dma.hbm_to_vmem [thread:$0]  %s32, 32768, %s34, [#allocation3], 256, 256, 16
    $region21: #{tpu_custom_call.1} parent=1 // pred_fallthru
      _
    // Predicated region
    $region22: #{tpu_custom_call.1} parent=1 // pred_check
      _
    $region23: #{tpu_custom_call.1} parent=1 // pred_check_branch
      %41 = sbr.rel (0) target = $region25
    $region24: #{tpu_custom_call.1} parent=1 // pred_region
      _
    $region25: #{tpu_custom_call.1} parent=1 // pred_fallthru
      _
    // Predicated region
    $region26: #{tpu_custom_call.1} parent=1 // pred_check
      _
    $region27: #{tpu_custom_call.1} parent=1 // pred_check_branch
      %43 = sbr.rel (0) target = $region29
    $region28: #{tpu_custom_call.1} parent=1 // pred_region
      _
    $region29: #{tpu_custom_call.1} parent=1 // pred_fallthru
      _
    // Predicated region
    $region30: #{tpu_custom_call.1} parent=1 // pred_check
      _
    $region31: #{tpu_custom_call.1} parent=1 // pred_check_branch
      %45 = sbr.rel (0) target = $region33
    $region32: #{tpu_custom_call.1} parent=1 // pred_region
      %47 = vsyncadd [#allocation5], 0
      %s48 = sshll.u32 %s7, 4
      %s49 = int_to_ptr.hbm [resolvable:$true] %s48
      %s50 = sshll.u32 [#allocation4], 4
      %s51 = int_to_ptr.vmem [resolvable:$true] %s50
      %56 = dma.hbm_to_vmem [thread:$0]  %s49, 8192, %s51, [#allocation5], 128, 128, 8
    $region33: #{tpu_custom_call.1} parent=1 // pred_fallthru
      _
    // Predicated region
    $region34: #{tpu_custom_call.1} parent=1 // pred_check
      _
    $region35: #{tpu_custom_call.1} parent=1 // pred_check_branch
      %58 = sbr.rel (0) target = $region37
    $region36: #{tpu_custom_call.1} parent=1 // pred_region
      _
    $region37: #{tpu_custom_call.1} parent=1 // pred_fallthru
      _
    // Predicated region
    $region38: #{tpu_custom_call.1} parent=1 // pred_check
      _
    $region39: #{tpu_custom_call.1} parent=1 // pred_check_branch
      %60 = sbr.rel (0) target = $region41
    $region40: #{tpu_custom_call.1} parent=1 // pred_region
      _
    $region41: #{tpu_custom_call.1} parent=1 // pred_fallthru
      _
    // Predicated region
    $region42: #{tpu_custom_call.1} parent=1 // pred_check
      _
    $region43: #{tpu_custom_call.1} parent=1 // pred_check_branch
      %62 = sbr.rel (0) target = $region45
    $region44: #{tpu_custom_call.1} parent=1 // pred_region
      _
    $region45: #{tpu_custom_call.1} parent=1 // pred_fallthru
      _
    // Predicated region
    $region46: #{tpu_custom_call.1} parent=1 // pred_check
      _
    $region47: #{tpu_custom_call.1} parent=1 // pred_check_branch
      %64 = sbr.rel (0) target = $region49
    $region48: #{tpu_custom_call.1} parent=1 // pred_region
      _
    $region49: #{tpu_custom_call.1} parent=1 // pred_fallthru
      _
    // Predicated region
    $region50: #{tpu_custom_call.1} parent=1 // pred_check
      _
    $region51: #{tpu_custom_call.1} parent=1 // pred_check_branch
      %66 = sbr.rel (0) target = $region53
    $region52: #{tpu_custom_call.1} parent=1 // pred_region
      %68 = dma.done [#allocation3], 32768
    $region53: #{tpu_custom_call.1} parent=1 // pred_fallthru
      _
    // Predicated region
    $region54: #{tpu_custom_call.1} parent=1 // pred_check
      _
    $region55: #{tpu_custom_call.1} parent=1 // pred_check_branch
      %70 = sbr.rel (0) target = $region57
    $region56: #{tpu_custom_call.1} parent=1 // pred_region
      %72 = dma.done [#allocation5], 8192
    $region57: #{tpu_custom_call.1} parent=1 // pred_fallthru
      _
    %v74 = vld [vmem:[%s0] sm:$0xff]
    %v75 = vld [vmem:[%s0 + $0x8] sm:$0xff]
    %v76 = vld [vmem:[%s0 + $0x10] sm:$0xff]
    %v77 = vld [vmem:[%s0 + $0x18] sm:$0xff]
    %v78 = vld [vmem:[%s0 + $0x20] sm:$0xff]
    %v79 = vld [vmem:[%s0 + $0x28] sm:$0xff]
    %v80 = vld [vmem:[%s0 + $0x30] sm:$0xff]
    %v81 = vld [vmem:[%s0 + $0x38] sm:$0xff]
    %v82 = vld [vmem:[%s0 + $0x40] sm:$0xff]
    %v83 = vld [vmem:[%s0 + $0x48] sm:$0xff]
    %v84 = vld [vmem:[%s0 + $0x50] sm:$0xff]
    %v85 = vld [vmem:[%s0 + $0x58] sm:$0xff]
    %v86 = vld [vmem:[%s0 + $0x60] sm:$0xff]
    %v87 = vld [vmem:[%s0 + $0x68] sm:$0xff]
    %v88 = vld [vmem:[%s0 + $0x70] sm:$0xff]
    %v89 = vld [vmem:[%s0 + $0x78] sm:$0xff]
    %v90 = vld [vmem:[%s0 + $0x80] sm:$0xff]
    %v91 = vld [vmem:[%s0 + $0x88] sm:$0xff]
    %v92 = vld [vmem:[%s0 + $0x90] sm:$0xff]
    %v93 = vld [vmem:[%s0 + $0x98] sm:$0xff]
    %v94 = vld [vmem:[%s0 + $0xa0] sm:$0xff]
    %v95 = vld [vmem:[%s0 + $0xa8] sm:$0xff]
    %v96 = vld [vmem:[%s0 + $0xb0] sm:$0xff]
    %v97 = vld [vmem:[%s0 + $0xb8] sm:$0xff]
    %v98 = vld [vmem:[%s0 + $0xc0] sm:$0xff]
    %v99 = vld [vmem:[%s0 + $0xc8] sm:$0xff]
    %v100 = vld [vmem:[%s0 + $0xd0] sm:$0xff]
    %v101 = vld [vmem:[%s0 + $0xd8] sm:$0xff]
    %v102 = vld [vmem:[%s0 + $0xe0] sm:$0xff]
    %v103 = vld [vmem:[%s0 + $0xe8] sm:$0xff]
    %v104 = vld [vmem:[%s0 + $0xf0] sm:$0xff]
    %v105 = vld [vmem:[%s0 + $0xf8] sm:$0xff]
    %v106 = vpack.c.bf16 %v75, %v74
    %v107 = vpack.c.bf16 %v77, %v76
    %v108 = vpack.c.bf16 %v79, %v78
    %v109 = vpack.c.bf16 %v81, %v80
    %v110 = vpack.c.bf16 %v83, %v82
    %v111 = vpack.c.bf16 %v85, %v84
    %v112 = vpack.c.bf16 %v87, %v86
    %v113 = vpack.c.bf16 %v89, %v88
    %v114 = vpack.c.bf16 %v91, %v90
    %v115 = vpack.c.bf16 %v93, %v92
    %v116 = vpack.c.bf16 %v95, %v94
    %v117 = vpack.c.bf16 %v97, %v96
    %v118 = vpack.c.bf16 %v99, %v98
    %v119 = vpack.c.bf16 %v101, %v100
    %v120 = vpack.c.bf16 %v103, %v102
    %v121 = vpack.c.bf16 %v105, %v104
    %v122 = vld [vmem:[%s1] sm:$0xff]
    %v123 = vld [vmem:[%s1 + $0x8] sm:$0xff]
    %v124 = vld [vmem:[%s1 + $0x10] sm:$0xff]
    %v125 = vld [vmem:[%s1 + $0x18] sm:$0xff]
    %v126 = vld [vmem:[%s1 + $0x20] sm:$0xff]
    %v127 = vld [vmem:[%s1 + $0x28] sm:$0xff]
    %v128 = vld [vmem:[%s1 + $0x30] sm:$0xff]
    %v129 = vld [vmem:[%s1 + $0x38] sm:$0xff]
    %v130 = vld [vmem:[%s1 + $0x40] sm:$0xff]
    %v131 = vld [vmem:[%s1 + $0x48] sm:$0xff]
    %v132 = vld [vmem:[%s1 + $0x50] sm:$0xff]
    %v133 = vld [vmem:[%s1 + $0x58] sm:$0xff]
    %v134 = vld [vmem:[%s1 + $0x60] sm:$0xff]
    %v135 = vld [vmem:[%s1 + $0x68] sm:$0xff]
    %v136 = vld [vmem:[%s1 + $0x70] sm:$0xff]
    %v137 = vld [vmem:[%s1 + $0x78] sm:$0xff]
    %v154 = vunpack.c.l.b16 %v122
    %v155 = vunpack.c.h.b16 %v122
    %v156 = vunpack.c.l.b16 %v123
    %v157 = vunpack.c.h.b16 %v123
    %v158 = vunpack.c.l.b16 %v124
    %v159 = vunpack.c.h.b16 %v124
    %v160 = vunpack.c.l.b16 %v125
    %v161 = vunpack.c.h.b16 %v125
    %v162 = vunpack.c.l.b16 %v126
    %v163 = vunpack.c.h.b16 %v126
    %v164 = vunpack.c.l.b16 %v127
    %v165 = vunpack.c.h.b16 %v127
    %v166 = vunpack.c.l.b16 %v128
    %v167 = vunpack.c.h.b16 %v128
    %v168 = vunpack.c.l.b16 %v129
    %v169 = vunpack.c.h.b16 %v129
    %v170 = vunpack.c.l.b16 %v130
    %v171 = vunpack.c.h.b16 %v130
    %v172 = vunpack.c.l.b16 %v131
    %v173 = vunpack.c.h.b16 %v131
    %v174 = vunpack.c.l.b16 %v132
    %v175 = vunpack.c.h.b16 %v132
    %v176 = vunpack.c.l.b16 %v133
    %v177 = vunpack.c.h.b16 %v133
    %v178 = vunpack.c.l.b16 %v134
    %v179 = vunpack.c.h.b16 %v134
    %v180 = vunpack.c.l.b16 %v135
    %v181 = vunpack.c.h.b16 %v135
    %v182 = vunpack.c.l.b16 %v136
    %v183 = vunpack.c.h.b16 %v136
    %v184 = vunpack.c.l.b16 %v137
    %v185 = vunpack.c.h.b16 %v137
    %v186 = vpack.c.b16 %v162, %v154
    %v187 = vpack.c.b16 %v163, %v155
    %v188 = vpack.c.b16 %v164, %v156
    %v189 = vpack.c.b16 %v165, %v157
    %v190 = vpack.c.b16 %v166, %v158
    %v191 = vpack.c.b16 %v167, %v159
    %v192 = vpack.c.b16 %v168, %v160
    %v193 = vpack.c.b16 %v169, %v161
    %v194 = vpack.c.b16 %v178, %v170
    %v195 = vpack.c.b16 %v179, %v171
    %v196 = vpack.c.b16 %v180, %v172
    %v197 = vpack.c.b16 %v181, %v173
    %v198 = vpack.c.b16 %v182, %v174
    %v199 = vpack.c.b16 %v183, %v175
    %v200 = vpack.c.b16 %v184, %v176
    %v201 = vpack.c.b16 %v185, %v177
    %vm218 = vcmask 261120
    %v220 = vsel %vm218, %v106, 0
    %v223 = vsel %vm218, %v107, 0
    %v226 = vsel %vm218, %v108, 0
    %v229 = vsel %vm218, %v109, 0
    %v232 = vsel %vm218, %v110, 0
    %v235 = vsel %vm218, %v111, 0
    %v238 = vsel %vm218, %v112, 0
    %v241 = vsel %vm218, %v113, 0
    %v244 = vsel %vm218, %v114, 0
    %v247 = vsel %vm218, %v115, 0
    %v250 = vsel %vm218, %v116, 0
    %v253 = vsel %vm218, %v117, 0
    %v256 = vsel %vm218, %v118, 0
    %v259 = vsel %vm218, %v119, 0
    %v262 = vsel %vm218, %v120, 0
    %v265 = vsel %vm218, %v121, 0
    %267 = vmatpush.bf16.msra.mxu0 0
    %268 = vmatpush.bf16.msra.mxu0 0
    %269 = vmatpush.bf16.msra.mxu0 0
    %270 = vmatpush.bf16.msra.mxu0 0
    %271 = vmatpush.bf16.msra.mxu0 0
    %272 = vmatpush.bf16.msra.mxu0 0
    %273 = vmatpush.bf16.msra.mxu0 %v194
    %274 = vmatpush.bf16.msra.mxu0 %v186
    %275 = vmatmul.bf16.gmra.mxu0 %v220
    %v276 = vpop.f32.mrf.mxu0
    %v277 = vadd.f32 0.0, %v276
    %v278 = vpop.f32.mrf.mxu0
    %v279 = vadd.f32 0.0, %v278
    %280 = vmatmul.bf16.gmra.mxu0 %v223
    %v281 = vpop.f32.mrf.mxu0
    %v282 = vadd.f32 0.0, %v281
    %v283 = vpop.f32.mrf.mxu0
    %v284 = vadd.f32 0.0, %v283
    %285 = vmatmul.bf16.gmra.mxu0 %v226
    %v286 = vpop.f32.mrf.mxu0
    %v287 = vadd.f32 0.0, %v286
    %v288 = vpop.f32.mrf.mxu0
    %v289 = vadd.f32 0.0, %v288
    %290 = vmatmul.bf16.gmra.mxu0 %v229
    %v291 = vpop.f32.mrf.mxu0
    %v292 = vadd.f32 0.0, %v291
    %v293 = vpop.f32.mrf.mxu0
    %v294 = vadd.f32 0.0, %v293
    %295 = vmatmul.bf16.gmra.mxu0 %v232
    %v296 = vpop.f32.mrf.mxu0
    %v297 = vadd.f32 0.0, %v296
    %v298 = vpop.f32.mrf.mxu0
    %v299 = vadd.f32 0.0, %v298
    %300 = vmatmul.bf16.gmra.mxu0 %v235
    %v301 = vpop.f32.mrf.mxu0
    %v302 = vadd.f32 0.0, %v301
    %v303 = vpop.f32.mrf.mxu0
    %v304 = vadd.f32 0.0, %v303
    %305 = vmatmul.bf16.gmra.mxu0 %v238
    %v306 = vpop.f32.mrf.mxu0
    %v307 = vadd.f32 0.0, %v306
    %v308 = vpop.f32.mrf.mxu0
    %v309 = vadd.f32 0.0, %v308
    %310 = vmatmul.bf16.gmra.mxu0 %v241
    %v311 = vpop.f32.mrf.mxu0
    %v312 = vadd.f32 0.0, %v311
    %v313 = vpop.f32.mrf.mxu0
    %v314 = vadd.f32 0.0, %v313
    %315 = vmatmul.bf16.gmra.mxu0 %v244
    %v316 = vpop.f32.mrf.mxu0
    %v317 = vadd.f32 0.0, %v316
    %v318 = vpop.f32.mrf.mxu0
    %v319 = vadd.f32 0.0, %v318
    %320 = vmatmul.bf16.gmra.mxu0 %v247
    %v321 = vpop.f32.mrf.mxu0
    %v322 = vadd.f32 0.0, %v321
    %v323 = vpop.f32.mrf.mxu0
    %v324 = vadd.f32 0.0, %v323
    %325 = vmatmul.bf16.gmra.mxu0 %v250
    %v326 = vpop.f32.mrf.mxu0
    %v327 = vadd.f32 0.0, %v326
    %v328 = vpop.f32.mrf.mxu0
    %v329 = vadd.f32 0.0, %v328
    %330 = vmatmul.bf16.gmra.mxu0 %v253
    %v331 = vpop.f32.mrf.mxu0
    %v332 = vadd.f32 0.0, %v331
    %v333 = vpop.f32.mrf.mxu0
    %v334 = vadd.f32 0.0, %v333
    %335 = vmatmul.bf16.gmra.mxu0 %v256
    %v336 = vpop.f32.mrf.mxu0
    %v337 = vadd.f32 0.0, %v336
    %v338 = vpop.f32.mrf.mxu0
    %v339 = vadd.f32 0.0, %v338
    %340 = vmatmul.bf16.gmra.mxu0 %v259
    %v341 = vpop.f32.mrf.mxu0
    %v342 = vadd.f32 0.0, %v341
    %v343 = vpop.f32.mrf.mxu0
    %v344 = vadd.f32 0.0, %v343
    %345 = vmatmul.bf16.gmra.mxu0 %v262
    %v346 = vpop.f32.mrf.mxu0
    %v347 = vadd.f32 0.0, %v346
    %v348 = vpop.f32.mrf.mxu0
    %v349 = vadd.f32 0.0, %v348
    %350 = vmatmul.bf16.gmra.mxu0 %v265
    %v351 = vpop.f32.mrf.mxu0
    %v352 = vadd.f32 0.0, %v351
    %v353 = vpop.f32.mrf.mxu0
    %v354 = vadd.f32 0.0, %v353
    %355 = vdwg.mxu0
    %356 = vmatpush.bf16.msra.mxu0 0
    %357 = vmatpush.bf16.msra.mxu0 0
    %358 = vmatpush.bf16.msra.mxu0 0
    %359 = vmatpush.bf16.msra.mxu0 0
    %360 = vmatpush.bf16.msra.mxu0 0
    %361 = vmatpush.bf16.msra.mxu0 0
    %362 = vmatpush.bf16.msra.mxu0 %v195
    %363 = vmatpush.bf16.msra.mxu0 %v187
    %364 = vmatmul.bf16.gmra.mxu0 %v220
    %v365 = vpop.f32.mrf.mxu0
    %v366 = vadd.f32 0.0, %v365
    %v367 = vpop.f32.mrf.mxu0
    %v368 = vadd.f32 0.0, %v367
    %369 = vmatmul.bf16.gmra.mxu0 %v223
    %v370 = vpop.f32.mrf.mxu0
    %v371 = vadd.f32 0.0, %v370
    %v372 = vpop.f32.mrf.mxu0
    %v373 = vadd.f32 0.0, %v372
    %374 = vmatmul.bf16.gmra.mxu0 %v226
    %v375 = vpop.f32.mrf.mxu0
    %v376 = vadd.f32 0.0, %v375
    %v377 = vpop.f32.mrf.mxu0
    %v378 = vadd.f32 0.0, %v377
    %379 = vmatmul.bf16.gmra.mxu0 %v229
    %v380 = vpop.f32.mrf.mxu0
    %v381 = vadd.f32 0.0, %v380
    %v382 = vpop.f32.mrf.mxu0
    %v383 = vadd.f32 0.0, %v382
    %384 = vmatmul.bf16.gmra.mxu0 %v232
    %v385 = vpop.f32.mrf.mxu0
    %v386 = vadd.f32 0.0, %v385
    %v387 = vpop.f32.mrf.mxu0
    %v388 = vadd.f32 0.0, %v387
    %389 = vmatmul.bf16.gmra.mxu0 %v235
    %v390 = vpop.f32.mrf.mxu0
    %v391 = vadd.f32 0.0, %v390
    %v392 = vpop.f32.mrf.mxu0
    %v393 = vadd.f32 0.0, %v392
    %394 = vmatmul.bf16.gmra.mxu0 %v238
    %v395 = vpop.f32.mrf.mxu0
    %v396 = vadd.f32 0.0, %v395
    %v397 = vpop.f32.mrf.mxu0
    %v398 = vadd.f32 0.0, %v397
    %399 = vmatmul.bf16.gmra.mxu0 %v241
    %v400 = vpop.f32.mrf.mxu0
    %v401 = vadd.f32 0.0, %v400
    %v402 = vpop.f32.mrf.mxu0
    %v403 = vadd.f32 0.0, %v402
    %404 = vmatmul.bf16.gmra.mxu0 %v244
    %v405 = vpop.f32.mrf.mxu0
    %v406 = vadd.f32 0.0, %v405
    %v407 = vpop.f32.mrf.mxu0
    %v408 = vadd.f32 0.0, %v407
    %409 = vmatmul.bf16.gmra.mxu0 %v247
    %v410 = vpop.f32.mrf.mxu0
    %v411 = vadd.f32 0.0, %v410
    %v412 = vpop.f32.mrf.mxu0
    %v413 = vadd.f32 0.0, %v412
    %414 = vmatmul.bf16.gmra.mxu0 %v250
    %v415 = vpop.f32.mrf.mxu0
    %v416 = vadd.f32 0.0, %v415
    %v417 = vpop.f32.mrf.mxu0
    %v418 = vadd.f32 0.0, %v417
    %419 = vmatmul.bf16.gmra.mxu0 %v253
    %v420 = vpop.f32.mrf.mxu0
    %v421 = vadd.f32 0.0, %v420
    %v422 = vpop.f32.mrf.mxu0
    %v423 = vadd.f32 0.0, %v422
    %424 = vmatmul.bf16.gmra.mxu0 %v256
    %v425 = vpop.f32.mrf.mxu0
    %v426 = vadd.f32 0.0, %v425
    %v427 = vpop.f32.mrf.mxu0
    %v428 = vadd.f32 0.0, %v427
    %429 = vmatmul.bf16.gmra.mxu0 %v259
    %v430 = vpop.f32.mrf.mxu0
    %v431 = vadd.f32 0.0, %v430
    %v432 = vpop.f32.mrf.mxu0
    %v433 = vadd.f32 0.0, %v432
    %434 = vmatmul.bf16.gmra.mxu0 %v262
    %v435 = vpop.f32.mrf.mxu0
    %v436 = vadd.f32 0.0, %v435
    %v437 = vpop.f32.mrf.mxu0
    %v438 = vadd.f32 0.0, %v437
    %439 = vmatmul.bf16.gmra.mxu0 %v265
    %v440 = vpop.f32.mrf.mxu0
    %v441 = vadd.f32 0.0, %v440
    %v442 = vpop.f32.mrf.mxu0
    %v443 = vadd.f32 0.0, %v442
    %444 = vdwg.mxu0
    %445 = vmatpush.bf16.msra.mxu0 0
    %446 = vmatpush.bf16.msra.mxu0 0
    %447 = vmatpush.bf16.msra.mxu0 0
    %448 = vmatpush.bf16.msra.mxu0 0
    %449 = vmatpush.bf16.msra.mxu0 0
    %450 = vmatpush.bf16.msra.mxu0 0
    %451 = vmatpush.bf16.msra.mxu0 %v196
    %452 = vmatpush.bf16.msra.mxu0 %v188
    %453 = vmatmul.bf16.gmra.mxu0 %v220
    %v454 = vpop.f32.mrf.mxu0
    %v455 = vadd.f32 0.0, %v454
    %v456 = vpop.f32.mrf.mxu0
    %v457 = vadd.f32 0.0, %v456
    %458 = vmatmul.bf16.gmra.mxu0 %v223
    %v459 = vpop.f32.mrf.mxu0
    %v460 = vadd.f32 0.0, %v459
    %v461 = vpop.f32.mrf.mxu0
    %v462 = vadd.f32 0.0, %v461
    %463 = vmatmul.bf16.gmra.mxu0 %v226
    %v464 = vpop.f32.mrf.mxu0
    %v465 = vadd.f32 0.0, %v464
    %v466 = vpop.f32.mrf.mxu0
    %v467 = vadd.f32 0.0, %v466
    %468 = vmatmul.bf16.gmra.mxu0 %v229
    %v469 = vpop.f32.mrf.mxu0
    %v470 = vadd.f32 0.0, %v469
    %v471 = vpop.f32.mrf.mxu0
    %v472 = vadd.f32 0.0, %v471
    %473 = vmatmul.bf16.gmra.mxu0 %v232
    %v474 = vpop.f32.mrf.mxu0
    %v475 = vadd.f32 0.0, %v474
    %v476 = vpop.f32.mrf.mxu0
    %v477 = vadd.f32 0.0, %v476
    %478 = vmatmul.bf16.gmra.mxu0 %v235
    %v479 = vpop.f32.mrf.mxu0
    %v480 = vadd.f32 0.0, %v479
    %v481 = vpop.f32.mrf.mxu0
    %v482 = vadd.f32 0.0, %v481
    %483 = vmatmul.bf16.gmra.mxu0 %v238
    %v484 = vpop.f32.mrf.mxu0
    %v485 = vadd.f32 0.0, %v484
    %v486 = vpop.f32.mrf.mxu0
    %v487 = vadd.f32 0.0, %v486
    %488 = vmatmul.bf16.gmra.mxu0 %v241
    %v489 = vpop.f32.mrf.mxu0
    %v490 = vadd.f32 0.0, %v489
    %v491 = vpop.f32.mrf.mxu0
    %v492 = vadd.f32 0.0, %v491
    %493 = vmatmul.bf16.gmra.mxu0 %v244
    %v494 = vpop.f32.mrf.mxu0
    %v495 = vadd.f32 0.0, %v494
    %v496 = vpop.f32.mrf.mxu0
    %v497 = vadd.f32 0.0, %v496
    %498 = vmatmul.bf16.gmra.mxu0 %v247
    %v499 = vpop.f32.mrf.mxu0
    %v500 = vadd.f32 0.0, %v499
    %v501 = vpop.f32.mrf.mxu0
    %v502 = vadd.f32 0.0, %v501
    %503 = vmatmul.bf16.gmra.mxu0 %v250
    %v504 = vpop.f32.mrf.mxu0
    %v505 = vadd.f32 0.0, %v504
    %v506 = vpop.f32.mrf.mxu0
    %v507 = vadd.f32 0.0, %v506
    %508 = vmatmul.bf16.gmra.mxu0 %v253
    %v509 = vpop.f32.mrf.mxu0
    %v510 = vadd.f32 0.0, %v509
    %v511 = vpop.f32.mrf.mxu0
    %v512 = vadd.f32 0.0, %v511
    %513 = vmatmul.bf16.gmra.mxu0 %v256
    %v514 = vpop.f32.mrf.mxu0
    %v515 = vadd.f32 0.0, %v514
    %v516 = vpop.f32.mrf.mxu0
    %v517 = vadd.f32 0.0, %v516
    %518 = vmatmul.bf16.gmra.mxu0 %v259
    %v519 = vpop.f32.mrf.mxu0
    %v520 = vadd.f32 0.0, %v519
    %v521 = vpop.f32.mrf.mxu0
    %v522 = vadd.f32 0.0, %v521
    %523 = vmatmul.bf16.gmra.mxu0 %v262
    %v524 = vpop.f32.mrf.mxu0
    %v525 = vadd.f32 0.0, %v524
    %v526 = vpop.f32.mrf.mxu0
    %v527 = vadd.f32 0.0, %v526
    %528 = vmatmul.bf16.gmra.mxu0 %v265
    %v529 = vpop.f32.mrf.mxu0
    %v530 = vadd.f32 0.0, %v529
    %v531 = vpop.f32.mrf.mxu0
    %v532 = vadd.f32 0.0, %v531
    %533 = vdwg.mxu0
    %534 = vmatpush.bf16.msra.mxu0 0
    %535 = vmatpush.bf16.msra.mxu0 0
    %536 = vmatpush.bf16.msra.mxu0 0
    %537 = vmatpush.bf16.msra.mxu0 0
    %538 = vmatpush.bf16.msra.mxu0 0
    %539 = vmatpush.bf16.msra.mxu0 0
    %540 = vmatpush.bf16.msra.mxu0 %v197
    %541 = vmatpush.bf16.msra.mxu0 %v189
    %542 = vmatmul.bf16.gmra.mxu0 %v220
    %v543 = vpop.f32.mrf.mxu0
    %v544 = vadd.f32 0.0, %v543
    %v545 = vpop.f32.mrf.mxu0
    %v546 = vadd.f32 0.0, %v545
    %547 = vmatmul.bf16.gmra.mxu0 %v223
    %v548 = vpop.f32.mrf.mxu0
    %v549 = vadd.f32 0.0, %v548
    %v550 = vpop.f32.mrf.mxu0
    %v551 = vadd.f32 0.0, %v550
    %552 = vmatmul.bf16.gmra.mxu0 %v226
    %v553 = vpop.f32.mrf.mxu0
    %v554 = vadd.f32 0.0, %v553
    %v555 = vpop.f32.mrf.mxu0
    %v556 = vadd.f32 0.0, %v555
    %557 = vmatmul.bf16.gmra.mxu0 %v229
    %v558 = vpop.f32.mrf.mxu0
    %v559 = vadd.f32 0.0, %v558
    %v560 = vpop.f32.mrf.mxu0
    %v561 = vadd.f32 0.0, %v560
    %562 = vmatmul.bf16.gmra.mxu0 %v232
    %v563 = vpop.f32.mrf.mxu0
    %v564 = vadd.f32 0.0, %v563
    %v565 = vpop.f32.mrf.mxu0
    %v566 = vadd.f32 0.0, %v565
    %567 = vmatmul.bf16.gmra.mxu0 %v235
    %v568 = vpop.f32.mrf.mxu0
    %v569 = vadd.f32 0.0, %v568
    %v570 = vpop.f32.mrf.mxu0
    %v571 = vadd.f32 0.0, %v570
    %572 = vmatmul.bf16.gmra.mxu0 %v238
    %v573 = vpop.f32.mrf.mxu0
    %v574 = vadd.f32 0.0, %v573
    %v575 = vpop.f32.mrf.mxu0
    %v576 = vadd.f32 0.0, %v575
    %577 = vmatmul.bf16.gmra.mxu0 %v241
    %v578 = vpop.f32.mrf.mxu0
    %v579 = vadd.f32 0.0, %v578
    %v580 = vpop.f32.mrf.mxu0
    %v581 = vadd.f32 0.0, %v580
    %582 = vmatmul.bf16.gmra.mxu0 %v244
    %v583 = vpop.f32.mrf.mxu0
    %v584 = vadd.f32 0.0, %v583
    %v585 = vpop.f32.mrf.mxu0
    %v586 = vadd.f32 0.0, %v585
    %587 = vmatmul.bf16.gmra.mxu0 %v247
    %v588 = vpop.f32.mrf.mxu0
    %v589 = vadd.f32 0.0, %v588
    %v590 = vpop.f32.mrf.mxu0
    %v591 = vadd.f32 0.0, %v590
    %592 = vmatmul.bf16.gmra.mxu0 %v250
    %v593 = vpop.f32.mrf.mxu0
    %v594 = vadd.f32 0.0, %v593
    %v595 = vpop.f32.mrf.mxu0
    %v596 = vadd.f32 0.0, %v595
    %597 = vmatmul.bf16.gmra.mxu0 %v253
    %v598 = vpop.f32.mrf.mxu0
    %v599 = vadd.f32 0.0, %v598
    %v600 = vpop.f32.mrf.mxu0
    %v601 = vadd.f32 0.0, %v600
    %602 = vmatmul.bf16.gmra.mxu0 %v256
    %v603 = vpop.f32.mrf.mxu0
    %v604 = vadd.f32 0.0, %v603
    %v605 = vpop.f32.mrf.mxu0
    %v606 = vadd.f32 0.0, %v605
    %607 = vmatmul.bf16.gmra.mxu0 %v259
    %v608 = vpop.f32.mrf.mxu0
    %v609 = vadd.f32 0.0, %v608
    %v610 = vpop.f32.mrf.mxu0
    %v611 = vadd.f32 0.0, %v610
    %612 = vmatmul.bf16.gmra.mxu0 %v262
    %v613 = vpop.f32.mrf.mxu0
    %v614 = vadd.f32 0.0, %v613
    %v615 = vpop.f32.mrf.mxu0
    %v616 = vadd.f32 0.0, %v615
    %617 = vmatmul.bf16.gmra.mxu0 %v265
    %v618 = vpop.f32.mrf.mxu0
    %v619 = vadd.f32 0.0, %v618
    %v620 = vpop.f32.mrf.mxu0
    %v621 = vadd.f32 0.0, %v620
    %622 = vdwg.mxu0
    %623 = vmatpush.bf16.msra.mxu0 0
    %624 = vmatpush.bf16.msra.mxu0 0
    %625 = vmatpush.bf16.msra.mxu0 0
    %626 = vmatpush.bf16.msra.mxu0 0
    %627 = vmatpush.bf16.msra.mxu0 0
    %628 = vmatpush.bf16.msra.mxu0 0
    %629 = vmatpush.bf16.msra.mxu0 %v198
    %630 = vmatpush.bf16.msra.mxu0 %v190
    %631 = vmatmul.bf16.gmra.mxu0 %v220
    %v632 = vpop.f32.mrf.mxu0
    %v633 = vadd.f32 0.0, %v632
    %v634 = vpop.f32.mrf.mxu0
    %v635 = vadd.f32 0.0, %v634
    %636 = vmatmul.bf16.gmra.mxu0 %v223
    %v637 = vpop.f32.mrf.mxu0
    %v638 = vadd.f32 0.0, %v637
    %v639 = vpop.f32.mrf.mxu0
    %v640 = vadd.f32 0.0, %v639
    %641 = vmatmul.bf16.gmra.mxu0 %v226
    %v642 = vpop.f32.mrf.mxu0
    %v643 = vadd.f32 0.0, %v642
    %v644 = vpop.f32.mrf.mxu0
    %v645 = vadd.f32 0.0, %v644
    %646 = vmatmul.bf16.gmra.mxu0 %v229
    %v647 = vpop.f32.mrf.mxu0
    %v648 = vadd.f32 0.0, %v647
    %v649 = vpop.f32.mrf.mxu0
    %v650 = vadd.f32 0.0, %v649
    %651 = vmatmul.bf16.gmra.mxu0 %v232
    %v652 = vpop.f32.mrf.mxu0
    %v653 = vadd.f32 0.0, %v652
    %v654 = vpop.f32.mrf.mxu0
    %v655 = vadd.f32 0.0, %v654
    %656 = vmatmul.bf16.gmra.mxu0 %v235
    %v657 = vpop.f32.mrf.mxu0
    %v658 = vadd.f32 0.0, %v657
    %v659 = vpop.f32.mrf.mxu0
    %v660 = vadd.f32 0.0, %v659
    %661 = vmatmul.bf16.gmra.mxu0 %v238
    %v662 = vpop.f32.mrf.mxu0
    %v663 = vadd.f32 0.0, %v662
    %v664 = vpop.f32.mrf.mxu0
    %v665 = vadd.f32 0.0, %v664
    %666 = vmatmul.bf16.gmra.mxu0 %v241
    %v667 = vpop.f32.mrf.mxu0
    %v668 = vadd.f32 0.0, %v667
    %v669 = vpop.f32.mrf.mxu0
    %v670 = vadd.f32 0.0, %v669
    %671 = vmatmul.bf16.gmra.mxu0 %v244
    %v672 = vpop.f32.mrf.mxu0
    %v673 = vadd.f32 0.0, %v672
    %v674 = vpop.f32.mrf.mxu0
    %v675 = vadd.f32 0.0, %v674
    %676 = vmatmul.bf16.gmra.mxu0 %v247
    %v677 = vpop.f32.mrf.mxu0
    %v678 = vadd.f32 0.0, %v677
    %v679 = vpop.f32.mrf.mxu0
    %v680 = vadd.f32 0.0, %v679
    %681 = vmatmul.bf16.gmra.mxu0 %v250
    %v682 = vpop.f32.mrf.mxu0
    %v683 = vadd.f32 0.0, %v682
    %v684 = vpop.f32.mrf.mxu0
    %v685 = vadd.f32 0.0, %v684
    %686 = vmatmul.bf16.gmra.mxu0 %v253
    %v687 = vpop.f32.mrf.mxu0
    %v688 = vadd.f32 0.0, %v687
    %v689 = vpop.f32.mrf.mxu0
    %v690 = vadd.f32 0.0, %v689
    %691 = vmatmul.bf16.gmra.mxu0 %v256
    %v692 = vpop.f32.mrf.mxu0
    %v693 = vadd.f32 0.0, %v692
    %v694 = vpop.f32.mrf.mxu0
    %v695 = vadd.f32 0.0, %v694
    %696 = vmatmul.bf16.gmra.mxu0 %v259
    %v697 = vpop.f32.mrf.mxu0
    %v698 = vadd.f32 0.0, %v697
    %v699 = vpop.f32.mrf.mxu0
    %v700 = vadd.f32 0.0, %v699
    %701 = vmatmul.bf16.gmra.mxu0 %v262
    %v702 = vpop.f32.mrf.mxu0
    %v703 = vadd.f32 0.0, %v702
    %v704 = vpop.f32.mrf.mxu0
    %v705 = vadd.f32 0.0, %v704
    %706 = vmatmul.bf16.gmra.mxu0 %v265
    %v707 = vpop.f32.mrf.mxu0
    %v708 = vadd.f32 0.0, %v707
    %v709 = vpop.f32.mrf.mxu0
    %v710 = vadd.f32 0.0, %v709
    %711 = vdwg.mxu0
    %712 = vmatpush.bf16.msra.mxu0 0
    %713 = vmatpush.bf16.msra.mxu0 0
    %714 = vmatpush.bf16.msra.mxu0 0
    %715 = vmatpush.bf16.msra.mxu0 0
    %716 = vmatpush.bf16.msra.mxu0 0
    %717 = vmatpush.bf16.msra.mxu0 0
    %718 = vmatpush.bf16.msra.mxu0 %v199
    %719 = vmatpush.bf16.msra.mxu0 %v191
    %720 = vmatmul.bf16.gmra.mxu0 %v220
    %v721 = vpop.f32.mrf.mxu0
    %v722 = vadd.f32 0.0, %v721
    %v723 = vpop.f32.mrf.mxu0
    %v724 = vadd.f32 0.0, %v723
    %725 = vmatmul.bf16.gmra.mxu0 %v223
    %v726 = vpop.f32.mrf.mxu0
    %v727 = vadd.f32 0.0, %v726
    %v728 = vpop.f32.mrf.mxu0
    %v729 = vadd.f32 0.0, %v728
    %730 = vmatmul.bf16.gmra.mxu0 %v226
    %v731 = vpop.f32.mrf.mxu0
    %v732 = vadd.f32 0.0, %v731
    %v733 = vpop.f32.mrf.mxu0
    %v734 = vadd.f32 0.0, %v733
    %735 = vmatmul.bf16.gmra.mxu0 %v229
    %v736 = vpop.f32.mrf.mxu0
    %v737 = vadd.f32 0.0, %v736
    %v738 = vpop.f32.mrf.mxu0
    %v739 = vadd.f32 0.0, %v738
    %740 = vmatmul.bf16.gmra.mxu0 %v232
    %v741 = vpop.f32.mrf.mxu0
    %v742 = vadd.f32 0.0, %v741
    %v743 = vpop.f32.mrf.mxu0
    %v744 = vadd.f32 0.0, %v743
    %745 = vmatmul.bf16.gmra.mxu0 %v235
    %v746 = vpop.f32.mrf.mxu0
    %v747 = vadd.f32 0.0, %v746
    %v748 = vpop.f32.mrf.mxu0
    %v749 = vadd.f32 0.0, %v748
    %750 = vmatmul.bf16.gmra.mxu0 %v238
    %v751 = vpop.f32.mrf.mxu0
    %v752 = vadd.f32 0.0, %v751
    %v753 = vpop.f32.mrf.mxu0
    %v754 = vadd.f32 0.0, %v753
    %755 = vmatmul.bf16.gmra.mxu0 %v241
    %v756 = vpop.f32.mrf.mxu0
    %v757 = vadd.f32 0.0, %v756
    %v758 = vpop.f32.mrf.mxu0
    %v759 = vadd.f32 0.0, %v758
    %760 = vmatmul.bf16.gmra.mxu0 %v244
    %v761 = vpop.f32.mrf.mxu0
    %v762 = vadd.f32 0.0, %v761
    %v763 = vpop.f32.mrf.mxu0
    %v764 = vadd.f32 0.0, %v763
    %765 = vmatmul.bf16.gmra.mxu0 %v247
    %v766 = vpop.f32.mrf.mxu0
    %v767 = vadd.f32 0.0, %v766
    %v768 = vpop.f32.mrf.mxu0
    %v769 = vadd.f32 0.0, %v768
    %770 = vmatmul.bf16.gmra.mxu0 %v250
    %v771 = vpop.f32.mrf.mxu0
    %v772 = vadd.f32 0.0, %v771
    %v773 = vpop.f32.mrf.mxu0
    %v774 = vadd.f32 0.0, %v773
    %775 = vmatmul.bf16.gmra.mxu0 %v253
    %v776 = vpop.f32.mrf.mxu0
    %v777 = vadd.f32 0.0, %v776
    %v778 = vpop.f32.mrf.mxu0
    %v779 = vadd.f32 0.0, %v778
    %780 = vmatmul.bf16.gmra.mxu0 %v256
    %v781 = vpop.f32.mrf.mxu0
    %v782 = vadd.f32 0.0, %v781
    %v783 = vpop.f32.mrf.mxu0
    %v784 = vadd.f32 0.0, %v783
    %785 = vmatmul.bf16.gmra.mxu0 %v259
    %v786 = vpop.f32.mrf.mxu0
    %v787 = vadd.f32 0.0, %v786
    %v788 = vpop.f32.mrf.mxu0
    %v789 = vadd.f32 0.0, %v788
    %790 = vmatmul.bf16.gmra.mxu0 %v262
    %v791 = vpop.f32.mrf.mxu0
    %v792 = vadd.f32 0.0, %v791
    %v793 = vpop.f32.mrf.mxu0
    %v794 = vadd.f32 0.0, %v793
    %795 = vmatmul.bf16.gmra.mxu0 %v265
    %v796 = vpop.f32.mrf.mxu0
    %v797 = vadd.f32 0.0, %v796
    %v798 = vpop.f32.mrf.mxu0
    %v799 = vadd.f32 0.0, %v798
    %800 = vdwg.mxu0
    %801 = vmatpush.bf16.msra.mxu0 0
    %802 = vmatpush.bf16.msra.mxu0 0
    %803 = vmatpush.bf16.msra.mxu0 0
    %804 = vmatpush.bf16.msra.mxu0 0
    %805 = vmatpush.bf16.msra.mxu0 0
    %806 = vmatpush.bf16.msra.mxu0 0
    %807 = vmatpush.bf16.msra.mxu0 %v200
    %808 = vmatpush.bf16.msra.mxu0 %v192
    %809 = vmatmul.bf16.gmra.mxu0 %v220
    %v810 = vpop.f32.mrf.mxu0
    %v811 = vadd.f32 0.0, %v810
    %v812 = vpop.f32.mrf.mxu0
    %v813 = vadd.f32 0.0, %v812
    %814 = vmatmul.bf16.gmra.mxu0 %v223
    %v815 = vpop.f32.mrf.mxu0
    %v816 = vadd.f32 0.0, %v815
    %v817 = vpop.f32.mrf.mxu0
    %v818 = vadd.f32 0.0, %v817
    %819 = vmatmul.bf16.gmra.mxu0 %v226
    %v820 = vpop.f32.mrf.mxu0
    %v821 = vadd.f32 0.0, %v820
    %v822 = vpop.f32.mrf.mxu0
    %v823 = vadd.f32 0.0, %v822
    %824 = vmatmul.bf16.gmra.mxu0 %v229
    %v825 = vpop.f32.mrf.mxu0
    %v826 = vadd.f32 0.0, %v825
    %v827 = vpop.f32.mrf.mxu0
    %v828 = vadd.f32 0.0, %v827
    %829 = vmatmul.bf16.gmra.mxu0 %v232
    %v830 = vpop.f32.mrf.mxu0
    %v831 = vadd.f32 0.0, %v830
    %v832 = vpop.f32.mrf.mxu0
    %v833 = vadd.f32 0.0, %v832
    %834 = vmatmul.bf16.gmra.mxu0 %v235
    %v835 = vpop.f32.mrf.mxu0
    %v836 = vadd.f32 0.0, %v835
    %v837 = vpop.f32.mrf.mxu0
    %v838 = vadd.f32 0.0, %v837
    %839 = vmatmul.bf16.gmra.mxu0 %v238
    %v840 = vpop.f32.mrf.mxu0
    %v841 = vadd.f32 0.0, %v840
    %v842 = vpop.f32.mrf.mxu0
    %v843 = vadd.f32 0.0, %v842
    %844 = vmatmul.bf16.gmra.mxu0 %v241
    %v845 = vpop.f32.mrf.mxu0
    %v846 = vadd.f32 0.0, %v845
    %v847 = vpop.f32.mrf.mxu0
    %v848 = vadd.f32 0.0, %v847
    %849 = vmatmul.bf16.gmra.mxu0 %v244
    %v850 = vpop.f32.mrf.mxu0
    %v851 = vadd.f32 0.0, %v850
    %v852 = vpop.f32.mrf.mxu0
    %v853 = vadd.f32 0.0, %v852
    %854 = vmatmul.bf16.gmra.mxu0 %v247
    %v855 = vpop.f32.mrf.mxu0
    %v856 = vadd.f32 0.0, %v855
    %v857 = vpop.f32.mrf.mxu0
    %v858 = vadd.f32 0.0, %v857
    %859 = vmatmul.bf16.gmra.mxu0 %v250
    %v860 = vpop.f32.mrf.mxu0
    %v861 = vadd.f32 0.0, %v860
    %v862 = vpop.f32.mrf.mxu0
    %v863 = vadd.f32 0.0, %v862
    %864 = vmatmul.bf16.gmra.mxu0 %v253
    %v865 = vpop.f32.mrf.mxu0
    %v866 = vadd.f32 0.0, %v865
    %v867 = vpop.f32.mrf.mxu0
    %v868 = vadd.f32 0.0, %v867
    %869 = vmatmul.bf16.gmra.mxu0 %v256
    %v870 = vpop.f32.mrf.mxu0
    %v871 = vadd.f32 0.0, %v870
    %v872 = vpop.f32.mrf.mxu0
    %v873 = vadd.f32 0.0, %v872
    %874 = vmatmul.bf16.gmra.mxu0 %v259
    %v875 = vpop.f32.mrf.mxu0
    %v876 = vadd.f32 0.0, %v875
    %v877 = vpop.f32.mrf.mxu0
    %v878 = vadd.f32 0.0, %v877
    %879 = vmatmul.bf16.gmra.mxu0 %v262
    %v880 = vpop.f32.mrf.mxu0
    %v881 = vadd.f32 0.0, %v880
    %v882 = vpop.f32.mrf.mxu0
    %v883 = vadd.f32 0.0, %v882
    %884 = vmatmul.bf16.gmra.mxu0 %v265
    %v885 = vpop.f32.mrf.mxu0
    %v886 = vadd.f32 0.0, %v885
    %v887 = vpop.f32.mrf.mxu0
    %v888 = vadd.f32 0.0, %v887
    %889 = vdwg.mxu0
    %890 = vmatpush.bf16.msra.mxu0 0
    %891 = vmatpush.bf16.msra.mxu0 0
    %892 = vmatpush.bf16.msra.mxu0 0
    %893 = vmatpush.bf16.msra.mxu0 0
    %894 = vmatpush.bf16.msra.mxu0 0
    %895 = vmatpush.bf16.msra.mxu0 0
    %896 = vmatpush.bf16.msra.mxu0 %v201
    %897 = vmatpush.bf16.msra.mxu0 %v193
    %898 = vmatmul.bf16.gmra.mxu0 %v220
    %v899 = vpop.f32.mrf.mxu0
    %v900 = vadd.f32 0.0, %v899
    %v901 = vpop.f32.mrf.mxu0
    %v902 = vadd.f32 0.0, %v901
    %903 = vmatmul.bf16.gmra.mxu0 %v223
    %v904 = vpop.f32.mrf.mxu0
    %v905 = vadd.f32 0.0, %v904
    %v906 = vpop.f32.mrf.mxu0
    %v907 = vadd.f32 0.0, %v906
    %908 = vmatmul.bf16.gmra.mxu0 %v226
    %v909 = vpop.f32.mrf.mxu0
    %v910 = vadd.f32 0.0, %v909
    %v911 = vpop.f32.mrf.mxu0
    %v912 = vadd.f32 0.0, %v911
    %913 = vmatmul.bf16.gmra.mxu0 %v229
    %v914 = vpop.f32.mrf.mxu0
    %v915 = vadd.f32 0.0, %v914
    %v916 = vpop.f32.mrf.mxu0
    %v917 = vadd.f32 0.0, %v916
    %918 = vmatmul.bf16.gmra.mxu0 %v232
    %v919 = vpop.f32.mrf.mxu0
    %v920 = vadd.f32 0.0, %v919
    %v921 = vpop.f32.mrf.mxu0
    %v922 = vadd.f32 0.0, %v921
    %923 = vmatmul.bf16.gmra.mxu0 %v235
    %v924 = vpop.f32.mrf.mxu0
    %v925 = vadd.f32 0.0, %v924
    %v926 = vpop.f32.mrf.mxu0
    %v927 = vadd.f32 0.0, %v926
    %928 = vmatmul.bf16.gmra.mxu0 %v238
    %v929 = vpop.f32.mrf.mxu0
    %v930 = vadd.f32 0.0, %v929
    %v931 = vpop.f32.mrf.mxu0
    %v932 = vadd.f32 0.0, %v931
    %933 = vmatmul.bf16.gmra.mxu0 %v241
    %v934 = vpop.f32.mrf.mxu0
    %v935 = vadd.f32 0.0, %v934
    %v936 = vpop.f32.mrf.mxu0
    %v937 = vadd.f32 0.0, %v936
    %938 = vmatmul.bf16.gmra.mxu0 %v244
    %v939 = vpop.f32.mrf.mxu0
    %v940 = vadd.f32 0.0, %v939
    %v941 = vpop.f32.mrf.mxu0
    %v942 = vadd.f32 0.0, %v941
    %943 = vmatmul.bf16.gmra.mxu0 %v247
    %v944 = vpop.f32.mrf.mxu0
    %v945 = vadd.f32 0.0, %v944
    %v946 = vpop.f32.mrf.mxu0
    %v947 = vadd.f32 0.0, %v946
    %948 = vmatmul.bf16.gmra.mxu0 %v250
    %v949 = vpop.f32.mrf.mxu0
    %v950 = vadd.f32 0.0, %v949
    %v951 = vpop.f32.mrf.mxu0
    %v952 = vadd.f32 0.0, %v951
    %953 = vmatmul.bf16.gmra.mxu0 %v253
    %v954 = vpop.f32.mrf.mxu0
    %v955 = vadd.f32 0.0, %v954
    %v956 = vpop.f32.mrf.mxu0
    %v957 = vadd.f32 0.0, %v956
    %958 = vmatmul.bf16.gmra.mxu0 %v256
    %v959 = vpop.f32.mrf.mxu0
    %v960 = vadd.f32 0.0, %v959
    %v961 = vpop.f32.mrf.mxu0
    %v962 = vadd.f32 0.0, %v961
    %963 = vmatmul.bf16.gmra.mxu0 %v259
    %v964 = vpop.f32.mrf.mxu0
    %v965 = vadd.f32 0.0, %v964
    %v966 = vpop.f32.mrf.mxu0
    %v967 = vadd.f32 0.0, %v966
    %968 = vmatmul.bf16.gmra.mxu0 %v262
    %v969 = vpop.f32.mrf.mxu0
    %v970 = vadd.f32 0.0, %v969
    %v971 = vpop.f32.mrf.mxu0
    %v972 = vadd.f32 0.0, %v971
    %973 = vmatmul.bf16.gmra.mxu0 %v265
    %v974 = vpop.f32.mrf.mxu0
    %v975 = vadd.f32 0.0, %v974
    %v976 = vpop.f32.mrf.mxu0
    %v977 = vadd.f32 0.0, %v976
    %978 = vdwg.mxu0
    %v979 = vadd.f32 %v277, %v279
    %v980 = vadd.f32 %v979, %v282
    %v981 = vadd.f32 %v980, %v284
    %v982 = vadd.f32 %v981, %v287
    %v983 = vadd.f32 %v982, %v289
    %v984 = vadd.f32 %v983, %v292
    %v985 = vadd.f32 %v984, %v294
    %v986 = vadd.f32 %v985, %v297
    %v987 = vadd.f32 %v986, %v299
    %v988 = vadd.f32 %v987, %v302
    %v989 = vadd.f32 %v988, %v304
    %v990 = vadd.f32 %v989, %v307
    %v991 = vadd.f32 %v990, %v309
    %v992 = vadd.f32 %v991, %v312
    %v993 = vadd.f32 %v992, %v314
    %v994 = vadd.f32 %v993, %v317
    %v995 = vadd.f32 %v994, %v319
    %v996 = vadd.f32 %v995, %v322
    %v997 = vadd.f32 %v996, %v324
    %v998 = vadd.f32 %v997, %v327
    %v999 = vadd.f32 %v998, %v329
    %v1000 = vadd.f32 %v999, %v332
    %v1001 = vadd.f32 %v1000, %v334
    %v1002 = vadd.f32 %v1001, %v337
    %v1003 = vadd.f32 %v1002, %v339
    %v1004 = vadd.f32 %v1003, %v342
    %v1005 = vadd.f32 %v1004, %v344
    %v1006 = vadd.f32 %v1005, %v347
    %v1007 = vadd.f32 %v1006, %v349
    %v1008 = vadd.f32 %v1007, %v352
    %v1009 = vadd.f32 %v1008, %v354
    %v1010 = vrot.slane %v1009, 4
    %v1011 = vadd.f32 %v1009, %v1010
    %v1012 = vrot.slane %v1011, 2
    %v1013 = vadd.f32 %v1011, %v1012
    %v1014 = vrot.slane %v1013, 1
    %v1015 = vadd.f32 %v1013, %v1014
    %v1016 = vadd.f32 %v366, %v368
    %v1017 = vadd.f32 %v1016, %v371
    %v1018 = vadd.f32 %v1017, %v373
    %v1019 = vadd.f32 %v1018, %v376
    %v1020 = vadd.f32 %v1019, %v378
    %v1021 = vadd.f32 %v1020, %v381
    %v1022 = vadd.f32 %v1021, %v383
    %v1023 = vadd.f32 %v1022, %v386
    %v1024 = vadd.f32 %v1023, %v388
    %v1025 = vadd.f32 %v1024, %v391
    %v1026 = vadd.f32 %v1025, %v393
    %v1027 = vadd.f32 %v1026, %v396
    %v1028 = vadd.f32 %v1027, %v398
    %v1029 = vadd.f32 %v1028, %v401
    %v1030 = vadd.f32 %v1029, %v403
    %v1031 = vadd.f32 %v1030, %v406
    %v1032 = vadd.f32 %v1031, %v408
    %v1033 = vadd.f32 %v1032, %v411
    %v1034 = vadd.f32 %v1033, %v413
    %v1035 = vadd.f32 %v1034, %v416
    %v1036 = vadd.f32 %v1035, %v418
    %v1037 = vadd.f32 %v1036, %v421
    %v1038 = vadd.f32 %v1037, %v423
    %v1039 = vadd.f32 %v1038, %v426
    %v1040 = vadd.f32 %v1039, %v428
    %v1041 = vadd.f32 %v1040, %v431
    %v1042 = vadd.f32 %v1041, %v433
    %v1043 = vadd.f32 %v1042, %v436
    %v1044 = vadd.f32 %v1043, %v438
    %v1045 = vadd.f32 %v1044, %v441
    %v1046 = vadd.f32 %v1045, %v443
    %v1047 = vrot.slane %v1046, 4
    %v1048 = vadd.f32 %v1046, %v1047
    %v1049 = vrot.slane %v1048, 2
    %v1050 = vadd.f32 %v1048, %v1049
    %v1051 = vrot.slane %v1050, 1
    %v1052 = vadd.f32 %v1050, %v1051
    %v1053 = vadd.f32 %v455, %v457
    %v1054 = vadd.f32 %v1053, %v460
    %v1055 = vadd.f32 %v1054, %v462
    %v1056 = vadd.f32 %v1055, %v465
    %v1057 = vadd.f32 %v1056, %v467
    %v1058 = vadd.f32 %v1057, %v470
    %v1059 = vadd.f32 %v1058, %v472
    %v1060 = vadd.f32 %v1059, %v475
    %v1061 = vadd.f32 %v1060, %v477
    %v1062 = vadd.f32 %v1061, %v480
    %v1063 = vadd.f32 %v1062, %v482
    %v1064 = vadd.f32 %v1063, %v485
    %v1065 = vadd.f32 %v1064, %v487
    %v1066 = vadd.f32 %v1065, %v490
    %v1067 = vadd.f32 %v1066, %v492
    %v1068 = vadd.f32 %v1067, %v495
    %v1069 = vadd.f32 %v1068, %v497
    %v1070 = vadd.f32 %v1069, %v500
    %v1071 = vadd.f32 %v1070, %v502
    %v1072 = vadd.f32 %v1071, %v505
    %v1073 = vadd.f32 %v1072, %v507
    %v1074 = vadd.f32 %v1073, %v510
    %v1075 = vadd.f32 %v1074, %v512
    %v1076 = vadd.f32 %v1075, %v515
    %v1077 = vadd.f32 %v1076, %v517
    %v1078 = vadd.f32 %v1077, %v520
    %v1079 = vadd.f32 %v1078, %v522
    %v1080 = vadd.f32 %v1079, %v525
    %v1081 = vadd.f32 %v1080, %v527
    %v1082 = vadd.f32 %v1081, %v530
    %v1083 = vadd.f32 %v1082, %v532
    %v1084 = vrot.slane %v1083, 4
    %v1085 = vadd.f32 %v1083, %v1084
    %v1086 = vrot.slane %v1085, 2
    %v1087 = vadd.f32 %v1085, %v1086
    %v1088 = vrot.slane %v1087, 1
    %v1089 = vadd.f32 %v1087, %v1088
    %v1090 = vadd.f32 %v544, %v546
    %v1091 = vadd.f32 %v1090, %v549
    %v1092 = vadd.f32 %v1091, %v551
    %v1093 = vadd.f32 %v1092, %v554
    %v1094 = vadd.f32 %v1093, %v556
    %v1095 = vadd.f32 %v1094, %v559
    %v1096 = vadd.f32 %v1095, %v561
    %v1097 = vadd.f32 %v1096, %v564
    %v1098 = vadd.f32 %v1097, %v566
    %v1099 = vadd.f32 %v1098, %v569
    %v1100 = vadd.f32 %v1099, %v571
    %v1101 = vadd.f32 %v1100, %v574
    %v1102 = vadd.f32 %v1101, %v576
    %v1103 = vadd.f32 %v1102, %v579
    %v1104 = vadd.f32 %v1103, %v581
    %v1105 = vadd.f32 %v1104, %v584
    %v1106 = vadd.f32 %v1105, %v586
    %v1107 = vadd.f32 %v1106, %v589
    %v1108 = vadd.f32 %v1107, %v591
    %v1109 = vadd.f32 %v1108, %v594
    %v1110 = vadd.f32 %v1109, %v596
    %v1111 = vadd.f32 %v1110, %v599
    %v1112 = vadd.f32 %v1111, %v601
    %v1113 = vadd.f32 %v1112, %v604
    %v1114 = vadd.f32 %v1113, %v606
    %v1115 = vadd.f32 %v1114, %v609
    %v1116 = vadd.f32 %v1115, %v611
    %v1117 = vadd.f32 %v1116, %v614
    %v1118 = vadd.f32 %v1117, %v616
    %v1119 = vadd.f32 %v1118, %v619
    %v1120 = vadd.f32 %v1119, %v621
    %v1121 = vrot.slane %v1120, 4
    %v1122 = vadd.f32 %v1120, %v1121
    %v1123 = vrot.slane %v1122, 2
    %v1124 = vadd.f32 %v1122, %v1123
    %v1125 = vrot.slane %v1124, 1
    %v1126 = vadd.f32 %v1124, %v1125
    %v1127 = vadd.f32 %v633, %v635
    %v1128 = vadd.f32 %v1127, %v638
    %v1129 = vadd.f32 %v1128, %v640
    %v1130 = vadd.f32 %v1129, %v643
    %v1131 = vadd.f32 %v1130, %v645
    %v1132 = vadd.f32 %v1131, %v648
    %v1133 = vadd.f32 %v1132, %v650
    %v1134 = vadd.f32 %v1133, %v653
    %v1135 = vadd.f32 %v1134, %v655
    %v1136 = vadd.f32 %v1135, %v658
    %v1137 = vadd.f32 %v1136, %v660
    %v1138 = vadd.f32 %v1137, %v663
    %v1139 = vadd.f32 %v1138, %v665
    %v1140 = vadd.f32 %v1139, %v668
    %v1141 = vadd.f32 %v1140, %v670
    %v1142 = vadd.f32 %v1141, %v673
    %v1143 = vadd.f32 %v1142, %v675
    %v1144 = vadd.f32 %v1143, %v678
    %v1145 = vadd.f32 %v1144, %v680
    %v1146 = vadd.f32 %v1145, %v683
    %v1147 = vadd.f32 %v1146, %v685
    %v1148 = vadd.f32 %v1147, %v688
    %v1149 = vadd.f32 %v1148, %v690
    %v1150 = vadd.f32 %v1149, %v693
    %v1151 = vadd.f32 %v1150, %v695
    %v1152 = vadd.f32 %v1151, %v698
    %v1153 = vadd.f32 %v1152, %v700
    %v1154 = vadd.f32 %v1153, %v703
    %v1155 = vadd.f32 %v1154, %v705
    %v1156 = vadd.f32 %v1155, %v708
    %v1157 = vadd.f32 %v1156, %v710
    %v1158 = vrot.slane %v1157, 4
    %v1159 = vadd.f32 %v1157, %v1158
    %v1160 = vrot.slane %v1159, 2
    %v1161 = vadd.f32 %v1159, %v1160
    %v1162 = vrot.slane %v1161, 1
    %v1163 = vadd.f32 %v1161, %v1162
    %v1164 = vadd.f32 %v722, %v724
    %v1165 = vadd.f32 %v1164, %v727
    %v1166 = vadd.f32 %v1165, %v729
    %v1167 = vadd.f32 %v1166, %v732
    %v1168 = vadd.f32 %v1167, %v734
    %v1169 = vadd.f32 %v1168, %v737
    %v1170 = vadd.f32 %v1169, %v739
    %v1171 = vadd.f32 %v1170, %v742
    %v1172 = vadd.f32 %v1171, %v744
    %v1173 = vadd.f32 %v1172, %v747
    %v1174 = vadd.f32 %v1173, %v749
    %v1175 = vadd.f32 %v1174, %v752
    %v1176 = vadd.f32 %v1175, %v754
    %v1177 = vadd.f32 %v1176, %v757
    %v1178 = vadd.f32 %v1177, %v759
    %v1179 = vadd.f32 %v1178, %v762
    %v1180 = vadd.f32 %v1179, %v764
    %v1181 = vadd.f32 %v1180, %v767
    %v1182 = vadd.f32 %v1181, %v769
    %v1183 = vadd.f32 %v1182, %v772
    %v1184 = vadd.f32 %v1183, %v774
    %v1185 = vadd.f32 %v1184, %v777
    %v1186 = vadd.f32 %v1185, %v779
    %v1187 = vadd.f32 %v1186, %v782
    %v1188 = vadd.f32 %v1187, %v784
    %v1189 = vadd.f32 %v1188, %v787
    %v1190 = vadd.f32 %v1189, %v789
    %v1191 = vadd.f32 %v1190, %v792
    %v1192 = vadd.f32 %v1191, %v794
    %v1193 = vadd.f32 %v1192, %v797
    %v1194 = vadd.f32 %v1193, %v799
    %v1195 = vrot.slane %v1194, 4
    %v1196 = vadd.f32 %v1194, %v1195
    %v1197 = vrot.slane %v1196, 2
    %v1198 = vadd.f32 %v1196, %v1197
    %v1199 = vrot.slane %v1198, 1
    %v1200 = vadd.f32 %v1198, %v1199
    %v1201 = vadd.f32 %v811, %v813
    %v1202 = vadd.f32 %v1201, %v816
    %v1203 = vadd.f32 %v1202, %v818
    %v1204 = vadd.f32 %v1203, %v821
    %v1205 = vadd.f32 %v1204, %v823
    %v1206 = vadd.f32 %v1205, %v826
    %v1207 = vadd.f32 %v1206, %v828
    %v1208 = vadd.f32 %v1207, %v831
    %v1209 = vadd.f32 %v1208, %v833
    %v1210 = vadd.f32 %v1209, %v836
    %v1211 = vadd.f32 %v1210, %v838
    %v1212 = vadd.f32 %v1211, %v841
    %v1213 = vadd.f32 %v1212, %v843
    %v1214 = vadd.f32 %v1213, %v846
    %v1215 = vadd.f32 %v1214, %v848
    %v1216 = vadd.f32 %v1215, %v851
    %v1217 = vadd.f32 %v1216, %v853
    %v1218 = vadd.f32 %v1217, %v856
    %v1219 = vadd.f32 %v1218, %v858
    %v1220 = vadd.f32 %v1219, %v861
    %v1221 = vadd.f32 %v1220, %v863
    %v1222 = vadd.f32 %v1221, %v866
    %v1223 = vadd.f32 %v1222, %v868
    %v1224 = vadd.f32 %v1223, %v871
    %v1225 = vadd.f32 %v1224, %v873
    %v1226 = vadd.f32 %v1225, %v876
    %v1227 = vadd.f32 %v1226, %v878
    %v1228 = vadd.f32 %v1227, %v881
    %v1229 = vadd.f32 %v1228, %v883
    %v1230 = vadd.f32 %v1229, %v886
    %v1231 = vadd.f32 %v1230, %v888
    %v1232 = vrot.slane %v1231, 4
    %v1233 = vadd.f32 %v1231, %v1232
    %v1234 = vrot.slane %v1233, 2
    %v1235 = vadd.f32 %v1233, %v1234
    %v1236 = vrot.slane %v1235, 1
    %v1237 = vadd.f32 %v1235, %v1236
    %v1238 = vadd.f32 %v900, %v902
    %v1239 = vadd.f32 %v1238, %v905
    %v1240 = vadd.f32 %v1239, %v907
    %v1241 = vadd.f32 %v1240, %v910
    %v1242 = vadd.f32 %v1241, %v912
    %v1243 = vadd.f32 %v1242, %v915
    %v1244 = vadd.f32 %v1243, %v917
    %v1245 = vadd.f32 %v1244, %v920
    %v1246 = vadd.f32 %v1245, %v922
    %v1247 = vadd.f32 %v1246, %v925
    %v1248 = vadd.f32 %v1247, %v927
    %v1249 = vadd.f32 %v1248, %v930
    %v1250 = vadd.f32 %v1249, %v932
    %v1251 = vadd.f32 %v1250, %v935
    %v1252 = vadd.f32 %v1251, %v937
    %v1253 = vadd.f32 %v1252, %v940
    %v1254 = vadd.f32 %v1253, %v942
    %v1255 = vadd.f32 %v1254, %v945
    %v1256 = vadd.f32 %v1255, %v947
    %v1257 = vadd.f32 %v1256, %v950
    %v1258 = vadd.f32 %v1257, %v952
    %v1259 = vadd.f32 %v1258, %v955
    %v1260 = vadd.f32 %v1259, %v957
    %v1261 = vadd.f32 %v1260, %v960
    %v1262 = vadd.f32 %v1261, %v962
    %v1263 = vadd.f32 %v1262, %v965
    %v1264 = vadd.f32 %v1263, %v967
    %v1265 = vadd.f32 %v1264, %v970
    %v1266 = vadd.f32 %v1265, %v972
    %v1267 = vadd.f32 %v1266, %v975
    %v1268 = vadd.f32 %v1267, %v977
    %v1269 = vrot.slane %v1268, 4
    %v1270 = vadd.f32 %v1268, %v1269
    %v1271 = vrot.slane %v1270, 2
    %v1272 = vadd.f32 %v1270, %v1271
    %v1273 = vrot.slane %v1272, 1
    %v1274 = vadd.f32 %v1272, %v1273
    %v1275 = vmul.f32 %v1015, 0.00390625
    %v1276 = vmul.f32 %v1052, 0.00390625
    %v1277 = vmul.f32 %v1089, 0.00390625
    %v1278 = vmul.f32 %v1126, 0.00390625
    %v1279 = vmul.f32 %v1163, 0.00390625
    %v1280 = vmul.f32 %v1200, 0.00390625
    %v1281 = vmul.f32 %v1237, 0.00390625
    %v1282 = vmul.f32 %v1274, 0.00390625
    %v1283 = vmul.f32 %v277, %v277
    %v1284 = vmul.f32 %v366, %v366
    %v1285 = vmul.f32 %v455, %v455
    %v1286 = vmul.f32 %v544, %v544
    %v1287 = vmul.f32 %v633, %v633
    %v1288 = vmul.f32 %v722, %v722
    %v1289 = vmul.f32 %v811, %v811
    %v1290 = vmul.f32 %v900, %v900
    %v1291 = vmul.f32 %v279, %v279
    %v1292 = vmul.f32 %v368, %v368
    %v1293 = vmul.f32 %v457, %v457
    %v1294 = vmul.f32 %v546, %v546
    %v1295 = vmul.f32 %v635, %v635
    %v1296 = vmul.f32 %v724, %v724
    %v1297 = vmul.f32 %v813, %v813
    %v1298 = vmul.f32 %v902, %v902
    %v1299 = vmul.f32 %v282, %v282
    %v1300 = vmul.f32 %v371, %v371
    %v1301 = vmul.f32 %v460, %v460
    %v1302 = vmul.f32 %v549, %v549
    %v1303 = vmul.f32 %v638, %v638
    %v1304 = vmul.f32 %v727, %v727
    %v1305 = vmul.f32 %v816, %v816
    %v1306 = vmul.f32 %v905, %v905
    %v1307 = vmul.f32 %v284, %v284
    %v1308 = vmul.f32 %v373, %v373
    %v1309 = vmul.f32 %v462, %v462
    %v1310 = vmul.f32 %v551, %v551
    %v1311 = vmul.f32 %v640, %v640
    %v1312 = vmul.f32 %v729, %v729
    %v1313 = vmul.f32 %v818, %v818
    %v1314 = vmul.f32 %v907, %v907
    %v1315 = vmul.f32 %v287, %v287
    %v1316 = vmul.f32 %v376, %v376
    %v1317 = vmul.f32 %v465, %v465
    %v1318 = vmul.f32 %v554, %v554
    %v1319 = vmul.f32 %v643, %v643
    %v1320 = vmul.f32 %v732, %v732
    %v1321 = vmul.f32 %v821, %v821
    %v1322 = vmul.f32 %v910, %v910
    %v1323 = vmul.f32 %v289, %v289
    %v1324 = vmul.f32 %v378, %v378
    %v1325 = vmul.f32 %v467, %v467
    %v1326 = vmul.f32 %v556, %v556
    %v1327 = vmul.f32 %v645, %v645
    %v1328 = vmul.f32 %v734, %v734
    %v1329 = vmul.f32 %v823, %v823
    %v1330 = vmul.f32 %v912, %v912
    %v1331 = vmul.f32 %v292, %v292
    %v1332 = vmul.f32 %v381, %v381
    %v1333 = vmul.f32 %v470, %v470
    %v1334 = vmul.f32 %v559, %v559
    %v1335 = vmul.f32 %v648, %v648
    %v1336 = vmul.f32 %v737, %v737
    %v1337 = vmul.f32 %v826, %v826
    %v1338 = vmul.f32 %v915, %v915
    %v1339 = vmul.f32 %v294, %v294
    %v1340 = vmul.f32 %v383, %v383
    %v1341 = vmul.f32 %v472, %v472
    %v1342 = vmul.f32 %v561, %v561
    %v1343 = vmul.f32 %v650, %v650
    %v1344 = vmul.f32 %v739, %v739
    %v1345 = vmul.f32 %v828, %v828
    %v1346 = vmul.f32 %v917, %v917
    %v1347 = vmul.f32 %v297, %v297
    %v1348 = vmul.f32 %v386, %v386
    %v1349 = vmul.f32 %v475, %v475
    %v1350 = vmul.f32 %v564, %v564
    %v1351 = vmul.f32 %v653, %v653
    %v1352 = vmul.f32 %v742, %v742
    %v1353 = vmul.f32 %v831, %v831
    %v1354 = vmul.f32 %v920, %v920
    %v1355 = vmul.f32 %v299, %v299
    %v1356 = vmul.f32 %v388, %v388
    %v1357 = vmul.f32 %v477, %v477
    %v1358 = vmul.f32 %v566, %v566
    %v1359 = vmul.f32 %v655, %v655
    %v1360 = vmul.f32 %v744, %v744
    %v1361 = vmul.f32 %v833, %v833
    %v1362 = vmul.f32 %v922, %v922
    %v1363 = vmul.f32 %v302, %v302
    %v1364 = vmul.f32 %v391, %v391
    %v1365 = vmul.f32 %v480, %v480
    %v1366 = vmul.f32 %v569, %v569
    %v1367 = vmul.f32 %v658, %v658
    %v1368 = vmul.f32 %v747, %v747
    %v1369 = vmul.f32 %v836, %v836
    %v1370 = vmul.f32 %v925, %v925
    %v1371 = vmul.f32 %v304, %v304
    %v1372 = vmul.f32 %v393, %v393
    %v1373 = vmul.f32 %v482, %v482
    %v1374 = vmul.f32 %v571, %v571
    %v1375 = vmul.f32 %v660, %v660
    %v1376 = vmul.f32 %v749, %v749
    %v1377 = vmul.f32 %v838, %v838
    %v1378 = vmul.f32 %v927, %v927
    %v1379 = vmul.f32 %v307, %v307
    %v1380 = vmul.f32 %v396, %v396
    %v1381 = vmul.f32 %v485, %v485
    %v1382 = vmul.f32 %v574, %v574
    %v1383 = vmul.f32 %v663, %v663
    %v1384 = vmul.f32 %v752, %v752
    %v1385 = vmul.f32 %v841, %v841
    %v1386 = vmul.f32 %v930, %v930
    %v1387 = vmul.f32 %v309, %v309
    %v1388 = vmul.f32 %v398, %v398
    %v1389 = vmul.f32 %v487, %v487
    %v1390 = vmul.f32 %v576, %v576
    %v1391 = vmul.f32 %v665, %v665
    %v1392 = vmul.f32 %v754, %v754
    %v1393 = vmul.f32 %v843, %v843
    %v1394 = vmul.f32 %v932, %v932
    %v1395 = vmul.f32 %v312, %v312
    %v1396 = vmul.f32 %v401, %v401
    %v1397 = vmul.f32 %v490, %v490
    %v1398 = vmul.f32 %v579, %v579
    %v1399 = vmul.f32 %v668, %v668
    %v1400 = vmul.f32 %v757, %v757
    %v1401 = vmul.f32 %v846, %v846
    %v1402 = vmul.f32 %v935, %v935
    %v1403 = vmul.f32 %v314, %v314
    %v1404 = vmul.f32 %v403, %v403
    %v1405 = vmul.f32 %v492, %v492
    %v1406 = vmul.f32 %v581, %v581
    %v1407 = vmul.f32 %v670, %v670
    %v1408 = vmul.f32 %v759, %v759
    %v1409 = vmul.f32 %v848, %v848
    %v1410 = vmul.f32 %v937, %v937
    %v1411 = vmul.f32 %v317, %v317
    %v1412 = vmul.f32 %v406, %v406
    %v1413 = vmul.f32 %v495, %v495
    %v1414 = vmul.f32 %v584, %v584
    %v1415 = vmul.f32 %v673, %v673
    %v1416 = vmul.f32 %v762, %v762
    %v1417 = vmul.f32 %v851, %v851
    %v1418 = vmul.f32 %v940, %v940
    %v1419 = vmul.f32 %v319, %v319
    %v1420 = vmul.f32 %v408, %v408
    %v1421 = vmul.f32 %v497, %v497
    %v1422 = vmul.f32 %v586, %v586
    %v1423 = vmul.f32 %v675, %v675
    %v1424 = vmul.f32 %v764, %v764
    %v1425 = vmul.f32 %v853, %v853
    %v1426 = vmul.f32 %v942, %v942
    %v1427 = vmul.f32 %v322, %v322
    %v1428 = vmul.f32 %v411, %v411
    %v1429 = vmul.f32 %v500, %v500
    %v1430 = vmul.f32 %v589, %v589
    %v1431 = vmul.f32 %v678, %v678
    %v1432 = vmul.f32 %v767, %v767
    %v1433 = vmul.f32 %v856, %v856
    %v1434 = vmul.f32 %v945, %v945
    %v1435 = vmul.f32 %v324, %v324
    %v1436 = vmul.f32 %v413, %v413
    %v1437 = vmul.f32 %v502, %v502
    %v1438 = vmul.f32 %v591, %v591
    %v1439 = vmul.f32 %v680, %v680
    %v1440 = vmul.f32 %v769, %v769
    %v1441 = vmul.f32 %v858, %v858
    %v1442 = vmul.f32 %v947, %v947
    %v1443 = vmul.f32 %v327, %v327
    %v1444 = vmul.f32 %v416, %v416
    %v1445 = vmul.f32 %v505, %v505
    %v1446 = vmul.f32 %v594, %v594
    %v1447 = vmul.f32 %v683, %v683
    %v1448 = vmul.f32 %v772, %v772
    %v1449 = vmul.f32 %v861, %v861
    %v1450 = vmul.f32 %v950, %v950
    %v1451 = vmul.f32 %v329, %v329
    %v1452 = vmul.f32 %v418, %v418
    %v1453 = vmul.f32 %v507, %v507
    %v1454 = vmul.f32 %v596, %v596
    %v1455 = vmul.f32 %v685, %v685
    %v1456 = vmul.f32 %v774, %v774
    %v1457 = vmul.f32 %v863, %v863
    %v1458 = vmul.f32 %v952, %v952
    %v1459 = vmul.f32 %v332, %v332
    %v1460 = vmul.f32 %v421, %v421
    %v1461 = vmul.f32 %v510, %v510
    %v1462 = vmul.f32 %v599, %v599
    %v1463 = vmul.f32 %v688, %v688
    %v1464 = vmul.f32 %v777, %v777
    %v1465 = vmul.f32 %v866, %v866
    %v1466 = vmul.f32 %v955, %v955
    %v1467 = vmul.f32 %v334, %v334
    %v1468 = vmul.f32 %v423, %v423
    %v1469 = vmul.f32 %v512, %v512
    %v1470 = vmul.f32 %v601, %v601
    %v1471 = vmul.f32 %v690, %v690
    %v1472 = vmul.f32 %v779, %v779
    %v1473 = vmul.f32 %v868, %v868
    %v1474 = vmul.f32 %v957, %v957
    %v1475 = vmul.f32 %v337, %v337
    %v1476 = vmul.f32 %v426, %v426
    %v1477 = vmul.f32 %v515, %v515
    %v1478 = vmul.f32 %v604, %v604
    %v1479 = vmul.f32 %v693, %v693
    %v1480 = vmul.f32 %v782, %v782
    %v1481 = vmul.f32 %v871, %v871
    %v1482 = vmul.f32 %v960, %v960
    %v1483 = vmul.f32 %v339, %v339
    %v1484 = vmul.f32 %v428, %v428
    %v1485 = vmul.f32 %v517, %v517
    %v1486 = vmul.f32 %v606, %v606
    %v1487 = vmul.f32 %v695, %v695
    %v1488 = vmul.f32 %v784, %v784
    %v1489 = vmul.f32 %v873, %v873
    %v1490 = vmul.f32 %v962, %v962
    %v1491 = vmul.f32 %v342, %v342
    %v1492 = vmul.f32 %v431, %v431
    %v1493 = vmul.f32 %v520, %v520
    %v1494 = vmul.f32 %v609, %v609
    %v1495 = vmul.f32 %v698, %v698
    %v1496 = vmul.f32 %v787, %v787
    %v1497 = vmul.f32 %v876, %v876
    %v1498 = vmul.f32 %v965, %v965
    %v1499 = vmul.f32 %v344, %v344
    %v1500 = vmul.f32 %v433, %v433
    %v1501 = vmul.f32 %v522, %v522
    %v1502 = vmul.f32 %v611, %v611
    %v1503 = vmul.f32 %v700, %v700
    %v1504 = vmul.f32 %v789, %v789
    %v1505 = vmul.f32 %v878, %v878
    %v1506 = vmul.f32 %v967, %v967
    %v1507 = vmul.f32 %v347, %v347
    %v1508 = vmul.f32 %v436, %v436
    %v1509 = vmul.f32 %v525, %v525
    %v1510 = vmul.f32 %v614, %v614
    %v1511 = vmul.f32 %v703, %v703
    %v1512 = vmul.f32 %v792, %v792
    %v1513 = vmul.f32 %v881, %v881
    %v1514 = vmul.f32 %v970, %v970
    %v1515 = vmul.f32 %v349, %v349
    %v1516 = vmul.f32 %v438, %v438
    %v1517 = vmul.f32 %v527, %v527
    %v1518 = vmul.f32 %v616, %v616
    %v1519 = vmul.f32 %v705, %v705
    %v1520 = vmul.f32 %v794, %v794
    %v1521 = vmul.f32 %v883, %v883
    %v1522 = vmul.f32 %v972, %v972
    %v1523 = vmul.f32 %v352, %v352
    %v1524 = vmul.f32 %v441, %v441
    %v1525 = vmul.f32 %v530, %v530
    %v1526 = vmul.f32 %v619, %v619
    %v1527 = vmul.f32 %v708, %v708
    %v1528 = vmul.f32 %v797, %v797
    %v1529 = vmul.f32 %v886, %v886
    %v1530 = vmul.f32 %v975, %v975
    %v1531 = vmul.f32 %v354, %v354
    %v1532 = vmul.f32 %v443, %v443
    %v1533 = vmul.f32 %v532, %v532
    %v1534 = vmul.f32 %v621, %v621
    %v1535 = vmul.f32 %v710, %v710
    %v1536 = vmul.f32 %v799, %v799
    %v1537 = vmul.f32 %v888, %v888
    %v1538 = vmul.f32 %v977, %v977
    %v1539 = vadd.f32 %v1283, %v1291
    %v1540 = vadd.f32 %v1539, %v1299
    %v1541 = vadd.f32 %v1540, %v1307
    %v1542 = vadd.f32 %v1541, %v1315
    %v1543 = vadd.f32 %v1542, %v1323
    %v1544 = vadd.f32 %v1543, %v1331
    %v1545 = vadd.f32 %v1544, %v1339
    %v1546 = vadd.f32 %v1545, %v1347
    %v1547 = vadd.f32 %v1546, %v1355
    %v1548 = vadd.f32 %v1547, %v1363
    %v1549 = vadd.f32 %v1548, %v1371
    %v1550 = vadd.f32 %v1549, %v1379
    %v1551 = vadd.f32 %v1550, %v1387
    %v1552 = vadd.f32 %v1551, %v1395
    %v1553 = vadd.f32 %v1552, %v1403
    %v1554 = vadd.f32 %v1553, %v1411
    %v1555 = vadd.f32 %v1554, %v1419
    %v1556 = vadd.f32 %v1555, %v1427
    %v1557 = vadd.f32 %v1556, %v1435
    %v1558 = vadd.f32 %v1557, %v1443
    %v1559 = vadd.f32 %v1558, %v1451
    %v1560 = vadd.f32 %v1559, %v1459
    %v1561 = vadd.f32 %v1560, %v1467
    %v1562 = vadd.f32 %v1561, %v1475
    %v1563 = vadd.f32 %v1562, %v1483
    %v1564 = vadd.f32 %v1563, %v1491
    %v1565 = vadd.f32 %v1564, %v1499
    %v1566 = vadd.f32 %v1565, %v1507
    %v1567 = vadd.f32 %v1566, %v1515
    %v1568 = vadd.f32 %v1567, %v1523
    %v1569 = vadd.f32 %v1568, %v1531
    %v1570 = vrot.slane %v1569, 4
    %v1571 = vadd.f32 %v1569, %v1570
    %v1572 = vrot.slane %v1571, 2
    %v1573 = vadd.f32 %v1571, %v1572
    %v1574 = vrot.slane %v1573, 1
    %v1575 = vadd.f32 %v1573, %v1574
    %v1576 = vadd.f32 %v1284, %v1292
    %v1577 = vadd.f32 %v1576, %v1300
    %v1578 = vadd.f32 %v1577, %v1308
    %v1579 = vadd.f32 %v1578, %v1316
    %v1580 = vadd.f32 %v1579, %v1324
    %v1581 = vadd.f32 %v1580, %v1332
    %v1582 = vadd.f32 %v1581, %v1340
    %v1583 = vadd.f32 %v1582, %v1348
    %v1584 = vadd.f32 %v1583, %v1356
    %v1585 = vadd.f32 %v1584, %v1364
    %v1586 = vadd.f32 %v1585, %v1372
    %v1587 = vadd.f32 %v1586, %v1380
    %v1588 = vadd.f32 %v1587, %v1388
    %v1589 = vadd.f32 %v1588, %v1396
    %v1590 = vadd.f32 %v1589, %v1404
    %v1591 = vadd.f32 %v1590, %v1412
    %v1592 = vadd.f32 %v1591, %v1420
    %v1593 = vadd.f32 %v1592, %v1428
    %v1594 = vadd.f32 %v1593, %v1436
    %v1595 = vadd.f32 %v1594, %v1444
    %v1596 = vadd.f32 %v1595, %v1452
    %v1597 = vadd.f32 %v1596, %v1460
    %v1598 = vadd.f32 %v1597, %v1468
    %v1599 = vadd.f32 %v1598, %v1476
    %v1600 = vadd.f32 %v1599, %v1484
    %v1601 = vadd.f32 %v1600, %v1492
    %v1602 = vadd.f32 %v1601, %v1500
    %v1603 = vadd.f32 %v1602, %v1508
    %v1604 = vadd.f32 %v1603, %v1516
    %v1605 = vadd.f32 %v1604, %v1524
    %v1606 = vadd.f32 %v1605, %v1532
    %v1607 = vrot.slane %v1606, 4
    %v1608 = vadd.f32 %v1606, %v1607
    %v1609 = vrot.slane %v1608, 2
    %v1610 = vadd.f32 %v1608, %v1609
    %v1611 = vrot.slane %v1610, 1
    %v1612 = vadd.f32 %v1610, %v1611
    %v1613 = vadd.f32 %v1285, %v1293
    %v1614 = vadd.f32 %v1613, %v1301
    %v1615 = vadd.f32 %v1614, %v1309
    %v1616 = vadd.f32 %v1615, %v1317
    %v1617 = vadd.f32 %v1616, %v1325
    %v1618 = vadd.f32 %v1617, %v1333
    %v1619 = vadd.f32 %v1618, %v1341
    %v1620 = vadd.f32 %v1619, %v1349
    %v1621 = vadd.f32 %v1620, %v1357
    %v1622 = vadd.f32 %v1621, %v1365
    %v1623 = vadd.f32 %v1622, %v1373
    %v1624 = vadd.f32 %v1623, %v1381
    %v1625 = vadd.f32 %v1624, %v1389
    %v1626 = vadd.f32 %v1625, %v1397
    %v1627 = vadd.f32 %v1626, %v1405
    %v1628 = vadd.f32 %v1627, %v1413
    %v1629 = vadd.f32 %v1628, %v1421
    %v1630 = vadd.f32 %v1629, %v1429
    %v1631 = vadd.f32 %v1630, %v1437
    %v1632 = vadd.f32 %v1631, %v1445
    %v1633 = vadd.f32 %v1632, %v1453
    %v1634 = vadd.f32 %v1633, %v1461
    %v1635 = vadd.f32 %v1634, %v1469
    %v1636 = vadd.f32 %v1635, %v1477
    %v1637 = vadd.f32 %v1636, %v1485
    %v1638 = vadd.f32 %v1637, %v1493
    %v1639 = vadd.f32 %v1638, %v1501
    %v1640 = vadd.f32 %v1639, %v1509
    %v1641 = vadd.f32 %v1640, %v1517
    %v1642 = vadd.f32 %v1641, %v1525
    %v1643 = vadd.f32 %v1642, %v1533
    %v1644 = vrot.slane %v1643, 4
    %v1645 = vadd.f32 %v1643, %v1644
    %v1646 = vrot.slane %v1645, 2
    %v1647 = vadd.f32 %v1645, %v1646
    %v1648 = vrot.slane %v1647, 1
    %v1649 = vadd.f32 %v1647, %v1648
    %v1650 = vadd.f32 %v1286, %v1294
    %v1651 = vadd.f32 %v1650, %v1302
    %v1652 = vadd.f32 %v1651, %v1310
    %v1653 = vadd.f32 %v1652, %v1318
    %v1654 = vadd.f32 %v1653, %v1326
    %v1655 = vadd.f32 %v1654, %v1334
    %v1656 = vadd.f32 %v1655, %v1342
    %v1657 = vadd.f32 %v1656, %v1350
    %v1658 = vadd.f32 %v1657, %v1358
    %v1659 = vadd.f32 %v1658, %v1366
    %v1660 = vadd.f32 %v1659, %v1374
    %v1661 = vadd.f32 %v1660, %v1382
    %v1662 = vadd.f32 %v1661, %v1390
    %v1663 = vadd.f32 %v1662, %v1398
    %v1664 = vadd.f32 %v1663, %v1406
    %v1665 = vadd.f32 %v1664, %v1414
    %v1666 = vadd.f32 %v1665, %v1422
    %v1667 = vadd.f32 %v1666, %v1430
    %v1668 = vadd.f32 %v1667, %v1438
    %v1669 = vadd.f32 %v1668, %v1446
    %v1670 = vadd.f32 %v1669, %v1454
    %v1671 = vadd.f32 %v1670, %v1462
    %v1672 = vadd.f32 %v1671, %v1470
    %v1673 = vadd.f32 %v1672, %v1478
    %v1674 = vadd.f32 %v1673, %v1486
    %v1675 = vadd.f32 %v1674, %v1494
    %v1676 = vadd.f32 %v1675, %v1502
    %v1677 = vadd.f32 %v1676, %v1510
    %v1678 = vadd.f32 %v1677, %v1518
    %v1679 = vadd.f32 %v1678, %v1526
    %v1680 = vadd.f32 %v1679, %v1534
    %v1681 = vrot.slane %v1680, 4
    %v1682 = vadd.f32 %v1680, %v1681
    %v1683 = vrot.slane %v1682, 2
    %v1684 = vadd.f32 %v1682, %v1683
    %v1685 = vrot.slane %v1684, 1
    %v1686 = vadd.f32 %v1684, %v1685
    %v1687 = vadd.f32 %v1287, %v1295
    %v1688 = vadd.f32 %v1687, %v1303
    %v1689 = vadd.f32 %v1688, %v1311
    %v1690 = vadd.f32 %v1689, %v1319
    %v1691 = vadd.f32 %v1690, %v1327
    %v1692 = vadd.f32 %v1691, %v1335
    %v1693 = vadd.f32 %v1692, %v1343
    %v1694 = vadd.f32 %v1693, %v1351
    %v1695 = vadd.f32 %v1694, %v1359
    %v1696 = vadd.f32 %v1695, %v1367
    %v1697 = vadd.f32 %v1696, %v1375
    %v1698 = vadd.f32 %v1697, %v1383
    %v1699 = vadd.f32 %v1698, %v1391
    %v1700 = vadd.f32 %v1699, %v1399
    %v1701 = vadd.f32 %v1700, %v1407
    %v1702 = vadd.f32 %v1701, %v1415
    %v1703 = vadd.f32 %v1702, %v1423
    %v1704 = vadd.f32 %v1703, %v1431
    %v1705 = vadd.f32 %v1704, %v1439
    %v1706 = vadd.f32 %v1705, %v1447
    %v1707 = vadd.f32 %v1706, %v1455
    %v1708 = vadd.f32 %v1707, %v1463
    %v1709 = vadd.f32 %v1708, %v1471
    %v1710 = vadd.f32 %v1709, %v1479
    %v1711 = vadd.f32 %v1710, %v1487
    %v1712 = vadd.f32 %v1711, %v1495
    %v1713 = vadd.f32 %v1712, %v1503
    %v1714 = vadd.f32 %v1713, %v1511
    %v1715 = vadd.f32 %v1714, %v1519
    %v1716 = vadd.f32 %v1715, %v1527
    %v1717 = vadd.f32 %v1716, %v1535
    %v1718 = vrot.slane %v1717, 4
    %v1719 = vadd.f32 %v1717, %v1718
    %v1720 = vrot.slane %v1719, 2
    %v1721 = vadd.f32 %v1719, %v1720
    %v1722 = vrot.slane %v1721, 1
    %v1723 = vadd.f32 %v1721, %v1722
    %v1724 = vadd.f32 %v1288, %v1296
    %v1725 = vadd.f32 %v1724, %v1304
    %v1726 = vadd.f32 %v1725, %v1312
    %v1727 = vadd.f32 %v1726, %v1320
    %v1728 = vadd.f32 %v1727, %v1328
    %v1729 = vadd.f32 %v1728, %v1336
    %v1730 = vadd.f32 %v1729, %v1344
    %v1731 = vadd.f32 %v1730, %v1352
    %v1732 = vadd.f32 %v1731, %v1360
    %v1733 = vadd.f32 %v1732, %v1368
    %v1734 = vadd.f32 %v1733, %v1376
    %v1735 = vadd.f32 %v1734, %v1384
    %v1736 = vadd.f32 %v1735, %v1392
    %v1737 = vadd.f32 %v1736, %v1400
    %v1738 = vadd.f32 %v1737, %v1408
    %v1739 = vadd.f32 %v1738, %v1416
    %v1740 = vadd.f32 %v1739, %v1424
    %v1741 = vadd.f32 %v1740, %v1432
    %v1742 = vadd.f32 %v1741, %v1440
    %v1743 = vadd.f32 %v1742, %v1448
    %v1744 = vadd.f32 %v1743, %v1456
    %v1745 = vadd.f32 %v1744, %v1464
    %v1746 = vadd.f32 %v1745, %v1472
    %v1747 = vadd.f32 %v1746, %v1480
    %v1748 = vadd.f32 %v1747, %v1488
    %v1749 = vadd.f32 %v1748, %v1496
    %v1750 = vadd.f32 %v1749, %v1504
    %v1751 = vadd.f32 %v1750, %v1512
    %v1752 = vadd.f32 %v1751, %v1520
    %v1753 = vadd.f32 %v1752, %v1528
    %v1754 = vadd.f32 %v1753, %v1536
    %v1755 = vrot.slane %v1754, 4
    %v1756 = vadd.f32 %v1754, %v1755
    %v1757 = vrot.slane %v1756, 2
    %v1758 = vadd.f32 %v1756, %v1757
    %v1759 = vrot.slane %v1758, 1
    %v1760 = vadd.f32 %v1758, %v1759
    %v1761 = vadd.f32 %v1289, %v1297
    %v1762 = vadd.f32 %v1761, %v1305
    %v1763 = vadd.f32 %v1762, %v1313
    %v1764 = vadd.f32 %v1763, %v1321
    %v1765 = vadd.f32 %v1764, %v1329
    %v1766 = vadd.f32 %v1765, %v1337
    %v1767 = vadd.f32 %v1766, %v1345
    %v1768 = vadd.f32 %v1767, %v1353
    %v1769 = vadd.f32 %v1768, %v1361
    %v1770 = vadd.f32 %v1769, %v1369
    %v1771 = vadd.f32 %v1770, %v1377
    %v1772 = vadd.f32 %v1771, %v1385
    %v1773 = vadd.f32 %v1772, %v1393
    %v1774 = vadd.f32 %v1773, %v1401
    %v1775 = vadd.f32 %v1774, %v1409
    %v1776 = vadd.f32 %v1775, %v1417
    %v1777 = vadd.f32 %v1776, %v1425
    %v1778 = vadd.f32 %v1777, %v1433
    %v1779 = vadd.f32 %v1778, %v1441
    %v1780 = vadd.f32 %v1779, %v1449
    %v1781 = vadd.f32 %v1780, %v1457
    %v1782 = vadd.f32 %v1781, %v1465
    %v1783 = vadd.f32 %v1782, %v1473
    %v1784 = vadd.f32 %v1783, %v1481
    %v1785 = vadd.f32 %v1784, %v1489
    %v1786 = vadd.f32 %v1785, %v1497
    %v1787 = vadd.f32 %v1786, %v1505
    %v1788 = vadd.f32 %v1787, %v1513
    %v1789 = vadd.f32 %v1788, %v1521
    %v1790 = vadd.f32 %v1789, %v1529
    %v1791 = vadd.f32 %v1790, %v1537
    %v1792 = vrot.slane %v1791, 4
    %v1793 = vadd.f32 %v1791, %v1792
    %v1794 = vrot.slane %v1793, 2
    %v1795 = vadd.f32 %v1793, %v1794
    %v1796 = vrot.slane %v1795, 1
    %v1797 = vadd.f32 %v1795, %v1796
    %v1798 = vadd.f32 %v1290, %v1298
    %v1799 = vadd.f32 %v1798, %v1306
    %v1800 = vadd.f32 %v1799, %v1314
    %v1801 = vadd.f32 %v1800, %v1322
    %v1802 = vadd.f32 %v1801, %v1330
    %v1803 = vadd.f32 %v1802, %v1338
    %v1804 = vadd.f32 %v1803, %v1346
    %v1805 = vadd.f32 %v1804, %v1354
    %v1806 = vadd.f32 %v1805, %v1362
    %v1807 = vadd.f32 %v1806, %v1370
    %v1808 = vadd.f32 %v1807, %v1378
    %v1809 = vadd.f32 %v1808, %v1386
    %v1810 = vadd.f32 %v1809, %v1394
    %v1811 = vadd.f32 %v1810, %v1402
    %v1812 = vadd.f32 %v1811, %v1410
    %v1813 = vadd.f32 %v1812, %v1418
    %v1814 = vadd.f32 %v1813, %v1426
    %v1815 = vadd.f32 %v1814, %v1434
    %v1816 = vadd.f32 %v1815, %v1442
    %v1817 = vadd.f32 %v1816, %v1450
    %v1818 = vadd.f32 %v1817, %v1458
    %v1819 = vadd.f32 %v1818, %v1466
    %v1820 = vadd.f32 %v1819, %v1474
    %v1821 = vadd.f32 %v1820, %v1482
    %v1822 = vadd.f32 %v1821, %v1490
    %v1823 = vadd.f32 %v1822, %v1498
    %v1824 = vadd.f32 %v1823, %v1506
    %v1825 = vadd.f32 %v1824, %v1514
    %v1826 = vadd.f32 %v1825, %v1522
    %v1827 = vadd.f32 %v1826, %v1530
    %v1828 = vadd.f32 %v1827, %v1538
    %v1829 = vrot.slane %v1828, 4
    %v1830 = vadd.f32 %v1828, %v1829
    %v1831 = vrot.slane %v1830, 2
    %v1832 = vadd.f32 %v1830, %v1831
    %v1833 = vrot.slane %v1832, 1
    %v1834 = vadd.f32 %v1832, %v1833
    %v1835 = vmul.f32 %v1575, 0.00390625
    %v1836 = vmul.f32 %v1612, 0.00390625
    %v1837 = vmul.f32 %v1649, 0.00390625
    %v1838 = vmul.f32 %v1686, 0.00390625
    %v1839 = vmul.f32 %v1723, 0.00390625
    %v1840 = vmul.f32 %v1760, 0.00390625
    %v1841 = vmul.f32 %v1797, 0.00390625
    %v1842 = vmul.f32 %v1834, 0.00390625
    %v1843 = vmul.f32 %v1275, %v1275
    %v1844 = vmul.f32 %v1276, %v1276
    %v1845 = vmul.f32 %v1277, %v1277
    %v1846 = vmul.f32 %v1278, %v1278
    %v1847 = vmul.f32 %v1279, %v1279
    %v1848 = vmul.f32 %v1280, %v1280
    %v1849 = vmul.f32 %v1281, %v1281
    %v1850 = vmul.f32 %v1282, %v1282
    %v1851 = vsub.f32 %v1835, %v1843
    %v1852 = vsub.f32 %v1836, %v1844
    %v1853 = vsub.f32 %v1837, %v1845
    %v1854 = vsub.f32 %v1838, %v1846
    %v1855 = vsub.f32 %v1839, %v1847
    %v1856 = vsub.f32 %v1840, %v1848
    %v1857 = vsub.f32 %v1841, %v1849
    %v1858 = vsub.f32 %v1842, %v1850
    %v1859 = vmax.f32 %v1851, 0.0
    %v1860 = vmax.f32 %v1852, 0.0
    %v1861 = vmax.f32 %v1853, 0.0
    %v1862 = vmax.f32 %v1854, 0.0
    %v1863 = vmax.f32 %v1855, 0.0
    %v1864 = vmax.f32 %v1856, 0.0
    %v1865 = vmax.f32 %v1857, 0.0
    %v1866 = vmax.f32 %v1858, 0.0
    %v1867 = vsub.f32 %v277, %v1275
    %v1868 = vsub.f32 %v366, %v1276
    %v1869 = vsub.f32 %v455, %v1277
    %v1870 = vsub.f32 %v544, %v1278
    %v1871 = vsub.f32 %v633, %v1279
    %v1872 = vsub.f32 %v722, %v1280
    %v1873 = vsub.f32 %v811, %v1281
    %v1874 = vsub.f32 %v900, %v1282
    %v1875 = vsub.f32 %v279, %v1275
    %v1876 = vsub.f32 %v368, %v1276
    %v1877 = vsub.f32 %v457, %v1277
    %v1878 = vsub.f32 %v546, %v1278
    %v1879 = vsub.f32 %v635, %v1279
    %v1880 = vsub.f32 %v724, %v1280
    %v1881 = vsub.f32 %v813, %v1281
    %v1882 = vsub.f32 %v902, %v1282
    %v1883 = vsub.f32 %v282, %v1275
    %v1884 = vsub.f32 %v371, %v1276
    %v1885 = vsub.f32 %v460, %v1277
    %v1886 = vsub.f32 %v549, %v1278
    %v1887 = vsub.f32 %v638, %v1279
    %v1888 = vsub.f32 %v727, %v1280
    %v1889 = vsub.f32 %v816, %v1281
    %v1890 = vsub.f32 %v905, %v1282
    %v1891 = vsub.f32 %v284, %v1275
    %v1892 = vsub.f32 %v373, %v1276
    %v1893 = vsub.f32 %v462, %v1277
    %v1894 = vsub.f32 %v551, %v1278
    %v1895 = vsub.f32 %v640, %v1279
    %v1896 = vsub.f32 %v729, %v1280
    %v1897 = vsub.f32 %v818, %v1281
    %v1898 = vsub.f32 %v907, %v1282
    %v1899 = vsub.f32 %v287, %v1275
    %v1900 = vsub.f32 %v376, %v1276
    %v1901 = vsub.f32 %v465, %v1277
    %v1902 = vsub.f32 %v554, %v1278
    %v1903 = vsub.f32 %v643, %v1279
    %v1904 = vsub.f32 %v732, %v1280
    %v1905 = vsub.f32 %v821, %v1281
    %v1906 = vsub.f32 %v910, %v1282
    %v1907 = vsub.f32 %v289, %v1275
    %v1908 = vsub.f32 %v378, %v1276
    %v1909 = vsub.f32 %v467, %v1277
    %v1910 = vsub.f32 %v556, %v1278
    %v1911 = vsub.f32 %v645, %v1279
    %v1912 = vsub.f32 %v734, %v1280
    %v1913 = vsub.f32 %v823, %v1281
    %v1914 = vsub.f32 %v912, %v1282
    %v1915 = vsub.f32 %v292, %v1275
    %v1916 = vsub.f32 %v381, %v1276
    %v1917 = vsub.f32 %v470, %v1277
    %v1918 = vsub.f32 %v559, %v1278
    %v1919 = vsub.f32 %v648, %v1279
    %v1920 = vsub.f32 %v737, %v1280
    %v1921 = vsub.f32 %v826, %v1281
    %v1922 = vsub.f32 %v915, %v1282
    %v1923 = vsub.f32 %v294, %v1275
    %v1924 = vsub.f32 %v383, %v1276
    %v1925 = vsub.f32 %v472, %v1277
    %v1926 = vsub.f32 %v561, %v1278
    %v1927 = vsub.f32 %v650, %v1279
    %v1928 = vsub.f32 %v739, %v1280
    %v1929 = vsub.f32 %v828, %v1281
    %v1930 = vsub.f32 %v917, %v1282
    %v1931 = vsub.f32 %v297, %v1275
    %v1932 = vsub.f32 %v386, %v1276
    %v1933 = vsub.f32 %v475, %v1277
    %v1934 = vsub.f32 %v564, %v1278
    %v1935 = vsub.f32 %v653, %v1279
    %v1936 = vsub.f32 %v742, %v1280
    %v1937 = vsub.f32 %v831, %v1281
    %v1938 = vsub.f32 %v920, %v1282
    %v1939 = vsub.f32 %v299, %v1275
    %v1940 = vsub.f32 %v388, %v1276
    %v1941 = vsub.f32 %v477, %v1277
    %v1942 = vsub.f32 %v566, %v1278
    %v1943 = vsub.f32 %v655, %v1279
    %v1944 = vsub.f32 %v744, %v1280
    %v1945 = vsub.f32 %v833, %v1281
    %v1946 = vsub.f32 %v922, %v1282
    %v1947 = vsub.f32 %v302, %v1275
    %v1948 = vsub.f32 %v391, %v1276
    %v1949 = vsub.f32 %v480, %v1277
    %v1950 = vsub.f32 %v569, %v1278
    %v1951 = vsub.f32 %v658, %v1279
    %v1952 = vsub.f32 %v747, %v1280
    %v1953 = vsub.f32 %v836, %v1281
    %v1954 = vsub.f32 %v925, %v1282
    %v1955 = vsub.f32 %v304, %v1275
    %v1956 = vsub.f32 %v393, %v1276
    %v1957 = vsub.f32 %v482, %v1277
    %v1958 = vsub.f32 %v571, %v1278
    %v1959 = vsub.f32 %v660, %v1279
    %v1960 = vsub.f32 %v749, %v1280
    %v1961 = vsub.f32 %v838, %v1281
    %v1962 = vsub.f32 %v927, %v1282
    %v1963 = vsub.f32 %v307, %v1275
    %v1964 = vsub.f32 %v396, %v1276
    %v1965 = vsub.f32 %v485, %v1277
    %v1966 = vsub.f32 %v574, %v1278
    %v1967 = vsub.f32 %v663, %v1279
    %v1968 = vsub.f32 %v752, %v1280
    %v1969 = vsub.f32 %v841, %v1281
    %v1970 = vsub.f32 %v930, %v1282
    %v1971 = vsub.f32 %v309, %v1275
    %v1972 = vsub.f32 %v398, %v1276
    %v1973 = vsub.f32 %v487, %v1277
    %v1974 = vsub.f32 %v576, %v1278
    %v1975 = vsub.f32 %v665, %v1279
    %v1976 = vsub.f32 %v754, %v1280
    %v1977 = vsub.f32 %v843, %v1281
    %v1978 = vsub.f32 %v932, %v1282
    %v1979 = vsub.f32 %v312, %v1275
    %v1980 = vsub.f32 %v401, %v1276
    %v1981 = vsub.f32 %v490, %v1277
    %v1982 = vsub.f32 %v579, %v1278
    %v1983 = vsub.f32 %v668, %v1279
    %v1984 = vsub.f32 %v757, %v1280
    %v1985 = vsub.f32 %v846, %v1281
    %v1986 = vsub.f32 %v935, %v1282
    %v1987 = vsub.f32 %v314, %v1275
    %v1988 = vsub.f32 %v403, %v1276
    %v1989 = vsub.f32 %v492, %v1277
    %v1990 = vsub.f32 %v581, %v1278
    %v1991 = vsub.f32 %v670, %v1279
    %v1992 = vsub.f32 %v759, %v1280
    %v1993 = vsub.f32 %v848, %v1281
    %v1994 = vsub.f32 %v937, %v1282
    %v1995 = vsub.f32 %v317, %v1275
    %v1996 = vsub.f32 %v406, %v1276
    %v1997 = vsub.f32 %v495, %v1277
    %v1998 = vsub.f32 %v584, %v1278
    %v1999 = vsub.f32 %v673, %v1279
    %v2000 = vsub.f32 %v762, %v1280
    %v2001 = vsub.f32 %v851, %v1281
    %v2002 = vsub.f32 %v940, %v1282
    %v2003 = vsub.f32 %v319, %v1275
    %v2004 = vsub.f32 %v408, %v1276
    %v2005 = vsub.f32 %v497, %v1277
    %v2006 = vsub.f32 %v586, %v1278
    %v2007 = vsub.f32 %v675, %v1279
    %v2008 = vsub.f32 %v764, %v1280
    %v2009 = vsub.f32 %v853, %v1281
    %v2010 = vsub.f32 %v942, %v1282
    %v2011 = vsub.f32 %v322, %v1275
    %v2012 = vsub.f32 %v411, %v1276
    %v2013 = vsub.f32 %v500, %v1277
    %v2014 = vsub.f32 %v589, %v1278
    %v2015 = vsub.f32 %v678, %v1279
    %v2016 = vsub.f32 %v767, %v1280
    %v2017 = vsub.f32 %v856, %v1281
    %v2018 = vsub.f32 %v945, %v1282
    %v2019 = vsub.f32 %v324, %v1275
    %v2020 = vsub.f32 %v413, %v1276
    %v2021 = vsub.f32 %v502, %v1277
    %v2022 = vsub.f32 %v591, %v1278
    %v2023 = vsub.f32 %v680, %v1279
    %v2024 = vsub.f32 %v769, %v1280
    %v2025 = vsub.f32 %v858, %v1281
    %v2026 = vsub.f32 %v947, %v1282
    %v2027 = vsub.f32 %v327, %v1275
    %v2028 = vsub.f32 %v416, %v1276
    %v2029 = vsub.f32 %v505, %v1277
    %v2030 = vsub.f32 %v594, %v1278
    %v2031 = vsub.f32 %v683, %v1279
    %v2032 = vsub.f32 %v772, %v1280
    %v2033 = vsub.f32 %v861, %v1281
    %v2034 = vsub.f32 %v950, %v1282
    %v2035 = vsub.f32 %v329, %v1275
    %v2036 = vsub.f32 %v418, %v1276
    %v2037 = vsub.f32 %v507, %v1277
    %v2038 = vsub.f32 %v596, %v1278
    %v2039 = vsub.f32 %v685, %v1279
    %v2040 = vsub.f32 %v774, %v1280
    %v2041 = vsub.f32 %v863, %v1281
    %v2042 = vsub.f32 %v952, %v1282
    %v2043 = vsub.f32 %v332, %v1275
    %v2044 = vsub.f32 %v421, %v1276
    %v2045 = vsub.f32 %v510, %v1277
    %v2046 = vsub.f32 %v599, %v1278
    %v2047 = vsub.f32 %v688, %v1279
    %v2048 = vsub.f32 %v777, %v1280
    %v2049 = vsub.f32 %v866, %v1281
    %v2050 = vsub.f32 %v955, %v1282
    %v2051 = vsub.f32 %v334, %v1275
    %v2052 = vsub.f32 %v423, %v1276
    %v2053 = vsub.f32 %v512, %v1277
    %v2054 = vsub.f32 %v601, %v1278
    %v2055 = vsub.f32 %v690, %v1279
    %v2056 = vsub.f32 %v779, %v1280
    %v2057 = vsub.f32 %v868, %v1281
    %v2058 = vsub.f32 %v957, %v1282
    %v2059 = vsub.f32 %v337, %v1275
    %v2060 = vsub.f32 %v426, %v1276
    %v2061 = vsub.f32 %v515, %v1277
    %v2062 = vsub.f32 %v604, %v1278
    %v2063 = vsub.f32 %v693, %v1279
    %v2064 = vsub.f32 %v782, %v1280
    %v2065 = vsub.f32 %v871, %v1281
    %v2066 = vsub.f32 %v960, %v1282
    %v2067 = vsub.f32 %v339, %v1275
    %v2068 = vsub.f32 %v428, %v1276
    %v2069 = vsub.f32 %v517, %v1277
    %v2070 = vsub.f32 %v606, %v1278
    %v2071 = vsub.f32 %v695, %v1279
    %v2072 = vsub.f32 %v784, %v1280
    %v2073 = vsub.f32 %v873, %v1281
    %v2074 = vsub.f32 %v962, %v1282
    %v2075 = vsub.f32 %v342, %v1275
    %v2076 = vsub.f32 %v431, %v1276
    %v2077 = vsub.f32 %v520, %v1277
    %v2078 = vsub.f32 %v609, %v1278
    %v2079 = vsub.f32 %v698, %v1279
    %v2080 = vsub.f32 %v787, %v1280
    %v2081 = vsub.f32 %v876, %v1281
    %v2082 = vsub.f32 %v965, %v1282
    %v2083 = vsub.f32 %v344, %v1275
    %v2084 = vsub.f32 %v433, %v1276
    %v2085 = vsub.f32 %v522, %v1277
    %v2086 = vsub.f32 %v611, %v1278
    %v2087 = vsub.f32 %v700, %v1279
    %v2088 = vsub.f32 %v789, %v1280
    %v2089 = vsub.f32 %v878, %v1281
    %v2090 = vsub.f32 %v967, %v1282
    %v2091 = vsub.f32 %v347, %v1275
    %v2092 = vsub.f32 %v436, %v1276
    %v2093 = vsub.f32 %v525, %v1277
    %v2094 = vsub.f32 %v614, %v1278
    %v2095 = vsub.f32 %v703, %v1279
    %v2096 = vsub.f32 %v792, %v1280
    %v2097 = vsub.f32 %v881, %v1281
    %v2098 = vsub.f32 %v970, %v1282
    %v2099 = vsub.f32 %v349, %v1275
    %v2100 = vsub.f32 %v438, %v1276
    %v2101 = vsub.f32 %v527, %v1277
    %v2102 = vsub.f32 %v616, %v1278
    %v2103 = vsub.f32 %v705, %v1279
    %v2104 = vsub.f32 %v794, %v1280
    %v2105 = vsub.f32 %v883, %v1281
    %v2106 = vsub.f32 %v972, %v1282
    %v2107 = vsub.f32 %v352, %v1275
    %v2108 = vsub.f32 %v441, %v1276
    %v2109 = vsub.f32 %v530, %v1277
    %v2110 = vsub.f32 %v619, %v1278
    %v2111 = vsub.f32 %v708, %v1279
    %v2112 = vsub.f32 %v797, %v1280
    %v2113 = vsub.f32 %v886, %v1281
    %v2114 = vsub.f32 %v975, %v1282
    %v2115 = vsub.f32 %v354, %v1275
    %v2116 = vsub.f32 %v443, %v1276
    %v2117 = vsub.f32 %v532, %v1277
    %v2118 = vsub.f32 %v621, %v1278
    %v2119 = vsub.f32 %v710, %v1279
    %v2120 = vsub.f32 %v799, %v1280
    %v2121 = vsub.f32 %v888, %v1281
    %v2122 = vsub.f32 %v977, %v1282
    %v2123 = vadd.f32 %v1859, 1e-05
    %v2124 = vadd.f32 %v1860, 1e-05
    %v2125 = vadd.f32 %v1861, 1e-05
    %v2126 = vadd.f32 %v1862, 1e-05
    %v2127 = vadd.f32 %v1863, 1e-05
    %v2128 = vadd.f32 %v1864, 1e-05
    %v2129 = vadd.f32 %v1865, 1e-05
    %v2130 = vadd.f32 %v1866, 1e-05
    %v2131 = vrsqrt.pop %v2123
    %v2132 = vmul.f32 %v2131, %v2123
    %v2133 = vmul.f32 %v2132, %v2131
    %v2134 = vmul.f32 0.5, %v2133
    %v2135 = vsub.f32 1.5, %v2134
    %v2136 = vmul.f32 %v2131, %v2135
    %vm2137 = vweird.f32 %v2123
    %vm2138 = vweird.f32 %v2131
    %vm2139 = vmor %vm2137, %vm2138
    %v2140 = vsel %vm2139, %v2131, %v2136
    %v2141 = vrsqrt.pop %v2124
    %v2142 = vmul.f32 %v2141, %v2124
    %v2143 = vmul.f32 %v2142, %v2141
    %v2144 = vmul.f32 0.5, %v2143
    %v2145 = vsub.f32 1.5, %v2144
    %v2146 = vmul.f32 %v2141, %v2145
    %vm2147 = vweird.f32 %v2124
    %vm2148 = vweird.f32 %v2141
    %vm2149 = vmor %vm2147, %vm2148
    %v2150 = vsel %vm2149, %v2141, %v2146
    %v2151 = vrsqrt.pop %v2125
    %v2152 = vmul.f32 %v2151, %v2125
    %v2153 = vmul.f32 %v2152, %v2151
    %v2154 = vmul.f32 0.5, %v2153
    %v2155 = vsub.f32 1.5, %v2154
    %v2156 = vmul.f32 %v2151, %v2155
    %vm2157 = vweird.f32 %v2125
    %vm2158 = vweird.f32 %v2151
    %vm2159 = vmor %vm2157, %vm2158
    %v2160 = vsel %vm2159, %v2151, %v2156
    %v2161 = vrsqrt.pop %v2126
    %v2162 = vmul.f32 %v2161, %v2126
    %v2163 = vmul.f32 %v2162, %v2161
    %v2164 = vmul.f32 0.5, %v2163
    %v2165 = vsub.f32 1.5, %v2164
    %v2166 = vmul.f32 %v2161, %v2165
    %vm2167 = vweird.f32 %v2126
    %vm2168 = vweird.f32 %v2161
    %vm2169 = vmor %vm2167, %vm2168
    %v2170 = vsel %vm2169, %v2161, %v2166
    %v2171 = vrsqrt.pop %v2127
    %v2172 = vmul.f32 %v2171, %v2127
    %v2173 = vmul.f32 %v2172, %v2171
    %v2174 = vmul.f32 0.5, %v2173
    %v2175 = vsub.f32 1.5, %v2174
    %v2176 = vmul.f32 %v2171, %v2175
    %vm2177 = vweird.f32 %v2127
    %vm2178 = vweird.f32 %v2171
    %vm2179 = vmor %vm2177, %vm2178
    %v2180 = vsel %vm2179, %v2171, %v2176
    %v2181 = vrsqrt.pop %v2128
    %v2182 = vmul.f32 %v2181, %v2128
    %v2183 = vmul.f32 %v2182, %v2181
    %v2184 = vmul.f32 0.5, %v2183
    %v2185 = vsub.f32 1.5, %v2184
    %v2186 = vmul.f32 %v2181, %v2185
    %vm2187 = vweird.f32 %v2128
    %vm2188 = vweird.f32 %v2181
    %vm2189 = vmor %vm2187, %vm2188
    %v2190 = vsel %vm2189, %v2181, %v2186
    %v2191 = vrsqrt.pop %v2129
    %v2192 = vmul.f32 %v2191, %v2129
    %v2193 = vmul.f32 %v2192, %v2191
    %v2194 = vmul.f32 0.5, %v2193
    %v2195 = vsub.f32 1.5, %v2194
    %v2196 = vmul.f32 %v2191, %v2195
    %vm2197 = vweird.f32 %v2129
    %vm2198 = vweird.f32 %v2191
    %vm2199 = vmor %vm2197, %vm2198
    %v2200 = vsel %vm2199, %v2191, %v2196
    %v2201 = vrsqrt.pop %v2130
    %v2202 = vmul.f32 %v2201, %v2130
    %v2203 = vmul.f32 %v2202, %v2201
    %v2204 = vmul.f32 0.5, %v2203
    %v2205 = vsub.f32 1.5, %v2204
    %v2206 = vmul.f32 %v2201, %v2205
    %vm2207 = vweird.f32 %v2130
    %vm2208 = vweird.f32 %v2201
    %vm2209 = vmor %vm2207, %vm2208
    %v2210 = vsel %vm2209, %v2201, %v2206
    %v2211 = vmul.f32 %v1867, %v2140
    %v2212 = vmul.f32 %v1868, %v2150
    %v2213 = vmul.f32 %v1869, %v2160
    %v2214 = vmul.f32 %v1870, %v2170
    %v2215 = vmul.f32 %v1871, %v2180
    %v2216 = vmul.f32 %v1872, %v2190
    %v2217 = vmul.f32 %v1873, %v2200
    %v2218 = vmul.f32 %v1874, %v2210
    %v2219 = vmul.f32 %v1875, %v2140
    %v2220 = vmul.f32 %v1876, %v2150
    %v2221 = vmul.f32 %v1877, %v2160
    %v2222 = vmul.f32 %v1878, %v2170
    %v2223 = vmul.f32 %v1879, %v2180
    %v2224 = vmul.f32 %v1880, %v2190
    %v2225 = vmul.f32 %v1881, %v2200
    %v2226 = vmul.f32 %v1882, %v2210
    %v2227 = vmul.f32 %v1883, %v2140
    %v2228 = vmul.f32 %v1884, %v2150
    %v2229 = vmul.f32 %v1885, %v2160
    %v2230 = vmul.f32 %v1886, %v2170
    %v2231 = vmul.f32 %v1887, %v2180
    %v2232 = vmul.f32 %v1888, %v2190
    %v2233 = vmul.f32 %v1889, %v2200
    %v2234 = vmul.f32 %v1890, %v2210
    %v2235 = vmul.f32 %v1891, %v2140
    %v2236 = vmul.f32 %v1892, %v2150
    %v2237 = vmul.f32 %v1893, %v2160
    %v2238 = vmul.f32 %v1894, %v2170
    %v2239 = vmul.f32 %v1895, %v2180
    %v2240 = vmul.f32 %v1896, %v2190
    %v2241 = vmul.f32 %v1897, %v2200
    %v2242 = vmul.f32 %v1898, %v2210
    %v2243 = vmul.f32 %v1899, %v2140
    %v2244 = vmul.f32 %v1900, %v2150
    %v2245 = vmul.f32 %v1901, %v2160
    %v2246 = vmul.f32 %v1902, %v2170
    %v2247 = vmul.f32 %v1903, %v2180
    %v2248 = vmul.f32 %v1904, %v2190
    %v2249 = vmul.f32 %v1905, %v2200
    %v2250 = vmul.f32 %v1906, %v2210
    %v2251 = vmul.f32 %v1907, %v2140
    %v2252 = vmul.f32 %v1908, %v2150
    %v2253 = vmul.f32 %v1909, %v2160
    %v2254 = vmul.f32 %v1910, %v2170
    %v2255 = vmul.f32 %v1911, %v2180
    %v2256 = vmul.f32 %v1912, %v2190
    %v2257 = vmul.f32 %v1913, %v2200
    %v2258 = vmul.f32 %v1914, %v2210
    %v2259 = vmul.f32 %v1915, %v2140
    %v2260 = vmul.f32 %v1916, %v2150
    %v2261 = vmul.f32 %v1917, %v2160
    %v2262 = vmul.f32 %v1918, %v2170
    %v2263 = vmul.f32 %v1919, %v2180
    %v2264 = vmul.f32 %v1920, %v2190
    %v2265 = vmul.f32 %v1921, %v2200
    %v2266 = vmul.f32 %v1922, %v2210
    %v2267 = vmul.f32 %v1923, %v2140
    %v2268 = vmul.f32 %v1924, %v2150
    %v2269 = vmul.f32 %v1925, %v2160
    %v2270 = vmul.f32 %v1926, %v2170
    %v2271 = vmul.f32 %v1927, %v2180
    %v2272 = vmul.f32 %v1928, %v2190
    %v2273 = vmul.f32 %v1929, %v2200
    %v2274 = vmul.f32 %v1930, %v2210
    %v2275 = vmul.f32 %v1931, %v2140
    %v2276 = vmul.f32 %v1932, %v2150
    %v2277 = vmul.f32 %v1933, %v2160
    %v2278 = vmul.f32 %v1934, %v2170
    %v2279 = vmul.f32 %v1935, %v2180
    %v2280 = vmul.f32 %v1936, %v2190
    %v2281 = vmul.f32 %v1937, %v2200
    %v2282 = vmul.f32 %v1938, %v2210
    %v2283 = vmul.f32 %v1939, %v2140
    %v2284 = vmul.f32 %v1940, %v2150
    %v2285 = vmul.f32 %v1941, %v2160
    %v2286 = vmul.f32 %v1942, %v2170
    %v2287 = vmul.f32 %v1943, %v2180
    %v2288 = vmul.f32 %v1944, %v2190
    %v2289 = vmul.f32 %v1945, %v2200
    %v2290 = vmul.f32 %v1946, %v2210
    %v2291 = vmul.f32 %v1947, %v2140
    %v2292 = vmul.f32 %v1948, %v2150
    %v2293 = vmul.f32 %v1949, %v2160
    %v2294 = vmul.f32 %v1950, %v2170
    %v2295 = vmul.f32 %v1951, %v2180
    %v2296 = vmul.f32 %v1952, %v2190
    %v2297 = vmul.f32 %v1953, %v2200
    %v2298 = vmul.f32 %v1954, %v2210
    %v2299 = vmul.f32 %v1955, %v2140
    %v2300 = vmul.f32 %v1956, %v2150
    %v2301 = vmul.f32 %v1957, %v2160
    %v2302 = vmul.f32 %v1958, %v2170
    %v2303 = vmul.f32 %v1959, %v2180
    %v2304 = vmul.f32 %v1960, %v2190
    %v2305 = vmul.f32 %v1961, %v2200
    %v2306 = vmul.f32 %v1962, %v2210
    %v2307 = vmul.f32 %v1963, %v2140
    %v2308 = vmul.f32 %v1964, %v2150
    %v2309 = vmul.f32 %v1965, %v2160
    %v2310 = vmul.f32 %v1966, %v2170
    %v2311 = vmul.f32 %v1967, %v2180
    %v2312 = vmul.f32 %v1968, %v2190
    %v2313 = vmul.f32 %v1969, %v2200
    %v2314 = vmul.f32 %v1970, %v2210
    %v2315 = vmul.f32 %v1971, %v2140
    %v2316 = vmul.f32 %v1972, %v2150
    %v2317 = vmul.f32 %v1973, %v2160
    %v2318 = vmul.f32 %v1974, %v2170
    %v2319 = vmul.f32 %v1975, %v2180
    %v2320 = vmul.f32 %v1976, %v2190
    %v2321 = vmul.f32 %v1977, %v2200
    %v2322 = vmul.f32 %v1978, %v2210
    %v2323 = vmul.f32 %v1979, %v2140
    %v2324 = vmul.f32 %v1980, %v2150
    %v2325 = vmul.f32 %v1981, %v2160
    %v2326 = vmul.f32 %v1982, %v2170
    %v2327 = vmul.f32 %v1983, %v2180
    %v2328 = vmul.f32 %v1984, %v2190
    %v2329 = vmul.f32 %v1985, %v2200
    %v2330 = vmul.f32 %v1986, %v2210
    %v2331 = vmul.f32 %v1987, %v2140
    %v2332 = vmul.f32 %v1988, %v2150
    %v2333 = vmul.f32 %v1989, %v2160
    %v2334 = vmul.f32 %v1990, %v2170
    %v2335 = vmul.f32 %v1991, %v2180
    %v2336 = vmul.f32 %v1992, %v2190
    %v2337 = vmul.f32 %v1993, %v2200
    %v2338 = vmul.f32 %v1994, %v2210
    %v2339 = vmul.f32 %v1995, %v2140
    %v2340 = vmul.f32 %v1996, %v2150
    %v2341 = vmul.f32 %v1997, %v2160
    %v2342 = vmul.f32 %v1998, %v2170
    %v2343 = vmul.f32 %v1999, %v2180
    %v2344 = vmul.f32 %v2000, %v2190
    %v2345 = vmul.f32 %v2001, %v2200
    %v2346 = vmul.f32 %v2002, %v2210
    %v2347 = vmul.f32 %v2003, %v2140
    %v2348 = vmul.f32 %v2004, %v2150
    %v2349 = vmul.f32 %v2005, %v2160
    %v2350 = vmul.f32 %v2006, %v2170
    %v2351 = vmul.f32 %v2007, %v2180
    %v2352 = vmul.f32 %v2008, %v2190
    %v2353 = vmul.f32 %v2009, %v2200
    %v2354 = vmul.f32 %v2010, %v2210
    %v2355 = vmul.f32 %v2011, %v2140
    %v2356 = vmul.f32 %v2012, %v2150
    %v2357 = vmul.f32 %v2013, %v2160
    %v2358 = vmul.f32 %v2014, %v2170
    %v2359 = vmul.f32 %v2015, %v2180
    %v2360 = vmul.f32 %v2016, %v2190
    %v2361 = vmul.f32 %v2017, %v2200
    %v2362 = vmul.f32 %v2018, %v2210
    %v2363 = vmul.f32 %v2019, %v2140
    %v2364 = vmul.f32 %v2020, %v2150
    %v2365 = vmul.f32 %v2021, %v2160
    %v2366 = vmul.f32 %v2022, %v2170
    %v2367 = vmul.f32 %v2023, %v2180
    %v2368 = vmul.f32 %v2024, %v2190
    %v2369 = vmul.f32 %v2025, %v2200
    %v2370 = vmul.f32 %v2026, %v2210
    %v2371 = vmul.f32 %v2027, %v2140
    %v2372 = vmul.f32 %v2028, %v2150
    %v2373 = vmul.f32 %v2029, %v2160
    %v2374 = vmul.f32 %v2030, %v2170
    %v2375 = vmul.f32 %v2031, %v2180
    %v2376 = vmul.f32 %v2032, %v2190
    %v2377 = vmul.f32 %v2033, %v2200
    %v2378 = vmul.f32 %v2034, %v2210
    %v2379 = vmul.f32 %v2035, %v2140
    %v2380 = vmul.f32 %v2036, %v2150
    %v2381 = vmul.f32 %v2037, %v2160
    %v2382 = vmul.f32 %v2038, %v2170
    %v2383 = vmul.f32 %v2039, %v2180
    %v2384 = vmul.f32 %v2040, %v2190
    %v2385 = vmul.f32 %v2041, %v2200
    %v2386 = vmul.f32 %v2042, %v2210
    %v2387 = vmul.f32 %v2043, %v2140
    %v2388 = vmul.f32 %v2044, %v2150
    %v2389 = vmul.f32 %v2045, %v2160
    %v2390 = vmul.f32 %v2046, %v2170
    %v2391 = vmul.f32 %v2047, %v2180
    %v2392 = vmul.f32 %v2048, %v2190
    %v2393 = vmul.f32 %v2049, %v2200
    %v2394 = vmul.f32 %v2050, %v2210
    %v2395 = vmul.f32 %v2051, %v2140
    %v2396 = vmul.f32 %v2052, %v2150
    %v2397 = vmul.f32 %v2053, %v2160
    %v2398 = vmul.f32 %v2054, %v2170
    %v2399 = vmul.f32 %v2055, %v2180
    %v2400 = vmul.f32 %v2056, %v2190
    %v2401 = vmul.f32 %v2057, %v2200
    %v2402 = vmul.f32 %v2058, %v2210
    %v2403 = vmul.f32 %v2059, %v2140
    %v2404 = vmul.f32 %v2060, %v2150
    %v2405 = vmul.f32 %v2061, %v2160
    %v2406 = vmul.f32 %v2062, %v2170
    %v2407 = vmul.f32 %v2063, %v2180
    %v2408 = vmul.f32 %v2064, %v2190
    %v2409 = vmul.f32 %v2065, %v2200
    %v2410 = vmul.f32 %v2066, %v2210
    %v2411 = vmul.f32 %v2067, %v2140
    %v2412 = vmul.f32 %v2068, %v2150
    %v2413 = vmul.f32 %v2069, %v2160
    %v2414 = vmul.f32 %v2070, %v2170
    %v2415 = vmul.f32 %v2071, %v2180
    %v2416 = vmul.f32 %v2072, %v2190
    %v2417 = vmul.f32 %v2073, %v2200
    %v2418 = vmul.f32 %v2074, %v2210
    %v2419 = vmul.f32 %v2075, %v2140
    %v2420 = vmul.f32 %v2076, %v2150
    %v2421 = vmul.f32 %v2077, %v2160
    %v2422 = vmul.f32 %v2078, %v2170
    %v2423 = vmul.f32 %v2079, %v2180
    %v2424 = vmul.f32 %v2080, %v2190
    %v2425 = vmul.f32 %v2081, %v2200
    %v2426 = vmul.f32 %v2082, %v2210
    %v2427 = vmul.f32 %v2083, %v2140
    %v2428 = vmul.f32 %v2084, %v2150
    %v2429 = vmul.f32 %v2085, %v2160
    %v2430 = vmul.f32 %v2086, %v2170
    %v2431 = vmul.f32 %v2087, %v2180
    %v2432 = vmul.f32 %v2088, %v2190
    %v2433 = vmul.f32 %v2089, %v2200
    %v2434 = vmul.f32 %v2090, %v2210
    %v2435 = vmul.f32 %v2091, %v2140
    %v2436 = vmul.f32 %v2092, %v2150
    %v2437 = vmul.f32 %v2093, %v2160
    %v2438 = vmul.f32 %v2094, %v2170
    %v2439 = vmul.f32 %v2095, %v2180
    %v2440 = vmul.f32 %v2096, %v2190
    %v2441 = vmul.f32 %v2097, %v2200
    %v2442 = vmul.f32 %v2098, %v2210
    %v2443 = vmul.f32 %v2099, %v2140
    %v2444 = vmul.f32 %v2100, %v2150
    %v2445 = vmul.f32 %v2101, %v2160
    %v2446 = vmul.f32 %v2102, %v2170
    %v2447 = vmul.f32 %v2103, %v2180
    %v2448 = vmul.f32 %v2104, %v2190
    %v2449 = vmul.f32 %v2105, %v2200
    %v2450 = vmul.f32 %v2106, %v2210
    %v2451 = vmul.f32 %v2107, %v2140
    %v2452 = vmul.f32 %v2108, %v2150
    %v2453 = vmul.f32 %v2109, %v2160
    %v2454 = vmul.f32 %v2110, %v2170
    %v2455 = vmul.f32 %v2111, %v2180
    %v2456 = vmul.f32 %v2112, %v2190
    %v2457 = vmul.f32 %v2113, %v2200
    %v2458 = vmul.f32 %v2114, %v2210
    %v2459 = vmul.f32 %v2115, %v2140
    %v2460 = vmul.f32 %v2116, %v2150
    %v2461 = vmul.f32 %v2117, %v2160
    %v2462 = vmul.f32 %v2118, %v2170
    %v2463 = vmul.f32 %v2119, %v2180
    %v2464 = vmul.f32 %v2120, %v2190
    %v2465 = vmul.f32 %v2121, %v2200
    %v2466 = vmul.f32 %v2122, %v2210
    %v2467 = vld [vmem:[%s2] sm:$0xff]
    %v2469 = vperm.slane %v2467, 0
    %v2470 = vperm.slane %v2467, 1
    %v2471 = vperm.slane %v2467, 2
    %v2472 = vperm.slane %v2467, 3
    %v2473 = vperm.slane %v2467, 4
    %v2474 = vperm.slane %v2467, 5
    %v2475 = vperm.slane %v2467, 6
    %v2476 = vperm.slane %v2467, 7
    %v2485 = vmul.f32 %v2211, %v2469
    %v2486 = vmul.f32 %v2212, %v2470
    %v2487 = vmul.f32 %v2213, %v2471
    %v2488 = vmul.f32 %v2214, %v2472
    %v2489 = vmul.f32 %v2215, %v2473
    %v2490 = vmul.f32 %v2216, %v2474
    %v2491 = vmul.f32 %v2217, %v2475
    %v2492 = vmul.f32 %v2218, %v2476
    %v2493 = vmul.f32 %v2219, %v2469
    %v2494 = vmul.f32 %v2220, %v2470
    %v2495 = vmul.f32 %v2221, %v2471
    %v2496 = vmul.f32 %v2222, %v2472
    %v2497 = vmul.f32 %v2223, %v2473
    %v2498 = vmul.f32 %v2224, %v2474
    %v2499 = vmul.f32 %v2225, %v2475
    %v2500 = vmul.f32 %v2226, %v2476
    %v2501 = vmul.f32 %v2227, %v2469
    %v2502 = vmul.f32 %v2228, %v2470
    %v2503 = vmul.f32 %v2229, %v2471
    %v2504 = vmul.f32 %v2230, %v2472
    %v2505 = vmul.f32 %v2231, %v2473
    %v2506 = vmul.f32 %v2232, %v2474
    %v2507 = vmul.f32 %v2233, %v2475
    %v2508 = vmul.f32 %v2234, %v2476
    %v2509 = vmul.f32 %v2235, %v2469
    %v2510 = vmul.f32 %v2236, %v2470
    %v2511 = vmul.f32 %v2237, %v2471
    %v2512 = vmul.f32 %v2238, %v2472
    %v2513 = vmul.f32 %v2239, %v2473
    %v2514 = vmul.f32 %v2240, %v2474
    %v2515 = vmul.f32 %v2241, %v2475
    %v2516 = vmul.f32 %v2242, %v2476
    %v2517 = vmul.f32 %v2243, %v2469
    %v2518 = vmul.f32 %v2244, %v2470
    %v2519 = vmul.f32 %v2245, %v2471
    %v2520 = vmul.f32 %v2246, %v2472
    %v2521 = vmul.f32 %v2247, %v2473
    %v2522 = vmul.f32 %v2248, %v2474
    %v2523 = vmul.f32 %v2249, %v2475
    %v2524 = vmul.f32 %v2250, %v2476
    %v2525 = vmul.f32 %v2251, %v2469
    %v2526 = vmul.f32 %v2252, %v2470
    %v2527 = vmul.f32 %v2253, %v2471
    %v2528 = vmul.f32 %v2254, %v2472
    %v2529 = vmul.f32 %v2255, %v2473
    %v2530 = vmul.f32 %v2256, %v2474
    %v2531 = vmul.f32 %v2257, %v2475
    %v2532 = vmul.f32 %v2258, %v2476
    %v2533 = vmul.f32 %v2259, %v2469
    %v2534 = vmul.f32 %v2260, %v2470
    %v2535 = vmul.f32 %v2261, %v2471
    %v2536 = vmul.f32 %v2262, %v2472
    %v2537 = vmul.f32 %v2263, %v2473
    %v2538 = vmul.f32 %v2264, %v2474
    %v2539 = vmul.f32 %v2265, %v2475
    %v2540 = vmul.f32 %v2266, %v2476
    %v2541 = vmul.f32 %v2267, %v2469
    %v2542 = vmul.f32 %v2268, %v2470
    %v2543 = vmul.f32 %v2269, %v2471
    %v2544 = vmul.f32 %v2270, %v2472
    %v2545 = vmul.f32 %v2271, %v2473
    %v2546 = vmul.f32 %v2272, %v2474
    %v2547 = vmul.f32 %v2273, %v2475
    %v2548 = vmul.f32 %v2274, %v2476
    %v2549 = vmul.f32 %v2275, %v2469
    %v2550 = vmul.f32 %v2276, %v2470
    %v2551 = vmul.f32 %v2277, %v2471
    %v2552 = vmul.f32 %v2278, %v2472
    %v2553 = vmul.f32 %v2279, %v2473
    %v2554 = vmul.f32 %v2280, %v2474
    %v2555 = vmul.f32 %v2281, %v2475
    %v2556 = vmul.f32 %v2282, %v2476
    %v2557 = vmul.f32 %v2283, %v2469
    %v2558 = vmul.f32 %v2284, %v2470
    %v2559 = vmul.f32 %v2285, %v2471
    %v2560 = vmul.f32 %v2286, %v2472
    %v2561 = vmul.f32 %v2287, %v2473
    %v2562 = vmul.f32 %v2288, %v2474
    %v2563 = vmul.f32 %v2289, %v2475
    %v2564 = vmul.f32 %v2290, %v2476
    %v2565 = vmul.f32 %v2291, %v2469
    %v2566 = vmul.f32 %v2292, %v2470
    %v2567 = vmul.f32 %v2293, %v2471
    %v2568 = vmul.f32 %v2294, %v2472
    %v2569 = vmul.f32 %v2295, %v2473
    %v2570 = vmul.f32 %v2296, %v2474
    %v2571 = vmul.f32 %v2297, %v2475
    %v2572 = vmul.f32 %v2298, %v2476
    %v2573 = vmul.f32 %v2299, %v2469
    %v2574 = vmul.f32 %v2300, %v2470
    %v2575 = vmul.f32 %v2301, %v2471
    %v2576 = vmul.f32 %v2302, %v2472
    %v2577 = vmul.f32 %v2303, %v2473
    %v2578 = vmul.f32 %v2304, %v2474
    %v2579 = vmul.f32 %v2305, %v2475
    %v2580 = vmul.f32 %v2306, %v2476
    %v2581 = vmul.f32 %v2307, %v2469
    %v2582 = vmul.f32 %v2308, %v2470
    %v2583 = vmul.f32 %v2309, %v2471
    %v2584 = vmul.f32 %v2310, %v2472
    %v2585 = vmul.f32 %v2311, %v2473
    %v2586 = vmul.f32 %v2312, %v2474
    %v2587 = vmul.f32 %v2313, %v2475
    %v2588 = vmul.f32 %v2314, %v2476
    %v2589 = vmul.f32 %v2315, %v2469
    %v2590 = vmul.f32 %v2316, %v2470
    %v2591 = vmul.f32 %v2317, %v2471
    %v2592 = vmul.f32 %v2318, %v2472
    %v2593 = vmul.f32 %v2319, %v2473
    %v2594 = vmul.f32 %v2320, %v2474
    %v2595 = vmul.f32 %v2321, %v2475
    %v2596 = vmul.f32 %v2322, %v2476
    %v2597 = vmul.f32 %v2323, %v2469
    %v2598 = vmul.f32 %v2324, %v2470
    %v2599 = vmul.f32 %v2325, %v2471
    %v2600 = vmul.f32 %v2326, %v2472
    %v2601 = vmul.f32 %v2327, %v2473
    %v2602 = vmul.f32 %v2328, %v2474
    %v2603 = vmul.f32 %v2329, %v2475
    %v2604 = vmul.f32 %v2330, %v2476
    %v2605 = vmul.f32 %v2331, %v2469
    %v2606 = vmul.f32 %v2332, %v2470
    %v2607 = vmul.f32 %v2333, %v2471
    %v2608 = vmul.f32 %v2334, %v2472
    %v2609 = vmul.f32 %v2335, %v2473
    %v2610 = vmul.f32 %v2336, %v2474
    %v2611 = vmul.f32 %v2337, %v2475
    %v2612 = vmul.f32 %v2338, %v2476
    %v2613 = vmul.f32 %v2339, %v2469
    %v2614 = vmul.f32 %v2340, %v2470
    %v2615 = vmul.f32 %v2341, %v2471
    %v2616 = vmul.f32 %v2342, %v2472
    %v2617 = vmul.f32 %v2343, %v2473
    %v2618 = vmul.f32 %v2344, %v2474
    %v2619 = vmul.f32 %v2345, %v2475
    %v2620 = vmul.f32 %v2346, %v2476
    %v2621 = vmul.f32 %v2347, %v2469
    %v2622 = vmul.f32 %v2348, %v2470
    %v2623 = vmul.f32 %v2349, %v2471
    %v2624 = vmul.f32 %v2350, %v2472
    %v2625 = vmul.f32 %v2351, %v2473
    %v2626 = vmul.f32 %v2352, %v2474
    %v2627 = vmul.f32 %v2353, %v2475
    %v2628 = vmul.f32 %v2354, %v2476
    %v2629 = vmul.f32 %v2355, %v2469
    %v2630 = vmul.f32 %v2356, %v2470
    %v2631 = vmul.f32 %v2357, %v2471
    %v2632 = vmul.f32 %v2358, %v2472
    %v2633 = vmul.f32 %v2359, %v2473
    %v2634 = vmul.f32 %v2360, %v2474
    %v2635 = vmul.f32 %v2361, %v2475
    %v2636 = vmul.f32 %v2362, %v2476
    %v2637 = vmul.f32 %v2363, %v2469
    %v2638 = vmul.f32 %v2364, %v2470
    %v2639 = vmul.f32 %v2365, %v2471
    %v2640 = vmul.f32 %v2366, %v2472
    %v2641 = vmul.f32 %v2367, %v2473
    %v2642 = vmul.f32 %v2368, %v2474
    %v2643 = vmul.f32 %v2369, %v2475
    %v2644 = vmul.f32 %v2370, %v2476
    %v2645 = vmul.f32 %v2371, %v2469
    %v2646 = vmul.f32 %v2372, %v2470
    %v2647 = vmul.f32 %v2373, %v2471
    %v2648 = vmul.f32 %v2374, %v2472
    %v2649 = vmul.f32 %v2375, %v2473
    %v2650 = vmul.f32 %v2376, %v2474
    %v2651 = vmul.f32 %v2377, %v2475
    %v2652 = vmul.f32 %v2378, %v2476
    %v2653 = vmul.f32 %v2379, %v2469
    %v2654 = vmul.f32 %v2380, %v2470
    %v2655 = vmul.f32 %v2381, %v2471
    %v2656 = vmul.f32 %v2382, %v2472
    %v2657 = vmul.f32 %v2383, %v2473
    %v2658 = vmul.f32 %v2384, %v2474
    %v2659 = vmul.f32 %v2385, %v2475
    %v2660 = vmul.f32 %v2386, %v2476
    %v2661 = vmul.f32 %v2387, %v2469
    %v2662 = vmul.f32 %v2388, %v2470
    %v2663 = vmul.f32 %v2389, %v2471
    %v2664 = vmul.f32 %v2390, %v2472
    %v2665 = vmul.f32 %v2391, %v2473
    %v2666 = vmul.f32 %v2392, %v2474
    %v2667 = vmul.f32 %v2393, %v2475
    %v2668 = vmul.f32 %v2394, %v2476
    %v2669 = vmul.f32 %v2395, %v2469
    %v2670 = vmul.f32 %v2396, %v2470
    %v2671 = vmul.f32 %v2397, %v2471
    %v2672 = vmul.f32 %v2398, %v2472
    %v2673 = vmul.f32 %v2399, %v2473
    %v2674 = vmul.f32 %v2400, %v2474
    %v2675 = vmul.f32 %v2401, %v2475
    %v2676 = vmul.f32 %v2402, %v2476
    %v2677 = vmul.f32 %v2403, %v2469
    %v2678 = vmul.f32 %v2404, %v2470
    %v2679 = vmul.f32 %v2405, %v2471
    %v2680 = vmul.f32 %v2406, %v2472
    %v2681 = vmul.f32 %v2407, %v2473
    %v2682 = vmul.f32 %v2408, %v2474
    %v2683 = vmul.f32 %v2409, %v2475
    %v2684 = vmul.f32 %v2410, %v2476
    %v2685 = vmul.f32 %v2411, %v2469
    %v2686 = vmul.f32 %v2412, %v2470
    %v2687 = vmul.f32 %v2413, %v2471
    %v2688 = vmul.f32 %v2414, %v2472
    %v2689 = vmul.f32 %v2415, %v2473
    %v2690 = vmul.f32 %v2416, %v2474
    %v2691 = vmul.f32 %v2417, %v2475
    %v2692 = vmul.f32 %v2418, %v2476
    %v2693 = vmul.f32 %v2419, %v2469
    %v2694 = vmul.f32 %v2420, %v2470
    %v2695 = vmul.f32 %v2421, %v2471
    %v2696 = vmul.f32 %v2422, %v2472
    %v2697 = vmul.f32 %v2423, %v2473
    %v2698 = vmul.f32 %v2424, %v2474
    %v2699 = vmul.f32 %v2425, %v2475
    %v2700 = vmul.f32 %v2426, %v2476
    %v2701 = vmul.f32 %v2427, %v2469
    %v2702 = vmul.f32 %v2428, %v2470
    %v2703 = vmul.f32 %v2429, %v2471
    %v2704 = vmul.f32 %v2430, %v2472
    %v2705 = vmul.f32 %v2431, %v2473
    %v2706 = vmul.f32 %v2432, %v2474
    %v2707 = vmul.f32 %v2433, %v2475
    %v2708 = vmul.f32 %v2434, %v2476
    %v2709 = vmul.f32 %v2435, %v2469
    %v2710 = vmul.f32 %v2436, %v2470
    %v2711 = vmul.f32 %v2437, %v2471
    %v2712 = vmul.f32 %v2438, %v2472
    %v2713 = vmul.f32 %v2439, %v2473
    %v2714 = vmul.f32 %v2440, %v2474
    %v2715 = vmul.f32 %v2441, %v2475
    %v2716 = vmul.f32 %v2442, %v2476
    %v2717 = vmul.f32 %v2443, %v2469
    %v2718 = vmul.f32 %v2444, %v2470
    %v2719 = vmul.f32 %v2445, %v2471
    %v2720 = vmul.f32 %v2446, %v2472
    %v2721 = vmul.f32 %v2447, %v2473
    %v2722 = vmul.f32 %v2448, %v2474
    %v2723 = vmul.f32 %v2449, %v2475
    %v2724 = vmul.f32 %v2450, %v2476
    %v2725 = vmul.f32 %v2451, %v2469
    %v2726 = vmul.f32 %v2452, %v2470
    %v2727 = vmul.f32 %v2453, %v2471
    %v2728 = vmul.f32 %v2454, %v2472
    %v2729 = vmul.f32 %v2455, %v2473
    %v2730 = vmul.f32 %v2456, %v2474
    %v2731 = vmul.f32 %v2457, %v2475
    %v2732 = vmul.f32 %v2458, %v2476
    %v2733 = vmul.f32 %v2459, %v2469
    %v2734 = vmul.f32 %v2460, %v2470
    %v2735 = vmul.f32 %v2461, %v2471
    %v2736 = vmul.f32 %v2462, %v2472
    %v2737 = vmul.f32 %v2463, %v2473
    %v2738 = vmul.f32 %v2464, %v2474
    %v2739 = vmul.f32 %v2465, %v2475
    %v2740 = vmul.f32 %v2466, %v2476
    %v2741 = vld [vmem:[%s3] sm:$0xff]
    %v2743 = vperm.slane %v2741, 0
    %v2744 = vperm.slane %v2741, 1
    %v2745 = vperm.slane %v2741, 2
    %v2746 = vperm.slane %v2741, 3
    %v2747 = vperm.slane %v2741, 4
    %v2748 = vperm.slane %v2741, 5
    %v2749 = vperm.slane %v2741, 6
    %v2750 = vperm.slane %v2741, 7
    %v2759 = vadd.f32 %v2485, %v2743
    %v2760 = vadd.f32 %v2486, %v2744
    %v2761 = vadd.f32 %v2487, %v2745
    %v2762 = vadd.f32 %v2488, %v2746
    %v2763 = vadd.f32 %v2489, %v2747
    %v2764 = vadd.f32 %v2490, %v2748
    %v2765 = vadd.f32 %v2491, %v2749
    %v2766 = vadd.f32 %v2492, %v2750
    %v2767 = vadd.f32 %v2493, %v2743
    %v2768 = vadd.f32 %v2494, %v2744
    %v2769 = vadd.f32 %v2495, %v2745
    %v2770 = vadd.f32 %v2496, %v2746
    %v2771 = vadd.f32 %v2497, %v2747
    %v2772 = vadd.f32 %v2498, %v2748
    %v2773 = vadd.f32 %v2499, %v2749
    %v2774 = vadd.f32 %v2500, %v2750
    %v2775 = vadd.f32 %v2501, %v2743
    %v2776 = vadd.f32 %v2502, %v2744
    %v2777 = vadd.f32 %v2503, %v2745
    %v2778 = vadd.f32 %v2504, %v2746
    %v2779 = vadd.f32 %v2505, %v2747
    %v2780 = vadd.f32 %v2506, %v2748
    %v2781 = vadd.f32 %v2507, %v2749
    %v2782 = vadd.f32 %v2508, %v2750
    %v2783 = vadd.f32 %v2509, %v2743
    %v2784 = vadd.f32 %v2510, %v2744
    %v2785 = vadd.f32 %v2511, %v2745
    %v2786 = vadd.f32 %v2512, %v2746
    %v2787 = vadd.f32 %v2513, %v2747
    %v2788 = vadd.f32 %v2514, %v2748
    %v2789 = vadd.f32 %v2515, %v2749
    %v2790 = vadd.f32 %v2516, %v2750
    %v2791 = vadd.f32 %v2517, %v2743
    %v2792 = vadd.f32 %v2518, %v2744
    %v2793 = vadd.f32 %v2519, %v2745
    %v2794 = vadd.f32 %v2520, %v2746
    %v2795 = vadd.f32 %v2521, %v2747
    %v2796 = vadd.f32 %v2522, %v2748
    %v2797 = vadd.f32 %v2523, %v2749
    %v2798 = vadd.f32 %v2524, %v2750
    %v2799 = vadd.f32 %v2525, %v2743
    %v2800 = vadd.f32 %v2526, %v2744
    %v2801 = vadd.f32 %v2527, %v2745
    %v2802 = vadd.f32 %v2528, %v2746
    %v2803 = vadd.f32 %v2529, %v2747
    %v2804 = vadd.f32 %v2530, %v2748
    %v2805 = vadd.f32 %v2531, %v2749
    %v2806 = vadd.f32 %v2532, %v2750
    %v2807 = vadd.f32 %v2533, %v2743
    %v2808 = vadd.f32 %v2534, %v2744
    %v2809 = vadd.f32 %v2535, %v2745
    %v2810 = vadd.f32 %v2536, %v2746
    %v2811 = vadd.f32 %v2537, %v2747
    %v2812 = vadd.f32 %v2538, %v2748
    %v2813 = vadd.f32 %v2539, %v2749
    %v2814 = vadd.f32 %v2540, %v2750
    %v2815 = vadd.f32 %v2541, %v2743
    %v2816 = vadd.f32 %v2542, %v2744
    %v2817 = vadd.f32 %v2543, %v2745
    %v2818 = vadd.f32 %v2544, %v2746
    %v2819 = vadd.f32 %v2545, %v2747
    %v2820 = vadd.f32 %v2546, %v2748
    %v2821 = vadd.f32 %v2547, %v2749
    %v2822 = vadd.f32 %v2548, %v2750
    %v2823 = vadd.f32 %v2549, %v2743
    %v2824 = vadd.f32 %v2550, %v2744
    %v2825 = vadd.f32 %v2551, %v2745
    %v2826 = vadd.f32 %v2552, %v2746
    %v2827 = vadd.f32 %v2553, %v2747
    %v2828 = vadd.f32 %v2554, %v2748
    %v2829 = vadd.f32 %v2555, %v2749
    %v2830 = vadd.f32 %v2556, %v2750
    %v2831 = vadd.f32 %v2557, %v2743
    %v2832 = vadd.f32 %v2558, %v2744
    %v2833 = vadd.f32 %v2559, %v2745
    %v2834 = vadd.f32 %v2560, %v2746
    %v2835 = vadd.f32 %v2561, %v2747
    %v2836 = vadd.f32 %v2562, %v2748
    %v2837 = vadd.f32 %v2563, %v2749
    %v2838 = vadd.f32 %v2564, %v2750
    %v2839 = vadd.f32 %v2565, %v2743
    %v2840 = vadd.f32 %v2566, %v2744
    %v2841 = vadd.f32 %v2567, %v2745
    %v2842 = vadd.f32 %v2568, %v2746
    %v2843 = vadd.f32 %v2569, %v2747
    %v2844 = vadd.f32 %v2570, %v2748
    %v2845 = vadd.f32 %v2571, %v2749
    %v2846 = vadd.f32 %v2572, %v2750
    %v2847 = vadd.f32 %v2573, %v2743
    %v2848 = vadd.f32 %v2574, %v2744
    %v2849 = vadd.f32 %v2575, %v2745
    %v2850 = vadd.f32 %v2576, %v2746
    %v2851 = vadd.f32 %v2577, %v2747
    %v2852 = vadd.f32 %v2578, %v2748
    %v2853 = vadd.f32 %v2579, %v2749
    %v2854 = vadd.f32 %v2580, %v2750
    %v2855 = vadd.f32 %v2581, %v2743
    %v2856 = vadd.f32 %v2582, %v2744
    %v2857 = vadd.f32 %v2583, %v2745
    %v2858 = vadd.f32 %v2584, %v2746
    %v2859 = vadd.f32 %v2585, %v2747
    %v2860 = vadd.f32 %v2586, %v2748
    %v2861 = vadd.f32 %v2587, %v2749
    %v2862 = vadd.f32 %v2588, %v2750
    %v2863 = vadd.f32 %v2589, %v2743
    %v2864 = vadd.f32 %v2590, %v2744
    %v2865 = vadd.f32 %v2591, %v2745
    %v2866 = vadd.f32 %v2592, %v2746
    %v2867 = vadd.f32 %v2593, %v2747
    %v2868 = vadd.f32 %v2594, %v2748
    %v2869 = vadd.f32 %v2595, %v2749
    %v2870 = vadd.f32 %v2596, %v2750
    %v2871 = vadd.f32 %v2597, %v2743
    %v2872 = vadd.f32 %v2598, %v2744
    %v2873 = vadd.f32 %v2599, %v2745
    %v2874 = vadd.f32 %v2600, %v2746
    %v2875 = vadd.f32 %v2601, %v2747
    %v2876 = vadd.f32 %v2602, %v2748
    %v2877 = vadd.f32 %v2603, %v2749
    %v2878 = vadd.f32 %v2604, %v2750
    %v2879 = vadd.f32 %v2605, %v2743
    %v2880 = vadd.f32 %v2606, %v2744
    %v2881 = vadd.f32 %v2607, %v2745
    %v2882 = vadd.f32 %v2608, %v2746
    %v2883 = vadd.f32 %v2609, %v2747
    %v2884 = vadd.f32 %v2610, %v2748
    %v2885 = vadd.f32 %v2611, %v2749
    %v2886 = vadd.f32 %v2612, %v2750
    %v2887 = vadd.f32 %v2613, %v2743
    %v2888 = vadd.f32 %v2614, %v2744
    %v2889 = vadd.f32 %v2615, %v2745
    %v2890 = vadd.f32 %v2616, %v2746
    %v2891 = vadd.f32 %v2617, %v2747
    %v2892 = vadd.f32 %v2618, %v2748
    %v2893 = vadd.f32 %v2619, %v2749
    %v2894 = vadd.f32 %v2620, %v2750
    %v2895 = vadd.f32 %v2621, %v2743
    %v2896 = vadd.f32 %v2622, %v2744
    %v2897 = vadd.f32 %v2623, %v2745
    %v2898 = vadd.f32 %v2624, %v2746
    %v2899 = vadd.f32 %v2625, %v2747
    %v2900 = vadd.f32 %v2626, %v2748
    %v2901 = vadd.f32 %v2627, %v2749
    %v2902 = vadd.f32 %v2628, %v2750
    %v2903 = vadd.f32 %v2629, %v2743
    %v2904 = vadd.f32 %v2630, %v2744
    %v2905 = vadd.f32 %v2631, %v2745
    %v2906 = vadd.f32 %v2632, %v2746
    %v2907 = vadd.f32 %v2633, %v2747
    %v2908 = vadd.f32 %v2634, %v2748
    %v2909 = vadd.f32 %v2635, %v2749
    %v2910 = vadd.f32 %v2636, %v2750
    %v2911 = vadd.f32 %v2637, %v2743
    %v2912 = vadd.f32 %v2638, %v2744
    %v2913 = vadd.f32 %v2639, %v2745
    %v2914 = vadd.f32 %v2640, %v2746
    %v2915 = vadd.f32 %v2641, %v2747
    %v2916 = vadd.f32 %v2642, %v2748
    %v2917 = vadd.f32 %v2643, %v2749
    %v2918 = vadd.f32 %v2644, %v2750
    %v2919 = vadd.f32 %v2645, %v2743
    %v2920 = vadd.f32 %v2646, %v2744
    %v2921 = vadd.f32 %v2647, %v2745
    %v2922 = vadd.f32 %v2648, %v2746
    %v2923 = vadd.f32 %v2649, %v2747
    %v2924 = vadd.f32 %v2650, %v2748
    %v2925 = vadd.f32 %v2651, %v2749
    %v2926 = vadd.f32 %v2652, %v2750
    %v2927 = vadd.f32 %v2653, %v2743
    %v2928 = vadd.f32 %v2654, %v2744
    %v2929 = vadd.f32 %v2655, %v2745
    %v2930 = vadd.f32 %v2656, %v2746
    %v2931 = vadd.f32 %v2657, %v2747
    %v2932 = vadd.f32 %v2658, %v2748
    %v2933 = vadd.f32 %v2659, %v2749
    %v2934 = vadd.f32 %v2660, %v2750
    %v2935 = vadd.f32 %v2661, %v2743
    %v2936 = vadd.f32 %v2662, %v2744
    %v2937 = vadd.f32 %v2663, %v2745
    %v2938 = vadd.f32 %v2664, %v2746
    %v2939 = vadd.f32 %v2665, %v2747
    %v2940 = vadd.f32 %v2666, %v2748
    %v2941 = vadd.f32 %v2667, %v2749
    %v2942 = vadd.f32 %v2668, %v2750
    %v2943 = vadd.f32 %v2669, %v2743
    %v2944 = vadd.f32 %v2670, %v2744
    %v2945 = vadd.f32 %v2671, %v2745
    %v2946 = vadd.f32 %v2672, %v2746
    %v2947 = vadd.f32 %v2673, %v2747
    %v2948 = vadd.f32 %v2674, %v2748
    %v2949 = vadd.f32 %v2675, %v2749
    %v2950 = vadd.f32 %v2676, %v2750
    %v2951 = vadd.f32 %v2677, %v2743
    %v2952 = vadd.f32 %v2678, %v2744
    %v2953 = vadd.f32 %v2679, %v2745
    %v2954 = vadd.f32 %v2680, %v2746
    %v2955 = vadd.f32 %v2681, %v2747
    %v2956 = vadd.f32 %v2682, %v2748
    %v2957 = vadd.f32 %v2683, %v2749
    %v2958 = vadd.f32 %v2684, %v2750
    %v2959 = vadd.f32 %v2685, %v2743
    %v2960 = vadd.f32 %v2686, %v2744
    %v2961 = vadd.f32 %v2687, %v2745
    %v2962 = vadd.f32 %v2688, %v2746
    %v2963 = vadd.f32 %v2689, %v2747
    %v2964 = vadd.f32 %v2690, %v2748
    %v2965 = vadd.f32 %v2691, %v2749
    %v2966 = vadd.f32 %v2692, %v2750
    %v2967 = vadd.f32 %v2693, %v2743
    %v2968 = vadd.f32 %v2694, %v2744
    %v2969 = vadd.f32 %v2695, %v2745
    %v2970 = vadd.f32 %v2696, %v2746
    %v2971 = vadd.f32 %v2697, %v2747
    %v2972 = vadd.f32 %v2698, %v2748
    %v2973 = vadd.f32 %v2699, %v2749
    %v2974 = vadd.f32 %v2700, %v2750
    %v2975 = vadd.f32 %v2701, %v2743
    %v2976 = vadd.f32 %v2702, %v2744
    %v2977 = vadd.f32 %v2703, %v2745
    %v2978 = vadd.f32 %v2704, %v2746
    %v2979 = vadd.f32 %v2705, %v2747
    %v2980 = vadd.f32 %v2706, %v2748
    %v2981 = vadd.f32 %v2707, %v2749
    %v2982 = vadd.f32 %v2708, %v2750
    %v2983 = vadd.f32 %v2709, %v2743
    %v2984 = vadd.f32 %v2710, %v2744
    %v2985 = vadd.f32 %v2711, %v2745
    %v2986 = vadd.f32 %v2712, %v2746
    %v2987 = vadd.f32 %v2713, %v2747
    %v2988 = vadd.f32 %v2714, %v2748
    %v2989 = vadd.f32 %v2715, %v2749
    %v2990 = vadd.f32 %v2716, %v2750
    %v2991 = vadd.f32 %v2717, %v2743
    %v2992 = vadd.f32 %v2718, %v2744
    %v2993 = vadd.f32 %v2719, %v2745
    %v2994 = vadd.f32 %v2720, %v2746
    %v2995 = vadd.f32 %v2721, %v2747
    %v2996 = vadd.f32 %v2722, %v2748
    %v2997 = vadd.f32 %v2723, %v2749
    %v2998 = vadd.f32 %v2724, %v2750
    %v2999 = vadd.f32 %v2725, %v2743
    %v3000 = vadd.f32 %v2726, %v2744
    %v3001 = vadd.f32 %v2727, %v2745
    %v3002 = vadd.f32 %v2728, %v2746
    %v3003 = vadd.f32 %v2729, %v2747
    %v3004 = vadd.f32 %v2730, %v2748
    %v3005 = vadd.f32 %v2731, %v2749
    %v3006 = vadd.f32 %v2732, %v2750
    %v3007 = vadd.f32 %v2733, %v2743
    %v3008 = vadd.f32 %v2734, %v2744
    %v3009 = vadd.f32 %v2735, %v2745
    %v3010 = vadd.f32 %v2736, %v2746
    %v3011 = vadd.f32 %v2737, %v2747
    %v3012 = vadd.f32 %v2738, %v2748
    %v3013 = vadd.f32 %v2739, %v2749
    %v3014 = vadd.f32 %v2740, %v2750
    %v3015 = vmul.f32 %v2759, 0.2
    %v3016 = vmul.f32 %v2760, 0.2
    %v3017 = vmul.f32 %v2761, 0.2
    %v3018 = vmul.f32 %v2762, 0.2
    %v3019 = vmul.f32 %v2763, 0.2
    %v3020 = vmul.f32 %v2764, 0.2
    %v3021 = vmul.f32 %v2765, 0.2
    %v3022 = vmul.f32 %v2766, 0.2
    %v3023 = vmul.f32 %v2767, 0.2
    %v3024 = vmul.f32 %v2768, 0.2
    %v3025 = vmul.f32 %v2769, 0.2
    %v3026 = vmul.f32 %v2770, 0.2
    %v3027 = vmul.f32 %v2771, 0.2
    %v3028 = vmul.f32 %v2772, 0.2
    %v3029 = vmul.f32 %v2773, 0.2
    %v3030 = vmul.f32 %v2774, 0.2
    %v3031 = vmul.f32 %v2775, 0.2
    %v3032 = vmul.f32 %v2776, 0.2
    %v3033 = vmul.f32 %v2777, 0.2
    %v3034 = vmul.f32 %v2778, 0.2
    %v3035 = vmul.f32 %v2779, 0.2
    %v3036 = vmul.f32 %v2780, 0.2
    %v3037 = vmul.f32 %v2781, 0.2
    %v3038 = vmul.f32 %v2782, 0.2
    %v3039 = vmul.f32 %v2783, 0.2
    %v3040 = vmul.f32 %v2784, 0.2
    %v3041 = vmul.f32 %v2785, 0.2
    %v3042 = vmul.f32 %v2786, 0.2
    %v3043 = vmul.f32 %v2787, 0.2
    %v3044 = vmul.f32 %v2788, 0.2
    %v3045 = vmul.f32 %v2789, 0.2
    %v3046 = vmul.f32 %v2790, 0.2
    %v3047 = vmul.f32 %v2791, 0.2
    %v3048 = vmul.f32 %v2792, 0.2
    %v3049 = vmul.f32 %v2793, 0.2
    %v3050 = vmul.f32 %v2794, 0.2
    %v3051 = vmul.f32 %v2795, 0.2
    %v3052 = vmul.f32 %v2796, 0.2
    %v3053 = vmul.f32 %v2797, 0.2
    %v3054 = vmul.f32 %v2798, 0.2
    %v3055 = vmul.f32 %v2799, 0.2
    %v3056 = vmul.f32 %v2800, 0.2
    %v3057 = vmul.f32 %v2801, 0.2
    %v3058 = vmul.f32 %v2802, 0.2
    %v3059 = vmul.f32 %v2803, 0.2
    %v3060 = vmul.f32 %v2804, 0.2
    %v3061 = vmul.f32 %v2805, 0.2
    %v3062 = vmul.f32 %v2806, 0.2
    %v3063 = vmul.f32 %v2807, 0.2
    %v3064 = vmul.f32 %v2808, 0.2
    %v3065 = vmul.f32 %v2809, 0.2
    %v3066 = vmul.f32 %v2810, 0.2
    %v3067 = vmul.f32 %v2811, 0.2
    %v3068 = vmul.f32 %v2812, 0.2
    %v3069 = vmul.f32 %v2813, 0.2
    %v3070 = vmul.f32 %v2814, 0.2
    %v3071 = vmul.f32 %v2815, 0.2
    %v3072 = vmul.f32 %v2816, 0.2
    %v3073 = vmul.f32 %v2817, 0.2
    %v3074 = vmul.f32 %v2818, 0.2
    %v3075 = vmul.f32 %v2819, 0.2
    %v3076 = vmul.f32 %v2820, 0.2
    %v3077 = vmul.f32 %v2821, 0.2
    %v3078 = vmul.f32 %v2822, 0.2
    %v3079 = vmul.f32 %v2823, 0.2
    %v3080 = vmul.f32 %v2824, 0.2
    %v3081 = vmul.f32 %v2825, 0.2
    %v3082 = vmul.f32 %v2826, 0.2
    %v3083 = vmul.f32 %v2827, 0.2
    %v3084 = vmul.f32 %v2828, 0.2
    %v3085 = vmul.f32 %v2829, 0.2
    %v3086 = vmul.f32 %v2830, 0.2
    %v3087 = vmul.f32 %v2831, 0.2
    %v3088 = vmul.f32 %v2832, 0.2
    %v3089 = vmul.f32 %v2833, 0.2
    %v3090 = vmul.f32 %v2834, 0.2
    %v3091 = vmul.f32 %v2835, 0.2
    %v3092 = vmul.f32 %v2836, 0.2
    %v3093 = vmul.f32 %v2837, 0.2
    %v3094 = vmul.f32 %v2838, 0.2
    %v3095 = vmul.f32 %v2839, 0.2
    %v3096 = vmul.f32 %v2840, 0.2
    %v3097 = vmul.f32 %v2841, 0.2
    %v3098 = vmul.f32 %v2842, 0.2
    %v3099 = vmul.f32 %v2843, 0.2
    %v3100 = vmul.f32 %v2844, 0.2
    %v3101 = vmul.f32 %v2845, 0.2
    %v3102 = vmul.f32 %v2846, 0.2
    %v3103 = vmul.f32 %v2847, 0.2
    %v3104 = vmul.f32 %v2848, 0.2
    %v3105 = vmul.f32 %v2849, 0.2
    %v3106 = vmul.f32 %v2850, 0.2
    %v3107 = vmul.f32 %v2851, 0.2
    %v3108 = vmul.f32 %v2852, 0.2
    %v3109 = vmul.f32 %v2853, 0.2
    %v3110 = vmul.f32 %v2854, 0.2
    %v3111 = vmul.f32 %v2855, 0.2
    %v3112 = vmul.f32 %v2856, 0.2
    %v3113 = vmul.f32 %v2857, 0.2
    %v3114 = vmul.f32 %v2858, 0.2
    %v3115 = vmul.f32 %v2859, 0.2
    %v3116 = vmul.f32 %v2860, 0.2
    %v3117 = vmul.f32 %v2861, 0.2
    %v3118 = vmul.f32 %v2862, 0.2
    %v3119 = vmul.f32 %v2863, 0.2
    %v3120 = vmul.f32 %v2864, 0.2
    %v3121 = vmul.f32 %v2865, 0.2
    %v3122 = vmul.f32 %v2866, 0.2
    %v3123 = vmul.f32 %v2867, 0.2
    %v3124 = vmul.f32 %v2868, 0.2
    %v3125 = vmul.f32 %v2869, 0.2
    %v3126 = vmul.f32 %v2870, 0.2
    %v3127 = vmul.f32 %v2871, 0.2
    %v3128 = vmul.f32 %v2872, 0.2
    %v3129 = vmul.f32 %v2873, 0.2
    %v3130 = vmul.f32 %v2874, 0.2
    %v3131 = vmul.f32 %v2875, 0.2
    %v3132 = vmul.f32 %v2876, 0.2
    %v3133 = vmul.f32 %v2877, 0.2
    %v3134 = vmul.f32 %v2878, 0.2
    %v3135 = vmul.f32 %v2879, 0.2
    %v3136 = vmul.f32 %v2880, 0.2
    %v3137 = vmul.f32 %v2881, 0.2
    %v3138 = vmul.f32 %v2882, 0.2
    %v3139 = vmul.f32 %v2883, 0.2
    %v3140 = vmul.f32 %v2884, 0.2
    %v3141 = vmul.f32 %v2885, 0.2
    %v3142 = vmul.f32 %v2886, 0.2
    %v3143 = vmul.f32 %v2887, 0.2
    %v3144 = vmul.f32 %v2888, 0.2
    %v3145 = vmul.f32 %v2889, 0.2
    %v3146 = vmul.f32 %v2890, 0.2
    %v3147 = vmul.f32 %v2891, 0.2
    %v3148 = vmul.f32 %v2892, 0.2
    %v3149 = vmul.f32 %v2893, 0.2
    %v3150 = vmul.f32 %v2894, 0.2
    %v3151 = vmul.f32 %v2895, 0.2
    %v3152 = vmul.f32 %v2896, 0.2
    %v3153 = vmul.f32 %v2897, 0.2
    %v3154 = vmul.f32 %v2898, 0.2
    %v3155 = vmul.f32 %v2899, 0.2
    %v3156 = vmul.f32 %v2900, 0.2
    %v3157 = vmul.f32 %v2901, 0.2
    %v3158 = vmul.f32 %v2902, 0.2
    %v3159 = vmul.f32 %v2903, 0.2
    %v3160 = vmul.f32 %v2904, 0.2
    %v3161 = vmul.f32 %v2905, 0.2
    %v3162 = vmul.f32 %v2906, 0.2
    %v3163 = vmul.f32 %v2907, 0.2
    %v3164 = vmul.f32 %v2908, 0.2
    %v3165 = vmul.f32 %v2909, 0.2
    %v3166 = vmul.f32 %v2910, 0.2
    %v3167 = vmul.f32 %v2911, 0.2
    %v3168 = vmul.f32 %v2912, 0.2
    %v3169 = vmul.f32 %v2913, 0.2
    %v3170 = vmul.f32 %v2914, 0.2
    %v3171 = vmul.f32 %v2915, 0.2
    %v3172 = vmul.f32 %v2916, 0.2
    %v3173 = vmul.f32 %v2917, 0.2
    %v3174 = vmul.f32 %v2918, 0.2
    %v3175 = vmul.f32 %v2919, 0.2
    %v3176 = vmul.f32 %v2920, 0.2
    %v3177 = vmul.f32 %v2921, 0.2
    %v3178 = vmul.f32 %v2922, 0.2
    %v3179 = vmul.f32 %v2923, 0.2
    %v3180 = vmul.f32 %v2924, 0.2
    %v3181 = vmul.f32 %v2925, 0.2
    %v3182 = vmul.f32 %v2926, 0.2
    %v3183 = vmul.f32 %v2927, 0.2
    %v3184 = vmul.f32 %v2928, 0.2
    %v3185 = vmul.f32 %v2929, 0.2
    %v3186 = vmul.f32 %v2930, 0.2
    %v3187 = vmul.f32 %v2931, 0.2
    %v3188 = vmul.f32 %v2932, 0.2
    %v3189 = vmul.f32 %v2933, 0.2
    %v3190 = vmul.f32 %v2934, 0.2
    %v3191 = vmul.f32 %v2935, 0.2
    %v3192 = vmul.f32 %v2936, 0.2
    %v3193 = vmul.f32 %v2937, 0.2
    %v3194 = vmul.f32 %v2938, 0.2
    %v3195 = vmul.f32 %v2939, 0.2
    %v3196 = vmul.f32 %v2940, 0.2
    %v3197 = vmul.f32 %v2941, 0.2
    %v3198 = vmul.f32 %v2942, 0.2
    %v3199 = vmul.f32 %v2943, 0.2
    %v3200 = vmul.f32 %v2944, 0.2
    %v3201 = vmul.f32 %v2945, 0.2
    %v3202 = vmul.f32 %v2946, 0.2
    %v3203 = vmul.f32 %v2947, 0.2
    %v3204 = vmul.f32 %v2948, 0.2
    %v3205 = vmul.f32 %v2949, 0.2
    %v3206 = vmul.f32 %v2950, 0.2
    %v3207 = vmul.f32 %v2951, 0.2
    %v3208 = vmul.f32 %v2952, 0.2
    %v3209 = vmul.f32 %v2953, 0.2
    %v3210 = vmul.f32 %v2954, 0.2
    %v3211 = vmul.f32 %v2955, 0.2
    %v3212 = vmul.f32 %v2956, 0.2
    %v3213 = vmul.f32 %v2957, 0.2
    %v3214 = vmul.f32 %v2958, 0.2
    %v3215 = vmul.f32 %v2959, 0.2
    %v3216 = vmul.f32 %v2960, 0.2
    %v3217 = vmul.f32 %v2961, 0.2
    %v3218 = vmul.f32 %v2962, 0.2
    %v3219 = vmul.f32 %v2963, 0.2
    %v3220 = vmul.f32 %v2964, 0.2
    %v3221 = vmul.f32 %v2965, 0.2
    %v3222 = vmul.f32 %v2966, 0.2
    %v3223 = vmul.f32 %v2967, 0.2
    %v3224 = vmul.f32 %v2968, 0.2
    %v3225 = vmul.f32 %v2969, 0.2
    %v3226 = vmul.f32 %v2970, 0.2
    %v3227 = vmul.f32 %v2971, 0.2
    %v3228 = vmul.f32 %v2972, 0.2
    %v3229 = vmul.f32 %v2973, 0.2
    %v3230 = vmul.f32 %v2974, 0.2
    %v3231 = vmul.f32 %v2975, 0.2
    %v3232 = vmul.f32 %v2976, 0.2
    %v3233 = vmul.f32 %v2977, 0.2
    %v3234 = vmul.f32 %v2978, 0.2
    %v3235 = vmul.f32 %v2979, 0.2
    %v3236 = vmul.f32 %v2980, 0.2
    %v3237 = vmul.f32 %v2981, 0.2
    %v3238 = vmul.f32 %v2982, 0.2
    %v3239 = vmul.f32 %v2983, 0.2
    %v3240 = vmul.f32 %v2984, 0.2
    %v3241 = vmul.f32 %v2985, 0.2
    %v3242 = vmul.f32 %v2986, 0.2
    %v3243 = vmul.f32 %v2987, 0.2
    %v3244 = vmul.f32 %v2988, 0.2
    %v3245 = vmul.f32 %v2989, 0.2
    %v3246 = vmul.f32 %v2990, 0.2
    %v3247 = vmul.f32 %v2991, 0.2
    %v3248 = vmul.f32 %v2992, 0.2
    %v3249 = vmul.f32 %v2993, 0.2
    %v3250 = vmul.f32 %v2994, 0.2
    %v3251 = vmul.f32 %v2995, 0.2
    %v3252 = vmul.f32 %v2996, 0.2
    %v3253 = vmul.f32 %v2997, 0.2
    %v3254 = vmul.f32 %v2998, 0.2
    %v3255 = vmul.f32 %v2999, 0.2
    %v3256 = vmul.f32 %v3000, 0.2
    %v3257 = vmul.f32 %v3001, 0.2
    %v3258 = vmul.f32 %v3002, 0.2
    %v3259 = vmul.f32 %v3003, 0.2
    %v3260 = vmul.f32 %v3004, 0.2
    %v3261 = vmul.f32 %v3005, 0.2
    %v3262 = vmul.f32 %v3006, 0.2
    %v3263 = vmul.f32 %v3007, 0.2
    %v3264 = vmul.f32 %v3008, 0.2
    %v3265 = vmul.f32 %v3009, 0.2
    %v3266 = vmul.f32 %v3010, 0.2
    %v3267 = vmul.f32 %v3011, 0.2
    %v3268 = vmul.f32 %v3012, 0.2
    %v3269 = vmul.f32 %v3013, 0.2
    %v3270 = vmul.f32 %v3014, 0.2
    %v3271 = vmax.f32 %v2759, %v3015
    %v3272 = vmax.f32 %v2760, %v3016
    %v3273 = vmax.f32 %v2761, %v3017
    %v3274 = vmax.f32 %v2762, %v3018
    %v3275 = vmax.f32 %v2763, %v3019
    %v3276 = vmax.f32 %v2764, %v3020
    %v3277 = vmax.f32 %v2765, %v3021
    %v3278 = vmax.f32 %v2766, %v3022
    %v3279 = vmax.f32 %v2767, %v3023
    %v3280 = vmax.f32 %v2768, %v3024
    %v3281 = vmax.f32 %v2769, %v3025
    %v3282 = vmax.f32 %v2770, %v3026
    %v3283 = vmax.f32 %v2771, %v3027
    %v3284 = vmax.f32 %v2772, %v3028
    %v3285 = vmax.f32 %v2773, %v3029
    %v3286 = vmax.f32 %v2774, %v3030
    %v3287 = vmax.f32 %v2775, %v3031
    %v3288 = vmax.f32 %v2776, %v3032
    %v3289 = vmax.f32 %v2777, %v3033
    %v3290 = vmax.f32 %v2778, %v3034
    %v3291 = vmax.f32 %v2779, %v3035
    %v3292 = vmax.f32 %v2780, %v3036
    %v3293 = vmax.f32 %v2781, %v3037
    %v3294 = vmax.f32 %v2782, %v3038
    %v3295 = vmax.f32 %v2783, %v3039
    %v3296 = vmax.f32 %v2784, %v3040
    %v3297 = vmax.f32 %v2785, %v3041
    %v3298 = vmax.f32 %v2786, %v3042
    %v3299 = vmax.f32 %v2787, %v3043
    %v3300 = vmax.f32 %v2788, %v3044
    %v3301 = vmax.f32 %v2789, %v3045
    %v3302 = vmax.f32 %v2790, %v3046
    %v3303 = vmax.f32 %v2791, %v3047
    %v3304 = vmax.f32 %v2792, %v3048
    %v3305 = vmax.f32 %v2793, %v3049
    %v3306 = vmax.f32 %v2794, %v3050
    %v3307 = vmax.f32 %v2795, %v3051
    %v3308 = vmax.f32 %v2796, %v3052
    %v3309 = vmax.f32 %v2797, %v3053
    %v3310 = vmax.f32 %v2798, %v3054
    %v3311 = vmax.f32 %v2799, %v3055
    %v3312 = vmax.f32 %v2800, %v3056
    %v3313 = vmax.f32 %v2801, %v3057
    %v3314 = vmax.f32 %v2802, %v3058
    %v3315 = vmax.f32 %v2803, %v3059
    %v3316 = vmax.f32 %v2804, %v3060
    %v3317 = vmax.f32 %v2805, %v3061
    %v3318 = vmax.f32 %v2806, %v3062
    %v3319 = vmax.f32 %v2807, %v3063
    %v3320 = vmax.f32 %v2808, %v3064
    %v3321 = vmax.f32 %v2809, %v3065
    %v3322 = vmax.f32 %v2810, %v3066
    %v3323 = vmax.f32 %v2811, %v3067
    %v3324 = vmax.f32 %v2812, %v3068
    %v3325 = vmax.f32 %v2813, %v3069
    %v3326 = vmax.f32 %v2814, %v3070
    %v3327 = vmax.f32 %v2815, %v3071
    %v3328 = vmax.f32 %v2816, %v3072
    %v3329 = vmax.f32 %v2817, %v3073
    %v3330 = vmax.f32 %v2818, %v3074
    %v3331 = vmax.f32 %v2819, %v3075
    %v3332 = vmax.f32 %v2820, %v3076
    %v3333 = vmax.f32 %v2821, %v3077
    %v3334 = vmax.f32 %v2822, %v3078
    %v3335 = vmax.f32 %v2823, %v3079
    %v3336 = vmax.f32 %v2824, %v3080
    %v3337 = vmax.f32 %v2825, %v3081
    %v3338 = vmax.f32 %v2826, %v3082
    %v3339 = vmax.f32 %v2827, %v3083
    %v3340 = vmax.f32 %v2828, %v3084
    %v3341 = vmax.f32 %v2829, %v3085
    %v3342 = vmax.f32 %v2830, %v3086
    %v3343 = vmax.f32 %v2831, %v3087
    %v3344 = vmax.f32 %v2832, %v3088
    %v3345 = vmax.f32 %v2833, %v3089
    %v3346 = vmax.f32 %v2834, %v3090
    %v3347 = vmax.f32 %v2835, %v3091
    %v3348 = vmax.f32 %v2836, %v3092
    %v3349 = vmax.f32 %v2837, %v3093
    %v3350 = vmax.f32 %v2838, %v3094
    %v3351 = vmax.f32 %v2839, %v3095
    %v3352 = vmax.f32 %v2840, %v3096
    %v3353 = vmax.f32 %v2841, %v3097
    %v3354 = vmax.f32 %v2842, %v3098
    %v3355 = vmax.f32 %v2843, %v3099
    %v3356 = vmax.f32 %v2844, %v3100
    %v3357 = vmax.f32 %v2845, %v3101
    %v3358 = vmax.f32 %v2846, %v3102
    %v3359 = vmax.f32 %v2847, %v3103
    %v3360 = vmax.f32 %v2848, %v3104
    %v3361 = vmax.f32 %v2849, %v3105
    %v3362 = vmax.f32 %v2850, %v3106
    %v3363 = vmax.f32 %v2851, %v3107
    %v3364 = vmax.f32 %v2852, %v3108
    %v3365 = vmax.f32 %v2853, %v3109
    %v3366 = vmax.f32 %v2854, %v3110
    %v3367 = vmax.f32 %v2855, %v3111
    %v3368 = vmax.f32 %v2856, %v3112
    %v3369 = vmax.f32 %v2857, %v3113
    %v3370 = vmax.f32 %v2858, %v3114
    %v3371 = vmax.f32 %v2859, %v3115
    %v3372 = vmax.f32 %v2860, %v3116
    %v3373 = vmax.f32 %v2861, %v3117
    %v3374 = vmax.f32 %v2862, %v3118
    %v3375 = vmax.f32 %v2863, %v3119
    %v3376 = vmax.f32 %v2864, %v3120
    %v3377 = vmax.f32 %v2865, %v3121
    %v3378 = vmax.f32 %v2866, %v3122
    %v3379 = vmax.f32 %v2867, %v3123
    %v3380 = vmax.f32 %v2868, %v3124
    %v3381 = vmax.f32 %v2869, %v3125
    %v3382 = vmax.f32 %v2870, %v3126
    %v3383 = vmax.f32 %v2871, %v3127
    %v3384 = vmax.f32 %v2872, %v3128
    %v3385 = vmax.f32 %v2873, %v3129
    %v3386 = vmax.f32 %v2874, %v3130
    %v3387 = vmax.f32 %v2875, %v3131
    %v3388 = vmax.f32 %v2876, %v3132
    %v3389 = vmax.f32 %v2877, %v3133
    %v3390 = vmax.f32 %v2878, %v3134
    %v3391 = vmax.f32 %v2879, %v3135
    %v3392 = vmax.f32 %v2880, %v3136
    %v3393 = vmax.f32 %v2881, %v3137
    %v3394 = vmax.f32 %v2882, %v3138
    %v3395 = vmax.f32 %v2883, %v3139
    %v3396 = vmax.f32 %v2884, %v3140
    %v3397 = vmax.f32 %v2885, %v3141
    %v3398 = vmax.f32 %v2886, %v3142
    %v3399 = vmax.f32 %v2887, %v3143
    %v3400 = vmax.f32 %v2888, %v3144
    %v3401 = vmax.f32 %v2889, %v3145
    %v3402 = vmax.f32 %v2890, %v3146
    %v3403 = vmax.f32 %v2891, %v3147
    %v3404 = vmax.f32 %v2892, %v3148
    %v3405 = vmax.f32 %v2893, %v3149
    %v3406 = vmax.f32 %v2894, %v3150
    %v3407 = vmax.f32 %v2895, %v3151
    %v3408 = vmax.f32 %v2896, %v3152
    %v3409 = vmax.f32 %v2897, %v3153
    %v3410 = vmax.f32 %v2898, %v3154
    %v3411 = vmax.f32 %v2899, %v3155
    %v3412 = vmax.f32 %v2900, %v3156
    %v3413 = vmax.f32 %v2901, %v3157
    %v3414 = vmax.f32 %v2902, %v3158
    %v3415 = vmax.f32 %v2903, %v3159
    %v3416 = vmax.f32 %v2904, %v3160
    %v3417 = vmax.f32 %v2905, %v3161
    %v3418 = vmax.f32 %v2906, %v3162
    %v3419 = vmax.f32 %v2907, %v3163
    %v3420 = vmax.f32 %v2908, %v3164
    %v3421 = vmax.f32 %v2909, %v3165
    %v3422 = vmax.f32 %v2910, %v3166
    %v3423 = vmax.f32 %v2911, %v3167
    %v3424 = vmax.f32 %v2912, %v3168
    %v3425 = vmax.f32 %v2913, %v3169
    %v3426 = vmax.f32 %v2914, %v3170
    %v3427 = vmax.f32 %v2915, %v3171
    %v3428 = vmax.f32 %v2916, %v3172
    %v3429 = vmax.f32 %v2917, %v3173
    %v3430 = vmax.f32 %v2918, %v3174
    %v3431 = vmax.f32 %v2919, %v3175
    %v3432 = vmax.f32 %v2920, %v3176
    %v3433 = vmax.f32 %v2921, %v3177
    %v3434 = vmax.f32 %v2922, %v3178
    %v3435 = vmax.f32 %v2923, %v3179
    %v3436 = vmax.f32 %v2924, %v3180
    %v3437 = vmax.f32 %v2925, %v3181
    %v3438 = vmax.f32 %v2926, %v3182
    %v3439 = vmax.f32 %v2927, %v3183
    %v3440 = vmax.f32 %v2928, %v3184
    %v3441 = vmax.f32 %v2929, %v3185
    %v3442 = vmax.f32 %v2930, %v3186
    %v3443 = vmax.f32 %v2931, %v3187
    %v3444 = vmax.f32 %v2932, %v3188
    %v3445 = vmax.f32 %v2933, %v3189
    %v3446 = vmax.f32 %v2934, %v3190
    %v3447 = vmax.f32 %v2935, %v3191
    %v3448 = vmax.f32 %v2936, %v3192
    %v3449 = vmax.f32 %v2937, %v3193
    %v3450 = vmax.f32 %v2938, %v3194
    %v3451 = vmax.f32 %v2939, %v3195
    %v3452 = vmax.f32 %v2940, %v3196
    %v3453 = vmax.f32 %v2941, %v3197
    %v3454 = vmax.f32 %v2942, %v3198
    %v3455 = vmax.f32 %v2943, %v3199
    %v3456 = vmax.f32 %v2944, %v3200
    %v3457 = vmax.f32 %v2945, %v3201
    %v3458 = vmax.f32 %v2946, %v3202
    %v3459 = vmax.f32 %v2947, %v3203
    %v3460 = vmax.f32 %v2948, %v3204
    %v3461 = vmax.f32 %v2949, %v3205
    %v3462 = vmax.f32 %v2950, %v3206
    %v3463 = vmax.f32 %v2951, %v3207
    %v3464 = vmax.f32 %v2952, %v3208
    %v3465 = vmax.f32 %v2953, %v3209
    %v3466 = vmax.f32 %v2954, %v3210
    %v3467 = vmax.f32 %v2955, %v3211
    %v3468 = vmax.f32 %v2956, %v3212
    %v3469 = vmax.f32 %v2957, %v3213
    %v3470 = vmax.f32 %v2958, %v3214
    %v3471 = vmax.f32 %v2959, %v3215
    %v3472 = vmax.f32 %v2960, %v3216
    %v3473 = vmax.f32 %v2961, %v3217
    %v3474 = vmax.f32 %v2962, %v3218
    %v3475 = vmax.f32 %v2963, %v3219
    %v3476 = vmax.f32 %v2964, %v3220
    %v3477 = vmax.f32 %v2965, %v3221
    %v3478 = vmax.f32 %v2966, %v3222
    %v3479 = vmax.f32 %v2967, %v3223
    %v3480 = vmax.f32 %v2968, %v3224
    %v3481 = vmax.f32 %v2969, %v3225
    %v3482 = vmax.f32 %v2970, %v3226
    %v3483 = vmax.f32 %v2971, %v3227
    %v3484 = vmax.f32 %v2972, %v3228
    %v3485 = vmax.f32 %v2973, %v3229
    %v3486 = vmax.f32 %v2974, %v3230
    %v3487 = vmax.f32 %v2975, %v3231
    %v3488 = vmax.f32 %v2976, %v3232
    %v3489 = vmax.f32 %v2977, %v3233
    %v3490 = vmax.f32 %v2978, %v3234
    %v3491 = vmax.f32 %v2979, %v3235
    %v3492 = vmax.f32 %v2980, %v3236
    %v3493 = vmax.f32 %v2981, %v3237
    %v3494 = vmax.f32 %v2982, %v3238
    %v3495 = vmax.f32 %v2983, %v3239
    %v3496 = vmax.f32 %v2984, %v3240
    %v3497 = vmax.f32 %v2985, %v3241
    %v3498 = vmax.f32 %v2986, %v3242
    %v3499 = vmax.f32 %v2987, %v3243
    %v3500 = vmax.f32 %v2988, %v3244
    %v3501 = vmax.f32 %v2989, %v3245
    %v3502 = vmax.f32 %v2990, %v3246
    %v3503 = vmax.f32 %v2991, %v3247
    %v3504 = vmax.f32 %v2992, %v3248
    %v3505 = vmax.f32 %v2993, %v3249
    %v3506 = vmax.f32 %v2994, %v3250
    %v3507 = vmax.f32 %v2995, %v3251
    %v3508 = vmax.f32 %v2996, %v3252
    %v3509 = vmax.f32 %v2997, %v3253
    %v3510 = vmax.f32 %v2998, %v3254
    %v3511 = vmax.f32 %v2999, %v3255
    %v3512 = vmax.f32 %v3000, %v3256
    %v3513 = vmax.f32 %v3001, %v3257
    %v3514 = vmax.f32 %v3002, %v3258
    %v3515 = vmax.f32 %v3003, %v3259
    %v3516 = vmax.f32 %v3004, %v3260
    %v3517 = vmax.f32 %v3005, %v3261
    %v3518 = vmax.f32 %v3006, %v3262
    %v3519 = vmax.f32 %v3007, %v3263
    %v3520 = vmax.f32 %v3008, %v3264
    %v3521 = vmax.f32 %v3009, %v3265
    %v3522 = vmax.f32 %v3010, %v3266
    %v3523 = vmax.f32 %v3011, %v3267
    %v3524 = vmax.f32 %v3012, %v3268
    %v3525 = vmax.f32 %v3013, %v3269
    %v3526 = vmax.f32 %v3014, %v3270
    %v3527 = vpack.c.bf16 %v3279, %v3271
    %v3528 = vpack.c.bf16 %v3280, %v3272
    %v3529 = vpack.c.bf16 %v3281, %v3273
    %v3530 = vpack.c.bf16 %v3282, %v3274
    %v3531 = vpack.c.bf16 %v3283, %v3275
    %v3532 = vpack.c.bf16 %v3284, %v3276
    %v3533 = vpack.c.bf16 %v3285, %v3277
    %v3534 = vpack.c.bf16 %v3286, %v3278
    %v3535 = vpack.c.bf16 %v3295, %v3287
    %v3536 = vpack.c.bf16 %v3296, %v3288
    %v3537 = vpack.c.bf16 %v3297, %v3289
    %v3538 = vpack.c.bf16 %v3298, %v3290
    %v3539 = vpack.c.bf16 %v3299, %v3291
    %v3540 = vpack.c.bf16 %v3300, %v3292
    %v3541 = vpack.c.bf16 %v3301, %v3293
    %v3542 = vpack.c.bf16 %v3302, %v3294
    %v3543 = vpack.c.bf16 %v3311, %v3303
    %v3544 = vpack.c.bf16 %v3312, %v3304
    %v3545 = vpack.c.bf16 %v3313, %v3305
    %v3546 = vpack.c.bf16 %v3314, %v3306
    %v3547 = vpack.c.bf16 %v3315, %v3307
    %v3548 = vpack.c.bf16 %v3316, %v3308
    %v3549 = vpack.c.bf16 %v3317, %v3309
    %v3550 = vpack.c.bf16 %v3318, %v3310
    %v3551 = vpack.c.bf16 %v3327, %v3319
    %v3552 = vpack.c.bf16 %v3328, %v3320
    %v3553 = vpack.c.bf16 %v3329, %v3321
    %v3554 = vpack.c.bf16 %v3330, %v3322
    %v3555 = vpack.c.bf16 %v3331, %v3323
    %v3556 = vpack.c.bf16 %v3332, %v3324
    %v3557 = vpack.c.bf16 %v3333, %v3325
    %v3558 = vpack.c.bf16 %v3334, %v3326
    %v3559 = vpack.c.bf16 %v3343, %v3335
    %v3560 = vpack.c.bf16 %v3344, %v3336
    %v3561 = vpack.c.bf16 %v3345, %v3337
    %v3562 = vpack.c.bf16 %v3346, %v3338
    %v3563 = vpack.c.bf16 %v3347, %v3339
    %v3564 = vpack.c.bf16 %v3348, %v3340
    %v3565 = vpack.c.bf16 %v3349, %v3341
    %v3566 = vpack.c.bf16 %v3350, %v3342
    %v3567 = vpack.c.bf16 %v3359, %v3351
    %v3568 = vpack.c.bf16 %v3360, %v3352
    %v3569 = vpack.c.bf16 %v3361, %v3353
    %v3570 = vpack.c.bf16 %v3362, %v3354
    %v3571 = vpack.c.bf16 %v3363, %v3355
    %v3572 = vpack.c.bf16 %v3364, %v3356
    %v3573 = vpack.c.bf16 %v3365, %v3357
    %v3574 = vpack.c.bf16 %v3366, %v3358
    %v3575 = vpack.c.bf16 %v3375, %v3367
    %v3576 = vpack.c.bf16 %v3376, %v3368
    %v3577 = vpack.c.bf16 %v3377, %v3369
    %v3578 = vpack.c.bf16 %v3378, %v3370
    %v3579 = vpack.c.bf16 %v3379, %v3371
    %v3580 = vpack.c.bf16 %v3380, %v3372
    %v3581 = vpack.c.bf16 %v3381, %v3373
    %v3582 = vpack.c.bf16 %v3382, %v3374
    %v3583 = vpack.c.bf16 %v3391, %v3383
    %v3584 = vpack.c.bf16 %v3392, %v3384
    %v3585 = vpack.c.bf16 %v3393, %v3385
    %v3586 = vpack.c.bf16 %v3394, %v3386
    %v3587 = vpack.c.bf16 %v3395, %v3387
    %v3588 = vpack.c.bf16 %v3396, %v3388
    %v3589 = vpack.c.bf16 %v3397, %v3389
    %v3590 = vpack.c.bf16 %v3398, %v3390
    %v3591 = vpack.c.bf16 %v3407, %v3399
    %v3592 = vpack.c.bf16 %v3408, %v3400
    %v3593 = vpack.c.bf16 %v3409, %v3401
    %v3594 = vpack.c.bf16 %v3410, %v3402
    %v3595 = vpack.c.bf16 %v3411, %v3403
    %v3596 = vpack.c.bf16 %v3412, %v3404
    %v3597 = vpack.c.bf16 %v3413, %v3405
    %v3598 = vpack.c.bf16 %v3414, %v3406
    %v3599 = vpack.c.bf16 %v3423, %v3415
    %v3600 = vpack.c.bf16 %v3424, %v3416
    %v3601 = vpack.c.bf16 %v3425, %v3417
    %v3602 = vpack.c.bf16 %v3426, %v3418
    %v3603 = vpack.c.bf16 %v3427, %v3419
    %v3604 = vpack.c.bf16 %v3428, %v3420
    %v3605 = vpack.c.bf16 %v3429, %v3421
    %v3606 = vpack.c.bf16 %v3430, %v3422
    %v3607 = vpack.c.bf16 %v3439, %v3431
    %v3608 = vpack.c.bf16 %v3440, %v3432
    %v3609 = vpack.c.bf16 %v3441, %v3433
    %v3610 = vpack.c.bf16 %v3442, %v3434
    %v3611 = vpack.c.bf16 %v3443, %v3435
    %v3612 = vpack.c.bf16 %v3444, %v3436
    %v3613 = vpack.c.bf16 %v3445, %v3437
    %v3614 = vpack.c.bf16 %v3446, %v3438
    %v3615 = vpack.c.bf16 %v3455, %v3447
    %v3616 = vpack.c.bf16 %v3456, %v3448
    %v3617 = vpack.c.bf16 %v3457, %v3449
    %v3618 = vpack.c.bf16 %v3458, %v3450
    %v3619 = vpack.c.bf16 %v3459, %v3451
    %v3620 = vpack.c.bf16 %v3460, %v3452
    %v3621 = vpack.c.bf16 %v3461, %v3453
    %v3622 = vpack.c.bf16 %v3462, %v3454
    %v3623 = vpack.c.bf16 %v3471, %v3463
    %v3624 = vpack.c.bf16 %v3472, %v3464
    %v3625 = vpack.c.bf16 %v3473, %v3465
    %v3626 = vpack.c.bf16 %v3474, %v3466
    %v3627 = vpack.c.bf16 %v3475, %v3467
    %v3628 = vpack.c.bf16 %v3476, %v3468
    %v3629 = vpack.c.bf16 %v3477, %v3469
    %v3630 = vpack.c.bf16 %v3478, %v3470
    %v3631 = vpack.c.bf16 %v3487, %v3479
    %v3632 = vpack.c.bf16 %v3488, %v3480
    %v3633 = vpack.c.bf16 %v3489, %v3481
    %v3634 = vpack.c.bf16 %v3490, %v3482
    %v3635 = vpack.c.bf16 %v3491, %v3483
    %v3636 = vpack.c.bf16 %v3492, %v3484
    %v3637 = vpack.c.bf16 %v3493, %v3485
    %v3638 = vpack.c.bf16 %v3494, %v3486
    %v3639 = vpack.c.bf16 %v3503, %v3495
    %v3640 = vpack.c.bf16 %v3504, %v3496
    %v3641 = vpack.c.bf16 %v3505, %v3497
    %v3642 = vpack.c.bf16 %v3506, %v3498
    %v3643 = vpack.c.bf16 %v3507, %v3499
    %v3644 = vpack.c.bf16 %v3508, %v3500
    %v3645 = vpack.c.bf16 %v3509, %v3501
    %v3646 = vpack.c.bf16 %v3510, %v3502
    %v3647 = vpack.c.bf16 %v3519, %v3511
    %v3648 = vpack.c.bf16 %v3520, %v3512
    %v3649 = vpack.c.bf16 %v3521, %v3513
    %v3650 = vpack.c.bf16 %v3522, %v3514
    %v3651 = vpack.c.bf16 %v3523, %v3515
    %v3652 = vpack.c.bf16 %v3524, %v3516
    %v3653 = vpack.c.bf16 %v3525, %v3517
    %v3654 = vpack.c.bf16 %v3526, %v3518
    %v3655 = vld [vmem:[#allocation2] sm:$0xff]
    %v3656 = vld [vmem:[#allocation2 + $0x8] sm:$0xff]
    %v3657 = vld [vmem:[#allocation2 + $0x10] sm:$0xff]
    %v3658 = vld [vmem:[#allocation2 + $0x18] sm:$0xff]
    %v3659 = vld [vmem:[#allocation2 + $0x20] sm:$0xff]
    %v3660 = vld [vmem:[#allocation2 + $0x28] sm:$0xff]
    %v3661 = vld [vmem:[#allocation2 + $0x30] sm:$0xff]
    %v3662 = vld [vmem:[#allocation2 + $0x38] sm:$0xff]
    %v3663 = vld [vmem:[#allocation2 + $0x40] sm:$0xff]
    %v3664 = vld [vmem:[#allocation2 + $0x48] sm:$0xff]
    %v3665 = vld [vmem:[#allocation2 + $0x50] sm:$0xff]
    %v3666 = vld [vmem:[#allocation2 + $0x58] sm:$0xff]
    %v3667 = vld [vmem:[#allocation2 + $0x60] sm:$0xff]
    %v3668 = vld [vmem:[#allocation2 + $0x68] sm:$0xff]
    %v3669 = vld [vmem:[#allocation2 + $0x70] sm:$0xff]
    %v3670 = vld [vmem:[#allocation2 + $0x78] sm:$0xff]
    %v3671 = vld [vmem:[#allocation2 + $0x80] sm:$0xff]
    %v3672 = vld [vmem:[#allocation2 + $0x88] sm:$0xff]
    %v3673 = vld [vmem:[#allocation2 + $0x90] sm:$0xff]
    %v3674 = vld [vmem:[#allocation2 + $0x98] sm:$0xff]
    %v3675 = vld [vmem:[#allocation2 + $0xa0] sm:$0xff]
    %v3676 = vld [vmem:[#allocation2 + $0xa8] sm:$0xff]
    %v3677 = vld [vmem:[#allocation2 + $0xb0] sm:$0xff]
    %v3678 = vld [vmem:[#allocation2 + $0xb8] sm:$0xff]
    %v3679 = vld [vmem:[#allocation2 + $0xc0] sm:$0xff]
    %v3680 = vld [vmem:[#allocation2 + $0xc8] sm:$0xff]
    %v3681 = vld [vmem:[#allocation2 + $0xd0] sm:$0xff]
    %v3682 = vld [vmem:[#allocation2 + $0xd8] sm:$0xff]
    %v3683 = vld [vmem:[#allocation2 + $0xe0] sm:$0xff]
    %v3684 = vld [vmem:[#allocation2 + $0xe8] sm:$0xff]
    %v3685 = vld [vmem:[#allocation2 + $0xf0] sm:$0xff]
    %v3686 = vld [vmem:[#allocation2 + $0xf8] sm:$0xff]
    %v3687 = vld [vmem:[#allocation2 + $0x100] sm:$0xff]
    %v3688 = vld [vmem:[#allocation2 + $0x108] sm:$0xff]
    %v3689 = vld [vmem:[#allocation2 + $0x110] sm:$0xff]
    %v3690 = vld [vmem:[#allocation2 + $0x118] sm:$0xff]
    %v3691 = vld [vmem:[#allocation2 + $0x120] sm:$0xff]
    %v3692 = vld [vmem:[#allocation2 + $0x128] sm:$0xff]
    %v3693 = vld [vmem:[#allocation2 + $0x130] sm:$0xff]
    %v3694 = vld [vmem:[#allocation2 + $0x138] sm:$0xff]
    %v3695 = vld [vmem:[#allocation2 + $0x140] sm:$0xff]
    %v3696 = vld [vmem:[#allocation2 + $0x148] sm:$0xff]
    %v3697 = vld [vmem:[#allocation2 + $0x150] sm:$0xff]
    %v3698 = vld [vmem:[#allocation2 + $0x158] sm:$0xff]
    %v3699 = vld [vmem:[#allocation2 + $0x160] sm:$0xff]
    %v3700 = vld [vmem:[#allocation2 + $0x168] sm:$0xff]
    %v3701 = vld [vmem:[#allocation2 + $0x170] sm:$0xff]
    %v3702 = vld [vmem:[#allocation2 + $0x178] sm:$0xff]
    %v3703 = vld [vmem:[#allocation2 + $0x180] sm:$0xff]
    %v3704 = vld [vmem:[#allocation2 + $0x188] sm:$0xff]
    %v3705 = vld [vmem:[#allocation2 + $0x190] sm:$0xff]
    %v3706 = vld [vmem:[#allocation2 + $0x198] sm:$0xff]
    %v3707 = vld [vmem:[#allocation2 + $0x1a0] sm:$0xff]
    %v3708 = vld [vmem:[#allocation2 + $0x1a8] sm:$0xff]
    %v3709 = vld [vmem:[#allocation2 + $0x1b0] sm:$0xff]
    %v3710 = vld [vmem:[#allocation2 + $0x1b8] sm:$0xff]
    %v3711 = vld [vmem:[#allocation2 + $0x1c0] sm:$0xff]
    %v3712 = vld [vmem:[#allocation2 + $0x1c8] sm:$0xff]
    %v3713 = vld [vmem:[#allocation2 + $0x1d0] sm:$0xff]
    %v3714 = vld [vmem:[#allocation2 + $0x1d8] sm:$0xff]
    %v3715 = vld [vmem:[#allocation2 + $0x1e0] sm:$0xff]
    %v3716 = vld [vmem:[#allocation2 + $0x1e8] sm:$0xff]
    %v3717 = vld [vmem:[#allocation2 + $0x1f0] sm:$0xff]
    %v3718 = vld [vmem:[#allocation2 + $0x1f8] sm:$0xff]
    %v3719 = vld [vmem:[#allocation2 + $0x200] sm:$0xff]
    %v3720 = vld [vmem:[#allocation2 + $0x208] sm:$0xff]
    %v3721 = vld [vmem:[#allocation2 + $0x210] sm:$0xff]
    %v3722 = vld [vmem:[#allocation2 + $0x218] sm:$0xff]
    %v3723 = vld [vmem:[#allocation2 + $0x220] sm:$0xff]
    %v3724 = vld [vmem:[#allocation2 + $0x228] sm:$0xff]
    %v3725 = vld [vmem:[#allocation2 + $0x230] sm:$0xff]
    %v3726 = vld [vmem:[#allocation2 + $0x238] sm:$0xff]
    %v3727 = vld [vmem:[#allocation2 + $0x240] sm:$0xff]
    %v3728 = vld [vmem:[#allocation2 + $0x248] sm:$0xff]
    %v3729 = vld [vmem:[#allocation2 + $0x250] sm:$0xff]
    %v3730 = vld [vmem:[#allocation2 + $0x258] sm:$0xff]
    %v3731 = vld [vmem:[#allocation2 + $0x260] sm:$0xff]
    %v3732 = vld [vmem:[#allocation2 + $0x268] sm:$0xff]
    %v3733 = vld [vmem:[#allocation2 + $0x270] sm:$0xff]
    %v3734 = vld [vmem:[#allocation2 + $0x278] sm:$0xff]
    %v3735 = vld [vmem:[#allocation2 + $0x280] sm:$0xff]
    %v3736 = vld [vmem:[#allocation2 + $0x288] sm:$0xff]
    %v3737 = vld [vmem:[#allocation2 + $0x290] sm:$0xff]
    %v3738 = vld [vmem:[#allocation2 + $0x298] sm:$0xff]
    %v3739 = vld [vmem:[#allocation2 + $0x2a0] sm:$0xff]
    %v3740 = vld [vmem:[#allocation2 + $0x2a8] sm:$0xff]
    %v3741 = vld [vmem:[#allocation2 + $0x2b0] sm:$0xff]
    %v3742 = vld [vmem:[#allocation2 + $0x2b8] sm:$0xff]
    %v3743 = vld [vmem:[#allocation2 + $0x2c0] sm:$0xff]
    %v3744 = vld [vmem:[#allocation2 + $0x2c8] sm:$0xff]
    %v3745 = vld [vmem:[#allocation2 + $0x2d0] sm:$0xff]
    %v3746 = vld [vmem:[#allocation2 + $0x2d8] sm:$0xff]
    %v3747 = vld [vmem:[#allocation2 + $0x2e0] sm:$0xff]
    %v3748 = vld [vmem:[#allocation2 + $0x2e8] sm:$0xff]
    %v3749 = vld [vmem:[#allocation2 + $0x2f0] sm:$0xff]
    %v3750 = vld [vmem:[#allocation2 + $0x2f8] sm:$0xff]
    %v3751 = vld [vmem:[#allocation2 + $0x300] sm:$0xff]
    %v3752 = vld [vmem:[#allocation2 + $0x308] sm:$0xff]
    %v3753 = vld [vmem:[#allocation2 + $0x310] sm:$0xff]
    %v3754 = vld [vmem:[#allocation2 + $0x318] sm:$0xff]
    %v3755 = vld [vmem:[#allocation2 + $0x320] sm:$0xff]
    %v3756 = vld [vmem:[#allocation2 + $0x328] sm:$0xff]
    %v3757 = vld [vmem:[#allocation2 + $0x330] sm:$0xff]
    %v3758 = vld [vmem:[#allocation2 + $0x338] sm:$0xff]
    %v3759 = vld [vmem:[#allocation2 + $0x340] sm:$0xff]
    %v3760 = vld [vmem:[#allocation2 + $0x348] sm:$0xff]
    %v3761 = vld [vmem:[#allocation2 + $0x350] sm:$0xff]
    %v3762 = vld [vmem:[#allocation2 + $0x358] sm:$0xff]
    %v3763 = vld [vmem:[#allocation2 + $0x360] sm:$0xff]
    %v3764 = vld [vmem:[#allocation2 + $0x368] sm:$0xff]
    %v3765 = vld [vmem:[#allocation2 + $0x370] sm:$0xff]
    %v3766 = vld [vmem:[#allocation2 + $0x378] sm:$0xff]
    %v3767 = vld [vmem:[#allocation2 + $0x380] sm:$0xff]
    %v3768 = vld [vmem:[#allocation2 + $0x388] sm:$0xff]
    %v3769 = vld [vmem:[#allocation2 + $0x390] sm:$0xff]
    %v3770 = vld [vmem:[#allocation2 + $0x398] sm:$0xff]
    %v3771 = vld [vmem:[#allocation2 + $0x3a0] sm:$0xff]
    %v3772 = vld [vmem:[#allocation2 + $0x3a8] sm:$0xff]
    %v3773 = vld [vmem:[#allocation2 + $0x3b0] sm:$0xff]
    %v3774 = vld [vmem:[#allocation2 + $0x3b8] sm:$0xff]
    %v3775 = vld [vmem:[#allocation2 + $0x3c0] sm:$0xff]
    %v3776 = vld [vmem:[#allocation2 + $0x3c8] sm:$0xff]
    %v3777 = vld [vmem:[#allocation2 + $0x3d0] sm:$0xff]
    %v3778 = vld [vmem:[#allocation2 + $0x3d8] sm:$0xff]
    %v3779 = vld [vmem:[#allocation2 + $0x3e0] sm:$0xff]
    %v3780 = vld [vmem:[#allocation2 + $0x3e8] sm:$0xff]
    %v3781 = vld [vmem:[#allocation2 + $0x3f0] sm:$0xff]
    %v3782 = vld [vmem:[#allocation2 + $0x3f8] sm:$0xff]
    %v3783 = vld [vmem:[#allocation2 + $0x400] sm:$0xff]
    %v3784 = vld [vmem:[#allocation2 + $0x408] sm:$0xff]
    %v3785 = vld [vmem:[#allocation2 + $0x410] sm:$0xff]
    %v3786 = vld [vmem:[#allocation2 + $0x418] sm:$0xff]
    %v3787 = vld [vmem:[#allocation2 + $0x420] sm:$0xff]
    %v3788 = vld [vmem:[#allocation2 + $0x428] sm:$0xff]
    %v3789 = vld [vmem:[#allocation2 + $0x430] sm:$0xff]
    %v3790 = vld [vmem:[#allocation2 + $0x438] sm:$0xff]
    %v3791 = vld [vmem:[#allocation2 + $0x440] sm:$0xff]
    %v3792 = vld [vmem:[#allocation2 + $0x448] sm:$0xff]
    %v3793 = vld [vmem:[#allocation2 + $0x450] sm:$0xff]
    %v3794 = vld [vmem:[#allocation2 + $0x458] sm:$0xff]
    %v3795 = vld [vmem:[#allocation2 + $0x460] sm:$0xff]
    %v3796 = vld [vmem:[#allocation2 + $0x468] sm:$0xff]
    %v3797 = vld [vmem:[#allocation2 + $0x470] sm:$0xff]
    %v3798 = vld [vmem:[#allocation2 + $0x478] sm:$0xff]
    %v3799 = vld [vmem:[#allocation2 + $0x480] sm:$0xff]
    %v3800 = vld [vmem:[#allocation2 + $0x488] sm:$0xff]
    %v3801 = vld [vmem:[#allocation2 + $0x490] sm:$0xff]
    %v3802 = vld [vmem:[#allocation2 + $0x498] sm:$0xff]
    %v3803 = vld [vmem:[#allocation2 + $0x4a0] sm:$0xff]
    %v3804 = vld [vmem:[#allocation2 + $0x4a8] sm:$0xff]
    %v3805 = vld [vmem:[#allocation2 + $0x4b0] sm:$0xff]
    %v3806 = vld [vmem:[#allocation2 + $0x4b8] sm:$0xff]
    %v3807 = vld [vmem:[#allocation2 + $0x4c0] sm:$0xff]
    %v3808 = vld [vmem:[#allocation2 + $0x4c8] sm:$0xff]
    %v3809 = vld [vmem:[#allocation2 + $0x4d0] sm:$0xff]
    %v3810 = vld [vmem:[#allocation2 + $0x4d8] sm:$0xff]
    %v3811 = vld [vmem:[#allocation2 + $0x4e0] sm:$0xff]
    %v3812 = vld [vmem:[#allocation2 + $0x4e8] sm:$0xff]
    %v3813 = vld [vmem:[#allocation2 + $0x4f0] sm:$0xff]
    %v3814 = vld [vmem:[#allocation2 + $0x4f8] sm:$0xff]
    %v3815 = vld [vmem:[#allocation2 + $0x500] sm:$0xff]
    %v3816 = vld [vmem:[#allocation2 + $0x508] sm:$0xff]
    %v3817 = vld [vmem:[#allocation2 + $0x510] sm:$0xff]
    %v3818 = vld [vmem:[#allocation2 + $0x518] sm:$0xff]
    %v3819 = vld [vmem:[#allocation2 + $0x520] sm:$0xff]
    %v3820 = vld [vmem:[#allocation2 + $0x528] sm:$0xff]
    %v3821 = vld [vmem:[#allocation2 + $0x530] sm:$0xff]
    %v3822 = vld [vmem:[#allocation2 + $0x538] sm:$0xff]
    %v3823 = vld [vmem:[#allocation2 + $0x540] sm:$0xff]
    %v3824 = vld [vmem:[#allocation2 + $0x548] sm:$0xff]
    %v3825 = vld [vmem:[#allocation2 + $0x550] sm:$0xff]
    %v3826 = vld [vmem:[#allocation2 + $0x558] sm:$0xff]
    %v3827 = vld [vmem:[#allocation2 + $0x560] sm:$0xff]
    %v3828 = vld [vmem:[#allocation2 + $0x568] sm:$0xff]
    %v3829 = vld [vmem:[#allocation2 + $0x570] sm:$0xff]
    %v3830 = vld [vmem:[#allocation2 + $0x578] sm:$0xff]
    %v3831 = vld [vmem:[#allocation2 + $0x580] sm:$0xff]
    %v3832 = vld [vmem:[#allocation2 + $0x588] sm:$0xff]
    %v3833 = vld [vmem:[#allocation2 + $0x590] sm:$0xff]
    %v3834 = vld [vmem:[#allocation2 + $0x598] sm:$0xff]
    %v3835 = vld [vmem:[#allocation2 + $0x5a0] sm:$0xff]
    %v3836 = vld [vmem:[#allocation2 + $0x5a8] sm:$0xff]
    %v3837 = vld [vmem:[#allocation2 + $0x5b0] sm:$0xff]
    %v3838 = vld [vmem:[#allocation2 + $0x5b8] sm:$0xff]
    %v3839 = vld [vmem:[#allocation2 + $0x5c0] sm:$0xff]
    %v3840 = vld [vmem:[#allocation2 + $0x5c8] sm:$0xff]
    %v3841 = vld [vmem:[#allocation2 + $0x5d0] sm:$0xff]
    %v3842 = vld [vmem:[#allocation2 + $0x5d8] sm:$0xff]
    %v3843 = vld [vmem:[#allocation2 + $0x5e0] sm:$0xff]
    %v3844 = vld [vmem:[#allocation2 + $0x5e8] sm:$0xff]
    %v3845 = vld [vmem:[#allocation2 + $0x5f0] sm:$0xff]
    %v3846 = vld [vmem:[#allocation2 + $0x5f8] sm:$0xff]
    %v3847 = vld [vmem:[#allocation2 + $0x600] sm:$0xff]
    %v3848 = vld [vmem:[#allocation2 + $0x608] sm:$0xff]
    %v3849 = vld [vmem:[#allocation2 + $0x610] sm:$0xff]
    %v3850 = vld [vmem:[#allocation2 + $0x618] sm:$0xff]
    %v3851 = vld [vmem:[#allocation2 + $0x620] sm:$0xff]
    %v3852 = vld [vmem:[#allocation2 + $0x628] sm:$0xff]
    %v3853 = vld [vmem:[#allocation2 + $0x630] sm:$0xff]
    %v3854 = vld [vmem:[#allocation2 + $0x638] sm:$0xff]
    %v3855 = vld [vmem:[#allocation2 + $0x640] sm:$0xff]
    %v3856 = vld [vmem:[#allocation2 + $0x648] sm:$0xff]
    %v3857 = vld [vmem:[#allocation2 + $0x650] sm:$0xff]
    %v3858 = vld [vmem:[#allocation2 + $0x658] sm:$0xff]
    %v3859 = vld [vmem:[#allocation2 + $0x660] sm:$0xff]
    %v3860 = vld [vmem:[#allocation2 + $0x668] sm:$0xff]
    %v3861 = vld [vmem:[#allocation2 + $0x670] sm:$0xff]
    %v3862 = vld [vmem:[#allocation2 + $0x678] sm:$0xff]
    %v3863 = vld [vmem:[#allocation2 + $0x680] sm:$0xff]
    %v3864 = vld [vmem:[#allocation2 + $0x688] sm:$0xff]
    %v3865 = vld [vmem:[#allocation2 + $0x690] sm:$0xff]
    %v3866 = vld [vmem:[#allocation2 + $0x698] sm:$0xff]
    %v3867 = vld [vmem:[#allocation2 + $0x6a0] sm:$0xff]
    %v3868 = vld [vmem:[#allocation2 + $0x6a8] sm:$0xff]
    %v3869 = vld [vmem:[#allocation2 + $0x6b0] sm:$0xff]
    %v3870 = vld [vmem:[#allocation2 + $0x6b8] sm:$0xff]
    %v3871 = vld [vmem:[#allocation2 + $0x6c0] sm:$0xff]
    %v3872 = vld [vmem:[#allocation2 + $0x6c8] sm:$0xff]
    %v3873 = vld [vmem:[#allocation2 + $0x6d0] sm:$0xff]
    %v3874 = vld [vmem:[#allocation2 + $0x6d8] sm:$0xff]
    %v3875 = vld [vmem:[#allocation2 + $0x6e0] sm:$0xff]
    %v3876 = vld [vmem:[#allocation2 + $0x6e8] sm:$0xff]
    %v3877 = vld [vmem:[#allocation2 + $0x6f0] sm:$0xff]
    %v3878 = vld [vmem:[#allocation2 + $0x6f8] sm:$0xff]
    %v3879 = vld [vmem:[#allocation2 + $0x700] sm:$0xff]
    %v3880 = vld [vmem:[#allocation2 + $0x708] sm:$0xff]
    %v3881 = vld [vmem:[#allocation2 + $0x710] sm:$0xff]
    %v3882 = vld [vmem:[#allocation2 + $0x718] sm:$0xff]
    %v3883 = vld [vmem:[#allocation2 + $0x720] sm:$0xff]
    %v3884 = vld [vmem:[#allocation2 + $0x728] sm:$0xff]
    %v3885 = vld [vmem:[#allocation2 + $0x730] sm:$0xff]
    %v3886 = vld [vmem:[#allocation2 + $0x738] sm:$0xff]
    %v3887 = vld [vmem:[#allocation2 + $0x740] sm:$0xff]
    %v3888 = vld [vmem:[#allocation2 + $0x748] sm:$0xff]
    %v3889 = vld [vmem:[#allocation2 + $0x750] sm:$0xff]
    %v3890 = vld [vmem:[#allocation2 + $0x758] sm:$0xff]
    %v3891 = vld [vmem:[#allocation2 + $0x760] sm:$0xff]
    %v3892 = vld [vmem:[#allocation2 + $0x768] sm:$0xff]
    %v3893 = vld [vmem:[#allocation2 + $0x770] sm:$0xff]
    %v3894 = vld [vmem:[#allocation2 + $0x778] sm:$0xff]
    %v3895 = vld [vmem:[#allocation2 + $0x780] sm:$0xff]
    %v3896 = vld [vmem:[#allocation2 + $0x788] sm:$0xff]
    %v3897 = vld [vmem:[#allocation2 + $0x790] sm:$0xff]
    %v3898 = vld [vmem:[#allocation2 + $0x798] sm:$0xff]
    %v3899 = vld [vmem:[#allocation2 + $0x7a0] sm:$0xff]
    %v3900 = vld [vmem:[#allocation2 + $0x7a8] sm:$0xff]
    %v3901 = vld [vmem:[#allocation2 + $0x7b0] sm:$0xff]
    %v3902 = vld [vmem:[#allocation2 + $0x7b8] sm:$0xff]
    %v3903 = vld [vmem:[#allocation2 + $0x7c0] sm:$0xff]
    %v3904 = vld [vmem:[#allocation2 + $0x7c8] sm:$0xff]
    %v3905 = vld [vmem:[#allocation2 + $0x7d0] sm:$0xff]
    %v3906 = vld [vmem:[#allocation2 + $0x7d8] sm:$0xff]
    %v3907 = vld [vmem:[#allocation2 + $0x7e0] sm:$0xff]
    %v3908 = vld [vmem:[#allocation2 + $0x7e8] sm:$0xff]
    %v3909 = vld [vmem:[#allocation2 + $0x7f0] sm:$0xff]
    %v3910 = vld [vmem:[#allocation2 + $0x7f8] sm:$0xff]
    %v4167 = vunpack.c.l.b16 %v3655
    %v4168 = vunpack.c.h.b16 %v3655
    %v4169 = vunpack.c.l.b16 %v3656
    %v4170 = vunpack.c.h.b16 %v3656
    %v4171 = vunpack.c.l.b16 %v3657
    %v4172 = vunpack.c.h.b16 %v3657
    %v4173 = vunpack.c.l.b16 %v3658
    %v4174 = vunpack.c.h.b16 %v3658
    %v4175 = vunpack.c.l.b16 %v3659
    %v4176 = vunpack.c.h.b16 %v3659
    %v4177 = vunpack.c.l.b16 %v3660
    %v4178 = vunpack.c.h.b16 %v3660
    %v4179 = vunpack.c.l.b16 %v3661
    %v4180 = vunpack.c.h.b16 %v3661
    %v4181 = vunpack.c.l.b16 %v3662
    %v4182 = vunpack.c.h.b16 %v3662
    %v4183 = vunpack.c.l.b16 %v3663
    %v4184 = vunpack.c.h.b16 %v3663
    %v4185 = vunpack.c.l.b16 %v3664
    %v4186 = vunpack.c.h.b16 %v3664
    %v4187 = vunpack.c.l.b16 %v3665
    %v4188 = vunpack.c.h.b16 %v3665
    %v4189 = vunpack.c.l.b16 %v3666
    %v4190 = vunpack.c.h.b16 %v3666
    %v4191 = vunpack.c.l.b16 %v3667
    %v4192 = vunpack.c.h.b16 %v3667
    %v4193 = vunpack.c.l.b16 %v3668
    %v4194 = vunpack.c.h.b16 %v3668
    %v4195 = vunpack.c.l.b16 %v3669
    %v4196 = vunpack.c.h.b16 %v3669
    %v4197 = vunpack.c.l.b16 %v3670
    %v4198 = vunpack.c.h.b16 %v3670
    %v4199 = vunpack.c.l.b16 %v3671
    %v4200 = vunpack.c.h.b16 %v3671
    %v4201 = vunpack.c.l.b16 %v3672
    %v4202 = vunpack.c.h.b16 %v3672
    %v4203 = vunpack.c.l.b16 %v3673
    %v4204 = vunpack.c.h.b16 %v3673
    %v4205 = vunpack.c.l.b16 %v3674
    %v4206 = vunpack.c.h.b16 %v3674
    %v4207 = vunpack.c.l.b16 %v3675
    %v4208 = vunpack.c.h.b16 %v3675
    %v4209 = vunpack.c.l.b16 %v3676
    %v4210 = vunpack.c.h.b16 %v3676
    %v4211 = vunpack.c.l.b16 %v3677
    %v4212 = vunpack.c.h.b16 %v3677
    %v4213 = vunpack.c.l.b16 %v3678
    %v4214 = vunpack.c.h.b16 %v3678
    %v4215 = vunpack.c.l.b16 %v3679
    %v4216 = vunpack.c.h.b16 %v3679
    %v4217 = vunpack.c.l.b16 %v3680
    %v4218 = vunpack.c.h.b16 %v3680
    %v4219 = vunpack.c.l.b16 %v3681
    %v4220 = vunpack.c.h.b16 %v3681
    %v4221 = vunpack.c.l.b16 %v3682
    %v4222 = vunpack.c.h.b16 %v3682
    %v4223 = vunpack.c.l.b16 %v3683
    %v4224 = vunpack.c.h.b16 %v3683
    %v4225 = vunpack.c.l.b16 %v3684
    %v4226 = vunpack.c.h.b16 %v3684
    %v4227 = vunpack.c.l.b16 %v3685
    %v4228 = vunpack.c.h.b16 %v3685
    %v4229 = vunpack.c.l.b16 %v3686
    %v4230 = vunpack.c.h.b16 %v3686
    %v4231 = vunpack.c.l.b16 %v3687
    %v4232 = vunpack.c.h.b16 %v3687
    %v4233 = vunpack.c.l.b16 %v3688
    %v4234 = vunpack.c.h.b16 %v3688
    %v4235 = vunpack.c.l.b16 %v3689
    %v4236 = vunpack.c.h.b16 %v3689
    %v4237 = vunpack.c.l.b16 %v3690
    %v4238 = vunpack.c.h.b16 %v3690
    %v4239 = vunpack.c.l.b16 %v3691
    %v4240 = vunpack.c.h.b16 %v3691
    %v4241 = vunpack.c.l.b16 %v3692
    %v4242 = vunpack.c.h.b16 %v3692
    %v4243 = vunpack.c.l.b16 %v3693
    %v4244 = vunpack.c.h.b16 %v3693
    %v4245 = vunpack.c.l.b16 %v3694
    %v4246 = vunpack.c.h.b16 %v3694
    %v4247 = vunpack.c.l.b16 %v3695
    %v4248 = vunpack.c.h.b16 %v3695
    %v4249 = vunpack.c.l.b16 %v3696
    %v4250 = vunpack.c.h.b16 %v3696
    %v4251 = vunpack.c.l.b16 %v3697
    %v4252 = vunpack.c.h.b16 %v3697
    %v4253 = vunpack.c.l.b16 %v3698
    %v4254 = vunpack.c.h.b16 %v3698
    %v4255 = vunpack.c.l.b16 %v3699
    %v4256 = vunpack.c.h.b16 %v3699
    %v4257 = vunpack.c.l.b16 %v3700
    %v4258 = vunpack.c.h.b16 %v3700
    %v4259 = vunpack.c.l.b16 %v3701
    %v4260 = vunpack.c.h.b16 %v3701
    %v4261 = vunpack.c.l.b16 %v3702
    %v4262 = vunpack.c.h.b16 %v3702
    %v4263 = vunpack.c.l.b16 %v3703
    %v4264 = vunpack.c.h.b16 %v3703
    %v4265 = vunpack.c.l.b16 %v3704
    %v4266 = vunpack.c.h.b16 %v3704
    %v4267 = vunpack.c.l.b16 %v3705
    %v4268 = vunpack.c.h.b16 %v3705
    %v4269 = vunpack.c.l.b16 %v3706
    %v4270 = vunpack.c.h.b16 %v3706
    %v4271 = vunpack.c.l.b16 %v3707
    %v4272 = vunpack.c.h.b16 %v3707
    %v4273 = vunpack.c.l.b16 %v3708
    %v4274 = vunpack.c.h.b16 %v3708
    %v4275 = vunpack.c.l.b16 %v3709
    %v4276 = vunpack.c.h.b16 %v3709
    %v4277 = vunpack.c.l.b16 %v3710
    %v4278 = vunpack.c.h.b16 %v3710
    %v4279 = vunpack.c.l.b16 %v3711
    %v4280 = vunpack.c.h.b16 %v3711
    %v4281 = vunpack.c.l.b16 %v3712
    %v4282 = vunpack.c.h.b16 %v3712
    %v4283 = vunpack.c.l.b16 %v3713
    %v4284 = vunpack.c.h.b16 %v3713
    %v4285 = vunpack.c.l.b16 %v3714
    %v4286 = vunpack.c.h.b16 %v3714
    %v4287 = vunpack.c.l.b16 %v3715
    %v4288 = vunpack.c.h.b16 %v3715
    %v4289 = vunpack.c.l.b16 %v3716
    %v4290 = vunpack.c.h.b16 %v3716
    %v4291 = vunpack.c.l.b16 %v3717
    %v4292 = vunpack.c.h.b16 %v3717
    %v4293 = vunpack.c.l.b16 %v3718
    %v4294 = vunpack.c.h.b16 %v3718
    %v4295 = vunpack.c.l.b16 %v3719
    %v4296 = vunpack.c.h.b16 %v3719
    %v4297 = vunpack.c.l.b16 %v3720
    %v4298 = vunpack.c.h.b16 %v3720
    %v4299 = vunpack.c.l.b16 %v3721
    %v4300 = vunpack.c.h.b16 %v3721
    %v4301 = vunpack.c.l.b16 %v3722
    %v4302 = vunpack.c.h.b16 %v3722
    %v4303 = vunpack.c.l.b16 %v3723
    %v4304 = vunpack.c.h.b16 %v3723
    %v4305 = vunpack.c.l.b16 %v3724
    %v4306 = vunpack.c.h.b16 %v3724
    %v4307 = vunpack.c.l.b16 %v3725
    %v4308 = vunpack.c.h.b16 %v3725
    %v4309 = vunpack.c.l.b16 %v3726
    %v4310 = vunpack.c.h.b16 %v3726
    %v4311 = vunpack.c.l.b16 %v3727
    %v4312 = vunpack.c.h.b16 %v3727
    %v4313 = vunpack.c.l.b16 %v3728
    %v4314 = vunpack.c.h.b16 %v3728
    %v4315 = vunpack.c.l.b16 %v3729
    %v4316 = vunpack.c.h.b16 %v3729
    %v4317 = vunpack.c.l.b16 %v3730
    %v4318 = vunpack.c.h.b16 %v3730
    %v4319 = vunpack.c.l.b16 %v3731
    %v4320 = vunpack.c.h.b16 %v3731
    %v4321 = vunpack.c.l.b16 %v3732
    %v4322 = vunpack.c.h.b16 %v3732
    %v4323 = vunpack.c.l.b16 %v3733
    %v4324 = vunpack.c.h.b16 %v3733
    %v4325 = vunpack.c.l.b16 %v3734
    %v4326 = vunpack.c.h.b16 %v3734
    %v4327 = vunpack.c.l.b16 %v3735
    %v4328 = vunpack.c.h.b16 %v3735
    %v4329 = vunpack.c.l.b16 %v3736
    %v4330 = vunpack.c.h.b16 %v3736
    %v4331 = vunpack.c.l.b16 %v3737
    %v4332 = vunpack.c.h.b16 %v3737
    %v4333 = vunpack.c.l.b16 %v3738
    %v4334 = vunpack.c.h.b16 %v3738
    %v4335 = vunpack.c.l.b16 %v3739
    %v4336 = vunpack.c.h.b16 %v3739
    %v4337 = vunpack.c.l.b16 %v3740
    %v4338 = vunpack.c.h.b16 %v3740
    %v4339 = vunpack.c.l.b16 %v3741
    %v4340 = vunpack.c.h.b16 %v3741
    %v4341 = vunpack.c.l.b16 %v3742
    %v4342 = vunpack.c.h.b16 %v3742
    %v4343 = vunpack.c.l.b16 %v3743
    %v4344 = vunpack.c.h.b16 %v3743
    %v4345 = vunpack.c.l.b16 %v3744
    %v4346 = vunpack.c.h.b16 %v3744
    %v4347 = vunpack.c.l.b16 %v3745
    %v4348 = vunpack.c.h.b16 %v3745
    %v4349 = vunpack.c.l.b16 %v3746
    %v4350 = vunpack.c.h.b16 %v3746
    %v4351 = vunpack.c.l.b16 %v3747
    %v4352 = vunpack.c.h.b16 %v3747
    %v4353 = vunpack.c.l.b16 %v3748
    %v4354 = vunpack.c.h.b16 %v3748
    %v4355 = vunpack.c.l.b16 %v3749
    %v4356 = vunpack.c.h.b16 %v3749
    %v4357 = vunpack.c.l.b16 %v3750
    %v4358 = vunpack.c.h.b16 %v3750
    %v4359 = vunpack.c.l.b16 %v3751
    %v4360 = vunpack.c.h.b16 %v3751
    %v4361 = vunpack.c.l.b16 %v3752
    %v4362 = vunpack.c.h.b16 %v3752
    %v4363 = vunpack.c.l.b16 %v3753
    %v4364 = vunpack.c.h.b16 %v3753
    %v4365 = vunpack.c.l.b16 %v3754
    %v4366 = vunpack.c.h.b16 %v3754
    %v4367 = vunpack.c.l.b16 %v3755
    %v4368 = vunpack.c.h.b16 %v3755
    %v4369 = vunpack.c.l.b16 %v3756
    %v4370 = vunpack.c.h.b16 %v3756
    %v4371 = vunpack.c.l.b16 %v3757
    %v4372 = vunpack.c.h.b16 %v3757
    %v4373 = vunpack.c.l.b16 %v3758
    %v4374 = vunpack.c.h.b16 %v3758
    %v4375 = vunpack.c.l.b16 %v3759
    %v4376 = vunpack.c.h.b16 %v3759
    %v4377 = vunpack.c.l.b16 %v3760
    %v4378 = vunpack.c.h.b16 %v3760
    %v4379 = vunpack.c.l.b16 %v3761
    %v4380 = vunpack.c.h.b16 %v3761
    %v4381 = vunpack.c.l.b16 %v3762
    %v4382 = vunpack.c.h.b16 %v3762
    %v4383 = vunpack.c.l.b16 %v3763
    %v4384 = vunpack.c.h.b16 %v3763
    %v4385 = vunpack.c.l.b16 %v3764
    %v4386 = vunpack.c.h.b16 %v3764
    %v4387 = vunpack.c.l.b16 %v3765
    %v4388 = vunpack.c.h.b16 %v3765
    %v4389 = vunpack.c.l.b16 %v3766
    %v4390 = vunpack.c.h.b16 %v3766
    %v4391 = vunpack.c.l.b16 %v3767
    %v4392 = vunpack.c.h.b16 %v3767
    %v4393 = vunpack.c.l.b16 %v3768
    %v4394 = vunpack.c.h.b16 %v3768
    %v4395 = vunpack.c.l.b16 %v3769
    %v4396 = vunpack.c.h.b16 %v3769
    %v4397 = vunpack.c.l.b16 %v3770
    %v4398 = vunpack.c.h.b16 %v3770
    %v4399 = vunpack.c.l.b16 %v3771
    %v4400 = vunpack.c.h.b16 %v3771
    %v4401 = vunpack.c.l.b16 %v3772
    %v4402 = vunpack.c.h.b16 %v3772
    %v4403 = vunpack.c.l.b16 %v3773
    %v4404 = vunpack.c.h.b16 %v3773
    %v4405 = vunpack.c.l.b16 %v3774
    %v4406 = vunpack.c.h.b16 %v3774
    %v4407 = vunpack.c.l.b16 %v3775
    %v4408 = vunpack.c.h.b16 %v3775
    %v4409 = vunpack.c.l.b16 %v3776
    %v4410 = vunpack.c.h.b16 %v3776
    %v4411 = vunpack.c.l.b16 %v3777
    %v4412 = vunpack.c.h.b16 %v3777
    %v4413 = vunpack.c.l.b16 %v3778
    %v4414 = vunpack.c.h.b16 %v3778
    %v4415 = vunpack.c.l.b16 %v3779
    %v4416 = vunpack.c.h.b16 %v3779
    %v4417 = vunpack.c.l.b16 %v3780
    %v4418 = vunpack.c.h.b16 %v3780
    %v4419 = vunpack.c.l.b16 %v3781
    %v4420 = vunpack.c.h.b16 %v3781
    %v4421 = vunpack.c.l.b16 %v3782
    %v4422 = vunpack.c.h.b16 %v3782
    %v4423 = vunpack.c.l.b16 %v3783
    %v4424 = vunpack.c.h.b16 %v3783
    %v4425 = vunpack.c.l.b16 %v3784
    %v4426 = vunpack.c.h.b16 %v3784
    %v4427 = vunpack.c.l.b16 %v3785
    %v4428 = vunpack.c.h.b16 %v3785
    %v4429 = vunpack.c.l.b16 %v3786
    %v4430 = vunpack.c.h.b16 %v3786
    %v4431 = vunpack.c.l.b16 %v3787
    %v4432 = vunpack.c.h.b16 %v3787
    %v4433 = vunpack.c.l.b16 %v3788
    %v4434 = vunpack.c.h.b16 %v3788
    %v4435 = vunpack.c.l.b16 %v3789
    %v4436 = vunpack.c.h.b16 %v3789
    %v4437 = vunpack.c.l.b16 %v3790
    %v4438 = vunpack.c.h.b16 %v3790
    %v4439 = vunpack.c.l.b16 %v3791
    %v4440 = vunpack.c.h.b16 %v3791
    %v4441 = vunpack.c.l.b16 %v3792
    %v4442 = vunpack.c.h.b16 %v3792
    %v4443 = vunpack.c.l.b16 %v3793
    %v4444 = vunpack.c.h.b16 %v3793
    %v4445 = vunpack.c.l.b16 %v3794
    %v4446 = vunpack.c.h.b16 %v3794
    %v4447 = vunpack.c.l.b16 %v3795
    %v4448 = vunpack.c.h.b16 %v3795
    %v4449 = vunpack.c.l.b16 %v3796
    %v4450 = vunpack.c.h.b16 %v3796
    %v4451 = vunpack.c.l.b16 %v3797
    %v4452 = vunpack.c.h.b16 %v3797
    %v4453 = vunpack.c.l.b16 %v3798
    %v4454 = vunpack.c.h.b16 %v3798
    %v4455 = vunpack.c.l.b16 %v3799
    %v4456 = vunpack.c.h.b16 %v3799
    %v4457 = vunpack.c.l.b16 %v3800
    %v4458 = vunpack.c.h.b16 %v3800
    %v4459 = vunpack.c.l.b16 %v3801
    %v4460 = vunpack.c.h.b16 %v3801
    %v4461 = vunpack.c.l.b16 %v3802
    %v4462 = vunpack.c.h.b16 %v3802
    %v4463 = vunpack.c.l.b16 %v3803
    %v4464 = vunpack.c.h.b16 %v3803
    %v4465 = vunpack.c.l.b16 %v3804
    %v4466 = vunpack.c.h.b16 %v3804
    %v4467 = vunpack.c.l.b16 %v3805
    %v4468 = vunpack.c.h.b16 %v3805
    %v4469 = vunpack.c.l.b16 %v3806
    %v4470 = vunpack.c.h.b16 %v3806
    %v4471 = vunpack.c.l.b16 %v3807
    %v4472 = vunpack.c.h.b16 %v3807
    %v4473 = vunpack.c.l.b16 %v3808
    %v4474 = vunpack.c.h.b16 %v3808
    %v4475 = vunpack.c.l.b16 %v3809
    %v4476 = vunpack.c.h.b16 %v3809
    %v4477 = vunpack.c.l.b16 %v3810
    %v4478 = vunpack.c.h.b16 %v3810
    %v4479 = vunpack.c.l.b16 %v3811
    %v4480 = vunpack.c.h.b16 %v3811
    %v4481 = vunpack.c.l.b16 %v3812
    %v4482 = vunpack.c.h.b16 %v3812
    %v4483 = vunpack.c.l.b16 %v3813
    %v4484 = vunpack.c.h.b16 %v3813
    %v4485 = vunpack.c.l.b16 %v3814
    %v4486 = vunpack.c.h.b16 %v3814
    %v4487 = vunpack.c.l.b16 %v3815
    %v4488 = vunpack.c.h.b16 %v3815
    %v4489 = vunpack.c.l.b16 %v3816
    %v4490 = vunpack.c.h.b16 %v3816
    %v4491 = vunpack.c.l.b16 %v3817
    %v4492 = vunpack.c.h.b16 %v3817
    %v4493 = vunpack.c.l.b16 %v3818
    %v4494 = vunpack.c.h.b16 %v3818
    %v4495 = vunpack.c.l.b16 %v3819
    %v4496 = vunpack.c.h.b16 %v3819
    %v4497 = vunpack.c.l.b16 %v3820
    %v4498 = vunpack.c.h.b16 %v3820
    %v4499 = vunpack.c.l.b16 %v3821
    %v4500 = vunpack.c.h.b16 %v3821
    %v4501 = vunpack.c.l.b16 %v3822
    %v4502 = vunpack.c.h.b16 %v3822
    %v4503 = vunpack.c.l.b16 %v3823
    %v4504 = vunpack.c.h.b16 %v3823
    %v4505 = vunpack.c.l.b16 %v3824
    %v4506 = vunpack.c.h.b16 %v3824
    %v4507 = vunpack.c.l.b16 %v3825
    %v4508 = vunpack.c.h.b16 %v3825
    %v4509 = vunpack.c.l.b16 %v3826
    %v4510 = vunpack.c.h.b16 %v3826
    %v4511 = vunpack.c.l.b16 %v3827
    %v4512 = vunpack.c.h.b16 %v3827
    %v4513 = vunpack.c.l.b16 %v3828
    %v4514 = vunpack.c.h.b16 %v3828
    %v4515 = vunpack.c.l.b16 %v3829
    %v4516 = vunpack.c.h.b16 %v3829
    %v4517 = vunpack.c.l.b16 %v3830
    %v4518 = vunpack.c.h.b16 %v3830
    %v4519 = vunpack.c.l.b16 %v3831
    %v4520 = vunpack.c.h.b16 %v3831
    %v4521 = vunpack.c.l.b16 %v3832
    %v4522 = vunpack.c.h.b16 %v3832
    %v4523 = vunpack.c.l.b16 %v3833
    %v4524 = vunpack.c.h.b16 %v3833
    %v4525 = vunpack.c.l.b16 %v3834
    %v4526 = vunpack.c.h.b16 %v3834
    %v4527 = vunpack.c.l.b16 %v3835
    %v4528 = vunpack.c.h.b16 %v3835
    %v4529 = vunpack.c.l.b16 %v3836
    %v4530 = vunpack.c.h.b16 %v3836
    %v4531 = vunpack.c.l.b16 %v3837
    %v4532 = vunpack.c.h.b16 %v3837
    %v4533 = vunpack.c.l.b16 %v3838
    %v4534 = vunpack.c.h.b16 %v3838
    %v4535 = vunpack.c.l.b16 %v3839
    %v4536 = vunpack.c.h.b16 %v3839
    %v4537 = vunpack.c.l.b16 %v3840
    %v4538 = vunpack.c.h.b16 %v3840
    %v4539 = vunpack.c.l.b16 %v3841
    %v4540 = vunpack.c.h.b16 %v3841
    %v4541 = vunpack.c.l.b16 %v3842
    %v4542 = vunpack.c.h.b16 %v3842
    %v4543 = vunpack.c.l.b16 %v3843
    %v4544 = vunpack.c.h.b16 %v3843
    %v4545 = vunpack.c.l.b16 %v3844
    %v4546 = vunpack.c.h.b16 %v3844
    %v4547 = vunpack.c.l.b16 %v3845
    %v4548 = vunpack.c.h.b16 %v3845
    %v4549 = vunpack.c.l.b16 %v3846
    %v4550 = vunpack.c.h.b16 %v3846
    %v4551 = vunpack.c.l.b16 %v3847
    %v4552 = vunpack.c.h.b16 %v3847
    %v4553 = vunpack.c.l.b16 %v3848
    %v4554 = vunpack.c.h.b16 %v3848
    %v4555 = vunpack.c.l.b16 %v3849
    %v4556 = vunpack.c.h.b16 %v3849
    %v4557 = vunpack.c.l.b16 %v3850
    %v4558 = vunpack.c.h.b16 %v3850
    %v4559 = vunpack.c.l.b16 %v3851
    %v4560 = vunpack.c.h.b16 %v3851
    %v4561 = vunpack.c.l.b16 %v3852
    %v4562 = vunpack.c.h.b16 %v3852
    %v4563 = vunpack.c.l.b16 %v3853
    %v4564 = vunpack.c.h.b16 %v3853
    %v4565 = vunpack.c.l.b16 %v3854
    %v4566 = vunpack.c.h.b16 %v3854
    %v4567 = vunpack.c.l.b16 %v3855
    %v4568 = vunpack.c.h.b16 %v3855
    %v4569 = vunpack.c.l.b16 %v3856
    %v4570 = vunpack.c.h.b16 %v3856
    %v4571 = vunpack.c.l.b16 %v3857
    %v4572 = vunpack.c.h.b16 %v3857
    %v4573 = vunpack.c.l.b16 %v3858
    %v4574 = vunpack.c.h.b16 %v3858
    %v4575 = vunpack.c.l.b16 %v3859
    %v4576 = vunpack.c.h.b16 %v3859
    %v4577 = vunpack.c.l.b16 %v3860
    %v4578 = vunpack.c.h.b16 %v3860
    %v4579 = vunpack.c.l.b16 %v3861
    %v4580 = vunpack.c.h.b16 %v3861
    %v4581 = vunpack.c.l.b16 %v3862
    %v4582 = vunpack.c.h.b16 %v3862
    %v4583 = vunpack.c.l.b16 %v3863
    %v4584 = vunpack.c.h.b16 %v3863
    %v4585 = vunpack.c.l.b16 %v3864
    %v4586 = vunpack.c.h.b16 %v3864
    %v4587 = vunpack.c.l.b16 %v3865
    %v4588 = vunpack.c.h.b16 %v3865
    %v4589 = vunpack.c.l.b16 %v3866
    %v4590 = vunpack.c.h.b16 %v3866
    %v4591 = vunpack.c.l.b16 %v3867
    %v4592 = vunpack.c.h.b16 %v3867
    %v4593 = vunpack.c.l.b16 %v3868
    %v4594 = vunpack.c.h.b16 %v3868
    %v4595 = vunpack.c.l.b16 %v3869
    %v4596 = vunpack.c.h.b16 %v3869
    %v4597 = vunpack.c.l.b16 %v3870
    %v4598 = vunpack.c.h.b16 %v3870
    %v4599 = vunpack.c.l.b16 %v3871
    %v4600 = vunpack.c.h.b16 %v3871
    %v4601 = vunpack.c.l.b16 %v3872
    %v4602 = vunpack.c.h.b16 %v3872
    %v4603 = vunpack.c.l.b16 %v3873
    %v4604 = vunpack.c.h.b16 %v3873
    %v4605 = vunpack.c.l.b16 %v3874
    %v4606 = vunpack.c.h.b16 %v3874
    %v4607 = vunpack.c.l.b16 %v3875
    %v4608 = vunpack.c.h.b16 %v3875
    %v4609 = vunpack.c.l.b16 %v3876
    %v4610 = vunpack.c.h.b16 %v3876
    %v4611 = vunpack.c.l.b16 %v3877
    %v4612 = vunpack.c.h.b16 %v3877
    %v4613 = vunpack.c.l.b16 %v3878
    %v4614 = vunpack.c.h.b16 %v3878
    %v4615 = vunpack.c.l.b16 %v3879
    %v4616 = vunpack.c.h.b16 %v3879
    %v4617 = vunpack.c.l.b16 %v3880
    %v4618 = vunpack.c.h.b16 %v3880
    %v4619 = vunpack.c.l.b16 %v3881
    %v4620 = vunpack.c.h.b16 %v3881
    %v4621 = vunpack.c.l.b16 %v3882
    %v4622 = vunpack.c.h.b16 %v3882
    %v4623 = vunpack.c.l.b16 %v3883
    %v4624 = vunpack.c.h.b16 %v3883
    %v4625 = vunpack.c.l.b16 %v3884
    %v4626 = vunpack.c.h.b16 %v3884
    %v4627 = vunpack.c.l.b16 %v3885
    %v4628 = vunpack.c.h.b16 %v3885
    %v4629 = vunpack.c.l.b16 %v3886
    %v4630 = vunpack.c.h.b16 %v3886
    %v4631 = vunpack.c.l.b16 %v3887
    %v4632 = vunpack.c.h.b16 %v3887
    %v4633 = vunpack.c.l.b16 %v3888
    %v4634 = vunpack.c.h.b16 %v3888
    %v4635 = vunpack.c.l.b16 %v3889
    %v4636 = vunpack.c.h.b16 %v3889
    %v4637 = vunpack.c.l.b16 %v3890
    %v4638 = vunpack.c.h.b16 %v3890
    %v4639 = vunpack.c.l.b16 %v3891
    %v4640 = vunpack.c.h.b16 %v3891
    %v4641 = vunpack.c.l.b16 %v3892
    %v4642 = vunpack.c.h.b16 %v3892
    %v4643 = vunpack.c.l.b16 %v3893
    %v4644 = vunpack.c.h.b16 %v3893
    %v4645 = vunpack.c.l.b16 %v3894
    %v4646 = vunpack.c.h.b16 %v3894
    %v4647 = vunpack.c.l.b16 %v3895
    %v4648 = vunpack.c.h.b16 %v3895
    %v4649 = vunpack.c.l.b16 %v3896
    %v4650 = vunpack.c.h.b16 %v3896
    %v4651 = vunpack.c.l.b16 %v3897
    %v4652 = vunpack.c.h.b16 %v3897
    %v4653 = vunpack.c.l.b16 %v3898
    %v4654 = vunpack.c.h.b16 %v3898
    %v4655 = vunpack.c.l.b16 %v3899
    %v4656 = vunpack.c.h.b16 %v3899
    %v4657 = vunpack.c.l.b16 %v3900
    %v4658 = vunpack.c.h.b16 %v3900
    %v4659 = vunpack.c.l.b16 %v3901
    %v4660 = vunpack.c.h.b16 %v3901
    %v4661 = vunpack.c.l.b16 %v3902
    %v4662 = vunpack.c.h.b16 %v3902
    %v4663 = vunpack.c.l.b16 %v3903
    %v4664 = vunpack.c.h.b16 %v3903
    %v4665 = vunpack.c.l.b16 %v3904
    %v4666 = vunpack.c.h.b16 %v3904
    %v4667 = vunpack.c.l.b16 %v3905
    %v4668 = vunpack.c.h.b16 %v3905
    %v4669 = vunpack.c.l.b16 %v3906
    %v4670 = vunpack.c.h.b16 %v3906
    %v4671 = vunpack.c.l.b16 %v3907
    %v4672 = vunpack.c.h.b16 %v3907
    %v4673 = vunpack.c.l.b16 %v3908
    %v4674 = vunpack.c.h.b16 %v3908
    %v4675 = vunpack.c.l.b16 %v3909
    %v4676 = vunpack.c.h.b16 %v3909
    %v4677 = vunpack.c.l.b16 %v3910
    %v4678 = vunpack.c.h.b16 %v3910
    %v4679 = vpack.c.b16 %v4171, %v4167
    %v4680 = vpack.c.b16 %v4172, %v4168
    %v4681 = vpack.c.b16 %v4173, %v4169
    %v4682 = vpack.c.b16 %v4174, %v4170
    %v4683 = vpack.c.b16 %v4179, %v4175
    %v4684 = vpack.c.b16 %v4180, %v4176
    %v4685 = vpack.c.b16 %v4181, %v4177
    %v4686 = vpack.c.b16 %v4182, %v4178
    %v4687 = vpack.c.b16 %v4187, %v4183
    %v4688 = vpack.c.b16 %v4188, %v4184
    %v4689 = vpack.c.b16 %v4189, %v4185
    %v4690 = vpack.c.b16 %v4190, %v4186
    %v4691 = vpack.c.b16 %v4195, %v4191
    %v4692 = vpack.c.b16 %v4196, %v4192
    %v4693 = vpack.c.b16 %v4197, %v4193
    %v4694 = vpack.c.b16 %v4198, %v4194
    %v4695 = vpack.c.b16 %v4203, %v4199
    %v4696 = vpack.c.b16 %v4204, %v4200
    %v4697 = vpack.c.b16 %v4205, %v4201
    %v4698 = vpack.c.b16 %v4206, %v4202
    %v4699 = vpack.c.b16 %v4211, %v4207
    %v4700 = vpack.c.b16 %v4212, %v4208
    %v4701 = vpack.c.b16 %v4213, %v4209
    %v4702 = vpack.c.b16 %v4214, %v4210
    %v4703 = vpack.c.b16 %v4219, %v4215
    %v4704 = vpack.c.b16 %v4220, %v4216
    %v4705 = vpack.c.b16 %v4221, %v4217
    %v4706 = vpack.c.b16 %v4222, %v4218
    %v4707 = vpack.c.b16 %v4227, %v4223
    %v4708 = vpack.c.b16 %v4228, %v4224
    %v4709 = vpack.c.b16 %v4229, %v4225
    %v4710 = vpack.c.b16 %v4230, %v4226
    %v4711 = vpack.c.b16 %v4235, %v4231
    %v4712 = vpack.c.b16 %v4236, %v4232
    %v4713 = vpack.c.b16 %v4237, %v4233
    %v4714 = vpack.c.b16 %v4238, %v4234
    %v4715 = vpack.c.b16 %v4243, %v4239
    %v4716 = vpack.c.b16 %v4244, %v4240
    %v4717 = vpack.c.b16 %v4245, %v4241
    %v4718 = vpack.c.b16 %v4246, %v4242
    %v4719 = vpack.c.b16 %v4251, %v4247
    %v4720 = vpack.c.b16 %v4252, %v4248
    %v4721 = vpack.c.b16 %v4253, %v4249
    %v4722 = vpack.c.b16 %v4254, %v4250
    %v4723 = vpack.c.b16 %v4259, %v4255
    %v4724 = vpack.c.b16 %v4260, %v4256
    %v4725 = vpack.c.b16 %v4261, %v4257
    %v4726 = vpack.c.b16 %v4262, %v4258
    %v4727 = vpack.c.b16 %v4267, %v4263
    %v4728 = vpack.c.b16 %v4268, %v4264
    %v4729 = vpack.c.b16 %v4269, %v4265
    %v4730 = vpack.c.b16 %v4270, %v4266
    %v4731 = vpack.c.b16 %v4275, %v4271
    %v4732 = vpack.c.b16 %v4276, %v4272
    %v4733 = vpack.c.b16 %v4277, %v4273
    %v4734 = vpack.c.b16 %v4278, %v4274
    %v4735 = vpack.c.b16 %v4283, %v4279
    %v4736 = vpack.c.b16 %v4284, %v4280
    %v4737 = vpack.c.b16 %v4285, %v4281
    %v4738 = vpack.c.b16 %v4286, %v4282
    %v4739 = vpack.c.b16 %v4291, %v4287
    %v4740 = vpack.c.b16 %v4292, %v4288
    %v4741 = vpack.c.b16 %v4293, %v4289
    %v4742 = vpack.c.b16 %v4294, %v4290
    %v4743 = vpack.c.b16 %v4299, %v4295
    %v4744 = vpack.c.b16 %v4300, %v4296
    %v4745 = vpack.c.b16 %v4301, %v4297
    %v4746 = vpack.c.b16 %v4302, %v4298
    %v4747 = vpack.c.b16 %v4307, %v4303
    %v4748 = vpack.c.b16 %v4308, %v4304
    %v4749 = vpack.c.b16 %v4309, %v4305
    %v4750 = vpack.c.b16 %v4310, %v4306
    %v4751 = vpack.c.b16 %v4315, %v4311
    %v4752 = vpack.c.b16 %v4316, %v4312
    %v4753 = vpack.c.b16 %v4317, %v4313
    %v4754 = vpack.c.b16 %v4318, %v4314
    %v4755 = vpack.c.b16 %v4323, %v4319
    %v4756 = vpack.c.b16 %v4324, %v4320
    %v4757 = vpack.c.b16 %v4325, %v4321
    %v4758 = vpack.c.b16 %v4326, %v4322
    %v4759 = vpack.c.b16 %v4331, %v4327
    %v4760 = vpack.c.b16 %v4332, %v4328
    %v4761 = vpack.c.b16 %v4333, %v4329
    %v4762 = vpack.c.b16 %v4334, %v4330
    %v4763 = vpack.c.b16 %v4339, %v4335
    %v4764 = vpack.c.b16 %v4340, %v4336
    %v4765 = vpack.c.b16 %v4341, %v4337
    %v4766 = vpack.c.b16 %v4342, %v4338
    %v4767 = vpack.c.b16 %v4347, %v4343
    %v4768 = vpack.c.b16 %v4348, %v4344
    %v4769 = vpack.c.b16 %v4349, %v4345
    %v4770 = vpack.c.b16 %v4350, %v4346
    %v4771 = vpack.c.b16 %v4355, %v4351
    %v4772 = vpack.c.b16 %v4356, %v4352
    %v4773 = vpack.c.b16 %v4357, %v4353
    %v4774 = vpack.c.b16 %v4358, %v4354
    %v4775 = vpack.c.b16 %v4363, %v4359
    %v4776 = vpack.c.b16 %v4364, %v4360
    %v4777 = vpack.c.b16 %v4365, %v4361
    %v4778 = vpack.c.b16 %v4366, %v4362
    %v4779 = vpack.c.b16 %v4371, %v4367
    %v4780 = vpack.c.b16 %v4372, %v4368
    %v4781 = vpack.c.b16 %v4373, %v4369
    %v4782 = vpack.c.b16 %v4374, %v4370
    %v4783 = vpack.c.b16 %v4379, %v4375
    %v4784 = vpack.c.b16 %v4380, %v4376
    %v4785 = vpack.c.b16 %v4381, %v4377
    %v4786 = vpack.c.b16 %v4382, %v4378
    %v4787 = vpack.c.b16 %v4387, %v4383
    %v4788 = vpack.c.b16 %v4388, %v4384
    %v4789 = vpack.c.b16 %v4389, %v4385
    %v4790 = vpack.c.b16 %v4390, %v4386
    %v4791 = vpack.c.b16 %v4395, %v4391
    %v4792 = vpack.c.b16 %v4396, %v4392
    %v4793 = vpack.c.b16 %v4397, %v4393
    %v4794 = vpack.c.b16 %v4398, %v4394
    %v4795 = vpack.c.b16 %v4403, %v4399
    %v4796 = vpack.c.b16 %v4404, %v4400
    %v4797 = vpack.c.b16 %v4405, %v4401
    %v4798 = vpack.c.b16 %v4406, %v4402
    %v4799 = vpack.c.b16 %v4411, %v4407
    %v4800 = vpack.c.b16 %v4412, %v4408
    %v4801 = vpack.c.b16 %v4413, %v4409
    %v4802 = vpack.c.b16 %v4414, %v4410
    %v4803 = vpack.c.b16 %v4419, %v4415
    %v4804 = vpack.c.b16 %v4420, %v4416
    %v4805 = vpack.c.b16 %v4421, %v4417
    %v4806 = vpack.c.b16 %v4422, %v4418
    %v4807 = vpack.c.b16 %v4427, %v4423
    %v4808 = vpack.c.b16 %v4428, %v4424
    %v4809 = vpack.c.b16 %v4429, %v4425
    %v4810 = vpack.c.b16 %v4430, %v4426
    %v4811 = vpack.c.b16 %v4435, %v4431
    %v4812 = vpack.c.b16 %v4436, %v4432
    %v4813 = vpack.c.b16 %v4437, %v4433
    %v4814 = vpack.c.b16 %v4438, %v4434
    %v4815 = vpack.c.b16 %v4443, %v4439
    %v4816 = vpack.c.b16 %v4444, %v4440
    %v4817 = vpack.c.b16 %v4445, %v4441
    %v4818 = vpack.c.b16 %v4446, %v4442
    %v4819 = vpack.c.b16 %v4451, %v4447
    %v4820 = vpack.c.b16 %v4452, %v4448
    %v4821 = vpack.c.b16 %v4453, %v4449
    %v4822 = vpack.c.b16 %v4454, %v4450
    %v4823 = vpack.c.b16 %v4459, %v4455
    %v4824 = vpack.c.b16 %v4460, %v4456
    %v4825 = vpack.c.b16 %v4461, %v4457
    %v4826 = vpack.c.b16 %v4462, %v4458
    %v4827 = vpack.c.b16 %v4467, %v4463
    %v4828 = vpack.c.b16 %v4468, %v4464
    %v4829 = vpack.c.b16 %v4469, %v4465
    %v4830 = vpack.c.b16 %v4470, %v4466
    %v4831 = vpack.c.b16 %v4475, %v4471
    %v4832 = vpack.c.b16 %v4476, %v4472
    %v4833 = vpack.c.b16 %v4477, %v4473
    %v4834 = vpack.c.b16 %v4478, %v4474
    %v4835 = vpack.c.b16 %v4483, %v4479
    %v4836 = vpack.c.b16 %v4484, %v4480
    %v4837 = vpack.c.b16 %v4485, %v4481
    %v4838 = vpack.c.b16 %v4486, %v4482
    %v4839 = vpack.c.b16 %v4491, %v4487
    %v4840 = vpack.c.b16 %v4492, %v4488
    %v4841 = vpack.c.b16 %v4493, %v4489
    %v4842 = vpack.c.b16 %v4494, %v4490
    %v4843 = vpack.c.b16 %v4499, %v4495
    %v4844 = vpack.c.b16 %v4500, %v4496
    %v4845 = vpack.c.b16 %v4501, %v4497
    %v4846 = vpack.c.b16 %v4502, %v4498
    %v4847 = vpack.c.b16 %v4507, %v4503
    %v4848 = vpack.c.b16 %v4508, %v4504
    %v4849 = vpack.c.b16 %v4509, %v4505
    %v4850 = vpack.c.b16 %v4510, %v4506
    %v4851 = vpack.c.b16 %v4515, %v4511
    %v4852 = vpack.c.b16 %v4516, %v4512
    %v4853 = vpack.c.b16 %v4517, %v4513
    %v4854 = vpack.c.b16 %v4518, %v4514
    %v4855 = vpack.c.b16 %v4523, %v4519
    %v4856 = vpack.c.b16 %v4524, %v4520
    %v4857 = vpack.c.b16 %v4525, %v4521
    %v4858 = vpack.c.b16 %v4526, %v4522
    %v4859 = vpack.c.b16 %v4531, %v4527
    %v4860 = vpack.c.b16 %v4532, %v4528
    %v4861 = vpack.c.b16 %v4533, %v4529
    %v4862 = vpack.c.b16 %v4534, %v4530
    %v4863 = vpack.c.b16 %v4539, %v4535
    %v4864 = vpack.c.b16 %v4540, %v4536
    %v4865 = vpack.c.b16 %v4541, %v4537
    %v4866 = vpack.c.b16 %v4542, %v4538
    %v4867 = vpack.c.b16 %v4547, %v4543
    %v4868 = vpack.c.b16 %v4548, %v4544
    %v4869 = vpack.c.b16 %v4549, %v4545
    %v4870 = vpack.c.b16 %v4550, %v4546
    %v4871 = vpack.c.b16 %v4555, %v4551
    %v4872 = vpack.c.b16 %v4556, %v4552
    %v4873 = vpack.c.b16 %v4557, %v4553
    %v4874 = vpack.c.b16 %v4558, %v4554
    %v4875 = vpack.c.b16 %v4563, %v4559
    %v4876 = vpack.c.b16 %v4564, %v4560
    %v4877 = vpack.c.b16 %v4565, %v4561
    %v4878 = vpack.c.b16 %v4566, %v4562
    %v4879 = vpack.c.b16 %v4571, %v4567
    %v4880 = vpack.c.b16 %v4572, %v4568
    %v4881 = vpack.c.b16 %v4573, %v4569
    %v4882 = vpack.c.b16 %v4574, %v4570
    %v4883 = vpack.c.b16 %v4579, %v4575
    %v4884 = vpack.c.b16 %v4580, %v4576
    %v4885 = vpack.c.b16 %v4581, %v4577
    %v4886 = vpack.c.b16 %v4582, %v4578
    %v4887 = vpack.c.b16 %v4587, %v4583
    %v4888 = vpack.c.b16 %v4588, %v4584
    %v4889 = vpack.c.b16 %v4589, %v4585
    %v4890 = vpack.c.b16 %v4590, %v4586
    %v4891 = vpack.c.b16 %v4595, %v4591
    %v4892 = vpack.c.b16 %v4596, %v4592
    %v4893 = vpack.c.b16 %v4597, %v4593
    %v4894 = vpack.c.b16 %v4598, %v4594
    %v4895 = vpack.c.b16 %v4603, %v4599
    %v4896 = vpack.c.b16 %v4604, %v4600
    %v4897 = vpack.c.b16 %v4605, %v4601
    %v4898 = vpack.c.b16 %v4606, %v4602
    %v4899 = vpack.c.b16 %v4611, %v4607
    %v4900 = vpack.c.b16 %v4612, %v4608
    %v4901 = vpack.c.b16 %v4613, %v4609
    %v4902 = vpack.c.b16 %v4614, %v4610
    %v4903 = vpack.c.b16 %v4619, %v4615
    %v4904 = vpack.c.b16 %v4620, %v4616
    %v4905 = vpack.c.b16 %v4621, %v4617
    %v4906 = vpack.c.b16 %v4622, %v4618
    %v4907 = vpack.c.b16 %v4627, %v4623
    %v4908 = vpack.c.b16 %v4628, %v4624
    %v4909 = vpack.c.b16 %v4629, %v4625
    %v4910 = vpack.c.b16 %v4630, %v4626
    %v4911 = vpack.c.b16 %v4635, %v4631
    %v4912 = vpack.c.b16 %v4636, %v4632
    %v4913 = vpack.c.b16 %v4637, %v4633
    %v4914 = vpack.c.b16 %v4638, %v4634
    %v4915 = vpack.c.b16 %v4643, %v4639
    %v4916 = vpack.c.b16 %v4644, %v4640
    %v4917 = vpack.c.b16 %v4645, %v4641
    %v4918 = vpack.c.b16 %v4646, %v4642
    %v4919 = vpack.c.b16 %v4651, %v4647
    %v4920 = vpack.c.b16 %v4652, %v4648
    %v4921 = vpack.c.b16 %v4653, %v4649
    %v4922 = vpack.c.b16 %v4654, %v4650
    %v4923 = vpack.c.b16 %v4659, %v4655
    %v4924 = vpack.c.b16 %v4660, %v4656
    %v4925 = vpack.c.b16 %v4661, %v4657
    %v4926 = vpack.c.b16 %v4662, %v4658
    %v4927 = vpack.c.b16 %v4667, %v4663
    %v4928 = vpack.c.b16 %v4668, %v4664
    %v4929 = vpack.c.b16 %v4669, %v4665
    %v4930 = vpack.c.b16 %v4670, %v4666
    %v4931 = vpack.c.b16 %v4675, %v4671
    %v4932 = vpack.c.b16 %v4676, %v4672
    %v4933 = vpack.c.b16 %v4677, %v4673
    %v4934 = vpack.c.b16 %v4678, %v4674
    %5191 = vmatpush.bf16.msra.mxu0 %v4707
    %5192 = vmatpush.bf16.msra.mxu0 %v4703
    %5193 = vmatpush.bf16.msra.mxu0 %v4699
    %5194 = vmatpush.bf16.msra.mxu0 %v4695
    %5195 = vmatpush.bf16.msra.mxu0 %v4691
    %5196 = vmatpush.bf16.msra.mxu0 %v4687
    %5197 = vmatpush.bf16.msra.mxu0 %v4683
    %5198 = vmatpush.bf16.msra.mxu0 %v4679
    %5199 = vmatmul.bf16.gmra.mxu0 %v3527
    %v5200 = vpop.f32.mrf.mxu0
    %v5201 = vadd.f32 0.0, %v5200
    %v5202 = vpop.f32.mrf.mxu0
    %v5203 = vadd.f32 0.0, %v5202
    %5204 = vmatmul.bf16.gmra.mxu0 %v3535
    %v5205 = vpop.f32.mrf.mxu0
    %v5206 = vadd.f32 0.0, %v5205
    %v5207 = vpop.f32.mrf.mxu0
    %v5208 = vadd.f32 0.0, %v5207
    %5209 = vmatmul.bf16.gmra.mxu0 %v3543
    %v5210 = vpop.f32.mrf.mxu0
    %v5211 = vadd.f32 0.0, %v5210
    %v5212 = vpop.f32.mrf.mxu0
    %v5213 = vadd.f32 0.0, %v5212
    %5214 = vmatmul.bf16.gmra.mxu0 %v3551
    %v5215 = vpop.f32.mrf.mxu0
    %v5216 = vadd.f32 0.0, %v5215
    %v5217 = vpop.f32.mrf.mxu0
    %v5218 = vadd.f32 0.0, %v5217
    %5219 = vmatmul.bf16.gmra.mxu0 %v3559
    %v5220 = vpop.f32.mrf.mxu0
    %v5221 = vadd.f32 0.0, %v5220
    %v5222 = vpop.f32.mrf.mxu0
    %v5223 = vadd.f32 0.0, %v5222
    %5224 = vmatmul.bf16.gmra.mxu0 %v3567
    %v5225 = vpop.f32.mrf.mxu0
    %v5226 = vadd.f32 0.0, %v5225
    %v5227 = vpop.f32.mrf.mxu0
    %v5228 = vadd.f32 0.0, %v5227
    %5229 = vmatmul.bf16.gmra.mxu0 %v3575
    %v5230 = vpop.f32.mrf.mxu0
    %v5231 = vadd.f32 0.0, %v5230
    %v5232 = vpop.f32.mrf.mxu0
    %v5233 = vadd.f32 0.0, %v5232
    %5234 = vmatmul.bf16.gmra.mxu0 %v3583
    %v5235 = vpop.f32.mrf.mxu0
    %v5236 = vadd.f32 0.0, %v5235
    %v5237 = vpop.f32.mrf.mxu0
    %v5238 = vadd.f32 0.0, %v5237
    %5239 = vmatmul.bf16.gmra.mxu0 %v3591
    %v5240 = vpop.f32.mrf.mxu0
    %v5241 = vadd.f32 0.0, %v5240
    %v5242 = vpop.f32.mrf.mxu0
    %v5243 = vadd.f32 0.0, %v5242
    %5244 = vmatmul.bf16.gmra.mxu0 %v3599
    %v5245 = vpop.f32.mrf.mxu0
    %v5246 = vadd.f32 0.0, %v5245
    %v5247 = vpop.f32.mrf.mxu0
    %v5248 = vadd.f32 0.0, %v5247
    %5249 = vmatmul.bf16.gmra.mxu0 %v3607
    %v5250 = vpop.f32.mrf.mxu0
    %v5251 = vadd.f32 0.0, %v5250
    %v5252 = vpop.f32.mrf.mxu0
    %v5253 = vadd.f32 0.0, %v5252
    %5254 = vmatmul.bf16.gmra.mxu0 %v3615
    %v5255 = vpop.f32.mrf.mxu0
    %v5256 = vadd.f32 0.0, %v5255
    %v5257 = vpop.f32.mrf.mxu0
    %v5258 = vadd.f32 0.0, %v5257
    %5259 = vmatmul.bf16.gmra.mxu0 %v3623
    %v5260 = vpop.f32.mrf.mxu0
    %v5261 = vadd.f32 0.0, %v5260
    %v5262 = vpop.f32.mrf.mxu0
    %v5263 = vadd.f32 0.0, %v5262
    %5264 = vmatmul.bf16.gmra.mxu0 %v3631
    %v5265 = vpop.f32.mrf.mxu0
    %v5266 = vadd.f32 0.0, %v5265
    %v5267 = vpop.f32.mrf.mxu0
    %v5268 = vadd.f32 0.0, %v5267
    %5269 = vmatmul.bf16.gmra.mxu0 %v3639
    %v5270 = vpop.f32.mrf.mxu0
    %v5271 = vadd.f32 0.0, %v5270
    %v5272 = vpop.f32.mrf.mxu0
    %v5273 = vadd.f32 0.0, %v5272
    %5274 = vmatmul.bf16.gmra.mxu0 %v3647
    %v5275 = vpop.f32.mrf.mxu0
    %v5276 = vadd.f32 0.0, %v5275
    %v5277 = vpop.f32.mrf.mxu0
    %v5278 = vadd.f32 0.0, %v5277
    %5279 = vdwg.mxu0
    %5280 = vmatpush.bf16.msra.mxu0 %v4739
    %5281 = vmatpush.bf16.msra.mxu0 %v4735
    %5282 = vmatpush.bf16.msra.mxu0 %v4731
    %5283 = vmatpush.bf16.msra.mxu0 %v4727
    %5284 = vmatpush.bf16.msra.mxu0 %v4723
    %5285 = vmatpush.bf16.msra.mxu0 %v4719
    %5286 = vmatpush.bf16.msra.mxu0 %v4715
    %5287 = vmatpush.bf16.msra.mxu0 %v4711
    %5288 = vmatmul.bf16.gmra.mxu0 %v3528
    %v5289 = vpop.f32.mrf.mxu0
    %v5290 = vadd.f32 %v5201, %v5289
    %v5291 = vpop.f32.mrf.mxu0
    %v5292 = vadd.f32 %v5203, %v5291
    %5293 = vmatmul.bf16.gmra.mxu0 %v3536
    %v5294 = vpop.f32.mrf.mxu0
    %v5295 = vadd.f32 %v5206, %v5294
    %v5296 = vpop.f32.mrf.mxu0
    %v5297 = vadd.f32 %v5208, %v5296
    %5298 = vmatmul.bf16.gmra.mxu0 %v3544
    %v5299 = vpop.f32.mrf.mxu0
    %v5300 = vadd.f32 %v5211, %v5299
    %v5301 = vpop.f32.mrf.mxu0
    %v5302 = vadd.f32 %v5213, %v5301
    %5303 = vmatmul.bf16.gmra.mxu0 %v3552
    %v5304 = vpop.f32.mrf.mxu0
    %v5305 = vadd.f32 %v5216, %v5304
    %v5306 = vpop.f32.mrf.mxu0
    %v5307 = vadd.f32 %v5218, %v5306
    %5308 = vmatmul.bf16.gmra.mxu0 %v3560
    %v5309 = vpop.f32.mrf.mxu0
    %v5310 = vadd.f32 %v5221, %v5309
    %v5311 = vpop.f32.mrf.mxu0
    %v5312 = vadd.f32 %v5223, %v5311
    %5313 = vmatmul.bf16.gmra.mxu0 %v3568
    %v5314 = vpop.f32.mrf.mxu0
    %v5315 = vadd.f32 %v5226, %v5314
    %v5316 = vpop.f32.mrf.mxu0
    %v5317 = vadd.f32 %v5228, %v5316
    %5318 = vmatmul.bf16.gmra.mxu0 %v3576
    %v5319 = vpop.f32.mrf.mxu0
    %v5320 = vadd.f32 %v5231, %v5319
    %v5321 = vpop.f32.mrf.mxu0
    %v5322 = vadd.f32 %v5233, %v5321
    %5323 = vmatmul.bf16.gmra.mxu0 %v3584
    %v5324 = vpop.f32.mrf.mxu0
    %v5325 = vadd.f32 %v5236, %v5324
    %v5326 = vpop.f32.mrf.mxu0
    %v5327 = vadd.f32 %v5238, %v5326
    %5328 = vmatmul.bf16.gmra.mxu0 %v3592
    %v5329 = vpop.f32.mrf.mxu0
    %v5330 = vadd.f32 %v5241, %v5329
    %v5331 = vpop.f32.mrf.mxu0
    %v5332 = vadd.f32 %v5243, %v5331
    %5333 = vmatmul.bf16.gmra.mxu0 %v3600
    %v5334 = vpop.f32.mrf.mxu0
    %v5335 = vadd.f32 %v5246, %v5334
    %v5336 = vpop.f32.mrf.mxu0
    %v5337 = vadd.f32 %v5248, %v5336
    %5338 = vmatmul.bf16.gmra.mxu0 %v3608
    %v5339 = vpop.f32.mrf.mxu0
    %v5340 = vadd.f32 %v5251, %v5339
    %v5341 = vpop.f32.mrf.mxu0
    %v5342 = vadd.f32 %v5253, %v5341
    %5343 = vmatmul.bf16.gmra.mxu0 %v3616
    %v5344 = vpop.f32.mrf.mxu0
    %v5345 = vadd.f32 %v5256, %v5344
    %v5346 = vpop.f32.mrf.mxu0
    %v5347 = vadd.f32 %v5258, %v5346
    %5348 = vmatmul.bf16.gmra.mxu0 %v3624
    %v5349 = vpop.f32.mrf.mxu0
    %v5350 = vadd.f32 %v5261, %v5349
    %v5351 = vpop.f32.mrf.mxu0
    %v5352 = vadd.f32 %v5263, %v5351
    %5353 = vmatmul.bf16.gmra.mxu0 %v3632
    %v5354 = vpop.f32.mrf.mxu0
    %v5355 = vadd.f32 %v5266, %v5354
    %v5356 = vpop.f32.mrf.mxu0
    %v5357 = vadd.f32 %v5268, %v5356
    %5358 = vmatmul.bf16.gmra.mxu0 %v3640
    %v5359 = vpop.f32.mrf.mxu0
    %v5360 = vadd.f32 %v5271, %v5359
    %v5361 = vpop.f32.mrf.mxu0
    %v5362 = vadd.f32 %v5273, %v5361
    %5363 = vmatmul.bf16.gmra.mxu0 %v3648
    %v5364 = vpop.f32.mrf.mxu0
    %v5365 = vadd.f32 %v5276, %v5364
    %v5366 = vpop.f32.mrf.mxu0
    %v5367 = vadd.f32 %v5278, %v5366
    %5368 = vdwg.mxu0
    %5369 = vmatpush.bf16.msra.mxu0 %v4771
    %5370 = vmatpush.bf16.msra.mxu0 %v4767
    %5371 = vmatpush.bf16.msra.mxu0 %v4763
    %5372 = vmatpush.bf16.msra.mxu0 %v4759
    %5373 = vmatpush.bf16.msra.mxu0 %v4755
    %5374 = vmatpush.bf16.msra.mxu0 %v4751
    %5375 = vmatpush.bf16.msra.mxu0 %v4747
    %5376 = vmatpush.bf16.msra.mxu0 %v4743
    %5377 = vmatmul.bf16.gmra.mxu0 %v3529
    %v5378 = vpop.f32.mrf.mxu0
    %v5379 = vadd.f32 %v5290, %v5378
    %v5380 = vpop.f32.mrf.mxu0
    %v5381 = vadd.f32 %v5292, %v5380
    %5382 = vmatmul.bf16.gmra.mxu0 %v3537
    %v5383 = vpop.f32.mrf.mxu0
    %v5384 = vadd.f32 %v5295, %v5383
    %v5385 = vpop.f32.mrf.mxu0
    %v5386 = vadd.f32 %v5297, %v5385
    %5387 = vmatmul.bf16.gmra.mxu0 %v3545
    %v5388 = vpop.f32.mrf.mxu0
    %v5389 = vadd.f32 %v5300, %v5388
    %v5390 = vpop.f32.mrf.mxu0
    %v5391 = vadd.f32 %v5302, %v5390
    %5392 = vmatmul.bf16.gmra.mxu0 %v3553
    %v5393 = vpop.f32.mrf.mxu0
    %v5394 = vadd.f32 %v5305, %v5393
    %v5395 = vpop.f32.mrf.mxu0
    %v5396 = vadd.f32 %v5307, %v5395
    %5397 = vmatmul.bf16.gmra.mxu0 %v3561
    %v5398 = vpop.f32.mrf.mxu0
    %v5399 = vadd.f32 %v5310, %v5398
    %v5400 = vpop.f32.mrf.mxu0
    %v5401 = vadd.f32 %v5312, %v5400
    %5402 = vmatmul.bf16.gmra.mxu0 %v3569
    %v5403 = vpop.f32.mrf.mxu0
    %v5404 = vadd.f32 %v5315, %v5403
    %v5405 = vpop.f32.mrf.mxu0
    %v5406 = vadd.f32 %v5317, %v5405
    %5407 = vmatmul.bf16.gmra.mxu0 %v3577
    %v5408 = vpop.f32.mrf.mxu0
    %v5409 = vadd.f32 %v5320, %v5408
    %v5410 = vpop.f32.mrf.mxu0
    %v5411 = vadd.f32 %v5322, %v5410
    %5412 = vmatmul.bf16.gmra.mxu0 %v3585
    %v5413 = vpop.f32.mrf.mxu0
    %v5414 = vadd.f32 %v5325, %v5413
    %v5415 = vpop.f32.mrf.mxu0
    %v5416 = vadd.f32 %v5327, %v5415
    %5417 = vmatmul.bf16.gmra.mxu0 %v3593
    %v5418 = vpop.f32.mrf.mxu0
    %v5419 = vadd.f32 %v5330, %v5418
    %v5420 = vpop.f32.mrf.mxu0
    %v5421 = vadd.f32 %v5332, %v5420
    %5422 = vmatmul.bf16.gmra.mxu0 %v3601
    %v5423 = vpop.f32.mrf.mxu0
    %v5424 = vadd.f32 %v5335, %v5423
    %v5425 = vpop.f32.mrf.mxu0
    %v5426 = vadd.f32 %v5337, %v5425
    %5427 = vmatmul.bf16.gmra.mxu0 %v3609
    %v5428 = vpop.f32.mrf.mxu0
    %v5429 = vadd.f32 %v5340, %v5428
    %v5430 = vpop.f32.mrf.mxu0
    %v5431 = vadd.f32 %v5342, %v5430
    %5432 = vmatmul.bf16.gmra.mxu0 %v3617
    %v5433 = vpop.f32.mrf.mxu0
    %v5434 = vadd.f32 %v5345, %v5433
    %v5435 = vpop.f32.mrf.mxu0
    %v5436 = vadd.f32 %v5347, %v5435
    %5437 = vmatmul.bf16.gmra.mxu0 %v3625
    %v5438 = vpop.f32.mrf.mxu0
    %v5439 = vadd.f32 %v5350, %v5438
    %v5440 = vpop.f32.mrf.mxu0
    %v5441 = vadd.f32 %v5352, %v5440
    %5442 = vmatmul.bf16.gmra.mxu0 %v3633
    %v5443 = vpop.f32.mrf.mxu0
    %v5444 = vadd.f32 %v5355, %v5443
    %v5445 = vpop.f32.mrf.mxu0
    %v5446 = vadd.f32 %v5357, %v5445
    %5447 = vmatmul.bf16.gmra.mxu0 %v3641
    %v5448 = vpop.f32.mrf.mxu0
    %v5449 = vadd.f32 %v5360, %v5448
    %v5450 = vpop.f32.mrf.mxu0
    %v5451 = vadd.f32 %v5362, %v5450
    %5452 = vmatmul.bf16.gmra.mxu0 %v3649
    %v5453 = vpop.f32.mrf.mxu0
    %v5454 = vadd.f32 %v5365, %v5453
    %v5455 = vpop.f32.mrf.mxu0
    %v5456 = vadd.f32 %v5367, %v5455
    %5457 = vdwg.mxu0
    %5458 = vmatpush.bf16.msra.mxu0 %v4803
    %5459 = vmatpush.bf16.msra.mxu0 %v4799
    %5460 = vmatpush.bf16.msra.mxu0 %v4795
    %5461 = vmatpush.bf16.msra.mxu0 %v4791
    %5462 = vmatpush.bf16.msra.mxu0 %v4787
    %5463 = vmatpush.bf16.msra.mxu0 %v4783
    %5464 = vmatpush.bf16.msra.mxu0 %v4779
    %5465 = vmatpush.bf16.msra.mxu0 %v4775
    %5466 = vmatmul.bf16.gmra.mxu0 %v3530
    %v5467 = vpop.f32.mrf.mxu0
    %v5468 = vadd.f32 %v5379, %v5467
    %v5469 = vpop.f32.mrf.mxu0
    %v5470 = vadd.f32 %v5381, %v5469
    %5471 = vmatmul.bf16.gmra.mxu0 %v3538
    %v5472 = vpop.f32.mrf.mxu0
    %v5473 = vadd.f32 %v5384, %v5472
    %v5474 = vpop.f32.mrf.mxu0
    %v5475 = vadd.f32 %v5386, %v5474
    %5476 = vmatmul.bf16.gmra.mxu0 %v3546
    %v5477 = vpop.f32.mrf.mxu0
    %v5478 = vadd.f32 %v5389, %v5477
    %v5479 = vpop.f32.mrf.mxu0
    %v5480 = vadd.f32 %v5391, %v5479
    %5481 = vmatmul.bf16.gmra.mxu0 %v3554
    %v5482 = vpop.f32.mrf.mxu0
    %v5483 = vadd.f32 %v5394, %v5482
    %v5484 = vpop.f32.mrf.mxu0
    %v5485 = vadd.f32 %v5396, %v5484
    %5486 = vmatmul.bf16.gmra.mxu0 %v3562
    %v5487 = vpop.f32.mrf.mxu0
    %v5488 = vadd.f32 %v5399, %v5487
    %v5489 = vpop.f32.mrf.mxu0
    %v5490 = vadd.f32 %v5401, %v5489
    %5491 = vmatmul.bf16.gmra.mxu0 %v3570
    %v5492 = vpop.f32.mrf.mxu0
    %v5493 = vadd.f32 %v5404, %v5492
    %v5494 = vpop.f32.mrf.mxu0
    %v5495 = vadd.f32 %v5406, %v5494
    %5496 = vmatmul.bf16.gmra.mxu0 %v3578
    %v5497 = vpop.f32.mrf.mxu0
    %v5498 = vadd.f32 %v5409, %v5497
    %v5499 = vpop.f32.mrf.mxu0
    %v5500 = vadd.f32 %v5411, %v5499
    %5501 = vmatmul.bf16.gmra.mxu0 %v3586
    %v5502 = vpop.f32.mrf.mxu0
    %v5503 = vadd.f32 %v5414, %v5502
    %v5504 = vpop.f32.mrf.mxu0
    %v5505 = vadd.f32 %v5416, %v5504
    %5506 = vmatmul.bf16.gmra.mxu0 %v3594
    %v5507 = vpop.f32.mrf.mxu0
    %v5508 = vadd.f32 %v5419, %v5507
    %v5509 = vpop.f32.mrf.mxu0
    %v5510 = vadd.f32 %v5421, %v5509
    %5511 = vmatmul.bf16.gmra.mxu0 %v3602
    %v5512 = vpop.f32.mrf.mxu0
    %v5513 = vadd.f32 %v5424, %v5512
    %v5514 = vpop.f32.mrf.mxu0
    %v5515 = vadd.f32 %v5426, %v5514
    %5516 = vmatmul.bf16.gmra.mxu0 %v3610
    %v5517 = vpop.f32.mrf.mxu0
    %v5518 = vadd.f32 %v5429, %v5517
    %v5519 = vpop.f32.mrf.mxu0
    %v5520 = vadd.f32 %v5431, %v5519
    %5521 = vmatmul.bf16.gmra.mxu0 %v3618
    %v5522 = vpop.f32.mrf.mxu0
    %v5523 = vadd.f32 %v5434, %v5522
    %v5524 = vpop.f32.mrf.mxu0
    %v5525 = vadd.f32 %v5436, %v5524
    %5526 = vmatmul.bf16.gmra.mxu0 %v3626
    %v5527 = vpop.f32.mrf.mxu0
    %v5528 = vadd.f32 %v5439, %v5527
    %v5529 = vpop.f32.mrf.mxu0
    %v5530 = vadd.f32 %v5441, %v5529
    %5531 = vmatmul.bf16.gmra.mxu0 %v3634
    %v5532 = vpop.f32.mrf.mxu0
    %v5533 = vadd.f32 %v5444, %v5532
    %v5534 = vpop.f32.mrf.mxu0
    %v5535 = vadd.f32 %v5446, %v5534
    %5536 = vmatmul.bf16.gmra.mxu0 %v3642
    %v5537 = vpop.f32.mrf.mxu0
    %v5538 = vadd.f32 %v5449, %v5537
    %v5539 = vpop.f32.mrf.mxu0
    %v5540 = vadd.f32 %v5451, %v5539
    %5541 = vmatmul.bf16.gmra.mxu0 %v3650
    %v5542 = vpop.f32.mrf.mxu0
    %v5543 = vadd.f32 %v5454, %v5542
    %v5544 = vpop.f32.mrf.mxu0
    %v5545 = vadd.f32 %v5456, %v5544
    %5546 = vdwg.mxu0
    %5547 = vmatpush.bf16.msra.mxu0 %v4835
    %5548 = vmatpush.bf16.msra.mxu0 %v4831
    %5549 = vmatpush.bf16.msra.mxu0 %v4827
    %5550 = vmatpush.bf16.msra.mxu0 %v4823
    %5551 = vmatpush.bf16.msra.mxu0 %v4819
    %5552 = vmatpush.bf16.msra.mxu0 %v4815
    %5553 = vmatpush.bf16.msra.mxu0 %v4811
    %5554 = vmatpush.bf16.msra.mxu0 %v4807
    %5555 = vmatmul.bf16.gmra.mxu0 %v3531
    %v5556 = vpop.f32.mrf.mxu0
    %v5557 = vadd.f32 %v5468, %v5556
    %v5558 = vpop.f32.mrf.mxu0
    %v5559 = vadd.f32 %v5470, %v5558
    %5560 = vmatmul.bf16.gmra.mxu0 %v3539
    %v5561 = vpop.f32.mrf.mxu0
    %v5562 = vadd.f32 %v5473, %v5561
    %v5563 = vpop.f32.mrf.mxu0
    %v5564 = vadd.f32 %v5475, %v5563
    %5565 = vmatmul.bf16.gmra.mxu0 %v3547
    %v5566 = vpop.f32.mrf.mxu0
    %v5567 = vadd.f32 %v5478, %v5566
    %v5568 = vpop.f32.mrf.mxu0
    %v5569 = vadd.f32 %v5480, %v5568
    %5570 = vmatmul.bf16.gmra.mxu0 %v3555
    %v5571 = vpop.f32.mrf.mxu0
    %v5572 = vadd.f32 %v5483, %v5571
    %v5573 = vpop.f32.mrf.mxu0
    %v5574 = vadd.f32 %v5485, %v5573
    %5575 = vmatmul.bf16.gmra.mxu0 %v3563
    %v5576 = vpop.f32.mrf.mxu0
    %v5577 = vadd.f32 %v5488, %v5576
    %v5578 = vpop.f32.mrf.mxu0
    %v5579 = vadd.f32 %v5490, %v5578
    %5580 = vmatmul.bf16.gmra.mxu0 %v3571
    %v5581 = vpop.f32.mrf.mxu0
    %v5582 = vadd.f32 %v5493, %v5581
    %v5583 = vpop.f32.mrf.mxu0
    %v5584 = vadd.f32 %v5495, %v5583
    %5585 = vmatmul.bf16.gmra.mxu0 %v3579
    %v5586 = vpop.f32.mrf.mxu0
    %v5587 = vadd.f32 %v5498, %v5586
    %v5588 = vpop.f32.mrf.mxu0
    %v5589 = vadd.f32 %v5500, %v5588
    %5590 = vmatmul.bf16.gmra.mxu0 %v3587
    %v5591 = vpop.f32.mrf.mxu0
    %v5592 = vadd.f32 %v5503, %v5591
    %v5593 = vpop.f32.mrf.mxu0
    %v5594 = vadd.f32 %v5505, %v5593
    %5595 = vmatmul.bf16.gmra.mxu0 %v3595
    %v5596 = vpop.f32.mrf.mxu0
    %v5597 = vadd.f32 %v5508, %v5596
    %v5598 = vpop.f32.mrf.mxu0
    %v5599 = vadd.f32 %v5510, %v5598
    %5600 = vmatmul.bf16.gmra.mxu0 %v3603
    %v5601 = vpop.f32.mrf.mxu0
    %v5602 = vadd.f32 %v5513, %v5601
    %v5603 = vpop.f32.mrf.mxu0
    %v5604 = vadd.f32 %v5515, %v5603
    %5605 = vmatmul.bf16.gmra.mxu0 %v3611
    %v5606 = vpop.f32.mrf.mxu0
    %v5607 = vadd.f32 %v5518, %v5606
    %v5608 = vpop.f32.mrf.mxu0
    %v5609 = vadd.f32 %v5520, %v5608
    %5610 = vmatmul.bf16.gmra.mxu0 %v3619
    %v5611 = vpop.f32.mrf.mxu0
    %v5612 = vadd.f32 %v5523, %v5611
    %v5613 = vpop.f32.mrf.mxu0
    %v5614 = vadd.f32 %v5525, %v5613
    %5615 = vmatmul.bf16.gmra.mxu0 %v3627
    %v5616 = vpop.f32.mrf.mxu0
    %v5617 = vadd.f32 %v5528, %v5616
    %v5618 = vpop.f32.mrf.mxu0
    %v5619 = vadd.f32 %v5530, %v5618
    %5620 = vmatmul.bf16.gmra.mxu0 %v3635
    %v5621 = vpop.f32.mrf.mxu0
    %v5622 = vadd.f32 %v5533, %v5621
    %v5623 = vpop.f32.mrf.mxu0
    %v5624 = vadd.f32 %v5535, %v5623
    %5625 = vmatmul.bf16.gmra.mxu0 %v3643
    %v5626 = vpop.f32.mrf.mxu0
    %v5627 = vadd.f32 %v5538, %v5626
    %v5628 = vpop.f32.mrf.mxu0
    %v5629 = vadd.f32 %v5540, %v5628
    %5630 = vmatmul.bf16.gmra.mxu0 %v3651
    %v5631 = vpop.f32.mrf.mxu0
    %v5632 = vadd.f32 %v5543, %v5631
    %v5633 = vpop.f32.mrf.mxu0
    %v5634 = vadd.f32 %v5545, %v5633
    %5635 = vdwg.mxu0
    %5636 = vmatpush.bf16.msra.mxu0 %v4867
    %5637 = vmatpush.bf16.msra.mxu0 %v4863
    %5638 = vmatpush.bf16.msra.mxu0 %v4859
    %5639 = vmatpush.bf16.msra.mxu0 %v4855
    %5640 = vmatpush.bf16.msra.mxu0 %v4851
    %5641 = vmatpush.bf16.msra.mxu0 %v4847
    %5642 = vmatpush.bf16.msra.mxu0 %v4843
    %5643 = vmatpush.bf16.msra.mxu0 %v4839
    %5644 = vmatmul.bf16.gmra.mxu0 %v3532
    %v5645 = vpop.f32.mrf.mxu0
    %v5646 = vadd.f32 %v5557, %v5645
    %v5647 = vpop.f32.mrf.mxu0
    %v5648 = vadd.f32 %v5559, %v5647
    %5649 = vmatmul.bf16.gmra.mxu0 %v3540
    %v5650 = vpop.f32.mrf.mxu0
    %v5651 = vadd.f32 %v5562, %v5650
    %v5652 = vpop.f32.mrf.mxu0
    %v5653 = vadd.f32 %v5564, %v5652
    %5654 = vmatmul.bf16.gmra.mxu0 %v3548
    %v5655 = vpop.f32.mrf.mxu0
    %v5656 = vadd.f32 %v5567, %v5655
    %v5657 = vpop.f32.mrf.mxu0
    %v5658 = vadd.f32 %v5569, %v5657
    %5659 = vmatmul.bf16.gmra.mxu0 %v3556
    %v5660 = vpop.f32.mrf.mxu0
    %v5661 = vadd.f32 %v5572, %v5660
    %v5662 = vpop.f32.mrf.mxu0
    %v5663 = vadd.f32 %v5574, %v5662
    %5664 = vmatmul.bf16.gmra.mxu0 %v3564
    %v5665 = vpop.f32.mrf.mxu0
    %v5666 = vadd.f32 %v5577, %v5665
    %v5667 = vpop.f32.mrf.mxu0
    %v5668 = vadd.f32 %v5579, %v5667
    %5669 = vmatmul.bf16.gmra.mxu0 %v3572
    %v5670 = vpop.f32.mrf.mxu0
    %v5671 = vadd.f32 %v5582, %v5670
    %v5672 = vpop.f32.mrf.mxu0
    %v5673 = vadd.f32 %v5584, %v5672
    %5674 = vmatmul.bf16.gmra.mxu0 %v3580
    %v5675 = vpop.f32.mrf.mxu0
    %v5676 = vadd.f32 %v5587, %v5675
    %v5677 = vpop.f32.mrf.mxu0
    %v5678 = vadd.f32 %v5589, %v5677
    %5679 = vmatmul.bf16.gmra.mxu0 %v3588
    %v5680 = vpop.f32.mrf.mxu0
    %v5681 = vadd.f32 %v5592, %v5680
    %v5682 = vpop.f32.mrf.mxu0
    %v5683 = vadd.f32 %v5594, %v5682
    %5684 = vmatmul.bf16.gmra.mxu0 %v3596
    %v5685 = vpop.f32.mrf.mxu0
    %v5686 = vadd.f32 %v5597, %v5685
    %v5687 = vpop.f32.mrf.mxu0
    %v5688 = vadd.f32 %v5599, %v5687
    %5689 = vmatmul.bf16.gmra.mxu0 %v3604
    %v5690 = vpop.f32.mrf.mxu0
    %v5691 = vadd.f32 %v5602, %v5690
    %v5692 = vpop.f32.mrf.mxu0
    %v5693 = vadd.f32 %v5604, %v5692
    %5694 = vmatmul.bf16.gmra.mxu0 %v3612
    %v5695 = vpop.f32.mrf.mxu0
    %v5696 = vadd.f32 %v5607, %v5695
    %v5697 = vpop.f32.mrf.mxu0
    %v5698 = vadd.f32 %v5609, %v5697
    %5699 = vmatmul.bf16.gmra.mxu0 %v3620
    %v5700 = vpop.f32.mrf.mxu0
    %v5701 = vadd.f32 %v5612, %v5700
    %v5702 = vpop.f32.mrf.mxu0
    %v5703 = vadd.f32 %v5614, %v5702
    %5704 = vmatmul.bf16.gmra.mxu0 %v3628
    %v5705 = vpop.f32.mrf.mxu0
    %v5706 = vadd.f32 %v5617, %v5705
    %v5707 = vpop.f32.mrf.mxu0
    %v5708 = vadd.f32 %v5619, %v5707
    %5709 = vmatmul.bf16.gmra.mxu0 %v3636
    %v5710 = vpop.f32.mrf.mxu0
    %v5711 = vadd.f32 %v5622, %v5710
    %v5712 = vpop.f32.mrf.mxu0
    %v5713 = vadd.f32 %v5624, %v5712
    %5714 = vmatmul.bf16.gmra.mxu0 %v3644
    %v5715 = vpop.f32.mrf.mxu0
    %v5716 = vadd.f32 %v5627, %v5715
    %v5717 = vpop.f32.mrf.mxu0
    %v5718 = vadd.f32 %v5629, %v5717
    %5719 = vmatmul.bf16.gmra.mxu0 %v3652
    %v5720 = vpop.f32.mrf.mxu0
    %v5721 = vadd.f32 %v5632, %v5720
    %v5722 = vpop.f32.mrf.mxu0
    %v5723 = vadd.f32 %v5634, %v5722
    %5724 = vdwg.mxu0
    %5725 = vmatpush.bf16.msra.mxu0 %v4899
    %5726 = vmatpush.bf16.msra.mxu0 %v4895
    %5727 = vmatpush.bf16.msra.mxu0 %v4891
    %5728 = vmatpush.bf16.msra.mxu0 %v4887
    %5729 = vmatpush.bf16.msra.mxu0 %v4883
    %5730 = vmatpush.bf16.msra.mxu0 %v4879
    %5731 = vmatpush.bf16.msra.mxu0 %v4875
    %5732 = vmatpush.bf16.msra.mxu0 %v4871
    %5733 = vmatmul.bf16.gmra.mxu0 %v3533
    %v5734 = vpop.f32.mrf.mxu0
    %v5735 = vadd.f32 %v5646, %v5734
    %v5736 = vpop.f32.mrf.mxu0
    %v5737 = vadd.f32 %v5648, %v5736
    %5738 = vmatmul.bf16.gmra.mxu0 %v3541
    %v5739 = vpop.f32.mrf.mxu0
    %v5740 = vadd.f32 %v5651, %v5739
    %v5741 = vpop.f32.mrf.mxu0
    %v5742 = vadd.f32 %v5653, %v5741
    %5743 = vmatmul.bf16.gmra.mxu0 %v3549
    %v5744 = vpop.f32.mrf.mxu0
    %v5745 = vadd.f32 %v5656, %v5744
    %v5746 = vpop.f32.mrf.mxu0
    %v5747 = vadd.f32 %v5658, %v5746
    %5748 = vmatmul.bf16.gmra.mxu0 %v3557
    %v5749 = vpop.f32.mrf.mxu0
    %v5750 = vadd.f32 %v5661, %v5749
    %v5751 = vpop.f32.mrf.mxu0
    %v5752 = vadd.f32 %v5663, %v5751
    %5753 = vmatmul.bf16.gmra.mxu0 %v3565
    %v5754 = vpop.f32.mrf.mxu0
    %v5755 = vadd.f32 %v5666, %v5754
    %v5756 = vpop.f32.mrf.mxu0
    %v5757 = vadd.f32 %v5668, %v5756
    %5758 = vmatmul.bf16.gmra.mxu0 %v3573
    %v5759 = vpop.f32.mrf.mxu0
    %v5760 = vadd.f32 %v5671, %v5759
    %v5761 = vpop.f32.mrf.mxu0
    %v5762 = vadd.f32 %v5673, %v5761
    %5763 = vmatmul.bf16.gmra.mxu0 %v3581
    %v5764 = vpop.f32.mrf.mxu0
    %v5765 = vadd.f32 %v5676, %v5764
    %v5766 = vpop.f32.mrf.mxu0
    %v5767 = vadd.f32 %v5678, %v5766
    %5768 = vmatmul.bf16.gmra.mxu0 %v3589
    %v5769 = vpop.f32.mrf.mxu0
    %v5770 = vadd.f32 %v5681, %v5769
    %v5771 = vpop.f32.mrf.mxu0
    %v5772 = vadd.f32 %v5683, %v5771
    %5773 = vmatmul.bf16.gmra.mxu0 %v3597
    %v5774 = vpop.f32.mrf.mxu0
    %v5775 = vadd.f32 %v5686, %v5774
    %v5776 = vpop.f32.mrf.mxu0
    %v5777 = vadd.f32 %v5688, %v5776
    %5778 = vmatmul.bf16.gmra.mxu0 %v3605
    %v5779 = vpop.f32.mrf.mxu0
    %v5780 = vadd.f32 %v5691, %v5779
    %v5781 = vpop.f32.mrf.mxu0
    %v5782 = vadd.f32 %v5693, %v5781
    %5783 = vmatmul.bf16.gmra.mxu0 %v3613
    %v5784 = vpop.f32.mrf.mxu0
    %v5785 = vadd.f32 %v5696, %v5784
    %v5786 = vpop.f32.mrf.mxu0
    %v5787 = vadd.f32 %v5698, %v5786
    %5788 = vmatmul.bf16.gmra.mxu0 %v3621
    %v5789 = vpop.f32.mrf.mxu0
    %v5790 = vadd.f32 %v5701, %v5789
    %v5791 = vpop.f32.mrf.mxu0
    %v5792 = vadd.f32 %v5703, %v5791
    %5793 = vmatmul.bf16.gmra.mxu0 %v3629
    %v5794 = vpop.f32.mrf.mxu0
    %v5795 = vadd.f32 %v5706, %v5794
    %v5796 = vpop.f32.mrf.mxu0
    %v5797 = vadd.f32 %v5708, %v5796
    %5798 = vmatmul.bf16.gmra.mxu0 %v3637
    %v5799 = vpop.f32.mrf.mxu0
    %v5800 = vadd.f32 %v5711, %v5799
    %v5801 = vpop.f32.mrf.mxu0
    %v5802 = vadd.f32 %v5713, %v5801
    %5803 = vmatmul.bf16.gmra.mxu0 %v3645
    %v5804 = vpop.f32.mrf.mxu0
    %v5805 = vadd.f32 %v5716, %v5804
    %v5806 = vpop.f32.mrf.mxu0
    %v5807 = vadd.f32 %v5718, %v5806
    %5808 = vmatmul.bf16.gmra.mxu0 %v3653
    %v5809 = vpop.f32.mrf.mxu0
    %v5810 = vadd.f32 %v5721, %v5809
    %v5811 = vpop.f32.mrf.mxu0
    %v5812 = vadd.f32 %v5723, %v5811
    %5813 = vdwg.mxu0
    %5814 = vmatpush.bf16.msra.mxu0 %v4931
    %5815 = vmatpush.bf16.msra.mxu0 %v4927
    %5816 = vmatpush.bf16.msra.mxu0 %v4923
    %5817 = vmatpush.bf16.msra.mxu0 %v4919
    %5818 = vmatpush.bf16.msra.mxu0 %v4915
    %5819 = vmatpush.bf16.msra.mxu0 %v4911
    %5820 = vmatpush.bf16.msra.mxu0 %v4907
    %5821 = vmatpush.bf16.msra.mxu0 %v4903
    %5822 = vmatmul.bf16.gmra.mxu0 %v3534
    %v5823 = vpop.f32.mrf.mxu0
    %v5824 = vadd.f32 %v5735, %v5823
    %v5825 = vpop.f32.mrf.mxu0
    %v5826 = vadd.f32 %v5737, %v5825
    %5827 = vmatmul.bf16.gmra.mxu0 %v3542
    %v5828 = vpop.f32.mrf.mxu0
    %v5829 = vadd.f32 %v5740, %v5828
    %v5830 = vpop.f32.mrf.mxu0
    %v5831 = vadd.f32 %v5742, %v5830
    %5832 = vmatmul.bf16.gmra.mxu0 %v3550
    %v5833 = vpop.f32.mrf.mxu0
    %v5834 = vadd.f32 %v5745, %v5833
    %v5835 = vpop.f32.mrf.mxu0
    %v5836 = vadd.f32 %v5747, %v5835
    %5837 = vmatmul.bf16.gmra.mxu0 %v3558
    %v5838 = vpop.f32.mrf.mxu0
    %v5839 = vadd.f32 %v5750, %v5838
    %v5840 = vpop.f32.mrf.mxu0
    %v5841 = vadd.f32 %v5752, %v5840
    %5842 = vmatmul.bf16.gmra.mxu0 %v3566
    %v5843 = vpop.f32.mrf.mxu0
    %v5844 = vadd.f32 %v5755, %v5843
    %v5845 = vpop.f32.mrf.mxu0
    %v5846 = vadd.f32 %v5757, %v5845
    %5847 = vmatmul.bf16.gmra.mxu0 %v3574
    %v5848 = vpop.f32.mrf.mxu0
    %v5849 = vadd.f32 %v5760, %v5848
    %v5850 = vpop.f32.mrf.mxu0
    %v5851 = vadd.f32 %v5762, %v5850
    %5852 = vmatmul.bf16.gmra.mxu0 %v3582
    %v5853 = vpop.f32.mrf.mxu0
    %v5854 = vadd.f32 %v5765, %v5853
    %v5855 = vpop.f32.mrf.mxu0
    %v5856 = vadd.f32 %v5767, %v5855
    %5857 = vmatmul.bf16.gmra.mxu0 %v3590
    %v5858 = vpop.f32.mrf.mxu0
    %v5859 = vadd.f32 %v5770, %v5858
    %v5860 = vpop.f32.mrf.mxu0
    %v5861 = vadd.f32 %v5772, %v5860
    %5862 = vmatmul.bf16.gmra.mxu0 %v3598
    %v5863 = vpop.f32.mrf.mxu0
    %v5864 = vadd.f32 %v5775, %v5863
    %v5865 = vpop.f32.mrf.mxu0
    %v5866 = vadd.f32 %v5777, %v5865
    %5867 = vmatmul.bf16.gmra.mxu0 %v3606
    %v5868 = vpop.f32.mrf.mxu0
    %v5869 = vadd.f32 %v5780, %v5868
    %v5870 = vpop.f32.mrf.mxu0
    %v5871 = vadd.f32 %v5782, %v5870
    %5872 = vmatmul.bf16.gmra.mxu0 %v3614
    %v5873 = vpop.f32.mrf.mxu0
    %v5874 = vadd.f32 %v5785, %v5873
    %v5875 = vpop.f32.mrf.mxu0
    %v5876 = vadd.f32 %v5787, %v5875
    %5877 = vmatmul.bf16.gmra.mxu0 %v3622
    %v5878 = vpop.f32.mrf.mxu0
    %v5879 = vadd.f32 %v5790, %v5878
    %v5880 = vpop.f32.mrf.mxu0
    %v5881 = vadd.f32 %v5792, %v5880
    %5882 = vmatmul.bf16.gmra.mxu0 %v3630
    %v5883 = vpop.f32.mrf.mxu0
    %v5884 = vadd.f32 %v5795, %v5883
    %v5885 = vpop.f32.mrf.mxu0
    %v5886 = vadd.f32 %v5797, %v5885
    %5887 = vmatmul.bf16.gmra.mxu0 %v3638
    %v5888 = vpop.f32.mrf.mxu0
    %v5889 = vadd.f32 %v5800, %v5888
    %v5890 = vpop.f32.mrf.mxu0
    %v5891 = vadd.f32 %v5802, %v5890
    %5892 = vmatmul.bf16.gmra.mxu0 %v3646
    %v5893 = vpop.f32.mrf.mxu0
    %v5894 = vadd.f32 %v5805, %v5893
    %v5895 = vpop.f32.mrf.mxu0
    %v5896 = vadd.f32 %v5807, %v5895
    %5897 = vmatmul.bf16.gmra.mxu0 %v3654
    %v5898 = vpop.f32.mrf.mxu0
    %v5899 = vadd.f32 %v5810, %v5898
    %v5900 = vpop.f32.mrf.mxu0
    %v5901 = vadd.f32 %v5812, %v5900
    %5902 = vdwg.mxu0
    %5903 = vmatpush.bf16.msra.mxu0 %v4708
    %5904 = vmatpush.bf16.msra.mxu0 %v4704
    %5905 = vmatpush.bf16.msra.mxu0 %v4700
    %5906 = vmatpush.bf16.msra.mxu0 %v4696
    %5907 = vmatpush.bf16.msra.mxu0 %v4692
    %5908 = vmatpush.bf16.msra.mxu0 %v4688
    %5909 = vmatpush.bf16.msra.mxu0 %v4684
    %5910 = vmatpush.bf16.msra.mxu0 %v4680
    %5911 = vmatmul.bf16.gmra.mxu0 %v3527
    %v5912 = vpop.f32.mrf.mxu0
    %v5913 = vadd.f32 0.0, %v5912
    %v5914 = vpop.f32.mrf.mxu0
    %v5915 = vadd.f32 0.0, %v5914
    %5916 = vmatmul.bf16.gmra.mxu0 %v3535
    %v5917 = vpop.f32.mrf.mxu0
    %v5918 = vadd.f32 0.0, %v5917
    %v5919 = vpop.f32.mrf.mxu0
    %v5920 = vadd.f32 0.0, %v5919
    %5921 = vmatmul.bf16.gmra.mxu0 %v3543
    %v5922 = vpop.f32.mrf.mxu0
    %v5923 = vadd.f32 0.0, %v5922
    %v5924 = vpop.f32.mrf.mxu0
    %v5925 = vadd.f32 0.0, %v5924
    %5926 = vmatmul.bf16.gmra.mxu0 %v3551
    %v5927 = vpop.f32.mrf.mxu0
    %v5928 = vadd.f32 0.0, %v5927
    %v5929 = vpop.f32.mrf.mxu0
    %v5930 = vadd.f32 0.0, %v5929
    %5931 = vmatmul.bf16.gmra.mxu0 %v3559
    %v5932 = vpop.f32.mrf.mxu0
    %v5933 = vadd.f32 0.0, %v5932
    %v5934 = vpop.f32.mrf.mxu0
    %v5935 = vadd.f32 0.0, %v5934
    %5936 = vmatmul.bf16.gmra.mxu0 %v3567
    %v5937 = vpop.f32.mrf.mxu0
    %v5938 = vadd.f32 0.0, %v5937
    %v5939 = vpop.f32.mrf.mxu0
    %v5940 = vadd.f32 0.0, %v5939
    %5941 = vmatmul.bf16.gmra.mxu0 %v3575
    %v5942 = vpop.f32.mrf.mxu0
    %v5943 = vadd.f32 0.0, %v5942
    %v5944 = vpop.f32.mrf.mxu0
    %v5945 = vadd.f32 0.0, %v5944
    %5946 = vmatmul.bf16.gmra.mxu0 %v3583
    %v5947 = vpop.f32.mrf.mxu0
    %v5948 = vadd.f32 0.0, %v5947
    %v5949 = vpop.f32.mrf.mxu0
    %v5950 = vadd.f32 0.0, %v5949
    %5951 = vmatmul.bf16.gmra.mxu0 %v3591
    %v5952 = vpop.f32.mrf.mxu0
    %v5953 = vadd.f32 0.0, %v5952
    %v5954 = vpop.f32.mrf.mxu0
    %v5955 = vadd.f32 0.0, %v5954
    %5956 = vmatmul.bf16.gmra.mxu0 %v3599
    %v5957 = vpop.f32.mrf.mxu0
    %v5958 = vadd.f32 0.0, %v5957
    %v5959 = vpop.f32.mrf.mxu0
    %v5960 = vadd.f32 0.0, %v5959
    %5961 = vmatmul.bf16.gmra.mxu0 %v3607
    %v5962 = vpop.f32.mrf.mxu0
    %v5963 = vadd.f32 0.0, %v5962
    %v5964 = vpop.f32.mrf.mxu0
    %v5965 = vadd.f32 0.0, %v5964
    %5966 = vmatmul.bf16.gmra.mxu0 %v3615
    %v5967 = vpop.f32.mrf.mxu0
    %v5968 = vadd.f32 0.0, %v5967
    %v5969 = vpop.f32.mrf.mxu0
    %v5970 = vadd.f32 0.0, %v5969
    %5971 = vmatmul.bf16.gmra.mxu0 %v3623
    %v5972 = vpop.f32.mrf.mxu0
    %v5973 = vadd.f32 0.0, %v5972
    %v5974 = vpop.f32.mrf.mxu0
    %v5975 = vadd.f32 0.0, %v5974
    %5976 = vmatmul.bf16.gmra.mxu0 %v3631
    %v5977 = vpop.f32.mrf.mxu0
    %v5978 = vadd.f32 0.0, %v5977
    %v5979 = vpop.f32.mrf.mxu0
    %v5980 = vadd.f32 0.0, %v5979
    %5981 = vmatmul.bf16.gmra.mxu0 %v3639
    %v5982 = vpop.f32.mrf.mxu0
    %v5983 = vadd.f32 0.0, %v5982
    %v5984 = vpop.f32.mrf.mxu0
    %v5985 = vadd.f32 0.0, %v5984
    %5986 = vmatmul.bf16.gmra.mxu0 %v3647
    %v5987 = vpop.f32.mrf.mxu0
    %v5988 = vadd.f32 0.0, %v5987
    %v5989 = vpop.f32.mrf.mxu0
    %v5990 = vadd.f32 0.0, %v5989
    %5991 = vdwg.mxu0
    %5992 = vmatpush.bf16.msra.mxu0 %v4740
    %5993 = vmatpush.bf16.msra.mxu0 %v4736
    %5994 = vmatpush.bf16.msra.mxu0 %v4732
    %5995 = vmatpush.bf16.msra.mxu0 %v4728
    %5996 = vmatpush.bf16.msra.mxu0 %v4724
    %5997 = vmatpush.bf16.msra.mxu0 %v4720
    %5998 = vmatpush.bf16.msra.mxu0 %v4716
    %5999 = vmatpush.bf16.msra.mxu0 %v4712
    %6000 = vmatmul.bf16.gmra.mxu0 %v3528
    %v6001 = vpop.f32.mrf.mxu0
    %v6002 = vadd.f32 %v5913, %v6001
    %v6003 = vpop.f32.mrf.mxu0
    %v6004 = vadd.f32 %v5915, %v6003
    %6005 = vmatmul.bf16.gmra.mxu0 %v3536
    %v6006 = vpop.f32.mrf.mxu0
    %v6007 = vadd.f32 %v5918, %v6006
    %v6008 = vpop.f32.mrf.mxu0
    %v6009 = vadd.f32 %v5920, %v6008
    %6010 = vmatmul.bf16.gmra.mxu0 %v3544
    %v6011 = vpop.f32.mrf.mxu0
    %v6012 = vadd.f32 %v5923, %v6011
    %v6013 = vpop.f32.mrf.mxu0
    %v6014 = vadd.f32 %v5925, %v6013
    %6015 = vmatmul.bf16.gmra.mxu0 %v3552
    %v6016 = vpop.f32.mrf.mxu0
    %v6017 = vadd.f32 %v5928, %v6016
    %v6018 = vpop.f32.mrf.mxu0
    %v6019 = vadd.f32 %v5930, %v6018
    %6020 = vmatmul.bf16.gmra.mxu0 %v3560
    %v6021 = vpop.f32.mrf.mxu0
    %v6022 = vadd.f32 %v5933, %v6021
    %v6023 = vpop.f32.mrf.mxu0
    %v6024 = vadd.f32 %v5935, %v6023
    %6025 = vmatmul.bf16.gmra.mxu0 %v3568
    %v6026 = vpop.f32.mrf.mxu0
    %v6027 = vadd.f32 %v5938, %v6026
    %v6028 = vpop.f32.mrf.mxu0
    %v6029 = vadd.f32 %v5940, %v6028
    %6030 = vmatmul.bf16.gmra.mxu0 %v3576
    %v6031 = vpop.f32.mrf.mxu0
    %v6032 = vadd.f32 %v5943, %v6031
    %v6033 = vpop.f32.mrf.mxu0
    %v6034 = vadd.f32 %v5945, %v6033
    %6035 = vmatmul.bf16.gmra.mxu0 %v3584
    %v6036 = vpop.f32.mrf.mxu0
    %v6037 = vadd.f32 %v5948, %v6036
    %v6038 = vpop.f32.mrf.mxu0
    %v6039 = vadd.f32 %v5950, %v6038
    %6040 = vmatmul.bf16.gmra.mxu0 %v3592
    %v6041 = vpop.f32.mrf.mxu0
    %v6042 = vadd.f32 %v5953, %v6041
    %v6043 = vpop.f32.mrf.mxu0
    %v6044 = vadd.f32 %v5955, %v6043
    %6045 = vmatmul.bf16.gmra.mxu0 %v3600
    %v6046 = vpop.f32.mrf.mxu0
    %v6047 = vadd.f32 %v5958, %v6046
    %v6048 = vpop.f32.mrf.mxu0
    %v6049 = vadd.f32 %v5960, %v6048
    %6050 = vmatmul.bf16.gmra.mxu0 %v3608
    %v6051 = vpop.f32.mrf.mxu0
    %v6052 = vadd.f32 %v5963, %v6051
    %v6053 = vpop.f32.mrf.mxu0
    %v6054 = vadd.f32 %v5965, %v6053
    %6055 = vmatmul.bf16.gmra.mxu0 %v3616
    %v6056 = vpop.f32.mrf.mxu0
    %v6057 = vadd.f32 %v5968, %v6056
    %v6058 = vpop.f32.mrf.mxu0
    %v6059 = vadd.f32 %v5970, %v6058
    %6060 = vmatmul.bf16.gmra.mxu0 %v3624
    %v6061 = vpop.f32.mrf.mxu0
    %v6062 = vadd.f32 %v5973, %v6061
    %v6063 = vpop.f32.mrf.mxu0
    %v6064 = vadd.f32 %v5975, %v6063
    %6065 = vmatmul.bf16.gmra.mxu0 %v3632
    %v6066 = vpop.f32.mrf.mxu0
    %v6067 = vadd.f32 %v5978, %v6066
    %v6068 = vpop.f32.mrf.mxu0
    %v6069 = vadd.f32 %v5980, %v6068
    %6070 = vmatmul.bf16.gmra.mxu0 %v3640
    %v6071 = vpop.f32.mrf.mxu0
    %v6072 = vadd.f32 %v5983, %v6071
    %v6073 = vpop.f32.mrf.mxu0
    %v6074 = vadd.f32 %v5985, %v6073
    %6075 = vmatmul.bf16.gmra.mxu0 %v3648
    %v6076 = vpop.f32.mrf.mxu0
    %v6077 = vadd.f32 %v5988, %v6076
    %v6078 = vpop.f32.mrf.mxu0
    %v6079 = vadd.f32 %v5990, %v6078
    %6080 = vdwg.mxu0
    %6081 = vmatpush.bf16.msra.mxu0 %v4772
    %6082 = vmatpush.bf16.msra.mxu0 %v4768
    %6083 = vmatpush.bf16.msra.mxu0 %v4764
    %6084 = vmatpush.bf16.msra.mxu0 %v4760
    %6085 = vmatpush.bf16.msra.mxu0 %v4756
    %6086 = vmatpush.bf16.msra.mxu0 %v4752
    %6087 = vmatpush.bf16.msra.mxu0 %v4748
    %6088 = vmatpush.bf16.msra.mxu0 %v4744
    %6089 = vmatmul.bf16.gmra.mxu0 %v3529
    %v6090 = vpop.f32.mrf.mxu0
    %v6091 = vadd.f32 %v6002, %v6090
    %v6092 = vpop.f32.mrf.mxu0
    %v6093 = vadd.f32 %v6004, %v6092
    %6094 = vmatmul.bf16.gmra.mxu0 %v3537
    %v6095 = vpop.f32.mrf.mxu0
    %v6096 = vadd.f32 %v6007, %v6095
    %v6097 = vpop.f32.mrf.mxu0
    %v6098 = vadd.f32 %v6009, %v6097
    %6099 = vmatmul.bf16.gmra.mxu0 %v3545
    %v6100 = vpop.f32.mrf.mxu0
    %v6101 = vadd.f32 %v6012, %v6100
    %v6102 = vpop.f32.mrf.mxu0
    %v6103 = vadd.f32 %v6014, %v6102
    %6104 = vmatmul.bf16.gmra.mxu0 %v3553
    %v6105 = vpop.f32.mrf.mxu0
    %v6106 = vadd.f32 %v6017, %v6105
    %v6107 = vpop.f32.mrf.mxu0
    %v6108 = vadd.f32 %v6019, %v6107
    %6109 = vmatmul.bf16.gmra.mxu0 %v3561
    %v6110 = vpop.f32.mrf.mxu0
    %v6111 = vadd.f32 %v6022, %v6110
    %v6112 = vpop.f32.mrf.mxu0
    %v6113 = vadd.f32 %v6024, %v6112
    %6114 = vmatmul.bf16.gmra.mxu0 %v3569
    %v6115 = vpop.f32.mrf.mxu0
    %v6116 = vadd.f32 %v6027, %v6115
    %v6117 = vpop.f32.mrf.mxu0
    %v6118 = vadd.f32 %v6029, %v6117
    %6119 = vmatmul.bf16.gmra.mxu0 %v3577
    %v6120 = vpop.f32.mrf.mxu0
    %v6121 = vadd.f32 %v6032, %v6120
    %v6122 = vpop.f32.mrf.mxu0
    %v6123 = vadd.f32 %v6034, %v6122
    %6124 = vmatmul.bf16.gmra.mxu0 %v3585
    %v6125 = vpop.f32.mrf.mxu0
    %v6126 = vadd.f32 %v6037, %v6125
    %v6127 = vpop.f32.mrf.mxu0
    %v6128 = vadd.f32 %v6039, %v6127
    %6129 = vmatmul.bf16.gmra.mxu0 %v3593
    %v6130 = vpop.f32.mrf.mxu0
    %v6131 = vadd.f32 %v6042, %v6130
    %v6132 = vpop.f32.mrf.mxu0
    %v6133 = vadd.f32 %v6044, %v6132
    %6134 = vmatmul.bf16.gmra.mxu0 %v3601
    %v6135 = vpop.f32.mrf.mxu0
    %v6136 = vadd.f32 %v6047, %v6135
    %v6137 = vpop.f32.mrf.mxu0
    %v6138 = vadd.f32 %v6049, %v6137
    %6139 = vmatmul.bf16.gmra.mxu0 %v3609
    %v6140 = vpop.f32.mrf.mxu0
    %v6141 = vadd.f32 %v6052, %v6140
    %v6142 = vpop.f32.mrf.mxu0
    %v6143 = vadd.f32 %v6054, %v6142
    %6144 = vmatmul.bf16.gmra.mxu0 %v3617
    %v6145 = vpop.f32.mrf.mxu0
    %v6146 = vadd.f32 %v6057, %v6145
    %v6147 = vpop.f32.mrf.mxu0
    %v6148 = vadd.f32 %v6059, %v6147
    %6149 = vmatmul.bf16.gmra.mxu0 %v3625
    %v6150 = vpop.f32.mrf.mxu0
    %v6151 = vadd.f32 %v6062, %v6150
    %v6152 = vpop.f32.mrf.mxu0
    %v6153 = vadd.f32 %v6064, %v6152
    %6154 = vmatmul.bf16.gmra.mxu0 %v3633
    %v6155 = vpop.f32.mrf.mxu0
    %v6156 = vadd.f32 %v6067, %v6155
    %v6157 = vpop.f32.mrf.mxu0
    %v6158 = vadd.f32 %v6069, %v6157
    %6159 = vmatmul.bf16.gmra.mxu0 %v3641
    %v6160 = vpop.f32.mrf.mxu0
    %v6161 = vadd.f32 %v6072, %v6160
    %v6162 = vpop.f32.mrf.mxu0
    %v6163 = vadd.f32 %v6074, %v6162
    %6164 = vmatmul.bf16.gmra.mxu0 %v3649
    %v6165 = vpop.f32.mrf.mxu0
    %v6166 = vadd.f32 %v6077, %v6165
    %v6167 = vpop.f32.mrf.mxu0
    %v6168 = vadd.f32 %v6079, %v6167
    %6169 = vdwg.mxu0
    %6170 = vmatpush.bf16.msra.mxu0 %v4804
    %6171 = vmatpush.bf16.msra.mxu0 %v4800
    %6172 = vmatpush.bf16.msra.mxu0 %v4796
    %6173 = vmatpush.bf16.msra.mxu0 %v4792
    %6174 = vmatpush.bf16.msra.mxu0 %v4788
    %6175 = vmatpush.bf16.msra.mxu0 %v4784
    %6176 = vmatpush.bf16.msra.mxu0 %v4780
    %6177 = vmatpush.bf16.msra.mxu0 %v4776
    %6178 = vmatmul.bf16.gmra.mxu0 %v3530
    %v6179 = vpop.f32.mrf.mxu0
    %v6180 = vadd.f32 %v6091, %v6179
    %v6181 = vpop.f32.mrf.mxu0
    %v6182 = vadd.f32 %v6093, %v6181
    %6183 = vmatmul.bf16.gmra.mxu0 %v3538
    %v6184 = vpop.f32.mrf.mxu0
    %v6185 = vadd.f32 %v6096, %v6184
    %v6186 = vpop.f32.mrf.mxu0
    %v6187 = vadd.f32 %v6098, %v6186
    %6188 = vmatmul.bf16.gmra.mxu0 %v3546
    %v6189 = vpop.f32.mrf.mxu0
    %v6190 = vadd.f32 %v6101, %v6189
    %v6191 = vpop.f32.mrf.mxu0
    %v6192 = vadd.f32 %v6103, %v6191
    %6193 = vmatmul.bf16.gmra.mxu0 %v3554
    %v6194 = vpop.f32.mrf.mxu0
    %v6195 = vadd.f32 %v6106, %v6194
    %v6196 = vpop.f32.mrf.mxu0
    %v6197 = vadd.f32 %v6108, %v6196
    %6198 = vmatmul.bf16.gmra.mxu0 %v3562
    %v6199 = vpop.f32.mrf.mxu0
    %v6200 = vadd.f32 %v6111, %v6199
    %v6201 = vpop.f32.mrf.mxu0
    %v6202 = vadd.f32 %v6113, %v6201
    %6203 = vmatmul.bf16.gmra.mxu0 %v3570
    %v6204 = vpop.f32.mrf.mxu0
    %v6205 = vadd.f32 %v6116, %v6204
    %v6206 = vpop.f32.mrf.mxu0
    %v6207 = vadd.f32 %v6118, %v6206
    %6208 = vmatmul.bf16.gmra.mxu0 %v3578
    %v6209 = vpop.f32.mrf.mxu0
    %v6210 = vadd.f32 %v6121, %v6209
    %v6211 = vpop.f32.mrf.mxu0
    %v6212 = vadd.f32 %v6123, %v6211
    %6213 = vmatmul.bf16.gmra.mxu0 %v3586
    %v6214 = vpop.f32.mrf.mxu0
    %v6215 = vadd.f32 %v6126, %v6214
    %v6216 = vpop.f32.mrf.mxu0
    %v6217 = vadd.f32 %v6128, %v6216
    %6218 = vmatmul.bf16.gmra.mxu0 %v3594
    %v6219 = vpop.f32.mrf.mxu0
    %v6220 = vadd.f32 %v6131, %v6219
    %v6221 = vpop.f32.mrf.mxu0
    %v6222 = vadd.f32 %v6133, %v6221
    %6223 = vmatmul.bf16.gmra.mxu0 %v3602
    %v6224 = vpop.f32.mrf.mxu0
    %v6225 = vadd.f32 %v6136, %v6224
    %v6226 = vpop.f32.mrf.mxu0
    %v6227 = vadd.f32 %v6138, %v6226
    %6228 = vmatmul.bf16.gmra.mxu0 %v3610
    %v6229 = vpop.f32.mrf.mxu0
    %v6230 = vadd.f32 %v6141, %v6229
    %v6231 = vpop.f32.mrf.mxu0
    %v6232 = vadd.f32 %v6143, %v6231
    %6233 = vmatmul.bf16.gmra.mxu0 %v3618
    %v6234 = vpop.f32.mrf.mxu0
    %v6235 = vadd.f32 %v6146, %v6234
    %v6236 = vpop.f32.mrf.mxu0
    %v6237 = vadd.f32 %v6148, %v6236
    %6238 = vmatmul.bf16.gmra.mxu0 %v3626
    %v6239 = vpop.f32.mrf.mxu0
    %v6240 = vadd.f32 %v6151, %v6239
    %v6241 = vpop.f32.mrf.mxu0
    %v6242 = vadd.f32 %v6153, %v6241
    %6243 = vmatmul.bf16.gmra.mxu0 %v3634
    %v6244 = vpop.f32.mrf.mxu0
    %v6245 = vadd.f32 %v6156, %v6244
    %v6246 = vpop.f32.mrf.mxu0
    %v6247 = vadd.f32 %v6158, %v6246
    %6248 = vmatmul.bf16.gmra.mxu0 %v3642
    %v6249 = vpop.f32.mrf.mxu0
    %v6250 = vadd.f32 %v6161, %v6249
    %v6251 = vpop.f32.mrf.mxu0
    %v6252 = vadd.f32 %v6163, %v6251
    %6253 = vmatmul.bf16.gmra.mxu0 %v3650
    %v6254 = vpop.f32.mrf.mxu0
    %v6255 = vadd.f32 %v6166, %v6254
    %v6256 = vpop.f32.mrf.mxu0
    %v6257 = vadd.f32 %v6168, %v6256
    %6258 = vdwg.mxu0
    %6259 = vmatpush.bf16.msra.mxu0 %v4836
    %6260 = vmatpush.bf16.msra.mxu0 %v4832
    %6261 = vmatpush.bf16.msra.mxu0 %v4828
    %6262 = vmatpush.bf16.msra.mxu0 %v4824
    %6263 = vmatpush.bf16.msra.mxu0 %v4820
    %6264 = vmatpush.bf16.msra.mxu0 %v4816
    %6265 = vmatpush.bf16.msra.mxu0 %v4812
    %6266 = vmatpush.bf16.msra.mxu0 %v4808
    %6267 = vmatmul.bf16.gmra.mxu0 %v3531
    %v6268 = vpop.f32.mrf.mxu0
    %v6269 = vadd.f32 %v6180, %v6268
    %v6270 = vpop.f32.mrf.mxu0
    %v6271 = vadd.f32 %v6182, %v6270
    %6272 = vmatmul.bf16.gmra.mxu0 %v3539
    %v6273 = vpop.f32.mrf.mxu0
    %v6274 = vadd.f32 %v6185, %v6273
    %v6275 = vpop.f32.mrf.mxu0
    %v6276 = vadd.f32 %v6187, %v6275
    %6277 = vmatmul.bf16.gmra.mxu0 %v3547
    %v6278 = vpop.f32.mrf.mxu0
    %v6279 = vadd.f32 %v6190, %v6278
    %v6280 = vpop.f32.mrf.mxu0
    %v6281 = vadd.f32 %v6192, %v6280
    %6282 = vmatmul.bf16.gmra.mxu0 %v3555
    %v6283 = vpop.f32.mrf.mxu0
    %v6284 = vadd.f32 %v6195, %v6283
    %v6285 = vpop.f32.mrf.mxu0
    %v6286 = vadd.f32 %v6197, %v6285
    %6287 = vmatmul.bf16.gmra.mxu0 %v3563
    %v6288 = vpop.f32.mrf.mxu0
    %v6289 = vadd.f32 %v6200, %v6288
    %v6290 = vpop.f32.mrf.mxu0
    %v6291 = vadd.f32 %v6202, %v6290
    %6292 = vmatmul.bf16.gmra.mxu0 %v3571
    %v6293 = vpop.f32.mrf.mxu0
    %v6294 = vadd.f32 %v6205, %v6293
    %v6295 = vpop.f32.mrf.mxu0
    %v6296 = vadd.f32 %v6207, %v6295
    %6297 = vmatmul.bf16.gmra.mxu0 %v3579
    %v6298 = vpop.f32.mrf.mxu0
    %v6299 = vadd.f32 %v6210, %v6298
    %v6300 = vpop.f32.mrf.mxu0
    %v6301 = vadd.f32 %v6212, %v6300
    %6302 = vmatmul.bf16.gmra.mxu0 %v3587
    %v6303 = vpop.f32.mrf.mxu0
    %v6304 = vadd.f32 %v6215, %v6303
    %v6305 = vpop.f32.mrf.mxu0
    %v6306 = vadd.f32 %v6217, %v6305
    %6307 = vmatmul.bf16.gmra.mxu0 %v3595
    %v6308 = vpop.f32.mrf.mxu0
    %v6309 = vadd.f32 %v6220, %v6308
    %v6310 = vpop.f32.mrf.mxu0
    %v6311 = vadd.f32 %v6222, %v6310
    %6312 = vmatmul.bf16.gmra.mxu0 %v3603
    %v6313 = vpop.f32.mrf.mxu0
    %v6314 = vadd.f32 %v6225, %v6313
    %v6315 = vpop.f32.mrf.mxu0
    %v6316 = vadd.f32 %v6227, %v6315
    %6317 = vmatmul.bf16.gmra.mxu0 %v3611
    %v6318 = vpop.f32.mrf.mxu0
    %v6319 = vadd.f32 %v6230, %v6318
    %v6320 = vpop.f32.mrf.mxu0
    %v6321 = vadd.f32 %v6232, %v6320
    %6322 = vmatmul.bf16.gmra.mxu0 %v3619
    %v6323 = vpop.f32.mrf.mxu0
    %v6324 = vadd.f32 %v6235, %v6323
    %v6325 = vpop.f32.mrf.mxu0
    %v6326 = vadd.f32 %v6237, %v6325
    %6327 = vmatmul.bf16.gmra.mxu0 %v3627
    %v6328 = vpop.f32.mrf.mxu0
    %v6329 = vadd.f32 %v6240, %v6328
    %v6330 = vpop.f32.mrf.mxu0
    %v6331 = vadd.f32 %v6242, %v6330
    %6332 = vmatmul.bf16.gmra.mxu0 %v3635
    %v6333 = vpop.f32.mrf.mxu0
    %v6334 = vadd.f32 %v6245, %v6333
    %v6335 = vpop.f32.mrf.mxu0
    %v6336 = vadd.f32 %v6247, %v6335
    %6337 = vmatmul.bf16.gmra.mxu0 %v3643
    %v6338 = vpop.f32.mrf.mxu0
    %v6339 = vadd.f32 %v6250, %v6338
    %v6340 = vpop.f32.mrf.mxu0
    %v6341 = vadd.f32 %v6252, %v6340
    %6342 = vmatmul.bf16.gmra.mxu0 %v3651
    %v6343 = vpop.f32.mrf.mxu0
    %v6344 = vadd.f32 %v6255, %v6343
    %v6345 = vpop.f32.mrf.mxu0
    %v6346 = vadd.f32 %v6257, %v6345
    %6347 = vdwg.mxu0
    %6348 = vmatpush.bf16.msra.mxu0 %v4868
    %6349 = vmatpush.bf16.msra.mxu0 %v4864
    %6350 = vmatpush.bf16.msra.mxu0 %v4860
    %6351 = vmatpush.bf16.msra.mxu0 %v4856
    %6352 = vmatpush.bf16.msra.mxu0 %v4852
    %6353 = vmatpush.bf16.msra.mxu0 %v4848
    %6354 = vmatpush.bf16.msra.mxu0 %v4844
    %6355 = vmatpush.bf16.msra.mxu0 %v4840
    %6356 = vmatmul.bf16.gmra.mxu0 %v3532
    %v6357 = vpop.f32.mrf.mxu0
    %v6358 = vadd.f32 %v6269, %v6357
    %v6359 = vpop.f32.mrf.mxu0
    %v6360 = vadd.f32 %v6271, %v6359
    %6361 = vmatmul.bf16.gmra.mxu0 %v3540
    %v6362 = vpop.f32.mrf.mxu0
    %v6363 = vadd.f32 %v6274, %v6362
    %v6364 = vpop.f32.mrf.mxu0
    %v6365 = vadd.f32 %v6276, %v6364
    %6366 = vmatmul.bf16.gmra.mxu0 %v3548
    %v6367 = vpop.f32.mrf.mxu0
    %v6368 = vadd.f32 %v6279, %v6367
    %v6369 = vpop.f32.mrf.mxu0
    %v6370 = vadd.f32 %v6281, %v6369
    %6371 = vmatmul.bf16.gmra.mxu0 %v3556
    %v6372 = vpop.f32.mrf.mxu0
    %v6373 = vadd.f32 %v6284, %v6372
    %v6374 = vpop.f32.mrf.mxu0
    %v6375 = vadd.f32 %v6286, %v6374
    %6376 = vmatmul.bf16.gmra.mxu0 %v3564
    %v6377 = vpop.f32.mrf.mxu0
    %v6378 = vadd.f32 %v6289, %v6377
    %v6379 = vpop.f32.mrf.mxu0
    %v6380 = vadd.f32 %v6291, %v6379
    %6381 = vmatmul.bf16.gmra.mxu0 %v3572
    %v6382 = vpop.f32.mrf.mxu0
    %v6383 = vadd.f32 %v6294, %v6382
    %v6384 = vpop.f32.mrf.mxu0
    %v6385 = vadd.f32 %v6296, %v6384
    %6386 = vmatmul.bf16.gmra.mxu0 %v3580
    %v6387 = vpop.f32.mrf.mxu0
    %v6388 = vadd.f32 %v6299, %v6387
    %v6389 = vpop.f32.mrf.mxu0
    %v6390 = vadd.f32 %v6301, %v6389
    %6391 = vmatmul.bf16.gmra.mxu0 %v3588
    %v6392 = vpop.f32.mrf.mxu0
    %v6393 = vadd.f32 %v6304, %v6392
    %v6394 = vpop.f32.mrf.mxu0
    %v6395 = vadd.f32 %v6306, %v6394
    %6396 = vmatmul.bf16.gmra.mxu0 %v3596
    %v6397 = vpop.f32.mrf.mxu0
    %v6398 = vadd.f32 %v6309, %v6397
    %v6399 = vpop.f32.mrf.mxu0
    %v6400 = vadd.f32 %v6311, %v6399
    %6401 = vmatmul.bf16.gmra.mxu0 %v3604
    %v6402 = vpop.f32.mrf.mxu0
    %v6403 = vadd.f32 %v6314, %v6402
    %v6404 = vpop.f32.mrf.mxu0
    %v6405 = vadd.f32 %v6316, %v6404
    %6406 = vmatmul.bf16.gmra.mxu0 %v3612
    %v6407 = vpop.f32.mrf.mxu0
    %v6408 = vadd.f32 %v6319, %v6407
    %v6409 = vpop.f32.mrf.mxu0
    %v6410 = vadd.f32 %v6321, %v6409
    %6411 = vmatmul.bf16.gmra.mxu0 %v3620
    %v6412 = vpop.f32.mrf.mxu0
    %v6413 = vadd.f32 %v6324, %v6412
    %v6414 = vpop.f32.mrf.mxu0
    %v6415 = vadd.f32 %v6326, %v6414
    %6416 = vmatmul.bf16.gmra.mxu0 %v3628
    %v6417 = vpop.f32.mrf.mxu0
    %v6418 = vadd.f32 %v6329, %v6417
    %v6419 = vpop.f32.mrf.mxu0
    %v6420 = vadd.f32 %v6331, %v6419
    %6421 = vmatmul.bf16.gmra.mxu0 %v3636
    %v6422 = vpop.f32.mrf.mxu0
    %v6423 = vadd.f32 %v6334, %v6422
    %v6424 = vpop.f32.mrf.mxu0
    %v6425 = vadd.f32 %v6336, %v6424
    %6426 = vmatmul.bf16.gmra.mxu0 %v3644
    %v6427 = vpop.f32.mrf.mxu0
    %v6428 = vadd.f32 %v6339, %v6427
    %v6429 = vpop.f32.mrf.mxu0
    %v6430 = vadd.f32 %v6341, %v6429
    %6431 = vmatmul.bf16.gmra.mxu0 %v3652
    %v6432 = vpop.f32.mrf.mxu0
    %v6433 = vadd.f32 %v6344, %v6432
    %v6434 = vpop.f32.mrf.mxu0
    %v6435 = vadd.f32 %v6346, %v6434
    %6436 = vdwg.mxu0
    %6437 = vmatpush.bf16.msra.mxu0 %v4900
    %6438 = vmatpush.bf16.msra.mxu0 %v4896
    %6439 = vmatpush.bf16.msra.mxu0 %v4892
    %6440 = vmatpush.bf16.msra.mxu0 %v4888
    %6441 = vmatpush.bf16.msra.mxu0 %v4884
    %6442 = vmatpush.bf16.msra.mxu0 %v4880
    %6443 = vmatpush.bf16.msra.mxu0 %v4876
    %6444 = vmatpush.bf16.msra.mxu0 %v4872
    %6445 = vmatmul.bf16.gmra.mxu0 %v3533
    %v6446 = vpop.f32.mrf.mxu0
    %v6447 = vadd.f32 %v6358, %v6446
    %v6448 = vpop.f32.mrf.mxu0
    %v6449 = vadd.f32 %v6360, %v6448
    %6450 = vmatmul.bf16.gmra.mxu0 %v3541
    %v6451 = vpop.f32.mrf.mxu0
    %v6452 = vadd.f32 %v6363, %v6451
    %v6453 = vpop.f32.mrf.mxu0
    %v6454 = vadd.f32 %v6365, %v6453
    %6455 = vmatmul.bf16.gmra.mxu0 %v3549
    %v6456 = vpop.f32.mrf.mxu0
    %v6457 = vadd.f32 %v6368, %v6456
    %v6458 = vpop.f32.mrf.mxu0
    %v6459 = vadd.f32 %v6370, %v6458
    %6460 = vmatmul.bf16.gmra.mxu0 %v3557
    %v6461 = vpop.f32.mrf.mxu0
    %v6462 = vadd.f32 %v6373, %v6461
    %v6463 = vpop.f32.mrf.mxu0
    %v6464 = vadd.f32 %v6375, %v6463
    %6465 = vmatmul.bf16.gmra.mxu0 %v3565
    %v6466 = vpop.f32.mrf.mxu0
    %v6467 = vadd.f32 %v6378, %v6466
    %v6468 = vpop.f32.mrf.mxu0
    %v6469 = vadd.f32 %v6380, %v6468
    %6470 = vmatmul.bf16.gmra.mxu0 %v3573
    %v6471 = vpop.f32.mrf.mxu0
    %v6472 = vadd.f32 %v6383, %v6471
    %v6473 = vpop.f32.mrf.mxu0
    %v6474 = vadd.f32 %v6385, %v6473
    %6475 = vmatmul.bf16.gmra.mxu0 %v3581
    %v6476 = vpop.f32.mrf.mxu0
    %v6477 = vadd.f32 %v6388, %v6476
    %v6478 = vpop.f32.mrf.mxu0
    %v6479 = vadd.f32 %v6390, %v6478
    %6480 = vmatmul.bf16.gmra.mxu0 %v3589
    %v6481 = vpop.f32.mrf.mxu0
    %v6482 = vadd.f32 %v6393, %v6481
    %v6483 = vpop.f32.mrf.mxu0
    %v6484 = vadd.f32 %v6395, %v6483
    %6485 = vmatmul.bf16.gmra.mxu0 %v3597
    %v6486 = vpop.f32.mrf.mxu0
    %v6487 = vadd.f32 %v6398, %v6486
    %v6488 = vpop.f32.mrf.mxu0
    %v6489 = vadd.f32 %v6400, %v6488
    %6490 = vmatmul.bf16.gmra.mxu0 %v3605
    %v6491 = vpop.f32.mrf.mxu0
    %v6492 = vadd.f32 %v6403, %v6491
    %v6493 = vpop.f32.mrf.mxu0
    %v6494 = vadd.f32 %v6405, %v6493
    %6495 = vmatmul.bf16.gmra.mxu0 %v3613
    %v6496 = vpop.f32.mrf.mxu0
    %v6497 = vadd.f32 %v6408, %v6496
    %v6498 = vpop.f32.mrf.mxu0
    %v6499 = vadd.f32 %v6410, %v6498
    %6500 = vmatmul.bf16.gmra.mxu0 %v3621
    %v6501 = vpop.f32.mrf.mxu0
    %v6502 = vadd.f32 %v6413, %v6501
    %v6503 = vpop.f32.mrf.mxu0
    %v6504 = vadd.f32 %v6415, %v6503
    %6505 = vmatmul.bf16.gmra.mxu0 %v3629
    %v6506 = vpop.f32.mrf.mxu0
    %v6507 = vadd.f32 %v6418, %v6506
    %v6508 = vpop.f32.mrf.mxu0
    %v6509 = vadd.f32 %v6420, %v6508
    %6510 = vmatmul.bf16.gmra.mxu0 %v3637
    %v6511 = vpop.f32.mrf.mxu0
    %v6512 = vadd.f32 %v6423, %v6511
    %v6513 = vpop.f32.mrf.mxu0
    %v6514 = vadd.f32 %v6425, %v6513
    %6515 = vmatmul.bf16.gmra.mxu0 %v3645
    %v6516 = vpop.f32.mrf.mxu0
    %v6517 = vadd.f32 %v6428, %v6516
    %v6518 = vpop.f32.mrf.mxu0
    %v6519 = vadd.f32 %v6430, %v6518
    %6520 = vmatmul.bf16.gmra.mxu0 %v3653
    %v6521 = vpop.f32.mrf.mxu0
    %v6522 = vadd.f32 %v6433, %v6521
    %v6523 = vpop.f32.mrf.mxu0
    %v6524 = vadd.f32 %v6435, %v6523
    %6525 = vdwg.mxu0
    %6526 = vmatpush.bf16.msra.mxu0 %v4932
    %6527 = vmatpush.bf16.msra.mxu0 %v4928
    %6528 = vmatpush.bf16.msra.mxu0 %v4924
    %6529 = vmatpush.bf16.msra.mxu0 %v4920
    %6530 = vmatpush.bf16.msra.mxu0 %v4916
    %6531 = vmatpush.bf16.msra.mxu0 %v4912
    %6532 = vmatpush.bf16.msra.mxu0 %v4908
    %6533 = vmatpush.bf16.msra.mxu0 %v4904
    %6534 = vmatmul.bf16.gmra.mxu0 %v3534
    %v6535 = vpop.f32.mrf.mxu0
    %v6536 = vadd.f32 %v6447, %v6535
    %v6537 = vpop.f32.mrf.mxu0
    %v6538 = vadd.f32 %v6449, %v6537
    %6539 = vmatmul.bf16.gmra.mxu0 %v3542
    %v6540 = vpop.f32.mrf.mxu0
    %v6541 = vadd.f32 %v6452, %v6540
    %v6542 = vpop.f32.mrf.mxu0
    %v6543 = vadd.f32 %v6454, %v6542
    %6544 = vmatmul.bf16.gmra.mxu0 %v3550
    %v6545 = vpop.f32.mrf.mxu0
    %v6546 = vadd.f32 %v6457, %v6545
    %v6547 = vpop.f32.mrf.mxu0
    %v6548 = vadd.f32 %v6459, %v6547
    %6549 = vmatmul.bf16.gmra.mxu0 %v3558
    %v6550 = vpop.f32.mrf.mxu0
    %v6551 = vadd.f32 %v6462, %v6550
    %v6552 = vpop.f32.mrf.mxu0
    %v6553 = vadd.f32 %v6464, %v6552
    %6554 = vmatmul.bf16.gmra.mxu0 %v3566
    %v6555 = vpop.f32.mrf.mxu0
    %v6556 = vadd.f32 %v6467, %v6555
    %v6557 = vpop.f32.mrf.mxu0
    %v6558 = vadd.f32 %v6469, %v6557
    %6559 = vmatmul.bf16.gmra.mxu0 %v3574
    %v6560 = vpop.f32.mrf.mxu0
    %v6561 = vadd.f32 %v6472, %v6560
    %v6562 = vpop.f32.mrf.mxu0
    %v6563 = vadd.f32 %v6474, %v6562
    %6564 = vmatmul.bf16.gmra.mxu0 %v3582
    %v6565 = vpop.f32.mrf.mxu0
    %v6566 = vadd.f32 %v6477, %v6565
    %v6567 = vpop.f32.mrf.mxu0
    %v6568 = vadd.f32 %v6479, %v6567
    %6569 = vmatmul.bf16.gmra.mxu0 %v3590
    %v6570 = vpop.f32.mrf.mxu0
    %v6571 = vadd.f32 %v6482, %v6570
    %v6572 = vpop.f32.mrf.mxu0
    %v6573 = vadd.f32 %v6484, %v6572
    %6574 = vmatmul.bf16.gmra.mxu0 %v3598
    %v6575 = vpop.f32.mrf.mxu0
    %v6576 = vadd.f32 %v6487, %v6575
    %v6577 = vpop.f32.mrf.mxu0
    %v6578 = vadd.f32 %v6489, %v6577
    %6579 = vmatmul.bf16.gmra.mxu0 %v3606
    %v6580 = vpop.f32.mrf.mxu0
    %v6581 = vadd.f32 %v6492, %v6580
    %v6582 = vpop.f32.mrf.mxu0
    %v6583 = vadd.f32 %v6494, %v6582
    %6584 = vmatmul.bf16.gmra.mxu0 %v3614
    %v6585 = vpop.f32.mrf.mxu0
    %v6586 = vadd.f32 %v6497, %v6585
    %v6587 = vpop.f32.mrf.mxu0
    %v6588 = vadd.f32 %v6499, %v6587
    %6589 = vmatmul.bf16.gmra.mxu0 %v3622
    %v6590 = vpop.f32.mrf.mxu0
    %v6591 = vadd.f32 %v6502, %v6590
    %v6592 = vpop.f32.mrf.mxu0
    %v6593 = vadd.f32 %v6504, %v6592
    %6594 = vmatmul.bf16.gmra.mxu0 %v3630
    %v6595 = vpop.f32.mrf.mxu0
    %v6596 = vadd.f32 %v6507, %v6595
    %v6597 = vpop.f32.mrf.mxu0
    %v6598 = vadd.f32 %v6509, %v6597
    %6599 = vmatmul.bf16.gmra.mxu0 %v3638
    %v6600 = vpop.f32.mrf.mxu0
    %v6601 = vadd.f32 %v6512, %v6600
    %v6602 = vpop.f32.mrf.mxu0
    %v6603 = vadd.f32 %v6514, %v6602
    %6604 = vmatmul.bf16.gmra.mxu0 %v3646
    %v6605 = vpop.f32.mrf.mxu0
    %v6606 = vadd.f32 %v6517, %v6605
    %v6607 = vpop.f32.mrf.mxu0
    %v6608 = vadd.f32 %v6519, %v6607
    %6609 = vmatmul.bf16.gmra.mxu0 %v3654
    %v6610 = vpop.f32.mrf.mxu0
    %v6611 = vadd.f32 %v6522, %v6610
    %v6612 = vpop.f32.mrf.mxu0
    %v6613 = vadd.f32 %v6524, %v6612
    %6614 = vdwg.mxu0
    %6615 = vmatpush.bf16.msra.mxu0 %v4709
    %6616 = vmatpush.bf16.msra.mxu0 %v4705
    %6617 = vmatpush.bf16.msra.mxu0 %v4701
    %6618 = vmatpush.bf16.msra.mxu0 %v4697
    %6619 = vmatpush.bf16.msra.mxu0 %v4693
    %6620 = vmatpush.bf16.msra.mxu0 %v4689
    %6621 = vmatpush.bf16.msra.mxu0 %v4685
    %6622 = vmatpush.bf16.msra.mxu0 %v4681
    %6623 = vmatmul.bf16.gmra.mxu0 %v3527
    %v6624 = vpop.f32.mrf.mxu0
    %v6625 = vadd.f32 0.0, %v6624
    %v6626 = vpop.f32.mrf.mxu0
    %v6627 = vadd.f32 0.0, %v6626
    %6628 = vmatmul.bf16.gmra.mxu0 %v3535
    %v6629 = vpop.f32.mrf.mxu0
    %v6630 = vadd.f32 0.0, %v6629
    %v6631 = vpop.f32.mrf.mxu0
    %v6632 = vadd.f32 0.0, %v6631
    %6633 = vmatmul.bf16.gmra.mxu0 %v3543
    %v6634 = vpop.f32.mrf.mxu0
    %v6635 = vadd.f32 0.0, %v6634
    %v6636 = vpop.f32.mrf.mxu0
    %v6637 = vadd.f32 0.0, %v6636
    %6638 = vmatmul.bf16.gmra.mxu0 %v3551
    %v6639 = vpop.f32.mrf.mxu0
    %v6640 = vadd.f32 0.0, %v6639
    %v6641 = vpop.f32.mrf.mxu0
    %v6642 = vadd.f32 0.0, %v6641
    %6643 = vmatmul.bf16.gmra.mxu0 %v3559
    %v6644 = vpop.f32.mrf.mxu0
    %v6645 = vadd.f32 0.0, %v6644
    %v6646 = vpop.f32.mrf.mxu0
    %v6647 = vadd.f32 0.0, %v6646
    %6648 = vmatmul.bf16.gmra.mxu0 %v3567
    %v6649 = vpop.f32.mrf.mxu0
    %v6650 = vadd.f32 0.0, %v6649
    %v6651 = vpop.f32.mrf.mxu0
    %v6652 = vadd.f32 0.0, %v6651
    %6653 = vmatmul.bf16.gmra.mxu0 %v3575
    %v6654 = vpop.f32.mrf.mxu0
    %v6655 = vadd.f32 0.0, %v6654
    %v6656 = vpop.f32.mrf.mxu0
    %v6657 = vadd.f32 0.0, %v6656
    %6658 = vmatmul.bf16.gmra.mxu0 %v3583
    %v6659 = vpop.f32.mrf.mxu0
    %v6660 = vadd.f32 0.0, %v6659
    %v6661 = vpop.f32.mrf.mxu0
    %v6662 = vadd.f32 0.0, %v6661
    %6663 = vmatmul.bf16.gmra.mxu0 %v3591
    %v6664 = vpop.f32.mrf.mxu0
    %v6665 = vadd.f32 0.0, %v6664
    %v6666 = vpop.f32.mrf.mxu0
    %v6667 = vadd.f32 0.0, %v6666
    %6668 = vmatmul.bf16.gmra.mxu0 %v3599
    %v6669 = vpop.f32.mrf.mxu0
    %v6670 = vadd.f32 0.0, %v6669
    %v6671 = vpop.f32.mrf.mxu0
    %v6672 = vadd.f32 0.0, %v6671
    %6673 = vmatmul.bf16.gmra.mxu0 %v3607
    %v6674 = vpop.f32.mrf.mxu0
    %v6675 = vadd.f32 0.0, %v6674
    %v6676 = vpop.f32.mrf.mxu0
    %v6677 = vadd.f32 0.0, %v6676
    %6678 = vmatmul.bf16.gmra.mxu0 %v3615
    %v6679 = vpop.f32.mrf.mxu0
    %v6680 = vadd.f32 0.0, %v6679
    %v6681 = vpop.f32.mrf.mxu0
    %v6682 = vadd.f32 0.0, %v6681
    %6683 = vmatmul.bf16.gmra.mxu0 %v3623
    %v6684 = vpop.f32.mrf.mxu0
    %v6685 = vadd.f32 0.0, %v6684
    %v6686 = vpop.f32.mrf.mxu0
    %v6687 = vadd.f32 0.0, %v6686
    %6688 = vmatmul.bf16.gmra.mxu0 %v3631
    %v6689 = vpop.f32.mrf.mxu0
    %v6690 = vadd.f32 0.0, %v6689
    %v6691 = vpop.f32.mrf.mxu0
    %v6692 = vadd.f32 0.0, %v6691
    %6693 = vmatmul.bf16.gmra.mxu0 %v3639
    %v6694 = vpop.f32.mrf.mxu0
    %v6695 = vadd.f32 0.0, %v6694
    %v6696 = vpop.f32.mrf.mxu0
    %v6697 = vadd.f32 0.0, %v6696
    %6698 = vmatmul.bf16.gmra.mxu0 %v3647
    %v6699 = vpop.f32.mrf.mxu0
    %v6700 = vadd.f32 0.0, %v6699
    %v6701 = vpop.f32.mrf.mxu0
    %v6702 = vadd.f32 0.0, %v6701
    %6703 = vdwg.mxu0
    %6704 = vmatpush.bf16.msra.mxu0 %v4741
    %6705 = vmatpush.bf16.msra.mxu0 %v4737
    %6706 = vmatpush.bf16.msra.mxu0 %v4733
    %6707 = vmatpush.bf16.msra.mxu0 %v4729
    %6708 = vmatpush.bf16.msra.mxu0 %v4725
    %6709 = vmatpush.bf16.msra.mxu0 %v4721
    %6710 = vmatpush.bf16.msra.mxu0 %v4717
    %6711 = vmatpush.bf16.msra.mxu0 %v4713
    %6712 = vmatmul.bf16.gmra.mxu0 %v3528
    %v6713 = vpop.f32.mrf.mxu0
    %v6714 = vadd.f32 %v6625, %v6713
    %v6715 = vpop.f32.mrf.mxu0
    %v6716 = vadd.f32 %v6627, %v6715
    %6717 = vmatmul.bf16.gmra.mxu0 %v3536
    %v6718 = vpop.f32.mrf.mxu0
    %v6719 = vadd.f32 %v6630, %v6718
    %v6720 = vpop.f32.mrf.mxu0
    %v6721 = vadd.f32 %v6632, %v6720
    %6722 = vmatmul.bf16.gmra.mxu0 %v3544
    %v6723 = vpop.f32.mrf.mxu0
    %v6724 = vadd.f32 %v6635, %v6723
    %v6725 = vpop.f32.mrf.mxu0
    %v6726 = vadd.f32 %v6637, %v6725
    %6727 = vmatmul.bf16.gmra.mxu0 %v3552
    %v6728 = vpop.f32.mrf.mxu0
    %v6729 = vadd.f32 %v6640, %v6728
    %v6730 = vpop.f32.mrf.mxu0
    %v6731 = vadd.f32 %v6642, %v6730
    %6732 = vmatmul.bf16.gmra.mxu0 %v3560
    %v6733 = vpop.f32.mrf.mxu0
    %v6734 = vadd.f32 %v6645, %v6733
    %v6735 = vpop.f32.mrf.mxu0
    %v6736 = vadd.f32 %v6647, %v6735
    %6737 = vmatmul.bf16.gmra.mxu0 %v3568
    %v6738 = vpop.f32.mrf.mxu0
    %v6739 = vadd.f32 %v6650, %v6738
    %v6740 = vpop.f32.mrf.mxu0
    %v6741 = vadd.f32 %v6652, %v6740
    %6742 = vmatmul.bf16.gmra.mxu0 %v3576
    %v6743 = vpop.f32.mrf.mxu0
    %v6744 = vadd.f32 %v6655, %v6743
    %v6745 = vpop.f32.mrf.mxu0
    %v6746 = vadd.f32 %v6657, %v6745
    %6747 = vmatmul.bf16.gmra.mxu0 %v3584
    %v6748 = vpop.f32.mrf.mxu0
    %v6749 = vadd.f32 %v6660, %v6748
    %v6750 = vpop.f32.mrf.mxu0
    %v6751 = vadd.f32 %v6662, %v6750
    %6752 = vmatmul.bf16.gmra.mxu0 %v3592
    %v6753 = vpop.f32.mrf.mxu0
    %v6754 = vadd.f32 %v6665, %v6753
    %v6755 = vpop.f32.mrf.mxu0
    %v6756 = vadd.f32 %v6667, %v6755
    %6757 = vmatmul.bf16.gmra.mxu0 %v3600
    %v6758 = vpop.f32.mrf.mxu0
    %v6759 = vadd.f32 %v6670, %v6758
    %v6760 = vpop.f32.mrf.mxu0
    %v6761 = vadd.f32 %v6672, %v6760
    %6762 = vmatmul.bf16.gmra.mxu0 %v3608
    %v6763 = vpop.f32.mrf.mxu0
    %v6764 = vadd.f32 %v6675, %v6763
    %v6765 = vpop.f32.mrf.mxu0
    %v6766 = vadd.f32 %v6677, %v6765
    %6767 = vmatmul.bf16.gmra.mxu0 %v3616
    %v6768 = vpop.f32.mrf.mxu0
    %v6769 = vadd.f32 %v6680, %v6768
    %v6770 = vpop.f32.mrf.mxu0
    %v6771 = vadd.f32 %v6682, %v6770
    %6772 = vmatmul.bf16.gmra.mxu0 %v3624
    %v6773 = vpop.f32.mrf.mxu0
    %v6774 = vadd.f32 %v6685, %v6773
    %v6775 = vpop.f32.mrf.mxu0
    %v6776 = vadd.f32 %v6687, %v6775
    %6777 = vmatmul.bf16.gmra.mxu0 %v3632
    %v6778 = vpop.f32.mrf.mxu0
    %v6779 = vadd.f32 %v6690, %v6778
    %v6780 = vpop.f32.mrf.mxu0
    %v6781 = vadd.f32 %v6692, %v6780
    %6782 = vmatmul.bf16.gmra.mxu0 %v3640
    %v6783 = vpop.f32.mrf.mxu0
    %v6784 = vadd.f32 %v6695, %v6783
    %v6785 = vpop.f32.mrf.mxu0
    %v6786 = vadd.f32 %v6697, %v6785
    %6787 = vmatmul.bf16.gmra.mxu0 %v3648
    %v6788 = vpop.f32.mrf.mxu0
    %v6789 = vadd.f32 %v6700, %v6788
    %v6790 = vpop.f32.mrf.mxu0
    %v6791 = vadd.f32 %v6702, %v6790
    %6792 = vdwg.mxu0
    %6793 = vmatpush.bf16.msra.mxu0 %v4773
    %6794 = vmatpush.bf16.msra.mxu0 %v4769
    %6795 = vmatpush.bf16.msra.mxu0 %v4765
    %6796 = vmatpush.bf16.msra.mxu0 %v4761
    %6797 = vmatpush.bf16.msra.mxu0 %v4757
    %6798 = vmatpush.bf16.msra.mxu0 %v4753
    %6799 = vmatpush.bf16.msra.mxu0 %v4749
    %6800 = vmatpush.bf16.msra.mxu0 %v4745
    %6801 = vmatmul.bf16.gmra.mxu0 %v3529
    %v6802 = vpop.f32.mrf.mxu0
    %v6803 = vadd.f32 %v6714, %v6802
    %v6804 = vpop.f32.mrf.mxu0
    %v6805 = vadd.f32 %v6716, %v6804
    %6806 = vmatmul.bf16.gmra.mxu0 %v3537
    %v6807 = vpop.f32.mrf.mxu0
    %v6808 = vadd.f32 %v6719, %v6807
    %v6809 = vpop.f32.mrf.mxu0
    %v6810 = vadd.f32 %v6721, %v6809
    %6811 = vmatmul.bf16.gmra.mxu0 %v3545
    %v6812 = vpop.f32.mrf.mxu0
    %v6813 = vadd.f32 %v6724, %v6812
    %v6814 = vpop.f32.mrf.mxu0
    %v6815 = vadd.f32 %v6726, %v6814
    %6816 = vmatmul.bf16.gmra.mxu0 %v3553
    %v6817 = vpop.f32.mrf.mxu0
    %v6818 = vadd.f32 %v6729, %v6817
    %v6819 = vpop.f32.mrf.mxu0
    %v6820 = vadd.f32 %v6731, %v6819
    %6821 = vmatmul.bf16.gmra.mxu0 %v3561
    %v6822 = vpop.f32.mrf.mxu0
    %v6823 = vadd.f32 %v6734, %v6822
    %v6824 = vpop.f32.mrf.mxu0
    %v6825 = vadd.f32 %v6736, %v6824
    %6826 = vmatmul.bf16.gmra.mxu0 %v3569
    %v6827 = vpop.f32.mrf.mxu0
    %v6828 = vadd.f32 %v6739, %v6827
    %v6829 = vpop.f32.mrf.mxu0
    %v6830 = vadd.f32 %v6741, %v6829
    %6831 = vmatmul.bf16.gmra.mxu0 %v3577
    %v6832 = vpop.f32.mrf.mxu0
    %v6833 = vadd.f32 %v6744, %v6832
    %v6834 = vpop.f32.mrf.mxu0
    %v6835 = vadd.f32 %v6746, %v6834
    %6836 = vmatmul.bf16.gmra.mxu0 %v3585
    %v6837 = vpop.f32.mrf.mxu0
    %v6838 = vadd.f32 %v6749, %v6837
    %v6839 = vpop.f32.mrf.mxu0
    %v6840 = vadd.f32 %v6751, %v6839
    %6841 = vmatmul.bf16.gmra.mxu0 %v3593
    %v6842 = vpop.f32.mrf.mxu0
    %v6843 = vadd.f32 %v6754, %v6842
    %v6844 = vpop.f32.mrf.mxu0
    %v6845 = vadd.f32 %v6756, %v6844
    %6846 = vmatmul.bf16.gmra.mxu0 %v3601
    %v6847 = vpop.f32.mrf.mxu0
    %v6848 = vadd.f32 %v6759, %v6847
    %v6849 = vpop.f32.mrf.mxu0
    %v6850 = vadd.f32 %v6761, %v6849
    %6851 = vmatmul.bf16.gmra.mxu0 %v3609
    %v6852 = vpop.f32.mrf.mxu0
    %v6853 = vadd.f32 %v6764, %v6852
    %v6854 = vpop.f32.mrf.mxu0
    %v6855 = vadd.f32 %v6766, %v6854
    %6856 = vmatmul.bf16.gmra.mxu0 %v3617
    %v6857 = vpop.f32.mrf.mxu0
    %v6858 = vadd.f32 %v6769, %v6857
    %v6859 = vpop.f32.mrf.mxu0
    %v6860 = vadd.f32 %v6771, %v6859
    %6861 = vmatmul.bf16.gmra.mxu0 %v3625
    %v6862 = vpop.f32.mrf.mxu0
    %v6863 = vadd.f32 %v6774, %v6862
    %v6864 = vpop.f32.mrf.mxu0
    %v6865 = vadd.f32 %v6776, %v6864
    %6866 = vmatmul.bf16.gmra.mxu0 %v3633
    %v6867 = vpop.f32.mrf.mxu0
    %v6868 = vadd.f32 %v6779, %v6867
    %v6869 = vpop.f32.mrf.mxu0
    %v6870 = vadd.f32 %v6781, %v6869
    %6871 = vmatmul.bf16.gmra.mxu0 %v3641
    %v6872 = vpop.f32.mrf.mxu0
    %v6873 = vadd.f32 %v6784, %v6872
    %v6874 = vpop.f32.mrf.mxu0
    %v6875 = vadd.f32 %v6786, %v6874
    %6876 = vmatmul.bf16.gmra.mxu0 %v3649
    %v6877 = vpop.f32.mrf.mxu0
    %v6878 = vadd.f32 %v6789, %v6877
    %v6879 = vpop.f32.mrf.mxu0
    %v6880 = vadd.f32 %v6791, %v6879
    %6881 = vdwg.mxu0
    %6882 = vmatpush.bf16.msra.mxu0 %v4805
    %6883 = vmatpush.bf16.msra.mxu0 %v4801
    %6884 = vmatpush.bf16.msra.mxu0 %v4797
    %6885 = vmatpush.bf16.msra.mxu0 %v4793
    %6886 = vmatpush.bf16.msra.mxu0 %v4789
    %6887 = vmatpush.bf16.msra.mxu0 %v4785
    %6888 = vmatpush.bf16.msra.mxu0 %v4781
    %6889 = vmatpush.bf16.msra.mxu0 %v4777
    %6890 = vmatmul.bf16.gmra.mxu0 %v3530
    %v6891 = vpop.f32.mrf.mxu0
    %v6892 = vadd.f32 %v6803, %v6891
    %v6893 = vpop.f32.mrf.mxu0
    %v6894 = vadd.f32 %v6805, %v6893
    %6895 = vmatmul.bf16.gmra.mxu0 %v3538
    %v6896 = vpop.f32.mrf.mxu0
    %v6897 = vadd.f32 %v6808, %v6896
    %v6898 = vpop.f32.mrf.mxu0
    %v6899 = vadd.f32 %v6810, %v6898
    %6900 = vmatmul.bf16.gmra.mxu0 %v3546
    %v6901 = vpop.f32.mrf.mxu0
    %v6902 = vadd.f32 %v6813, %v6901
    %v6903 = vpop.f32.mrf.mxu0
    %v6904 = vadd.f32 %v6815, %v6903
    %6905 = vmatmul.bf16.gmra.mxu0 %v3554
    %v6906 = vpop.f32.mrf.mxu0
    %v6907 = vadd.f32 %v6818, %v6906
    %v6908 = vpop.f32.mrf.mxu0
    %v6909 = vadd.f32 %v6820, %v6908
    %6910 = vmatmul.bf16.gmra.mxu0 %v3562
    %v6911 = vpop.f32.mrf.mxu0
    %v6912 = vadd.f32 %v6823, %v6911
    %v6913 = vpop.f32.mrf.mxu0
    %v6914 = vadd.f32 %v6825, %v6913
    %6915 = vmatmul.bf16.gmra.mxu0 %v3570
    %v6916 = vpop.f32.mrf.mxu0
    %v6917 = vadd.f32 %v6828, %v6916
    %v6918 = vpop.f32.mrf.mxu0
    %v6919 = vadd.f32 %v6830, %v6918
    %6920 = vmatmul.bf16.gmra.mxu0 %v3578
    %v6921 = vpop.f32.mrf.mxu0
    %v6922 = vadd.f32 %v6833, %v6921
    %v6923 = vpop.f32.mrf.mxu0
    %v6924 = vadd.f32 %v6835, %v6923
    %6925 = vmatmul.bf16.gmra.mxu0 %v3586
    %v6926 = vpop.f32.mrf.mxu0
    %v6927 = vadd.f32 %v6838, %v6926
    %v6928 = vpop.f32.mrf.mxu0
    %v6929 = vadd.f32 %v6840, %v6928
    %6930 = vmatmul.bf16.gmra.mxu0 %v3594
    %v6931 = vpop.f32.mrf.mxu0
    %v6932 = vadd.f32 %v6843, %v6931
    %v6933 = vpop.f32.mrf.mxu0
    %v6934 = vadd.f32 %v6845, %v6933
    %6935 = vmatmul.bf16.gmra.mxu0 %v3602
    %v6936 = vpop.f32.mrf.mxu0
    %v6937 = vadd.f32 %v6848, %v6936
    %v6938 = vpop.f32.mrf.mxu0
    %v6939 = vadd.f32 %v6850, %v6938
    %6940 = vmatmul.bf16.gmra.mxu0 %v3610
    %v6941 = vpop.f32.mrf.mxu0
    %v6942 = vadd.f32 %v6853, %v6941
    %v6943 = vpop.f32.mrf.mxu0
    %v6944 = vadd.f32 %v6855, %v6943
    %6945 = vmatmul.bf16.gmra.mxu0 %v3618
    %v6946 = vpop.f32.mrf.mxu0
    %v6947 = vadd.f32 %v6858, %v6946
    %v6948 = vpop.f32.mrf.mxu0
    %v6949 = vadd.f32 %v6860, %v6948
    %6950 = vmatmul.bf16.gmra.mxu0 %v3626
    %v6951 = vpop.f32.mrf.mxu0
    %v6952 = vadd.f32 %v6863, %v6951
    %v6953 = vpop.f32.mrf.mxu0
    %v6954 = vadd.f32 %v6865, %v6953
    %6955 = vmatmul.bf16.gmra.mxu0 %v3634
    %v6956 = vpop.f32.mrf.mxu0
    %v6957 = vadd.f32 %v6868, %v6956
    %v6958 = vpop.f32.mrf.mxu0
    %v6959 = vadd.f32 %v6870, %v6958
    %6960 = vmatmul.bf16.gmra.mxu0 %v3642
    %v6961 = vpop.f32.mrf.mxu0
    %v6962 = vadd.f32 %v6873, %v6961
    %v6963 = vpop.f32.mrf.mxu0
    %v6964 = vadd.f32 %v6875, %v6963
    %6965 = vmatmul.bf16.gmra.mxu0 %v3650
    %v6966 = vpop.f32.mrf.mxu0
    %v6967 = vadd.f32 %v6878, %v6966
    %v6968 = vpop.f32.mrf.mxu0
    %v6969 = vadd.f32 %v6880, %v6968
    %6970 = vdwg.mxu0
    %6971 = vmatpush.bf16.msra.mxu0 %v4837
    %6972 = vmatpush.bf16.msra.mxu0 %v4833
    %6973 = vmatpush.bf16.msra.mxu0 %v4829
    %6974 = vmatpush.bf16.msra.mxu0 %v4825
    %6975 = vmatpush.bf16.msra.mxu0 %v4821
    %6976 = vmatpush.bf16.msra.mxu0 %v4817
    %6977 = vmatpush.bf16.msra.mxu0 %v4813
    %6978 = vmatpush.bf16.msra.mxu0 %v4809
    %6979 = vmatmul.bf16.gmra.mxu0 %v3531
    %v6980 = vpop.f32.mrf.mxu0
    %v6981 = vadd.f32 %v6892, %v6980
    %v6982 = vpop.f32.mrf.mxu0
    %v6983 = vadd.f32 %v6894, %v6982
    %6984 = vmatmul.bf16.gmra.mxu0 %v3539
    %v6985 = vpop.f32.mrf.mxu0
    %v6986 = vadd.f32 %v6897, %v6985
    %v6987 = vpop.f32.mrf.mxu0
    %v6988 = vadd.f32 %v6899, %v6987
    %6989 = vmatmul.bf16.gmra.mxu0 %v3547
    %v6990 = vpop.f32.mrf.mxu0
    %v6991 = vadd.f32 %v6902, %v6990
    %v6992 = vpop.f32.mrf.mxu0
    %v6993 = vadd.f32 %v6904, %v6992
    %6994 = vmatmul.bf16.gmra.mxu0 %v3555
    %v6995 = vpop.f32.mrf.mxu0
    %v6996 = vadd.f32 %v6907, %v6995
    %v6997 = vpop.f32.mrf.mxu0
    %v6998 = vadd.f32 %v6909, %v6997
    %6999 = vmatmul.bf16.gmra.mxu0 %v3563
    %v7000 = vpop.f32.mrf.mxu0
    %v7001 = vadd.f32 %v6912, %v7000
    %v7002 = vpop.f32.mrf.mxu0
    %v7003 = vadd.f32 %v6914, %v7002
    %7004 = vmatmul.bf16.gmra.mxu0 %v3571
    %v7005 = vpop.f32.mrf.mxu0
    %v7006 = vadd.f32 %v6917, %v7005
    %v7007 = vpop.f32.mrf.mxu0
    %v7008 = vadd.f32 %v6919, %v7007
    %7009 = vmatmul.bf16.gmra.mxu0 %v3579
    %v7010 = vpop.f32.mrf.mxu0
    %v7011 = vadd.f32 %v6922, %v7010
    %v7012 = vpop.f32.mrf.mxu0
    %v7013 = vadd.f32 %v6924, %v7012
    %7014 = vmatmul.bf16.gmra.mxu0 %v3587
    %v7015 = vpop.f32.mrf.mxu0
    %v7016 = vadd.f32 %v6927, %v7015
    %v7017 = vpop.f32.mrf.mxu0
    %v7018 = vadd.f32 %v6929, %v7017
    %7019 = vmatmul.bf16.gmra.mxu0 %v3595
    %v7020 = vpop.f32.mrf.mxu0
    %v7021 = vadd.f32 %v6932, %v7020
    %v7022 = vpop.f32.mrf.mxu0
    %v7023 = vadd.f32 %v6934, %v7022
    %7024 = vmatmul.bf16.gmra.mxu0 %v3603
    %v7025 = vpop.f32.mrf.mxu0
    %v7026 = vadd.f32 %v6937, %v7025
    %v7027 = vpop.f32.mrf.mxu0
    %v7028 = vadd.f32 %v6939, %v7027
    %7029 = vmatmul.bf16.gmra.mxu0 %v3611
    %v7030 = vpop.f32.mrf.mxu0
    %v7031 = vadd.f32 %v6942, %v7030
    %v7032 = vpop.f32.mrf.mxu0
    %v7033 = vadd.f32 %v6944, %v7032
    %7034 = vmatmul.bf16.gmra.mxu0 %v3619
    %v7035 = vpop.f32.mrf.mxu0
    %v7036 = vadd.f32 %v6947, %v7035
    %v7037 = vpop.f32.mrf.mxu0
    %v7038 = vadd.f32 %v6949, %v7037
    %7039 = vmatmul.bf16.gmra.mxu0 %v3627
    %v7040 = vpop.f32.mrf.mxu0
    %v7041 = vadd.f32 %v6952, %v7040
    %v7042 = vpop.f32.mrf.mxu0
    %v7043 = vadd.f32 %v6954, %v7042
    %7044 = vmatmul.bf16.gmra.mxu0 %v3635
    %v7045 = vpop.f32.mrf.mxu0
    %v7046 = vadd.f32 %v6957, %v7045
    %v7047 = vpop.f32.mrf.mxu0
    %v7048 = vadd.f32 %v6959, %v7047
    %7049 = vmatmul.bf16.gmra.mxu0 %v3643
    %v7050 = vpop.f32.mrf.mxu0
    %v7051 = vadd.f32 %v6962, %v7050
    %v7052 = vpop.f32.mrf.mxu0
    %v7053 = vadd.f32 %v6964, %v7052
    %7054 = vmatmul.bf16.gmra.mxu0 %v3651
    %v7055 = vpop.f32.mrf.mxu0
    %v7056 = vadd.f32 %v6967, %v7055
    %v7057 = vpop.f32.mrf.mxu0
    %v7058 = vadd.f32 %v6969, %v7057
    %7059 = vdwg.mxu0
    %7060 = vmatpush.bf16.msra.mxu0 %v4869
    %7061 = vmatpush.bf16.msra.mxu0 %v4865
    %7062 = vmatpush.bf16.msra.mxu0 %v4861
    %7063 = vmatpush.bf16.msra.mxu0 %v4857
    %7064 = vmatpush.bf16.msra.mxu0 %v4853
    %7065 = vmatpush.bf16.msra.mxu0 %v4849
    %7066 = vmatpush.bf16.msra.mxu0 %v4845
    %7067 = vmatpush.bf16.msra.mxu0 %v4841
    %7068 = vmatmul.bf16.gmra.mxu0 %v3532
    %v7069 = vpop.f32.mrf.mxu0
    %v7070 = vadd.f32 %v6981, %v7069
    %v7071 = vpop.f32.mrf.mxu0
    %v7072 = vadd.f32 %v6983, %v7071
    %7073 = vmatmul.bf16.gmra.mxu0 %v3540
    %v7074 = vpop.f32.mrf.mxu0
    %v7075 = vadd.f32 %v6986, %v7074
    %v7076 = vpop.f32.mrf.mxu0
    %v7077 = vadd.f32 %v6988, %v7076
    %7078 = vmatmul.bf16.gmra.mxu0 %v3548
    %v7079 = vpop.f32.mrf.mxu0
    %v7080 = vadd.f32 %v6991, %v7079
    %v7081 = vpop.f32.mrf.mxu0
    %v7082 = vadd.f32 %v6993, %v7081
    %7083 = vmatmul.bf16.gmra.mxu0 %v3556
    %v7084 = vpop.f32.mrf.mxu0
    %v7085 = vadd.f32 %v6996, %v7084
    %v7086 = vpop.f32.mrf.mxu0
    %v7087 = vadd.f32 %v6998, %v7086
    %7088 = vmatmul.bf16.gmra.mxu0 %v3564
    %v7089 = vpop.f32.mrf.mxu0
    %v7090 = vadd.f32 %v7001, %v7089
    %v7091 = vpop.f32.mrf.mxu0
    %v7092 = vadd.f32 %v7003, %v7091
    %7093 = vmatmul.bf16.gmra.mxu0 %v3572
    %v7094 = vpop.f32.mrf.mxu0
    %v7095 = vadd.f32 %v7006, %v7094
    %v7096 = vpop.f32.mrf.mxu0
    %v7097 = vadd.f32 %v7008, %v7096
    %7098 = vmatmul.bf16.gmra.mxu0 %v3580
    %v7099 = vpop.f32.mrf.mxu0
    %v7100 = vadd.f32 %v7011, %v7099
    %v7101 = vpop.f32.mrf.mxu0
    %v7102 = vadd.f32 %v7013, %v7101
    %7103 = vmatmul.bf16.gmra.mxu0 %v3588
    %v7104 = vpop.f32.mrf.mxu0
    %v7105 = vadd.f32 %v7016, %v7104
    %v7106 = vpop.f32.mrf.mxu0
    %v7107 = vadd.f32 %v7018, %v7106
    %7108 = vmatmul.bf16.gmra.mxu0 %v3596
    %v7109 = vpop.f32.mrf.mxu0
    %v7110 = vadd.f32 %v7021, %v7109
    %v7111 = vpop.f32.mrf.mxu0
    %v7112 = vadd.f32 %v7023, %v7111
    %7113 = vmatmul.bf16.gmra.mxu0 %v3604
    %v7114 = vpop.f32.mrf.mxu0
    %v7115 = vadd.f32 %v7026, %v7114
    %v7116 = vpop.f32.mrf.mxu0
    %v7117 = vadd.f32 %v7028, %v7116
    %7118 = vmatmul.bf16.gmra.mxu0 %v3612
    %v7119 = vpop.f32.mrf.mxu0
    %v7120 = vadd.f32 %v7031, %v7119
    %v7121 = vpop.f32.mrf.mxu0
    %v7122 = vadd.f32 %v7033, %v7121
    %7123 = vmatmul.bf16.gmra.mxu0 %v3620
    %v7124 = vpop.f32.mrf.mxu0
    %v7125 = vadd.f32 %v7036, %v7124
    %v7126 = vpop.f32.mrf.mxu0
    %v7127 = vadd.f32 %v7038, %v7126
    %7128 = vmatmul.bf16.gmra.mxu0 %v3628
    %v7129 = vpop.f32.mrf.mxu0
    %v7130 = vadd.f32 %v7041, %v7129
    %v7131 = vpop.f32.mrf.mxu0
    %v7132 = vadd.f32 %v7043, %v7131
    %7133 = vmatmul.bf16.gmra.mxu0 %v3636
    %v7134 = vpop.f32.mrf.mxu0
    %v7135 = vadd.f32 %v7046, %v7134
    %v7136 = vpop.f32.mrf.mxu0
    %v7137 = vadd.f32 %v7048, %v7136
    %7138 = vmatmul.bf16.gmra.mxu0 %v3644
    %v7139 = vpop.f32.mrf.mxu0
    %v7140 = vadd.f32 %v7051, %v7139
    %v7141 = vpop.f32.mrf.mxu0
    %v7142 = vadd.f32 %v7053, %v7141
    %7143 = vmatmul.bf16.gmra.mxu0 %v3652
    %v7144 = vpop.f32.mrf.mxu0
    %v7145 = vadd.f32 %v7056, %v7144
    %v7146 = vpop.f32.mrf.mxu0
    %v7147 = vadd.f32 %v7058, %v7146
    %7148 = vdwg.mxu0
    %7149 = vmatpush.bf16.msra.mxu0 %v4901
    %7150 = vmatpush.bf16.msra.mxu0 %v4897
    %7151 = vmatpush.bf16.msra.mxu0 %v4893
    %7152 = vmatpush.bf16.msra.mxu0 %v4889
    %7153 = vmatpush.bf16.msra.mxu0 %v4885
    %7154 = vmatpush.bf16.msra.mxu0 %v4881
    %7155 = vmatpush.bf16.msra.mxu0 %v4877
    %7156 = vmatpush.bf16.msra.mxu0 %v4873
    %7157 = vmatmul.bf16.gmra.mxu0 %v3533
    %v7158 = vpop.f32.mrf.mxu0
    %v7159 = vadd.f32 %v7070, %v7158
    %v7160 = vpop.f32.mrf.mxu0
    %v7161 = vadd.f32 %v7072, %v7160
    %7162 = vmatmul.bf16.gmra.mxu0 %v3541
    %v7163 = vpop.f32.mrf.mxu0
    %v7164 = vadd.f32 %v7075, %v7163
    %v7165 = vpop.f32.mrf.mxu0
    %v7166 = vadd.f32 %v7077, %v7165
    %7167 = vmatmul.bf16.gmra.mxu0 %v3549
    %v7168 = vpop.f32.mrf.mxu0
    %v7169 = vadd.f32 %v7080, %v7168
    %v7170 = vpop.f32.mrf.mxu0
    %v7171 = vadd.f32 %v7082, %v7170
    %7172 = vmatmul.bf16.gmra.mxu0 %v3557
    %v7173 = vpop.f32.mrf.mxu0
    %v7174 = vadd.f32 %v7085, %v7173
    %v7175 = vpop.f32.mrf.mxu0
    %v7176 = vadd.f32 %v7087, %v7175
    %7177 = vmatmul.bf16.gmra.mxu0 %v3565
    %v7178 = vpop.f32.mrf.mxu0
    %v7179 = vadd.f32 %v7090, %v7178
    %v7180 = vpop.f32.mrf.mxu0
    %v7181 = vadd.f32 %v7092, %v7180
    %7182 = vmatmul.bf16.gmra.mxu0 %v3573
    %v7183 = vpop.f32.mrf.mxu0
    %v7184 = vadd.f32 %v7095, %v7183
    %v7185 = vpop.f32.mrf.mxu0
    %v7186 = vadd.f32 %v7097, %v7185
    %7187 = vmatmul.bf16.gmra.mxu0 %v3581
    %v7188 = vpop.f32.mrf.mxu0
    %v7189 = vadd.f32 %v7100, %v7188
    %v7190 = vpop.f32.mrf.mxu0
    %v7191 = vadd.f32 %v7102, %v7190
    %7192 = vmatmul.bf16.gmra.mxu0 %v3589
    %v7193 = vpop.f32.mrf.mxu0
    %v7194 = vadd.f32 %v7105, %v7193
    %v7195 = vpop.f32.mrf.mxu0
    %v7196 = vadd.f32 %v7107, %v7195
    %7197 = vmatmul.bf16.gmra.mxu0 %v3597
    %v7198 = vpop.f32.mrf.mxu0
    %v7199 = vadd.f32 %v7110, %v7198
    %v7200 = vpop.f32.mrf.mxu0
    %v7201 = vadd.f32 %v7112, %v7200
    %7202 = vmatmul.bf16.gmra.mxu0 %v3605
    %v7203 = vpop.f32.mrf.mxu0
    %v7204 = vadd.f32 %v7115, %v7203
    %v7205 = vpop.f32.mrf.mxu0
    %v7206 = vadd.f32 %v7117, %v7205
    %7207 = vmatmul.bf16.gmra.mxu0 %v3613
    %v7208 = vpop.f32.mrf.mxu0
    %v7209 = vadd.f32 %v7120, %v7208
    %v7210 = vpop.f32.mrf.mxu0
    %v7211 = vadd.f32 %v7122, %v7210
    %7212 = vmatmul.bf16.gmra.mxu0 %v3621
    %v7213 = vpop.f32.mrf.mxu0
    %v7214 = vadd.f32 %v7125, %v7213
    %v7215 = vpop.f32.mrf.mxu0
    %v7216 = vadd.f32 %v7127, %v7215
    %7217 = vmatmul.bf16.gmra.mxu0 %v3629
    %v7218 = vpop.f32.mrf.mxu0
    %v7219 = vadd.f32 %v7130, %v7218
    %v7220 = vpop.f32.mrf.mxu0
    %v7221 = vadd.f32 %v7132, %v7220
    %7222 = vmatmul.bf16.gmra.mxu0 %v3637
    %v7223 = vpop.f32.mrf.mxu0
    %v7224 = vadd.f32 %v7135, %v7223
    %v7225 = vpop.f32.mrf.mxu0
    %v7226 = vadd.f32 %v7137, %v7225
    %7227 = vmatmul.bf16.gmra.mxu0 %v3645
    %v7228 = vpop.f32.mrf.mxu0
    %v7229 = vadd.f32 %v7140, %v7228
    %v7230 = vpop.f32.mrf.mxu0
    %v7231 = vadd.f32 %v7142, %v7230
    %7232 = vmatmul.bf16.gmra.mxu0 %v3653
    %v7233 = vpop.f32.mrf.mxu0
    %v7234 = vadd.f32 %v7145, %v7233
    %v7235 = vpop.f32.mrf.mxu0
    %v7236 = vadd.f32 %v7147, %v7235
    %7237 = vdwg.mxu0
    %7238 = vmatpush.bf16.msra.mxu0 %v4933
    %7239 = vmatpush.bf16.msra.mxu0 %v4929
    %7240 = vmatpush.bf16.msra.mxu0 %v4925
    %7241 = vmatpush.bf16.msra.mxu0 %v4921
    %7242 = vmatpush.bf16.msra.mxu0 %v4917
    %7243 = vmatpush.bf16.msra.mxu0 %v4913
    %7244 = vmatpush.bf16.msra.mxu0 %v4909
    %7245 = vmatpush.bf16.msra.mxu0 %v4905
    %7246 = vmatmul.bf16.gmra.mxu0 %v3534
    %v7247 = vpop.f32.mrf.mxu0
    %v7248 = vadd.f32 %v7159, %v7247
    %v7249 = vpop.f32.mrf.mxu0
    %v7250 = vadd.f32 %v7161, %v7249
    %7251 = vmatmul.bf16.gmra.mxu0 %v3542
    %v7252 = vpop.f32.mrf.mxu0
    %v7253 = vadd.f32 %v7164, %v7252
    %v7254 = vpop.f32.mrf.mxu0
    %v7255 = vadd.f32 %v7166, %v7254
    %7256 = vmatmul.bf16.gmra.mxu0 %v3550
    %v7257 = vpop.f32.mrf.mxu0
    %v7258 = vadd.f32 %v7169, %v7257
    %v7259 = vpop.f32.mrf.mxu0
    %v7260 = vadd.f32 %v7171, %v7259
    %7261 = vmatmul.bf16.gmra.mxu0 %v3558
    %v7262 = vpop.f32.mrf.mxu0
    %v7263 = vadd.f32 %v7174, %v7262
    %v7264 = vpop.f32.mrf.mxu0
    %v7265 = vadd.f32 %v7176, %v7264
    %7266 = vmatmul.bf16.gmra.mxu0 %v3566
    %v7267 = vpop.f32.mrf.mxu0
    %v7268 = vadd.f32 %v7179, %v7267
    %v7269 = vpop.f32.mrf.mxu0
    %v7270 = vadd.f32 %v7181, %v7269
    %7271 = vmatmul.bf16.gmra.mxu0 %v3574
    %v7272 = vpop.f32.mrf.mxu0
    %v7273 = vadd.f32 %v7184, %v7272
    %v7274 = vpop.f32.mrf.mxu0
    %v7275 = vadd.f32 %v7186, %v7274
    %7276 = vmatmul.bf16.gmra.mxu0 %v3582
    %v7277 = vpop.f32.mrf.mxu0
    %v7278 = vadd.f32 %v7189, %v7277
    %v7279 = vpop.f32.mrf.mxu0
    %v7280 = vadd.f32 %v7191, %v7279
    %7281 = vmatmul.bf16.gmra.mxu0 %v3590
    %v7282 = vpop.f32.mrf.mxu0
    %v7283 = vadd.f32 %v7194, %v7282
    %v7284 = vpop.f32.mrf.mxu0
    %v7285 = vadd.f32 %v7196, %v7284
    %7286 = vmatmul.bf16.gmra.mxu0 %v3598
    %v7287 = vpop.f32.mrf.mxu0
    %v7288 = vadd.f32 %v7199, %v7287
    %v7289 = vpop.f32.mrf.mxu0
    %v7290 = vadd.f32 %v7201, %v7289
    %7291 = vmatmul.bf16.gmra.mxu0 %v3606
    %v7292 = vpop.f32.mrf.mxu0
    %v7293 = vadd.f32 %v7204, %v7292
    %v7294 = vpop.f32.mrf.mxu0
    %v7295 = vadd.f32 %v7206, %v7294
    %7296 = vmatmul.bf16.gmra.mxu0 %v3614
    %v7297 = vpop.f32.mrf.mxu0
    %v7298 = vadd.f32 %v7209, %v7297
    %v7299 = vpop.f32.mrf.mxu0
    %v7300 = vadd.f32 %v7211, %v7299
    %7301 = vmatmul.bf16.gmra.mxu0 %v3622
    %v7302 = vpop.f32.mrf.mxu0
    %v7303 = vadd.f32 %v7214, %v7302
    %v7304 = vpop.f32.mrf.mxu0
    %v7305 = vadd.f32 %v7216, %v7304
    %7306 = vmatmul.bf16.gmra.mxu0 %v3630
    %v7307 = vpop.f32.mrf.mxu0
    %v7308 = vadd.f32 %v7219, %v7307
    %v7309 = vpop.f32.mrf.mxu0
    %v7310 = vadd.f32 %v7221, %v7309
    %7311 = vmatmul.bf16.gmra.mxu0 %v3638
    %v7312 = vpop.f32.mrf.mxu0
    %v7313 = vadd.f32 %v7224, %v7312
    %v7314 = vpop.f32.mrf.mxu0
    %v7315 = vadd.f32 %v7226, %v7314
    %7316 = vmatmul.bf16.gmra.mxu0 %v3646
    %v7317 = vpop.f32.mrf.mxu0
    %v7318 = vadd.f32 %v7229, %v7317
    %v7319 = vpop.f32.mrf.mxu0
    %v7320 = vadd.f32 %v7231, %v7319
    %7321 = vmatmul.bf16.gmra.mxu0 %v3654
    %v7322 = vpop.f32.mrf.mxu0
    %v7323 = vadd.f32 %v7234, %v7322
    %v7324 = vpop.f32.mrf.mxu0
    %v7325 = vadd.f32 %v7236, %v7324
    %7326 = vdwg.mxu0
    %7327 = vmatpush.bf16.msra.mxu0 %v4710
    %7328 = vmatpush.bf16.msra.mxu0 %v4706
    %7329 = vmatpush.bf16.msra.mxu0 %v4702
    %7330 = vmatpush.bf16.msra.mxu0 %v4698
    %7331 = vmatpush.bf16.msra.mxu0 %v4694
    %7332 = vmatpush.bf16.msra.mxu0 %v4690
    %7333 = vmatpush.bf16.msra.mxu0 %v4686
    %7334 = vmatpush.bf16.msra.mxu0 %v4682
    %7335 = vmatmul.bf16.gmra.mxu0 %v3527
    %v7336 = vpop.f32.mrf.mxu0
    %v7337 = vadd.f32 0.0, %v7336
    %v7338 = vpop.f32.mrf.mxu0
    %v7339 = vadd.f32 0.0, %v7338
    %7340 = vmatmul.bf16.gmra.mxu0 %v3535
    %v7341 = vpop.f32.mrf.mxu0
    %v7342 = vadd.f32 0.0, %v7341
    %v7343 = vpop.f32.mrf.mxu0
    %v7344 = vadd.f32 0.0, %v7343
    %7345 = vmatmul.bf16.gmra.mxu0 %v3543
    %v7346 = vpop.f32.mrf.mxu0
    %v7347 = vadd.f32 0.0, %v7346
    %v7348 = vpop.f32.mrf.mxu0
    %v7349 = vadd.f32 0.0, %v7348
    %7350 = vmatmul.bf16.gmra.mxu0 %v3551
    %v7351 = vpop.f32.mrf.mxu0
    %v7352 = vadd.f32 0.0, %v7351
    %v7353 = vpop.f32.mrf.mxu0
    %v7354 = vadd.f32 0.0, %v7353
    %7355 = vmatmul.bf16.gmra.mxu0 %v3559
    %v7356 = vpop.f32.mrf.mxu0
    %v7357 = vadd.f32 0.0, %v7356
    %v7358 = vpop.f32.mrf.mxu0
    %v7359 = vadd.f32 0.0, %v7358
    %7360 = vmatmul.bf16.gmra.mxu0 %v3567
    %v7361 = vpop.f32.mrf.mxu0
    %v7362 = vadd.f32 0.0, %v7361
    %v7363 = vpop.f32.mrf.mxu0
    %v7364 = vadd.f32 0.0, %v7363
    %7365 = vmatmul.bf16.gmra.mxu0 %v3575
    %v7366 = vpop.f32.mrf.mxu0
    %v7367 = vadd.f32 0.0, %v7366
    %v7368 = vpop.f32.mrf.mxu0
    %v7369 = vadd.f32 0.0, %v7368
    %7370 = vmatmul.bf16.gmra.mxu0 %v3583
    %v7371 = vpop.f32.mrf.mxu0
    %v7372 = vadd.f32 0.0, %v7371
    %v7373 = vpop.f32.mrf.mxu0
    %v7374 = vadd.f32 0.0, %v7373
    %7375 = vmatmul.bf16.gmra.mxu0 %v3591
    %v7376 = vpop.f32.mrf.mxu0
    %v7377 = vadd.f32 0.0, %v7376
    %v7378 = vpop.f32.mrf.mxu0
    %v7379 = vadd.f32 0.0, %v7378
    %7380 = vmatmul.bf16.gmra.mxu0 %v3599
    %v7381 = vpop.f32.mrf.mxu0
    %v7382 = vadd.f32 0.0, %v7381
    %v7383 = vpop.f32.mrf.mxu0
    %v7384 = vadd.f32 0.0, %v7383
    %7385 = vmatmul.bf16.gmra.mxu0 %v3607
    %v7386 = vpop.f32.mrf.mxu0
    %v7387 = vadd.f32 0.0, %v7386
    %v7388 = vpop.f32.mrf.mxu0
    %v7389 = vadd.f32 0.0, %v7388
    %7390 = vmatmul.bf16.gmra.mxu0 %v3615
    %v7391 = vpop.f32.mrf.mxu0
    %v7392 = vadd.f32 0.0, %v7391
    %v7393 = vpop.f32.mrf.mxu0
    %v7394 = vadd.f32 0.0, %v7393
    %7395 = vmatmul.bf16.gmra.mxu0 %v3623
    %v7396 = vpop.f32.mrf.mxu0
    %v7397 = vadd.f32 0.0, %v7396
    %v7398 = vpop.f32.mrf.mxu0
    %v7399 = vadd.f32 0.0, %v7398
    %7400 = vmatmul.bf16.gmra.mxu0 %v3631
    %v7401 = vpop.f32.mrf.mxu0
    %v7402 = vadd.f32 0.0, %v7401
    %v7403 = vpop.f32.mrf.mxu0
    %v7404 = vadd.f32 0.0, %v7403
    %7405 = vmatmul.bf16.gmra.mxu0 %v3639
    %v7406 = vpop.f32.mrf.mxu0
    %v7407 = vadd.f32 0.0, %v7406
    %v7408 = vpop.f32.mrf.mxu0
    %v7409 = vadd.f32 0.0, %v7408
    %7410 = vmatmul.bf16.gmra.mxu0 %v3647
    %v7411 = vpop.f32.mrf.mxu0
    %v7412 = vadd.f32 0.0, %v7411
    %v7413 = vpop.f32.mrf.mxu0
    %v7414 = vadd.f32 0.0, %v7413
    %7415 = vdwg.mxu0
    %7416 = vmatpush.bf16.msra.mxu0 %v4742
    %7417 = vmatpush.bf16.msra.mxu0 %v4738
    %7418 = vmatpush.bf16.msra.mxu0 %v4734
    %7419 = vmatpush.bf16.msra.mxu0 %v4730
    %7420 = vmatpush.bf16.msra.mxu0 %v4726
    %7421 = vmatpush.bf16.msra.mxu0 %v4722
    %7422 = vmatpush.bf16.msra.mxu0 %v4718
    %7423 = vmatpush.bf16.msra.mxu0 %v4714
    %7424 = vmatmul.bf16.gmra.mxu0 %v3528
    %v7425 = vpop.f32.mrf.mxu0
    %v7426 = vadd.f32 %v7337, %v7425
    %v7427 = vpop.f32.mrf.mxu0
    %v7428 = vadd.f32 %v7339, %v7427
    %7429 = vmatmul.bf16.gmra.mxu0 %v3536
    %v7430 = vpop.f32.mrf.mxu0
    %v7431 = vadd.f32 %v7342, %v7430
    %v7432 = vpop.f32.mrf.mxu0
    %v7433 = vadd.f32 %v7344, %v7432
    %7434 = vmatmul.bf16.gmra.mxu0 %v3544
    %v7435 = vpop.f32.mrf.mxu0
    %v7436 = vadd.f32 %v7347, %v7435
    %v7437 = vpop.f32.mrf.mxu0
    %v7438 = vadd.f32 %v7349, %v7437
    %7439 = vmatmul.bf16.gmra.mxu0 %v3552
    %v7440 = vpop.f32.mrf.mxu0
    %v7441 = vadd.f32 %v7352, %v7440
    %v7442 = vpop.f32.mrf.mxu0
    %v7443 = vadd.f32 %v7354, %v7442
    %7444 = vmatmul.bf16.gmra.mxu0 %v3560
    %v7445 = vpop.f32.mrf.mxu0
    %v7446 = vadd.f32 %v7357, %v7445
    %v7447 = vpop.f32.mrf.mxu0
    %v7448 = vadd.f32 %v7359, %v7447
    %7449 = vmatmul.bf16.gmra.mxu0 %v3568
    %v7450 = vpop.f32.mrf.mxu0
    %v7451 = vadd.f32 %v7362, %v7450
    %v7452 = vpop.f32.mrf.mxu0
    %v7453 = vadd.f32 %v7364, %v7452
    %7454 = vmatmul.bf16.gmra.mxu0 %v3576
    %v7455 = vpop.f32.mrf.mxu0
    %v7456 = vadd.f32 %v7367, %v7455
    %v7457 = vpop.f32.mrf.mxu0
    %v7458 = vadd.f32 %v7369, %v7457
    %7459 = vmatmul.bf16.gmra.mxu0 %v3584
    %v7460 = vpop.f32.mrf.mxu0
    %v7461 = vadd.f32 %v7372, %v7460
    %v7462 = vpop.f32.mrf.mxu0
    %v7463 = vadd.f32 %v7374, %v7462
    %7464 = vmatmul.bf16.gmra.mxu0 %v3592
    %v7465 = vpop.f32.mrf.mxu0
    %v7466 = vadd.f32 %v7377, %v7465
    %v7467 = vpop.f32.mrf.mxu0
    %v7468 = vadd.f32 %v7379, %v7467
    %7469 = vmatmul.bf16.gmra.mxu0 %v3600
    %v7470 = vpop.f32.mrf.mxu0
    %v7471 = vadd.f32 %v7382, %v7470
    %v7472 = vpop.f32.mrf.mxu0
    %v7473 = vadd.f32 %v7384, %v7472
    %7474 = vmatmul.bf16.gmra.mxu0 %v3608
    %v7475 = vpop.f32.mrf.mxu0
    %v7476 = vadd.f32 %v7387, %v7475
    %v7477 = vpop.f32.mrf.mxu0
    %v7478 = vadd.f32 %v7389, %v7477
    %7479 = vmatmul.bf16.gmra.mxu0 %v3616
    %v7480 = vpop.f32.mrf.mxu0
    %v7481 = vadd.f32 %v7392, %v7480
    %v7482 = vpop.f32.mrf.mxu0
    %v7483 = vadd.f32 %v7394, %v7482
    %7484 = vmatmul.bf16.gmra.mxu0 %v3624
    %v7485 = vpop.f32.mrf.mxu0
    %v7486 = vadd.f32 %v7397, %v7485
    %v7487 = vpop.f32.mrf.mxu0
    %v7488 = vadd.f32 %v7399, %v7487
    %7489 = vmatmul.bf16.gmra.mxu0 %v3632
    %v7490 = vpop.f32.mrf.mxu0
    %v7491 = vadd.f32 %v7402, %v7490
    %v7492 = vpop.f32.mrf.mxu0
    %v7493 = vadd.f32 %v7404, %v7492
    %7494 = vmatmul.bf16.gmra.mxu0 %v3640
    %v7495 = vpop.f32.mrf.mxu0
    %v7496 = vadd.f32 %v7407, %v7495
    %v7497 = vpop.f32.mrf.mxu0
    %v7498 = vadd.f32 %v7409, %v7497
    %7499 = vmatmul.bf16.gmra.mxu0 %v3648
    %v7500 = vpop.f32.mrf.mxu0
    %v7501 = vadd.f32 %v7412, %v7500
    %v7502 = vpop.f32.mrf.mxu0
    %v7503 = vadd.f32 %v7414, %v7502
    %7504 = vdwg.mxu0
    %7505 = vmatpush.bf16.msra.mxu0 %v4774
    %7506 = vmatpush.bf16.msra.mxu0 %v4770
    %7507 = vmatpush.bf16.msra.mxu0 %v4766
    %7508 = vmatpush.bf16.msra.mxu0 %v4762
    %7509 = vmatpush.bf16.msra.mxu0 %v4758
    %7510 = vmatpush.bf16.msra.mxu0 %v4754
    %7511 = vmatpush.bf16.msra.mxu0 %v4750
    %7512 = vmatpush.bf16.msra.mxu0 %v4746
    %7513 = vmatmul.bf16.gmra.mxu0 %v3529
    %v7514 = vpop.f32.mrf.mxu0
    %v7515 = vadd.f32 %v7426, %v7514
    %v7516 = vpop.f32.mrf.mxu0
    %v7517 = vadd.f32 %v7428, %v7516
    %7518 = vmatmul.bf16.gmra.mxu0 %v3537
    %v7519 = vpop.f32.mrf.mxu0
    %v7520 = vadd.f32 %v7431, %v7519
    %v7521 = vpop.f32.mrf.mxu0
    %v7522 = vadd.f32 %v7433, %v7521
    %7523 = vmatmul.bf16.gmra.mxu0 %v3545
    %v7524 = vpop.f32.mrf.mxu0
    %v7525 = vadd.f32 %v7436, %v7524
    %v7526 = vpop.f32.mrf.mxu0
    %v7527 = vadd.f32 %v7438, %v7526
    %7528 = vmatmul.bf16.gmra.mxu0 %v3553
    %v7529 = vpop.f32.mrf.mxu0
    %v7530 = vadd.f32 %v7441, %v7529
    %v7531 = vpop.f32.mrf.mxu0
    %v7532 = vadd.f32 %v7443, %v7531
    %7533 = vmatmul.bf16.gmra.mxu0 %v3561
    %v7534 = vpop.f32.mrf.mxu0
    %v7535 = vadd.f32 %v7446, %v7534
    %v7536 = vpop.f32.mrf.mxu0
    %v7537 = vadd.f32 %v7448, %v7536
    %7538 = vmatmul.bf16.gmra.mxu0 %v3569
    %v7539 = vpop.f32.mrf.mxu0
    %v7540 = vadd.f32 %v7451, %v7539
    %v7541 = vpop.f32.mrf.mxu0
    %v7542 = vadd.f32 %v7453, %v7541
    %7543 = vmatmul.bf16.gmra.mxu0 %v3577
    %v7544 = vpop.f32.mrf.mxu0
    %v7545 = vadd.f32 %v7456, %v7544
    %v7546 = vpop.f32.mrf.mxu0
    %v7547 = vadd.f32 %v7458, %v7546
    %7548 = vmatmul.bf16.gmra.mxu0 %v3585
    %v7549 = vpop.f32.mrf.mxu0
    %v7550 = vadd.f32 %v7461, %v7549
    %v7551 = vpop.f32.mrf.mxu0
    %v7552 = vadd.f32 %v7463, %v7551
    %7553 = vmatmul.bf16.gmra.mxu0 %v3593
    %v7554 = vpop.f32.mrf.mxu0
    %v7555 = vadd.f32 %v7466, %v7554
    %v7556 = vpop.f32.mrf.mxu0
    %v7557 = vadd.f32 %v7468, %v7556
    %7558 = vmatmul.bf16.gmra.mxu0 %v3601
    %v7559 = vpop.f32.mrf.mxu0
    %v7560 = vadd.f32 %v7471, %v7559
    %v7561 = vpop.f32.mrf.mxu0
    %v7562 = vadd.f32 %v7473, %v7561
    %7563 = vmatmul.bf16.gmra.mxu0 %v3609
    %v7564 = vpop.f32.mrf.mxu0
    %v7565 = vadd.f32 %v7476, %v7564
    %v7566 = vpop.f32.mrf.mxu0
    %v7567 = vadd.f32 %v7478, %v7566
    %7568 = vmatmul.bf16.gmra.mxu0 %v3617
    %v7569 = vpop.f32.mrf.mxu0
    %v7570 = vadd.f32 %v7481, %v7569
    %v7571 = vpop.f32.mrf.mxu0
    %v7572 = vadd.f32 %v7483, %v7571
    %7573 = vmatmul.bf16.gmra.mxu0 %v3625
    %v7574 = vpop.f32.mrf.mxu0
    %v7575 = vadd.f32 %v7486, %v7574
    %v7576 = vpop.f32.mrf.mxu0
    %v7577 = vadd.f32 %v7488, %v7576
    %7578 = vmatmul.bf16.gmra.mxu0 %v3633
    %v7579 = vpop.f32.mrf.mxu0
    %v7580 = vadd.f32 %v7491, %v7579
    %v7581 = vpop.f32.mrf.mxu0
    %v7582 = vadd.f32 %v7493, %v7581
    %7583 = vmatmul.bf16.gmra.mxu0 %v3641
    %v7584 = vpop.f32.mrf.mxu0
    %v7585 = vadd.f32 %v7496, %v7584
    %v7586 = vpop.f32.mrf.mxu0
    %v7587 = vadd.f32 %v7498, %v7586
    %7588 = vmatmul.bf16.gmra.mxu0 %v3649
    %v7589 = vpop.f32.mrf.mxu0
    %v7590 = vadd.f32 %v7501, %v7589
    %v7591 = vpop.f32.mrf.mxu0
    %v7592 = vadd.f32 %v7503, %v7591
    %7593 = vdwg.mxu0
    %7594 = vmatpush.bf16.msra.mxu0 %v4806
    %7595 = vmatpush.bf16.msra.mxu0 %v4802
    %7596 = vmatpush.bf16.msra.mxu0 %v4798
    %7597 = vmatpush.bf16.msra.mxu0 %v4794
    %7598 = vmatpush.bf16.msra.mxu0 %v4790
    %7599 = vmatpush.bf16.msra.mxu0 %v4786
    %7600 = vmatpush.bf16.msra.mxu0 %v4782
    %7601 = vmatpush.bf16.msra.mxu0 %v4778
    %7602 = vmatmul.bf16.gmra.mxu0 %v3530
    %v7603 = vpop.f32.mrf.mxu0
    %v7604 = vadd.f32 %v7515, %v7603
    %v7605 = vpop.f32.mrf.mxu0
    %v7606 = vadd.f32 %v7517, %v7605
    %7607 = vmatmul.bf16.gmra.mxu0 %v3538
    %v7608 = vpop.f32.mrf.mxu0
    %v7609 = vadd.f32 %v7520, %v7608
    %v7610 = vpop.f32.mrf.mxu0
    %v7611 = vadd.f32 %v7522, %v7610
    %7612 = vmatmul.bf16.gmra.mxu0 %v3546
    %v7613 = vpop.f32.mrf.mxu0
    %v7614 = vadd.f32 %v7525, %v7613
    %v7615 = vpop.f32.mrf.mxu0
    %v7616 = vadd.f32 %v7527, %v7615
    %7617 = vmatmul.bf16.gmra.mxu0 %v3554
    %v7618 = vpop.f32.mrf.mxu0
    %v7619 = vadd.f32 %v7530, %v7618
    %v7620 = vpop.f32.mrf.mxu0
    %v7621 = vadd.f32 %v7532, %v7620
    %7622 = vmatmul.bf16.gmra.mxu0 %v3562
    %v7623 = vpop.f32.mrf.mxu0
    %v7624 = vadd.f32 %v7535, %v7623
    %v7625 = vpop.f32.mrf.mxu0
    %v7626 = vadd.f32 %v7537, %v7625
    %7627 = vmatmul.bf16.gmra.mxu0 %v3570
    %v7628 = vpop.f32.mrf.mxu0
    %v7629 = vadd.f32 %v7540, %v7628
    %v7630 = vpop.f32.mrf.mxu0
    %v7631 = vadd.f32 %v7542, %v7630
    %7632 = vmatmul.bf16.gmra.mxu0 %v3578
    %v7633 = vpop.f32.mrf.mxu0
    %v7634 = vadd.f32 %v7545, %v7633
    %v7635 = vpop.f32.mrf.mxu0
    %v7636 = vadd.f32 %v7547, %v7635
    %7637 = vmatmul.bf16.gmra.mxu0 %v3586
    %v7638 = vpop.f32.mrf.mxu0
    %v7639 = vadd.f32 %v7550, %v7638
    %v7640 = vpop.f32.mrf.mxu0
    %v7641 = vadd.f32 %v7552, %v7640
    %7642 = vmatmul.bf16.gmra.mxu0 %v3594
    %v7643 = vpop.f32.mrf.mxu0
    %v7644 = vadd.f32 %v7555, %v7643
    %v7645 = vpop.f32.mrf.mxu0
    %v7646 = vadd.f32 %v7557, %v7645
    %7647 = vmatmul.bf16.gmra.mxu0 %v3602
    %v7648 = vpop.f32.mrf.mxu0
    %v7649 = vadd.f32 %v7560, %v7648
    %v7650 = vpop.f32.mrf.mxu0
    %v7651 = vadd.f32 %v7562, %v7650
    %7652 = vmatmul.bf16.gmra.mxu0 %v3610
    %v7653 = vpop.f32.mrf.mxu0
    %v7654 = vadd.f32 %v7565, %v7653
    %v7655 = vpop.f32.mrf.mxu0
    %v7656 = vadd.f32 %v7567, %v7655
    %7657 = vmatmul.bf16.gmra.mxu0 %v3618
    %v7658 = vpop.f32.mrf.mxu0
    %v7659 = vadd.f32 %v7570, %v7658
    %v7660 = vpop.f32.mrf.mxu0
    %v7661 = vadd.f32 %v7572, %v7660
    %7662 = vmatmul.bf16.gmra.mxu0 %v3626
    %v7663 = vpop.f32.mrf.mxu0
    %v7664 = vadd.f32 %v7575, %v7663
    %v7665 = vpop.f32.mrf.mxu0
    %v7666 = vadd.f32 %v7577, %v7665
    %7667 = vmatmul.bf16.gmra.mxu0 %v3634
    %v7668 = vpop.f32.mrf.mxu0
    %v7669 = vadd.f32 %v7580, %v7668
    %v7670 = vpop.f32.mrf.mxu0
    %v7671 = vadd.f32 %v7582, %v7670
    %7672 = vmatmul.bf16.gmra.mxu0 %v3642
    %v7673 = vpop.f32.mrf.mxu0
    %v7674 = vadd.f32 %v7585, %v7673
    %v7675 = vpop.f32.mrf.mxu0
    %v7676 = vadd.f32 %v7587, %v7675
    %7677 = vmatmul.bf16.gmra.mxu0 %v3650
    %v7678 = vpop.f32.mrf.mxu0
    %v7679 = vadd.f32 %v7590, %v7678
    %v7680 = vpop.f32.mrf.mxu0
    %v7681 = vadd.f32 %v7592, %v7680
    %7682 = vdwg.mxu0
    %7683 = vmatpush.bf16.msra.mxu0 %v4838
    %7684 = vmatpush.bf16.msra.mxu0 %v4834
    %7685 = vmatpush.bf16.msra.mxu0 %v4830
    %7686 = vmatpush.bf16.msra.mxu0 %v4826
    %7687 = vmatpush.bf16.msra.mxu0 %v4822
    %7688 = vmatpush.bf16.msra.mxu0 %v4818
    %7689 = vmatpush.bf16.msra.mxu0 %v4814
    %7690 = vmatpush.bf16.msra.mxu0 %v4810
    %7691 = vmatmul.bf16.gmra.mxu0 %v3531
    %v7692 = vpop.f32.mrf.mxu0
    %v7693 = vadd.f32 %v7604, %v7692
    %v7694 = vpop.f32.mrf.mxu0
    %v7695 = vadd.f32 %v7606, %v7694
    %7696 = vmatmul.bf16.gmra.mxu0 %v3539
    %v7697 = vpop.f32.mrf.mxu0
    %v7698 = vadd.f32 %v7609, %v7697
    %v7699 = vpop.f32.mrf.mxu0
    %v7700 = vadd.f32 %v7611, %v7699
    %7701 = vmatmul.bf16.gmra.mxu0 %v3547
    %v7702 = vpop.f32.mrf.mxu0
    %v7703 = vadd.f32 %v7614, %v7702
    %v7704 = vpop.f32.mrf.mxu0
    %v7705 = vadd.f32 %v7616, %v7704
    %7706 = vmatmul.bf16.gmra.mxu0 %v3555
    %v7707 = vpop.f32.mrf.mxu0
    %v7708 = vadd.f32 %v7619, %v7707
    %v7709 = vpop.f32.mrf.mxu0
    %v7710 = vadd.f32 %v7621, %v7709
    %7711 = vmatmul.bf16.gmra.mxu0 %v3563
    %v7712 = vpop.f32.mrf.mxu0
    %v7713 = vadd.f32 %v7624, %v7712
    %v7714 = vpop.f32.mrf.mxu0
    %v7715 = vadd.f32 %v7626, %v7714
    %7716 = vmatmul.bf16.gmra.mxu0 %v3571
    %v7717 = vpop.f32.mrf.mxu0
    %v7718 = vadd.f32 %v7629, %v7717
    %v7719 = vpop.f32.mrf.mxu0
    %v7720 = vadd.f32 %v7631, %v7719
    %7721 = vmatmul.bf16.gmra.mxu0 %v3579
    %v7722 = vpop.f32.mrf.mxu0
    %v7723 = vadd.f32 %v7634, %v7722
    %v7724 = vpop.f32.mrf.mxu0
    %v7725 = vadd.f32 %v7636, %v7724
    %7726 = vmatmul.bf16.gmra.mxu0 %v3587
    %v7727 = vpop.f32.mrf.mxu0
    %v7728 = vadd.f32 %v7639, %v7727
    %v7729 = vpop.f32.mrf.mxu0
    %v7730 = vadd.f32 %v7641, %v7729
    %7731 = vmatmul.bf16.gmra.mxu0 %v3595
    %v7732 = vpop.f32.mrf.mxu0
    %v7733 = vadd.f32 %v7644, %v7732
    %v7734 = vpop.f32.mrf.mxu0
    %v7735 = vadd.f32 %v7646, %v7734
    %7736 = vmatmul.bf16.gmra.mxu0 %v3603
    %v7737 = vpop.f32.mrf.mxu0
    %v7738 = vadd.f32 %v7649, %v7737
    %v7739 = vpop.f32.mrf.mxu0
    %v7740 = vadd.f32 %v7651, %v7739
    %7741 = vmatmul.bf16.gmra.mxu0 %v3611
    %v7742 = vpop.f32.mrf.mxu0
    %v7743 = vadd.f32 %v7654, %v7742
    %v7744 = vpop.f32.mrf.mxu0
    %v7745 = vadd.f32 %v7656, %v7744
    %7746 = vmatmul.bf16.gmra.mxu0 %v3619
    %v7747 = vpop.f32.mrf.mxu0
    %v7748 = vadd.f32 %v7659, %v7747
    %v7749 = vpop.f32.mrf.mxu0
    %v7750 = vadd.f32 %v7661, %v7749
    %7751 = vmatmul.bf16.gmra.mxu0 %v3627
    %v7752 = vpop.f32.mrf.mxu0
    %v7753 = vadd.f32 %v7664, %v7752
    %v7754 = vpop.f32.mrf.mxu0
    %v7755 = vadd.f32 %v7666, %v7754
    %7756 = vmatmul.bf16.gmra.mxu0 %v3635
    %v7757 = vpop.f32.mrf.mxu0
    %v7758 = vadd.f32 %v7669, %v7757
    %v7759 = vpop.f32.mrf.mxu0
    %v7760 = vadd.f32 %v7671, %v7759
    %7761 = vmatmul.bf16.gmra.mxu0 %v3643
    %v7762 = vpop.f32.mrf.mxu0
    %v7763 = vadd.f32 %v7674, %v7762
    %v7764 = vpop.f32.mrf.mxu0
    %v7765 = vadd.f32 %v7676, %v7764
    %7766 = vmatmul.bf16.gmra.mxu0 %v3651
    %v7767 = vpop.f32.mrf.mxu0
    %v7768 = vadd.f32 %v7679, %v7767
    %v7769 = vpop.f32.mrf.mxu0
    %v7770 = vadd.f32 %v7681, %v7769
    %7771 = vdwg.mxu0
    %7772 = vmatpush.bf16.msra.mxu0 %v4870
    %7773 = vmatpush.bf16.msra.mxu0 %v4866
    %7774 = vmatpush.bf16.msra.mxu0 %v4862
    %7775 = vmatpush.bf16.msra.mxu0 %v4858
    %7776 = vmatpush.bf16.msra.mxu0 %v4854
    %7777 = vmatpush.bf16.msra.mxu0 %v4850
    %7778 = vmatpush.bf16.msra.mxu0 %v4846
    %7779 = vmatpush.bf16.msra.mxu0 %v4842
    %7780 = vmatmul.bf16.gmra.mxu0 %v3532
    %v7781 = vpop.f32.mrf.mxu0
    %v7782 = vadd.f32 %v7693, %v7781
    %v7783 = vpop.f32.mrf.mxu0
    %v7784 = vadd.f32 %v7695, %v7783
    %7785 = vmatmul.bf16.gmra.mxu0 %v3540
    %v7786 = vpop.f32.mrf.mxu0
    %v7787 = vadd.f32 %v7698, %v7786
    %v7788 = vpop.f32.mrf.mxu0
    %v7789 = vadd.f32 %v7700, %v7788
    %7790 = vmatmul.bf16.gmra.mxu0 %v3548
    %v7791 = vpop.f32.mrf.mxu0
    %v7792 = vadd.f32 %v7703, %v7791
    %v7793 = vpop.f32.mrf.mxu0
    %v7794 = vadd.f32 %v7705, %v7793
    %7795 = vmatmul.bf16.gmra.mxu0 %v3556
    %v7796 = vpop.f32.mrf.mxu0
    %v7797 = vadd.f32 %v7708, %v7796
    %v7798 = vpop.f32.mrf.mxu0
    %v7799 = vadd.f32 %v7710, %v7798
    %7800 = vmatmul.bf16.gmra.mxu0 %v3564
    %v7801 = vpop.f32.mrf.mxu0
    %v7802 = vadd.f32 %v7713, %v7801
    %v7803 = vpop.f32.mrf.mxu0
    %v7804 = vadd.f32 %v7715, %v7803
    %7805 = vmatmul.bf16.gmra.mxu0 %v3572
    %v7806 = vpop.f32.mrf.mxu0
    %v7807 = vadd.f32 %v7718, %v7806
    %v7808 = vpop.f32.mrf.mxu0
    %v7809 = vadd.f32 %v7720, %v7808
    %7810 = vmatmul.bf16.gmra.mxu0 %v3580
    %v7811 = vpop.f32.mrf.mxu0
    %v7812 = vadd.f32 %v7723, %v7811
    %v7813 = vpop.f32.mrf.mxu0
    %v7814 = vadd.f32 %v7725, %v7813
    %7815 = vmatmul.bf16.gmra.mxu0 %v3588
    %v7816 = vpop.f32.mrf.mxu0
    %v7817 = vadd.f32 %v7728, %v7816
    %v7818 = vpop.f32.mrf.mxu0
    %v7819 = vadd.f32 %v7730, %v7818
    %7820 = vmatmul.bf16.gmra.mxu0 %v3596
    %v7821 = vpop.f32.mrf.mxu0
    %v7822 = vadd.f32 %v7733, %v7821
    %v7823 = vpop.f32.mrf.mxu0
    %v7824 = vadd.f32 %v7735, %v7823
    %7825 = vmatmul.bf16.gmra.mxu0 %v3604
    %v7826 = vpop.f32.mrf.mxu0
    %v7827 = vadd.f32 %v7738, %v7826
    %v7828 = vpop.f32.mrf.mxu0
    %v7829 = vadd.f32 %v7740, %v7828
    %7830 = vmatmul.bf16.gmra.mxu0 %v3612
    %v7831 = vpop.f32.mrf.mxu0
    %v7832 = vadd.f32 %v7743, %v7831
    %v7833 = vpop.f32.mrf.mxu0
    %v7834 = vadd.f32 %v7745, %v7833
    %7835 = vmatmul.bf16.gmra.mxu0 %v3620
    %v7836 = vpop.f32.mrf.mxu0
    %v7837 = vadd.f32 %v7748, %v7836
    %v7838 = vpop.f32.mrf.mxu0
    %v7839 = vadd.f32 %v7750, %v7838
    %7840 = vmatmul.bf16.gmra.mxu0 %v3628
    %v7841 = vpop.f32.mrf.mxu0
    %v7842 = vadd.f32 %v7753, %v7841
    %v7843 = vpop.f32.mrf.mxu0
    %v7844 = vadd.f32 %v7755, %v7843
    %7845 = vmatmul.bf16.gmra.mxu0 %v3636
    %v7846 = vpop.f32.mrf.mxu0
    %v7847 = vadd.f32 %v7758, %v7846
    %v7848 = vpop.f32.mrf.mxu0
    %v7849 = vadd.f32 %v7760, %v7848
    %7850 = vmatmul.bf16.gmra.mxu0 %v3644
    %v7851 = vpop.f32.mrf.mxu0
    %v7852 = vadd.f32 %v7763, %v7851
    %v7853 = vpop.f32.mrf.mxu0
    %v7854 = vadd.f32 %v7765, %v7853
    %7855 = vmatmul.bf16.gmra.mxu0 %v3652
    %v7856 = vpop.f32.mrf.mxu0
    %v7857 = vadd.f32 %v7768, %v7856
    %v7858 = vpop.f32.mrf.mxu0
    %v7859 = vadd.f32 %v7770, %v7858
    %7860 = vdwg.mxu0
    %7861 = vmatpush.bf16.msra.mxu0 %v4902
    %7862 = vmatpush.bf16.msra.mxu0 %v4898
    %7863 = vmatpush.bf16.msra.mxu0 %v4894
    %7864 = vmatpush.bf16.msra.mxu0 %v4890
    %7865 = vmatpush.bf16.msra.mxu0 %v4886
    %7866 = vmatpush.bf16.msra.mxu0 %v4882
    %7867 = vmatpush.bf16.msra.mxu0 %v4878
    %7868 = vmatpush.bf16.msra.mxu0 %v4874
    %7869 = vmatmul.bf16.gmra.mxu0 %v3533
    %v7870 = vpop.f32.mrf.mxu0
    %v7871 = vadd.f32 %v7782, %v7870
    %v7872 = vpop.f32.mrf.mxu0
    %v7873 = vadd.f32 %v7784, %v7872
    %7874 = vmatmul.bf16.gmra.mxu0 %v3541
    %v7875 = vpop.f32.mrf.mxu0
    %v7876 = vadd.f32 %v7787, %v7875
    %v7877 = vpop.f32.mrf.mxu0
    %v7878 = vadd.f32 %v7789, %v7877
    %7879 = vmatmul.bf16.gmra.mxu0 %v3549
    %v7880 = vpop.f32.mrf.mxu0
    %v7881 = vadd.f32 %v7792, %v7880
    %v7882 = vpop.f32.mrf.mxu0
    %v7883 = vadd.f32 %v7794, %v7882
    %7884 = vmatmul.bf16.gmra.mxu0 %v3557
    %v7885 = vpop.f32.mrf.mxu0
    %v7886 = vadd.f32 %v7797, %v7885
    %v7887 = vpop.f32.mrf.mxu0
    %v7888 = vadd.f32 %v7799, %v7887
    %7889 = vmatmul.bf16.gmra.mxu0 %v3565
    %v7890 = vpop.f32.mrf.mxu0
    %v7891 = vadd.f32 %v7802, %v7890
    %v7892 = vpop.f32.mrf.mxu0
    %v7893 = vadd.f32 %v7804, %v7892
    %7894 = vmatmul.bf16.gmra.mxu0 %v3573
    %v7895 = vpop.f32.mrf.mxu0
    %v7896 = vadd.f32 %v7807, %v7895
    %v7897 = vpop.f32.mrf.mxu0
    %v7898 = vadd.f32 %v7809, %v7897
    %7899 = vmatmul.bf16.gmra.mxu0 %v3581
    %v7900 = vpop.f32.mrf.mxu0
    %v7901 = vadd.f32 %v7812, %v7900
    %v7902 = vpop.f32.mrf.mxu0
    %v7903 = vadd.f32 %v7814, %v7902
    %7904 = vmatmul.bf16.gmra.mxu0 %v3589
    %v7905 = vpop.f32.mrf.mxu0
    %v7906 = vadd.f32 %v7817, %v7905
    %v7907 = vpop.f32.mrf.mxu0
    %v7908 = vadd.f32 %v7819, %v7907
    %7909 = vmatmul.bf16.gmra.mxu0 %v3597
    %v7910 = vpop.f32.mrf.mxu0
    %v7911 = vadd.f32 %v7822, %v7910
    %v7912 = vpop.f32.mrf.mxu0
    %v7913 = vadd.f32 %v7824, %v7912
    %7914 = vmatmul.bf16.gmra.mxu0 %v3605
    %v7915 = vpop.f32.mrf.mxu0
    %v7916 = vadd.f32 %v7827, %v7915
    %v7917 = vpop.f32.mrf.mxu0
    %v7918 = vadd.f32 %v7829, %v7917
    %7919 = vmatmul.bf16.gmra.mxu0 %v3613
    %v7920 = vpop.f32.mrf.mxu0
    %v7921 = vadd.f32 %v7832, %v7920
    %v7922 = vpop.f32.mrf.mxu0
    %v7923 = vadd.f32 %v7834, %v7922
    %7924 = vmatmul.bf16.gmra.mxu0 %v3621
    %v7925 = vpop.f32.mrf.mxu0
    %v7926 = vadd.f32 %v7837, %v7925
    %v7927 = vpop.f32.mrf.mxu0
    %v7928 = vadd.f32 %v7839, %v7927
    %7929 = vmatmul.bf16.gmra.mxu0 %v3629
    %v7930 = vpop.f32.mrf.mxu0
    %v7931 = vadd.f32 %v7842, %v7930
    %v7932 = vpop.f32.mrf.mxu0
    %v7933 = vadd.f32 %v7844, %v7932
    %7934 = vmatmul.bf16.gmra.mxu0 %v3637
    %v7935 = vpop.f32.mrf.mxu0
    %v7936 = vadd.f32 %v7847, %v7935
    %v7937 = vpop.f32.mrf.mxu0
    %v7938 = vadd.f32 %v7849, %v7937
    %7939 = vmatmul.bf16.gmra.mxu0 %v3645
    %v7940 = vpop.f32.mrf.mxu0
    %v7941 = vadd.f32 %v7852, %v7940
    %v7942 = vpop.f32.mrf.mxu0
    %v7943 = vadd.f32 %v7854, %v7942
    %7944 = vmatmul.bf16.gmra.mxu0 %v3653
    %v7945 = vpop.f32.mrf.mxu0
    %v7946 = vadd.f32 %v7857, %v7945
    %v7947 = vpop.f32.mrf.mxu0
    %v7948 = vadd.f32 %v7859, %v7947
    %7949 = vdwg.mxu0
    %7950 = vmatpush.bf16.msra.mxu0 %v4934
    %7951 = vmatpush.bf16.msra.mxu0 %v4930
    %7952 = vmatpush.bf16.msra.mxu0 %v4926
    %7953 = vmatpush.bf16.msra.mxu0 %v4922
    %7954 = vmatpush.bf16.msra.mxu0 %v4918
    %7955 = vmatpush.bf16.msra.mxu0 %v4914
    %7956 = vmatpush.bf16.msra.mxu0 %v4910
    %7957 = vmatpush.bf16.msra.mxu0 %v4906
    %7958 = vmatmul.bf16.gmra.mxu0 %v3534
    %v7959 = vpop.f32.mrf.mxu0
    %v7960 = vadd.f32 %v7871, %v7959
    %v7961 = vpop.f32.mrf.mxu0
    %v7962 = vadd.f32 %v7873, %v7961
    %7963 = vmatmul.bf16.gmra.mxu0 %v3542
    %v7964 = vpop.f32.mrf.mxu0
    %v7965 = vadd.f32 %v7876, %v7964
    %v7966 = vpop.f32.mrf.mxu0
    %v7967 = vadd.f32 %v7878, %v7966
    %7968 = vmatmul.bf16.gmra.mxu0 %v3550
    %v7969 = vpop.f32.mrf.mxu0
    %v7970 = vadd.f32 %v7881, %v7969
    %v7971 = vpop.f32.mrf.mxu0
    %v7972 = vadd.f32 %v7883, %v7971
    %7973 = vmatmul.bf16.gmra.mxu0 %v3558
    %v7974 = vpop.f32.mrf.mxu0
    %v7975 = vadd.f32 %v7886, %v7974
    %v7976 = vpop.f32.mrf.mxu0
    %v7977 = vadd.f32 %v7888, %v7976
    %7978 = vmatmul.bf16.gmra.mxu0 %v3566
    %v7979 = vpop.f32.mrf.mxu0
    %v7980 = vadd.f32 %v7891, %v7979
    %v7981 = vpop.f32.mrf.mxu0
    %v7982 = vadd.f32 %v7893, %v7981
    %7983 = vmatmul.bf16.gmra.mxu0 %v3574
    %v7984 = vpop.f32.mrf.mxu0
    %v7985 = vadd.f32 %v7896, %v7984
    %v7986 = vpop.f32.mrf.mxu0
    %v7987 = vadd.f32 %v7898, %v7986
    %7988 = vmatmul.bf16.gmra.mxu0 %v3582
    %v7989 = vpop.f32.mrf.mxu0
    %v7990 = vadd.f32 %v7901, %v7989
    %v7991 = vpop.f32.mrf.mxu0
    %v7992 = vadd.f32 %v7903, %v7991
    %7993 = vmatmul.bf16.gmra.mxu0 %v3590
    %v7994 = vpop.f32.mrf.mxu0
    %v7995 = vadd.f32 %v7906, %v7994
    %v7996 = vpop.f32.mrf.mxu0
    %v7997 = vadd.f32 %v7908, %v7996
    %7998 = vmatmul.bf16.gmra.mxu0 %v3598
    %v7999 = vpop.f32.mrf.mxu0
    %v8000 = vadd.f32 %v7911, %v7999
    %v8001 = vpop.f32.mrf.mxu0
    %v8002 = vadd.f32 %v7913, %v8001
    %8003 = vmatmul.bf16.gmra.mxu0 %v3606
    %v8004 = vpop.f32.mrf.mxu0
    %v8005 = vadd.f32 %v7916, %v8004
    %v8006 = vpop.f32.mrf.mxu0
    %v8007 = vadd.f32 %v7918, %v8006
    %8008 = vmatmul.bf16.gmra.mxu0 %v3614
    %v8009 = vpop.f32.mrf.mxu0
    %v8010 = vadd.f32 %v7921, %v8009
    %v8011 = vpop.f32.mrf.mxu0
    %v8012 = vadd.f32 %v7923, %v8011
    %8013 = vmatmul.bf16.gmra.mxu0 %v3622
    %v8014 = vpop.f32.mrf.mxu0
    %v8015 = vadd.f32 %v7926, %v8014
    %v8016 = vpop.f32.mrf.mxu0
    %v8017 = vadd.f32 %v7928, %v8016
    %8018 = vmatmul.bf16.gmra.mxu0 %v3630
    %v8019 = vpop.f32.mrf.mxu0
    %v8020 = vadd.f32 %v7931, %v8019
    %v8021 = vpop.f32.mrf.mxu0
    %v8022 = vadd.f32 %v7933, %v8021
    %8023 = vmatmul.bf16.gmra.mxu0 %v3638
    %v8024 = vpop.f32.mrf.mxu0
    %v8025 = vadd.f32 %v7936, %v8024
    %v8026 = vpop.f32.mrf.mxu0
    %v8027 = vadd.f32 %v7938, %v8026
    %8028 = vmatmul.bf16.gmra.mxu0 %v3646
    %v8029 = vpop.f32.mrf.mxu0
    %v8030 = vadd.f32 %v7941, %v8029
    %v8031 = vpop.f32.mrf.mxu0
    %v8032 = vadd.f32 %v7943, %v8031
    %8033 = vmatmul.bf16.gmra.mxu0 %v3654
    %v8034 = vpop.f32.mrf.mxu0
    %v8035 = vadd.f32 %v7946, %v8034
    %v8036 = vpop.f32.mrf.mxu0
    %v8037 = vadd.f32 %v7948, %v8036
    %8038 = vdwg.mxu0
    %v8039 = vadd.f32 %v5824, %v5826
    %v8040 = vadd.f32 %v8039, %v5829
    %v8041 = vadd.f32 %v8040, %v5831
    %v8042 = vadd.f32 %v8041, %v5834
    %v8043 = vadd.f32 %v8042, %v5836
    %v8044 = vadd.f32 %v8043, %v5839
    %v8045 = vadd.f32 %v8044, %v5841
    %v8046 = vadd.f32 %v8045, %v5844
    %v8047 = vadd.f32 %v8046, %v5846
    %v8048 = vadd.f32 %v8047, %v5849
    %v8049 = vadd.f32 %v8048, %v5851
    %v8050 = vadd.f32 %v8049, %v5854
    %v8051 = vadd.f32 %v8050, %v5856
    %v8052 = vadd.f32 %v8051, %v5859
    %v8053 = vadd.f32 %v8052, %v5861
    %v8054 = vadd.f32 %v8053, %v5864
    %v8055 = vadd.f32 %v8054, %v5866
    %v8056 = vadd.f32 %v8055, %v5869
    %v8057 = vadd.f32 %v8056, %v5871
    %v8058 = vadd.f32 %v8057, %v5874
    %v8059 = vadd.f32 %v8058, %v5876
    %v8060 = vadd.f32 %v8059, %v5879
    %v8061 = vadd.f32 %v8060, %v5881
    %v8062 = vadd.f32 %v8061, %v5884
    %v8063 = vadd.f32 %v8062, %v5886
    %v8064 = vadd.f32 %v8063, %v5889
    %v8065 = vadd.f32 %v8064, %v5891
    %v8066 = vadd.f32 %v8065, %v5894
    %v8067 = vadd.f32 %v8066, %v5896
    %v8068 = vadd.f32 %v8067, %v5899
    %v8069 = vadd.f32 %v8068, %v5901
    %v8070 = vrot.slane %v8069, 4
    %v8071 = vadd.f32 %v8069, %v8070
    %v8072 = vrot.slane %v8071, 2
    %v8073 = vadd.f32 %v8071, %v8072
    %v8074 = vrot.slane %v8073, 1
    %v8075 = vadd.f32 %v8073, %v8074
    %v8076 = vadd.f32 %v6536, %v6538
    %v8077 = vadd.f32 %v8076, %v6541
    %v8078 = vadd.f32 %v8077, %v6543
    %v8079 = vadd.f32 %v8078, %v6546
    %v8080 = vadd.f32 %v8079, %v6548
    %v8081 = vadd.f32 %v8080, %v6551
    %v8082 = vadd.f32 %v8081, %v6553
    %v8083 = vadd.f32 %v8082, %v6556
    %v8084 = vadd.f32 %v8083, %v6558
    %v8085 = vadd.f32 %v8084, %v6561
    %v8086 = vadd.f32 %v8085, %v6563
    %v8087 = vadd.f32 %v8086, %v6566
    %v8088 = vadd.f32 %v8087, %v6568
    %v8089 = vadd.f32 %v8088, %v6571
    %v8090 = vadd.f32 %v8089, %v6573
    %v8091 = vadd.f32 %v8090, %v6576
    %v8092 = vadd.f32 %v8091, %v6578
    %v8093 = vadd.f32 %v8092, %v6581
    %v8094 = vadd.f32 %v8093, %v6583
    %v8095 = vadd.f32 %v8094, %v6586
    %v8096 = vadd.f32 %v8095, %v6588
    %v8097 = vadd.f32 %v8096, %v6591
    %v8098 = vadd.f32 %v8097, %v6593
    %v8099 = vadd.f32 %v8098, %v6596
    %v8100 = vadd.f32 %v8099, %v6598
    %v8101 = vadd.f32 %v8100, %v6601
    %v8102 = vadd.f32 %v8101, %v6603
    %v8103 = vadd.f32 %v8102, %v6606
    %v8104 = vadd.f32 %v8103, %v6608
    %v8105 = vadd.f32 %v8104, %v6611
    %v8106 = vadd.f32 %v8105, %v6613
    %v8107 = vrot.slane %v8106, 4
    %v8108 = vadd.f32 %v8106, %v8107
    %v8109 = vrot.slane %v8108, 2
    %v8110 = vadd.f32 %v8108, %v8109
    %v8111 = vrot.slane %v8110, 1
    %v8112 = vadd.f32 %v8110, %v8111
    %v8113 = vadd.f32 %v7248, %v7250
    %v8114 = vadd.f32 %v8113, %v7253
    %v8115 = vadd.f32 %v8114, %v7255
    %v8116 = vadd.f32 %v8115, %v7258
    %v8117 = vadd.f32 %v8116, %v7260
    %v8118 = vadd.f32 %v8117, %v7263
    %v8119 = vadd.f32 %v8118, %v7265
    %v8120 = vadd.f32 %v8119, %v7268
    %v8121 = vadd.f32 %v8120, %v7270
    %v8122 = vadd.f32 %v8121, %v7273
    %v8123 = vadd.f32 %v8122, %v7275
    %v8124 = vadd.f32 %v8123, %v7278
    %v8125 = vadd.f32 %v8124, %v7280
    %v8126 = vadd.f32 %v8125, %v7283
    %v8127 = vadd.f32 %v8126, %v7285
    %v8128 = vadd.f32 %v8127, %v7288
    %v8129 = vadd.f32 %v8128, %v7290
    %v8130 = vadd.f32 %v8129, %v7293
    %v8131 = vadd.f32 %v8130, %v7295
    %v8132 = vadd.f32 %v8131, %v7298
    %v8133 = vadd.f32 %v8132, %v7300
    %v8134 = vadd.f32 %v8133, %v7303
    %v8135 = vadd.f32 %v8134, %v7305
    %v8136 = vadd.f32 %v8135, %v7308
    %v8137 = vadd.f32 %v8136, %v7310
    %v8138 = vadd.f32 %v8137, %v7313
    %v8139 = vadd.f32 %v8138, %v7315
    %v8140 = vadd.f32 %v8139, %v7318
    %v8141 = vadd.f32 %v8140, %v7320
    %v8142 = vadd.f32 %v8141, %v7323
    %v8143 = vadd.f32 %v8142, %v7325
    %v8144 = vrot.slane %v8143, 4
    %v8145 = vadd.f32 %v8143, %v8144
    %v8146 = vrot.slane %v8145, 2
    %v8147 = vadd.f32 %v8145, %v8146
    %v8148 = vrot.slane %v8147, 1
    %v8149 = vadd.f32 %v8147, %v8148
    %v8150 = vadd.f32 %v7960, %v7962
    %v8151 = vadd.f32 %v8150, %v7965
    %v8152 = vadd.f32 %v8151, %v7967
    %v8153 = vadd.f32 %v8152, %v7970
    %v8154 = vadd.f32 %v8153, %v7972
    %v8155 = vadd.f32 %v8154, %v7975
    %v8156 = vadd.f32 %v8155, %v7977
    %v8157 = vadd.f32 %v8156, %v7980
    %v8158 = vadd.f32 %v8157, %v7982
    %v8159 = vadd.f32 %v8158, %v7985
    %v8160 = vadd.f32 %v8159, %v7987
    %v8161 = vadd.f32 %v8160, %v7990
    %v8162 = vadd.f32 %v8161, %v7992
    %v8163 = vadd.f32 %v8162, %v7995
    %v8164 = vadd.f32 %v8163, %v7997
    %v8165 = vadd.f32 %v8164, %v8000
    %v8166 = vadd.f32 %v8165, %v8002
    %v8167 = vadd.f32 %v8166, %v8005
    %v8168 = vadd.f32 %v8167, %v8007
    %v8169 = vadd.f32 %v8168, %v8010
    %v8170 = vadd.f32 %v8169, %v8012
    %v8171 = vadd.f32 %v8170, %v8015
    %v8172 = vadd.f32 %v8171, %v8017
    %v8173 = vadd.f32 %v8172, %v8020
    %v8174 = vadd.f32 %v8173, %v8022
    %v8175 = vadd.f32 %v8174, %v8025
    %v8176 = vadd.f32 %v8175, %v8027
    %v8177 = vadd.f32 %v8176, %v8030
    %v8178 = vadd.f32 %v8177, %v8032
    %v8179 = vadd.f32 %v8178, %v8035
    %v8180 = vadd.f32 %v8179, %v8037
    %v8181 = vrot.slane %v8180, 4
    %v8182 = vadd.f32 %v8180, %v8181
    %v8183 = vrot.slane %v8182, 2
    %v8184 = vadd.f32 %v8182, %v8183
    %v8185 = vrot.slane %v8184, 1
    %v8186 = vadd.f32 %v8184, %v8185
    %v8187 = vmul.f32 %v8075, 0.00390625
    %v8188 = vmul.f32 %v8112, 0.00390625
    %v8189 = vmul.f32 %v8149, 0.00390625
    %v8190 = vmul.f32 %v8186, 0.00390625
    %v8191 = vmul.f32 %v5824, %v5824
    %v8192 = vmul.f32 %v6536, %v6536
    %v8193 = vmul.f32 %v7248, %v7248
    %v8194 = vmul.f32 %v7960, %v7960
    %v8195 = vmul.f32 %v5826, %v5826
    %v8196 = vmul.f32 %v6538, %v6538
    %v8197 = vmul.f32 %v7250, %v7250
    %v8198 = vmul.f32 %v7962, %v7962
    %v8199 = vmul.f32 %v5829, %v5829
    %v8200 = vmul.f32 %v6541, %v6541
    %v8201 = vmul.f32 %v7253, %v7253
    %v8202 = vmul.f32 %v7965, %v7965
    %v8203 = vmul.f32 %v5831, %v5831
    %v8204 = vmul.f32 %v6543, %v6543
    %v8205 = vmul.f32 %v7255, %v7255
    %v8206 = vmul.f32 %v7967, %v7967
    %v8207 = vmul.f32 %v5834, %v5834
    %v8208 = vmul.f32 %v6546, %v6546
    %v8209 = vmul.f32 %v7258, %v7258
    %v8210 = vmul.f32 %v7970, %v7970
    %v8211 = vmul.f32 %v5836, %v5836
    %v8212 = vmul.f32 %v6548, %v6548
    %v8213 = vmul.f32 %v7260, %v7260
    %v8214 = vmul.f32 %v7972, %v7972
    %v8215 = vmul.f32 %v5839, %v5839
    %v8216 = vmul.f32 %v6551, %v6551
    %v8217 = vmul.f32 %v7263, %v7263
    %v8218 = vmul.f32 %v7975, %v7975
    %v8219 = vmul.f32 %v5841, %v5841
    %v8220 = vmul.f32 %v6553, %v6553
    %v8221 = vmul.f32 %v7265, %v7265
    %v8222 = vmul.f32 %v7977, %v7977
    %v8223 = vmul.f32 %v5844, %v5844
    %v8224 = vmul.f32 %v6556, %v6556
    %v8225 = vmul.f32 %v7268, %v7268
    %v8226 = vmul.f32 %v7980, %v7980
    %v8227 = vmul.f32 %v5846, %v5846
    %v8228 = vmul.f32 %v6558, %v6558
    %v8229 = vmul.f32 %v7270, %v7270
    %v8230 = vmul.f32 %v7982, %v7982
    %v8231 = vmul.f32 %v5849, %v5849
    %v8232 = vmul.f32 %v6561, %v6561
    %v8233 = vmul.f32 %v7273, %v7273
    %v8234 = vmul.f32 %v7985, %v7985
    %v8235 = vmul.f32 %v5851, %v5851
    %v8236 = vmul.f32 %v6563, %v6563
    %v8237 = vmul.f32 %v7275, %v7275
    %v8238 = vmul.f32 %v7987, %v7987
    %v8239 = vmul.f32 %v5854, %v5854
    %v8240 = vmul.f32 %v6566, %v6566
    %v8241 = vmul.f32 %v7278, %v7278
    %v8242 = vmul.f32 %v7990, %v7990
    %v8243 = vmul.f32 %v5856, %v5856
    %v8244 = vmul.f32 %v6568, %v6568
    %v8245 = vmul.f32 %v7280, %v7280
    %v8246 = vmul.f32 %v7992, %v7992
    %v8247 = vmul.f32 %v5859, %v5859
    %v8248 = vmul.f32 %v6571, %v6571
    %v8249 = vmul.f32 %v7283, %v7283
    %v8250 = vmul.f32 %v7995, %v7995
    %v8251 = vmul.f32 %v5861, %v5861
    %v8252 = vmul.f32 %v6573, %v6573
    %v8253 = vmul.f32 %v7285, %v7285
    %v8254 = vmul.f32 %v7997, %v7997
    %v8255 = vmul.f32 %v5864, %v5864
    %v8256 = vmul.f32 %v6576, %v6576
    %v8257 = vmul.f32 %v7288, %v7288
    %v8258 = vmul.f32 %v8000, %v8000
    %v8259 = vmul.f32 %v5866, %v5866
    %v8260 = vmul.f32 %v6578, %v6578
    %v8261 = vmul.f32 %v7290, %v7290
    %v8262 = vmul.f32 %v8002, %v8002
    %v8263 = vmul.f32 %v5869, %v5869
    %v8264 = vmul.f32 %v6581, %v6581
    %v8265 = vmul.f32 %v7293, %v7293
    %v8266 = vmul.f32 %v8005, %v8005
    %v8267 = vmul.f32 %v5871, %v5871
    %v8268 = vmul.f32 %v6583, %v6583
    %v8269 = vmul.f32 %v7295, %v7295
    %v8270 = vmul.f32 %v8007, %v8007
    %v8271 = vmul.f32 %v5874, %v5874
    %v8272 = vmul.f32 %v6586, %v6586
    %v8273 = vmul.f32 %v7298, %v7298
    %v8274 = vmul.f32 %v8010, %v8010
    %v8275 = vmul.f32 %v5876, %v5876
    %v8276 = vmul.f32 %v6588, %v6588
    %v8277 = vmul.f32 %v7300, %v7300
    %v8278 = vmul.f32 %v8012, %v8012
    %v8279 = vmul.f32 %v5879, %v5879
    %v8280 = vmul.f32 %v6591, %v6591
    %v8281 = vmul.f32 %v7303, %v7303
    %v8282 = vmul.f32 %v8015, %v8015
    %v8283 = vmul.f32 %v5881, %v5881
    %v8284 = vmul.f32 %v6593, %v6593
    %v8285 = vmul.f32 %v7305, %v7305
    %v8286 = vmul.f32 %v8017, %v8017
    %v8287 = vmul.f32 %v5884, %v5884
    %v8288 = vmul.f32 %v6596, %v6596
    %v8289 = vmul.f32 %v7308, %v7308
    %v8290 = vmul.f32 %v8020, %v8020
    %v8291 = vmul.f32 %v5886, %v5886
    %v8292 = vmul.f32 %v6598, %v6598
    %v8293 = vmul.f32 %v7310, %v7310
    %v8294 = vmul.f32 %v8022, %v8022
    %v8295 = vmul.f32 %v5889, %v5889
    %v8296 = vmul.f32 %v6601, %v6601
    %v8297 = vmul.f32 %v7313, %v7313
    %v8298 = vmul.f32 %v8025, %v8025
    %v8299 = vmul.f32 %v5891, %v5891
    %v8300 = vmul.f32 %v6603, %v6603
    %v8301 = vmul.f32 %v7315, %v7315
    %v8302 = vmul.f32 %v8027, %v8027
    %v8303 = vmul.f32 %v5894, %v5894
    %v8304 = vmul.f32 %v6606, %v6606
    %v8305 = vmul.f32 %v7318, %v7318
    %v8306 = vmul.f32 %v8030, %v8030
    %v8307 = vmul.f32 %v5896, %v5896
    %v8308 = vmul.f32 %v6608, %v6608
    %v8309 = vmul.f32 %v7320, %v7320
    %v8310 = vmul.f32 %v8032, %v8032
    %v8311 = vmul.f32 %v5899, %v5899
    %v8312 = vmul.f32 %v6611, %v6611
    %v8313 = vmul.f32 %v7323, %v7323
    %v8314 = vmul.f32 %v8035, %v8035
    %v8315 = vmul.f32 %v5901, %v5901
    %v8316 = vmul.f32 %v6613, %v6613
    %v8317 = vmul.f32 %v7325, %v7325
    %v8318 = vmul.f32 %v8037, %v8037
    %v8319 = vadd.f32 %v8191, %v8195
    %v8320 = vadd.f32 %v8319, %v8199
    %v8321 = vadd.f32 %v8320, %v8203
    %v8322 = vadd.f32 %v8321, %v8207
    %v8323 = vadd.f32 %v8322, %v8211
    %v8324 = vadd.f32 %v8323, %v8215
    %v8325 = vadd.f32 %v8324, %v8219
    %v8326 = vadd.f32 %v8325, %v8223
    %v8327 = vadd.f32 %v8326, %v8227
    %v8328 = vadd.f32 %v8327, %v8231
    %v8329 = vadd.f32 %v8328, %v8235
    %v8330 = vadd.f32 %v8329, %v8239
    %v8331 = vadd.f32 %v8330, %v8243
    %v8332 = vadd.f32 %v8331, %v8247
    %v8333 = vadd.f32 %v8332, %v8251
    %v8334 = vadd.f32 %v8333, %v8255
    %v8335 = vadd.f32 %v8334, %v8259
    %v8336 = vadd.f32 %v8335, %v8263
    %v8337 = vadd.f32 %v8336, %v8267
    %v8338 = vadd.f32 %v8337, %v8271
    %v8339 = vadd.f32 %v8338, %v8275
    %v8340 = vadd.f32 %v8339, %v8279
    %v8341 = vadd.f32 %v8340, %v8283
    %v8342 = vadd.f32 %v8341, %v8287
    %v8343 = vadd.f32 %v8342, %v8291
    %v8344 = vadd.f32 %v8343, %v8295
    %v8345 = vadd.f32 %v8344, %v8299
    %v8346 = vadd.f32 %v8345, %v8303
    %v8347 = vadd.f32 %v8346, %v8307
    %v8348 = vadd.f32 %v8347, %v8311
    %v8349 = vadd.f32 %v8348, %v8315
    %v8350 = vrot.slane %v8349, 4
    %v8351 = vadd.f32 %v8349, %v8350
    %v8352 = vrot.slane %v8351, 2
    %v8353 = vadd.f32 %v8351, %v8352
    %v8354 = vrot.slane %v8353, 1
    %v8355 = vadd.f32 %v8353, %v8354
    %v8356 = vadd.f32 %v8192, %v8196
    %v8357 = vadd.f32 %v8356, %v8200
    %v8358 = vadd.f32 %v8357, %v8204
    %v8359 = vadd.f32 %v8358, %v8208
    %v8360 = vadd.f32 %v8359, %v8212
    %v8361 = vadd.f32 %v8360, %v8216
    %v8362 = vadd.f32 %v8361, %v8220
    %v8363 = vadd.f32 %v8362, %v8224
    %v8364 = vadd.f32 %v8363, %v8228
    %v8365 = vadd.f32 %v8364, %v8232
    %v8366 = vadd.f32 %v8365, %v8236
    %v8367 = vadd.f32 %v8366, %v8240
    %v8368 = vadd.f32 %v8367, %v8244
    %v8369 = vadd.f32 %v8368, %v8248
    %v8370 = vadd.f32 %v8369, %v8252
    %v8371 = vadd.f32 %v8370, %v8256
    %v8372 = vadd.f32 %v8371, %v8260
    %v8373 = vadd.f32 %v8372, %v8264
    %v8374 = vadd.f32 %v8373, %v8268
    %v8375 = vadd.f32 %v8374, %v8272
    %v8376 = vadd.f32 %v8375, %v8276
    %v8377 = vadd.f32 %v8376, %v8280
    %v8378 = vadd.f32 %v8377, %v8284
    %v8379 = vadd.f32 %v8378, %v8288
    %v8380 = vadd.f32 %v8379, %v8292
    %v8381 = vadd.f32 %v8380, %v8296
    %v8382 = vadd.f32 %v8381, %v8300
    %v8383 = vadd.f32 %v8382, %v8304
    %v8384 = vadd.f32 %v8383, %v8308
    %v8385 = vadd.f32 %v8384, %v8312
    %v8386 = vadd.f32 %v8385, %v8316
    %v8387 = vrot.slane %v8386, 4
    %v8388 = vadd.f32 %v8386, %v8387
    %v8389 = vrot.slane %v8388, 2
    %v8390 = vadd.f32 %v8388, %v8389
    %v8391 = vrot.slane %v8390, 1
    %v8392 = vadd.f32 %v8390, %v8391
    %v8393 = vadd.f32 %v8193, %v8197
    %v8394 = vadd.f32 %v8393, %v8201
    %v8395 = vadd.f32 %v8394, %v8205
    %v8396 = vadd.f32 %v8395, %v8209
    %v8397 = vadd.f32 %v8396, %v8213
    %v8398 = vadd.f32 %v8397, %v8217
    %v8399 = vadd.f32 %v8398, %v8221
    %v8400 = vadd.f32 %v8399, %v8225
    %v8401 = vadd.f32 %v8400, %v8229
    %v8402 = vadd.f32 %v8401, %v8233
    %v8403 = vadd.f32 %v8402, %v8237
    %v8404 = vadd.f32 %v8403, %v8241
    %v8405 = vadd.f32 %v8404, %v8245
    %v8406 = vadd.f32 %v8405, %v8249
    %v8407 = vadd.f32 %v8406, %v8253
    %v8408 = vadd.f32 %v8407, %v8257
    %v8409 = vadd.f32 %v8408, %v8261
    %v8410 = vadd.f32 %v8409, %v8265
    %v8411 = vadd.f32 %v8410, %v8269
    %v8412 = vadd.f32 %v8411, %v8273
    %v8413 = vadd.f32 %v8412, %v8277
    %v8414 = vadd.f32 %v8413, %v8281
    %v8415 = vadd.f32 %v8414, %v8285
    %v8416 = vadd.f32 %v8415, %v8289
    %v8417 = vadd.f32 %v8416, %v8293
    %v8418 = vadd.f32 %v8417, %v8297
    %v8419 = vadd.f32 %v8418, %v8301
    %v8420 = vadd.f32 %v8419, %v8305
    %v8421 = vadd.f32 %v8420, %v8309
    %v8422 = vadd.f32 %v8421, %v8313
    %v8423 = vadd.f32 %v8422, %v8317
    %v8424 = vrot.slane %v8423, 4
    %v8425 = vadd.f32 %v8423, %v8424
    %v8426 = vrot.slane %v8425, 2
    %v8427 = vadd.f32 %v8425, %v8426
    %v8428 = vrot.slane %v8427, 1
    %v8429 = vadd.f32 %v8427, %v8428
    %v8430 = vadd.f32 %v8194, %v8198
    %v8431 = vadd.f32 %v8430, %v8202
    %v8432 = vadd.f32 %v8431, %v8206
    %v8433 = vadd.f32 %v8432, %v8210
    %v8434 = vadd.f32 %v8433, %v8214
    %v8435 = vadd.f32 %v8434, %v8218
    %v8436 = vadd.f32 %v8435, %v8222
    %v8437 = vadd.f32 %v8436, %v8226
    %v8438 = vadd.f32 %v8437, %v8230
    %v8439 = vadd.f32 %v8438, %v8234
    %v8440 = vadd.f32 %v8439, %v8238
    %v8441 = vadd.f32 %v8440, %v8242
    %v8442 = vadd.f32 %v8441, %v8246
    %v8443 = vadd.f32 %v8442, %v8250
    %v8444 = vadd.f32 %v8443, %v8254
    %v8445 = vadd.f32 %v8444, %v8258
    %v8446 = vadd.f32 %v8445, %v8262
    %v8447 = vadd.f32 %v8446, %v8266
    %v8448 = vadd.f32 %v8447, %v8270
    %v8449 = vadd.f32 %v8448, %v8274
    %v8450 = vadd.f32 %v8449, %v8278
    %v8451 = vadd.f32 %v8450, %v8282
    %v8452 = vadd.f32 %v8451, %v8286
    %v8453 = vadd.f32 %v8452, %v8290
    %v8454 = vadd.f32 %v8453, %v8294
    %v8455 = vadd.f32 %v8454, %v8298
    %v8456 = vadd.f32 %v8455, %v8302
    %v8457 = vadd.f32 %v8456, %v8306
    %v8458 = vadd.f32 %v8457, %v8310
    %v8459 = vadd.f32 %v8458, %v8314
    %v8460 = vadd.f32 %v8459, %v8318
    %v8461 = vrot.slane %v8460, 4
    %v8462 = vadd.f32 %v8460, %v8461
    %v8463 = vrot.slane %v8462, 2
    %v8464 = vadd.f32 %v8462, %v8463
    %v8465 = vrot.slane %v8464, 1
    %v8466 = vadd.f32 %v8464, %v8465
    %v8467 = vmul.f32 %v8355, 0.00390625
    %v8468 = vmul.f32 %v8392, 0.00390625
    %v8469 = vmul.f32 %v8429, 0.00390625
    %v8470 = vmul.f32 %v8466, 0.00390625
    %v8471 = vmul.f32 %v8187, %v8187
    %v8472 = vmul.f32 %v8188, %v8188
    %v8473 = vmul.f32 %v8189, %v8189
    %v8474 = vmul.f32 %v8190, %v8190
    %v8475 = vsub.f32 %v8467, %v8471
    %v8476 = vsub.f32 %v8468, %v8472
    %v8477 = vsub.f32 %v8469, %v8473
    %v8478 = vsub.f32 %v8470, %v8474
    %v8479 = vmax.f32 %v8475, 0.0
    %v8480 = vmax.f32 %v8476, 0.0
    %v8481 = vmax.f32 %v8477, 0.0
    %v8482 = vmax.f32 %v8478, 0.0
    %v8483 = vsub.f32 %v5824, %v8187
    %v8484 = vsub.f32 %v6536, %v8188
    %v8485 = vsub.f32 %v7248, %v8189
    %v8486 = vsub.f32 %v7960, %v8190
    %v8487 = vsub.f32 %v5826, %v8187
    %v8488 = vsub.f32 %v6538, %v8188
    %v8489 = vsub.f32 %v7250, %v8189
    %v8490 = vsub.f32 %v7962, %v8190
    %v8491 = vsub.f32 %v5829, %v8187
    %v8492 = vsub.f32 %v6541, %v8188
    %v8493 = vsub.f32 %v7253, %v8189
    %v8494 = vsub.f32 %v7965, %v8190
    %v8495 = vsub.f32 %v5831, %v8187
    %v8496 = vsub.f32 %v6543, %v8188
    %v8497 = vsub.f32 %v7255, %v8189
    %v8498 = vsub.f32 %v7967, %v8190
    %v8499 = vsub.f32 %v5834, %v8187
    %v8500 = vsub.f32 %v6546, %v8188
    %v8501 = vsub.f32 %v7258, %v8189
    %v8502 = vsub.f32 %v7970, %v8190
    %v8503 = vsub.f32 %v5836, %v8187
    %v8504 = vsub.f32 %v6548, %v8188
    %v8505 = vsub.f32 %v7260, %v8189
    %v8506 = vsub.f32 %v7972, %v8190
    %v8507 = vsub.f32 %v5839, %v8187
    %v8508 = vsub.f32 %v6551, %v8188
    %v8509 = vsub.f32 %v7263, %v8189
    %v8510 = vsub.f32 %v7975, %v8190
    %v8511 = vsub.f32 %v5841, %v8187
    %v8512 = vsub.f32 %v6553, %v8188
    %v8513 = vsub.f32 %v7265, %v8189
    %v8514 = vsub.f32 %v7977, %v8190
    %v8515 = vsub.f32 %v5844, %v8187
    %v8516 = vsub.f32 %v6556, %v8188
    %v8517 = vsub.f32 %v7268, %v8189
    %v8518 = vsub.f32 %v7980, %v8190
    %v8519 = vsub.f32 %v5846, %v8187
    %v8520 = vsub.f32 %v6558, %v8188
    %v8521 = vsub.f32 %v7270, %v8189
    %v8522 = vsub.f32 %v7982, %v8190
    %v8523 = vsub.f32 %v5849, %v8187
    %v8524 = vsub.f32 %v6561, %v8188
    %v8525 = vsub.f32 %v7273, %v8189
    %v8526 = vsub.f32 %v7985, %v8190
    %v8527 = vsub.f32 %v5851, %v8187
    %v8528 = vsub.f32 %v6563, %v8188
    %v8529 = vsub.f32 %v7275, %v8189
    %v8530 = vsub.f32 %v7987, %v8190
    %v8531 = vsub.f32 %v5854, %v8187
    %v8532 = vsub.f32 %v6566, %v8188
    %v8533 = vsub.f32 %v7278, %v8189
    %v8534 = vsub.f32 %v7990, %v8190
    %v8535 = vsub.f32 %v5856, %v8187
    %v8536 = vsub.f32 %v6568, %v8188
    %v8537 = vsub.f32 %v7280, %v8189
    %v8538 = vsub.f32 %v7992, %v8190
    %v8539 = vsub.f32 %v5859, %v8187
    %v8540 = vsub.f32 %v6571, %v8188
    %v8541 = vsub.f32 %v7283, %v8189
    %v8542 = vsub.f32 %v7995, %v8190
    %v8543 = vsub.f32 %v5861, %v8187
    %v8544 = vsub.f32 %v6573, %v8188
    %v8545 = vsub.f32 %v7285, %v8189
    %v8546 = vsub.f32 %v7997, %v8190
    %v8547 = vsub.f32 %v5864, %v8187
    %v8548 = vsub.f32 %v6576, %v8188
    %v8549 = vsub.f32 %v7288, %v8189
    %v8550 = vsub.f32 %v8000, %v8190
    %v8551 = vsub.f32 %v5866, %v8187
    %v8552 = vsub.f32 %v6578, %v8188
    %v8553 = vsub.f32 %v7290, %v8189
    %v8554 = vsub.f32 %v8002, %v8190
    %v8555 = vsub.f32 %v5869, %v8187
    %v8556 = vsub.f32 %v6581, %v8188
    %v8557 = vsub.f32 %v7293, %v8189
    %v8558 = vsub.f32 %v8005, %v8190
    %v8559 = vsub.f32 %v5871, %v8187
    %v8560 = vsub.f32 %v6583, %v8188
    %v8561 = vsub.f32 %v7295, %v8189
    %v8562 = vsub.f32 %v8007, %v8190
    %v8563 = vsub.f32 %v5874, %v8187
    %v8564 = vsub.f32 %v6586, %v8188
    %v8565 = vsub.f32 %v7298, %v8189
    %v8566 = vsub.f32 %v8010, %v8190
    %v8567 = vsub.f32 %v5876, %v8187
    %v8568 = vsub.f32 %v6588, %v8188
    %v8569 = vsub.f32 %v7300, %v8189
    %v8570 = vsub.f32 %v8012, %v8190
    %v8571 = vsub.f32 %v5879, %v8187
    %v8572 = vsub.f32 %v6591, %v8188
    %v8573 = vsub.f32 %v7303, %v8189
    %v8574 = vsub.f32 %v8015, %v8190
    %v8575 = vsub.f32 %v5881, %v8187
    %v8576 = vsub.f32 %v6593, %v8188
    %v8577 = vsub.f32 %v7305, %v8189
    %v8578 = vsub.f32 %v8017, %v8190
    %v8579 = vsub.f32 %v5884, %v8187
    %v8580 = vsub.f32 %v6596, %v8188
    %v8581 = vsub.f32 %v7308, %v8189
    %v8582 = vsub.f32 %v8020, %v8190
    %v8583 = vsub.f32 %v5886, %v8187
    %v8584 = vsub.f32 %v6598, %v8188
    %v8585 = vsub.f32 %v7310, %v8189
    %v8586 = vsub.f32 %v8022, %v8190
    %v8587 = vsub.f32 %v5889, %v8187
    %v8588 = vsub.f32 %v6601, %v8188
    %v8589 = vsub.f32 %v7313, %v8189
    %v8590 = vsub.f32 %v8025, %v8190
    %v8591 = vsub.f32 %v5891, %v8187
    %v8592 = vsub.f32 %v6603, %v8188
    %v8593 = vsub.f32 %v7315, %v8189
    %v8594 = vsub.f32 %v8027, %v8190
    %v8595 = vsub.f32 %v5894, %v8187
    %v8596 = vsub.f32 %v6606, %v8188
    %v8597 = vsub.f32 %v7318, %v8189
    %v8598 = vsub.f32 %v8030, %v8190
    %v8599 = vsub.f32 %v5896, %v8187
    %v8600 = vsub.f32 %v6608, %v8188
    %v8601 = vsub.f32 %v7320, %v8189
    %v8602 = vsub.f32 %v8032, %v8190
    %v8603 = vsub.f32 %v5899, %v8187
    %v8604 = vsub.f32 %v6611, %v8188
    %v8605 = vsub.f32 %v7323, %v8189
    %v8606 = vsub.f32 %v8035, %v8190
    %v8607 = vsub.f32 %v5901, %v8187
    %v8608 = vsub.f32 %v6613, %v8188
    %v8609 = vsub.f32 %v7325, %v8189
    %v8610 = vsub.f32 %v8037, %v8190
    %v8611 = vadd.f32 %v8479, 1e-05
    %v8612 = vadd.f32 %v8480, 1e-05
    %v8613 = vadd.f32 %v8481, 1e-05
    %v8614 = vadd.f32 %v8482, 1e-05
    %v8615 = vrsqrt.pop %v8611
    %v8616 = vmul.f32 %v8615, %v8611
    %v8617 = vmul.f32 %v8616, %v8615
    %v8618 = vmul.f32 0.5, %v8617
    %v8619 = vsub.f32 1.5, %v8618
    %v8620 = vmul.f32 %v8615, %v8619
    %vm8621 = vweird.f32 %v8611
    %vm8622 = vweird.f32 %v8615
    %vm8623 = vmor %vm8621, %vm8622
    %v8624 = vsel %vm8623, %v8615, %v8620
    %v8625 = vrsqrt.pop %v8612
    %v8626 = vmul.f32 %v8625, %v8612
    %v8627 = vmul.f32 %v8626, %v8625
    %v8628 = vmul.f32 0.5, %v8627
    %v8629 = vsub.f32 1.5, %v8628
    %v8630 = vmul.f32 %v8625, %v8629
    %vm8631 = vweird.f32 %v8612
    %vm8632 = vweird.f32 %v8625
    %vm8633 = vmor %vm8631, %vm8632
    %v8634 = vsel %vm8633, %v8625, %v8630
    %v8635 = vrsqrt.pop %v8613
    %v8636 = vmul.f32 %v8635, %v8613
    %v8637 = vmul.f32 %v8636, %v8635
    %v8638 = vmul.f32 0.5, %v8637
    %v8639 = vsub.f32 1.5, %v8638
    %v8640 = vmul.f32 %v8635, %v8639
    %vm8641 = vweird.f32 %v8613
    %vm8642 = vweird.f32 %v8635
    %vm8643 = vmor %vm8641, %vm8642
    %v8644 = vsel %vm8643, %v8635, %v8640
    %v8645 = vrsqrt.pop %v8614
    %v8646 = vmul.f32 %v8645, %v8614
    %v8647 = vmul.f32 %v8646, %v8645
    %v8648 = vmul.f32 0.5, %v8647
    %v8649 = vsub.f32 1.5, %v8648
    %v8650 = vmul.f32 %v8645, %v8649
    %vm8651 = vweird.f32 %v8614
    %vm8652 = vweird.f32 %v8645
    %vm8653 = vmor %vm8651, %vm8652
    %v8654 = vsel %vm8653, %v8645, %v8650
    %v8655 = vmul.f32 %v8483, %v8624
    %v8656 = vmul.f32 %v8484, %v8634
    %v8657 = vmul.f32 %v8485, %v8644
    %v8658 = vmul.f32 %v8486, %v8654
    %v8659 = vmul.f32 %v8487, %v8624
    %v8660 = vmul.f32 %v8488, %v8634
    %v8661 = vmul.f32 %v8489, %v8644
    %v8662 = vmul.f32 %v8490, %v8654
    %v8663 = vmul.f32 %v8491, %v8624
    %v8664 = vmul.f32 %v8492, %v8634
    %v8665 = vmul.f32 %v8493, %v8644
    %v8666 = vmul.f32 %v8494, %v8654
    %v8667 = vmul.f32 %v8495, %v8624
    %v8668 = vmul.f32 %v8496, %v8634
    %v8669 = vmul.f32 %v8497, %v8644
    %v8670 = vmul.f32 %v8498, %v8654
    %v8671 = vmul.f32 %v8499, %v8624
    %v8672 = vmul.f32 %v8500, %v8634
    %v8673 = vmul.f32 %v8501, %v8644
    %v8674 = vmul.f32 %v8502, %v8654
    %v8675 = vmul.f32 %v8503, %v8624
    %v8676 = vmul.f32 %v8504, %v8634
    %v8677 = vmul.f32 %v8505, %v8644
    %v8678 = vmul.f32 %v8506, %v8654
    %v8679 = vmul.f32 %v8507, %v8624
    %v8680 = vmul.f32 %v8508, %v8634
    %v8681 = vmul.f32 %v8509, %v8644
    %v8682 = vmul.f32 %v8510, %v8654
    %v8683 = vmul.f32 %v8511, %v8624
    %v8684 = vmul.f32 %v8512, %v8634
    %v8685 = vmul.f32 %v8513, %v8644
    %v8686 = vmul.f32 %v8514, %v8654
    %v8687 = vmul.f32 %v8515, %v8624
    %v8688 = vmul.f32 %v8516, %v8634
    %v8689 = vmul.f32 %v8517, %v8644
    %v8690 = vmul.f32 %v8518, %v8654
    %v8691 = vmul.f32 %v8519, %v8624
    %v8692 = vmul.f32 %v8520, %v8634
    %v8693 = vmul.f32 %v8521, %v8644
    %v8694 = vmul.f32 %v8522, %v8654
    %v8695 = vmul.f32 %v8523, %v8624
    %v8696 = vmul.f32 %v8524, %v8634
    %v8697 = vmul.f32 %v8525, %v8644
    %v8698 = vmul.f32 %v8526, %v8654
    %v8699 = vmul.f32 %v8527, %v8624
    %v8700 = vmul.f32 %v8528, %v8634
    %v8701 = vmul.f32 %v8529, %v8644
    %v8702 = vmul.f32 %v8530, %v8654
    %v8703 = vmul.f32 %v8531, %v8624
    %v8704 = vmul.f32 %v8532, %v8634
    %v8705 = vmul.f32 %v8533, %v8644
    %v8706 = vmul.f32 %v8534, %v8654
    %v8707 = vmul.f32 %v8535, %v8624
    %v8708 = vmul.f32 %v8536, %v8634
    %v8709 = vmul.f32 %v8537, %v8644
    %v8710 = vmul.f32 %v8538, %v8654
    %v8711 = vmul.f32 %v8539, %v8624
    %v8712 = vmul.f32 %v8540, %v8634
    %v8713 = vmul.f32 %v8541, %v8644
    %v8714 = vmul.f32 %v8542, %v8654
    %v8715 = vmul.f32 %v8543, %v8624
    %v8716 = vmul.f32 %v8544, %v8634
    %v8717 = vmul.f32 %v8545, %v8644
    %v8718 = vmul.f32 %v8546, %v8654
    %v8719 = vmul.f32 %v8547, %v8624
    %v8720 = vmul.f32 %v8548, %v8634
    %v8721 = vmul.f32 %v8549, %v8644
    %v8722 = vmul.f32 %v8550, %v8654
    %v8723 = vmul.f32 %v8551, %v8624
    %v8724 = vmul.f32 %v8552, %v8634
    %v8725 = vmul.f32 %v8553, %v8644
    %v8726 = vmul.f32 %v8554, %v8654
    %v8727 = vmul.f32 %v8555, %v8624
    %v8728 = vmul.f32 %v8556, %v8634
    %v8729 = vmul.f32 %v8557, %v8644
    %v8730 = vmul.f32 %v8558, %v8654
    %v8731 = vmul.f32 %v8559, %v8624
    %v8732 = vmul.f32 %v8560, %v8634
    %v8733 = vmul.f32 %v8561, %v8644
    %v8734 = vmul.f32 %v8562, %v8654
    %v8735 = vmul.f32 %v8563, %v8624
    %v8736 = vmul.f32 %v8564, %v8634
    %v8737 = vmul.f32 %v8565, %v8644
    %v8738 = vmul.f32 %v8566, %v8654
    %v8739 = vmul.f32 %v8567, %v8624
    %v8740 = vmul.f32 %v8568, %v8634
    %v8741 = vmul.f32 %v8569, %v8644
    %v8742 = vmul.f32 %v8570, %v8654
    %v8743 = vmul.f32 %v8571, %v8624
    %v8744 = vmul.f32 %v8572, %v8634
    %v8745 = vmul.f32 %v8573, %v8644
    %v8746 = vmul.f32 %v8574, %v8654
    %v8747 = vmul.f32 %v8575, %v8624
    %v8748 = vmul.f32 %v8576, %v8634
    %v8749 = vmul.f32 %v8577, %v8644
    %v8750 = vmul.f32 %v8578, %v8654
    %v8751 = vmul.f32 %v8579, %v8624
    %v8752 = vmul.f32 %v8580, %v8634
    %v8753 = vmul.f32 %v8581, %v8644
    %v8754 = vmul.f32 %v8582, %v8654
    %v8755 = vmul.f32 %v8583, %v8624
    %v8756 = vmul.f32 %v8584, %v8634
    %v8757 = vmul.f32 %v8585, %v8644
    %v8758 = vmul.f32 %v8586, %v8654
    %v8759 = vmul.f32 %v8587, %v8624
    %v8760 = vmul.f32 %v8588, %v8634
    %v8761 = vmul.f32 %v8589, %v8644
    %v8762 = vmul.f32 %v8590, %v8654
    %v8763 = vmul.f32 %v8591, %v8624
    %v8764 = vmul.f32 %v8592, %v8634
    %v8765 = vmul.f32 %v8593, %v8644
    %v8766 = vmul.f32 %v8594, %v8654
    %v8767 = vmul.f32 %v8595, %v8624
    %v8768 = vmul.f32 %v8596, %v8634
    %v8769 = vmul.f32 %v8597, %v8644
    %v8770 = vmul.f32 %v8598, %v8654
    %v8771 = vmul.f32 %v8599, %v8624
    %v8772 = vmul.f32 %v8600, %v8634
    %v8773 = vmul.f32 %v8601, %v8644
    %v8774 = vmul.f32 %v8602, %v8654
    %v8775 = vmul.f32 %v8603, %v8624
    %v8776 = vmul.f32 %v8604, %v8634
    %v8777 = vmul.f32 %v8605, %v8644
    %v8778 = vmul.f32 %v8606, %v8654
    %v8779 = vmul.f32 %v8607, %v8624
    %v8780 = vmul.f32 %v8608, %v8634
    %v8781 = vmul.f32 %v8609, %v8644
    %v8782 = vmul.f32 %v8610, %v8654
    %v8783 = vld [vmem:[%s5] sm:$0xf]
    %v8785 = vperm.slane %v8783, 0
    %v8786 = vperm.slane %v8783, 1
    %v8787 = vperm.slane %v8783, 2
    %v8788 = vperm.slane %v8783, 3
    %v8793 = vmul.f32 %v8655, %v8785
    %v8794 = vmul.f32 %v8656, %v8786
    %v8795 = vmul.f32 %v8657, %v8787
    %v8796 = vmul.f32 %v8658, %v8788
    %v8797 = vmul.f32 %v8659, %v8785
    %v8798 = vmul.f32 %v8660, %v8786
    %v8799 = vmul.f32 %v8661, %v8787
    %v8800 = vmul.f32 %v8662, %v8788
    %v8801 = vmul.f32 %v8663, %v8785
    %v8802 = vmul.f32 %v8664, %v8786
    %v8803 = vmul.f32 %v8665, %v8787
    %v8804 = vmul.f32 %v8666, %v8788
    %v8805 = vmul.f32 %v8667, %v8785
    %v8806 = vmul.f32 %v8668, %v8786
    %v8807 = vmul.f32 %v8669, %v8787
    %v8808 = vmul.f32 %v8670, %v8788
    %v8809 = vmul.f32 %v8671, %v8785
    %v8810 = vmul.f32 %v8672, %v8786
    %v8811 = vmul.f32 %v8673, %v8787
    %v8812 = vmul.f32 %v8674, %v8788
    %v8813 = vmul.f32 %v8675, %v8785
    %v8814 = vmul.f32 %v8676, %v8786
    %v8815 = vmul.f32 %v8677, %v8787
    %v8816 = vmul.f32 %v8678, %v8788
    %v8817 = vmul.f32 %v8679, %v8785
    %v8818 = vmul.f32 %v8680, %v8786
    %v8819 = vmul.f32 %v8681, %v8787
    %v8820 = vmul.f32 %v8682, %v8788
    %v8821 = vmul.f32 %v8683, %v8785
    %v8822 = vmul.f32 %v8684, %v8786
    %v8823 = vmul.f32 %v8685, %v8787
    %v8824 = vmul.f32 %v8686, %v8788
    %v8825 = vmul.f32 %v8687, %v8785
    %v8826 = vmul.f32 %v8688, %v8786
    %v8827 = vmul.f32 %v8689, %v8787
    %v8828 = vmul.f32 %v8690, %v8788
    %v8829 = vmul.f32 %v8691, %v8785
    %v8830 = vmul.f32 %v8692, %v8786
    %v8831 = vmul.f32 %v8693, %v8787
    %v8832 = vmul.f32 %v8694, %v8788
    %v8833 = vmul.f32 %v8695, %v8785
    %v8834 = vmul.f32 %v8696, %v8786
    %v8835 = vmul.f32 %v8697, %v8787
    %v8836 = vmul.f32 %v8698, %v8788
    %v8837 = vmul.f32 %v8699, %v8785
    %v8838 = vmul.f32 %v8700, %v8786
    %v8839 = vmul.f32 %v8701, %v8787
    %v8840 = vmul.f32 %v8702, %v8788
    %v8841 = vmul.f32 %v8703, %v8785
    %v8842 = vmul.f32 %v8704, %v8786
    %v8843 = vmul.f32 %v8705, %v8787
    %v8844 = vmul.f32 %v8706, %v8788
    %v8845 = vmul.f32 %v8707, %v8785
    %v8846 = vmul.f32 %v8708, %v8786
    %v8847 = vmul.f32 %v8709, %v8787
    %v8848 = vmul.f32 %v8710, %v8788
    %v8849 = vmul.f32 %v8711, %v8785
    %v8850 = vmul.f32 %v8712, %v8786
    %v8851 = vmul.f32 %v8713, %v8787
    %v8852 = vmul.f32 %v8714, %v8788
    %v8853 = vmul.f32 %v8715, %v8785
    %v8854 = vmul.f32 %v8716, %v8786
    %v8855 = vmul.f32 %v8717, %v8787
    %v8856 = vmul.f32 %v8718, %v8788
    %v8857 = vmul.f32 %v8719, %v8785
    %v8858 = vmul.f32 %v8720, %v8786
    %v8859 = vmul.f32 %v8721, %v8787
    %v8860 = vmul.f32 %v8722, %v8788
    %v8861 = vmul.f32 %v8723, %v8785
    %v8862 = vmul.f32 %v8724, %v8786
    %v8863 = vmul.f32 %v8725, %v8787
    %v8864 = vmul.f32 %v8726, %v8788
    %v8865 = vmul.f32 %v8727, %v8785
    %v8866 = vmul.f32 %v8728, %v8786
    %v8867 = vmul.f32 %v8729, %v8787
    %v8868 = vmul.f32 %v8730, %v8788
    %v8869 = vmul.f32 %v8731, %v8785
    %v8870 = vmul.f32 %v8732, %v8786
    %v8871 = vmul.f32 %v8733, %v8787
    %v8872 = vmul.f32 %v8734, %v8788
    %v8873 = vmul.f32 %v8735, %v8785
    %v8874 = vmul.f32 %v8736, %v8786
    %v8875 = vmul.f32 %v8737, %v8787
    %v8876 = vmul.f32 %v8738, %v8788
    %v8877 = vmul.f32 %v8739, %v8785
    %v8878 = vmul.f32 %v8740, %v8786
    %v8879 = vmul.f32 %v8741, %v8787
    %v8880 = vmul.f32 %v8742, %v8788
    %v8881 = vmul.f32 %v8743, %v8785
    %v8882 = vmul.f32 %v8744, %v8786
    %v8883 = vmul.f32 %v8745, %v8787
    %v8884 = vmul.f32 %v8746, %v8788
    %v8885 = vmul.f32 %v8747, %v8785
    %v8886 = vmul.f32 %v8748, %v8786
    %v8887 = vmul.f32 %v8749, %v8787
    %v8888 = vmul.f32 %v8750, %v8788
    %v8889 = vmul.f32 %v8751, %v8785
    %v8890 = vmul.f32 %v8752, %v8786
    %v8891 = vmul.f32 %v8753, %v8787
    %v8892 = vmul.f32 %v8754, %v8788
    %v8893 = vmul.f32 %v8755, %v8785
    %v8894 = vmul.f32 %v8756, %v8786
    %v8895 = vmul.f32 %v8757, %v8787
    %v8896 = vmul.f32 %v8758, %v8788
    %v8897 = vmul.f32 %v8759, %v8785
    %v8898 = vmul.f32 %v8760, %v8786
    %v8899 = vmul.f32 %v8761, %v8787
    %v8900 = vmul.f32 %v8762, %v8788
    %v8901 = vmul.f32 %v8763, %v8785
    %v8902 = vmul.f32 %v8764, %v8786
    %v8903 = vmul.f32 %v8765, %v8787
    %v8904 = vmul.f32 %v8766, %v8788
    %v8905 = vmul.f32 %v8767, %v8785
    %v8906 = vmul.f32 %v8768, %v8786
    %v8907 = vmul.f32 %v8769, %v8787
    %v8908 = vmul.f32 %v8770, %v8788
    %v8909 = vmul.f32 %v8771, %v8785
    %v8910 = vmul.f32 %v8772, %v8786
    %v8911 = vmul.f32 %v8773, %v8787
    %v8912 = vmul.f32 %v8774, %v8788
    %v8913 = vmul.f32 %v8775, %v8785
    %v8914 = vmul.f32 %v8776, %v8786
    %v8915 = vmul.f32 %v8777, %v8787
    %v8916 = vmul.f32 %v8778, %v8788
    %v8917 = vmul.f32 %v8779, %v8785
    %v8918 = vmul.f32 %v8780, %v8786
    %v8919 = vmul.f32 %v8781, %v8787
    %v8920 = vmul.f32 %v8782, %v8788
    %v8921 = vld [vmem:[%s6] sm:$0xf]
    %v8923 = vperm.slane %v8921, 0
    %v8924 = vperm.slane %v8921, 1
    %v8925 = vperm.slane %v8921, 2
    %v8926 = vperm.slane %v8921, 3
    %v8931 = vadd.f32 %v8793, %v8923
    %v8932 = vadd.f32 %v8794, %v8924
    %v8933 = vadd.f32 %v8795, %v8925
    %v8934 = vadd.f32 %v8796, %v8926
    %v8935 = vadd.f32 %v8797, %v8923
    %v8936 = vadd.f32 %v8798, %v8924
    %v8937 = vadd.f32 %v8799, %v8925
    %v8938 = vadd.f32 %v8800, %v8926
    %v8939 = vadd.f32 %v8801, %v8923
    %v8940 = vadd.f32 %v8802, %v8924
    %v8941 = vadd.f32 %v8803, %v8925
    %v8942 = vadd.f32 %v8804, %v8926
    %v8943 = vadd.f32 %v8805, %v8923
    %v8944 = vadd.f32 %v8806, %v8924
    %v8945 = vadd.f32 %v8807, %v8925
    %v8946 = vadd.f32 %v8808, %v8926
    %v8947 = vadd.f32 %v8809, %v8923
    %v8948 = vadd.f32 %v8810, %v8924
    %v8949 = vadd.f32 %v8811, %v8925
    %v8950 = vadd.f32 %v8812, %v8926
    %v8951 = vadd.f32 %v8813, %v8923
    %v8952 = vadd.f32 %v8814, %v8924
    %v8953 = vadd.f32 %v8815, %v8925
    %v8954 = vadd.f32 %v8816, %v8926
    %v8955 = vadd.f32 %v8817, %v8923
    %v8956 = vadd.f32 %v8818, %v8924
    %v8957 = vadd.f32 %v8819, %v8925
    %v8958 = vadd.f32 %v8820, %v8926
    %v8959 = vadd.f32 %v8821, %v8923
    %v8960 = vadd.f32 %v8822, %v8924
    %v8961 = vadd.f32 %v8823, %v8925
    %v8962 = vadd.f32 %v8824, %v8926
    %v8963 = vadd.f32 %v8825, %v8923
    %v8964 = vadd.f32 %v8826, %v8924
    %v8965 = vadd.f32 %v8827, %v8925
    %v8966 = vadd.f32 %v8828, %v8926
    %v8967 = vadd.f32 %v8829, %v8923
    %v8968 = vadd.f32 %v8830, %v8924
    %v8969 = vadd.f32 %v8831, %v8925
    %v8970 = vadd.f32 %v8832, %v8926
    %v8971 = vadd.f32 %v8833, %v8923
    %v8972 = vadd.f32 %v8834, %v8924
    %v8973 = vadd.f32 %v8835, %v8925
    %v8974 = vadd.f32 %v8836, %v8926
    %v8975 = vadd.f32 %v8837, %v8923
    %v8976 = vadd.f32 %v8838, %v8924
    %v8977 = vadd.f32 %v8839, %v8925
    %v8978 = vadd.f32 %v8840, %v8926
    %v8979 = vadd.f32 %v8841, %v8923
    %v8980 = vadd.f32 %v8842, %v8924
    %v8981 = vadd.f32 %v8843, %v8925
    %v8982 = vadd.f32 %v8844, %v8926
    %v8983 = vadd.f32 %v8845, %v8923
    %v8984 = vadd.f32 %v8846, %v8924
    %v8985 = vadd.f32 %v8847, %v8925
    %v8986 = vadd.f32 %v8848, %v8926
    %v8987 = vadd.f32 %v8849, %v8923
    %v8988 = vadd.f32 %v8850, %v8924
    %v8989 = vadd.f32 %v8851, %v8925
    %v8990 = vadd.f32 %v8852, %v8926
    %v8991 = vadd.f32 %v8853, %v8923
    %v8992 = vadd.f32 %v8854, %v8924
    %v8993 = vadd.f32 %v8855, %v8925
    %v8994 = vadd.f32 %v8856, %v8926
    %v8995 = vadd.f32 %v8857, %v8923
    %v8996 = vadd.f32 %v8858, %v8924
    %v8997 = vadd.f32 %v8859, %v8925
    %v8998 = vadd.f32 %v8860, %v8926
    %v8999 = vadd.f32 %v8861, %v8923
    %v9000 = vadd.f32 %v8862, %v8924
    %v9001 = vadd.f32 %v8863, %v8925
    %v9002 = vadd.f32 %v8864, %v8926
    %v9003 = vadd.f32 %v8865, %v8923
    %v9004 = vadd.f32 %v8866, %v8924
    %v9005 = vadd.f32 %v8867, %v8925
    %v9006 = vadd.f32 %v8868, %v8926
    %v9007 = vadd.f32 %v8869, %v8923
    %v9008 = vadd.f32 %v8870, %v8924
    %v9009 = vadd.f32 %v8871, %v8925
    %v9010 = vadd.f32 %v8872, %v8926
    %v9011 = vadd.f32 %v8873, %v8923
    %v9012 = vadd.f32 %v8874, %v8924
    %v9013 = vadd.f32 %v8875, %v8925
    %v9014 = vadd.f32 %v8876, %v8926
    %v9015 = vadd.f32 %v8877, %v8923
    %v9016 = vadd.f32 %v8878, %v8924
    %v9017 = vadd.f32 %v8879, %v8925
    %v9018 = vadd.f32 %v8880, %v8926
    %v9019 = vadd.f32 %v8881, %v8923
    %v9020 = vadd.f32 %v8882, %v8924
    %v9021 = vadd.f32 %v8883, %v8925
    %v9022 = vadd.f32 %v8884, %v8926
    %v9023 = vadd.f32 %v8885, %v8923
    %v9024 = vadd.f32 %v8886, %v8924
    %v9025 = vadd.f32 %v8887, %v8925
    %v9026 = vadd.f32 %v8888, %v8926
    %v9027 = vadd.f32 %v8889, %v8923
    %v9028 = vadd.f32 %v8890, %v8924
    %v9029 = vadd.f32 %v8891, %v8925
    %v9030 = vadd.f32 %v8892, %v8926
    %v9031 = vadd.f32 %v8893, %v8923
    %v9032 = vadd.f32 %v8894, %v8924
    %v9033 = vadd.f32 %v8895, %v8925
    %v9034 = vadd.f32 %v8896, %v8926
    %v9035 = vadd.f32 %v8897, %v8923
    %v9036 = vadd.f32 %v8898, %v8924
    %v9037 = vadd.f32 %v8899, %v8925
    %v9038 = vadd.f32 %v8900, %v8926
    %v9039 = vadd.f32 %v8901, %v8923
    %v9040 = vadd.f32 %v8902, %v8924
    %v9041 = vadd.f32 %v8903, %v8925
    %v9042 = vadd.f32 %v8904, %v8926
    %v9043 = vadd.f32 %v8905, %v8923
    %v9044 = vadd.f32 %v8906, %v8924
    %v9045 = vadd.f32 %v8907, %v8925
    %v9046 = vadd.f32 %v8908, %v8926
    %v9047 = vadd.f32 %v8909, %v8923
    %v9048 = vadd.f32 %v8910, %v8924
    %v9049 = vadd.f32 %v8911, %v8925
    %v9050 = vadd.f32 %v8912, %v8926
    %v9051 = vadd.f32 %v8913, %v8923
    %v9052 = vadd.f32 %v8914, %v8924
    %v9053 = vadd.f32 %v8915, %v8925
    %v9054 = vadd.f32 %v8916, %v8926
    %v9055 = vadd.f32 %v8917, %v8923
    %v9056 = vadd.f32 %v8918, %v8924
    %v9057 = vadd.f32 %v8919, %v8925
    %v9058 = vadd.f32 %v8920, %v8926
    %v9059 = vmul.f32 %v8931, 0.2
    %v9060 = vmul.f32 %v8932, 0.2
    %v9061 = vmul.f32 %v8933, 0.2
    %v9062 = vmul.f32 %v8934, 0.2
    %v9063 = vmul.f32 %v8935, 0.2
    %v9064 = vmul.f32 %v8936, 0.2
    %v9065 = vmul.f32 %v8937, 0.2
    %v9066 = vmul.f32 %v8938, 0.2
    %v9067 = vmul.f32 %v8939, 0.2
    %v9068 = vmul.f32 %v8940, 0.2
    %v9069 = vmul.f32 %v8941, 0.2
    %v9070 = vmul.f32 %v8942, 0.2
    %v9071 = vmul.f32 %v8943, 0.2
    %v9072 = vmul.f32 %v8944, 0.2
    %v9073 = vmul.f32 %v8945, 0.2
    %v9074 = vmul.f32 %v8946, 0.2
    %v9075 = vmul.f32 %v8947, 0.2
    %v9076 = vmul.f32 %v8948, 0.2
    %v9077 = vmul.f32 %v8949, 0.2
    %v9078 = vmul.f32 %v8950, 0.2
    %v9079 = vmul.f32 %v8951, 0.2
    %v9080 = vmul.f32 %v8952, 0.2
    %v9081 = vmul.f32 %v8953, 0.2
    %v9082 = vmul.f32 %v8954, 0.2
    %v9083 = vmul.f32 %v8955, 0.2
    %v9084 = vmul.f32 %v8956, 0.2
    %v9085 = vmul.f32 %v8957, 0.2
    %v9086 = vmul.f32 %v8958, 0.2
    %v9087 = vmul.f32 %v8959, 0.2
    %v9088 = vmul.f32 %v8960, 0.2
    %v9089 = vmul.f32 %v8961, 0.2
    %v9090 = vmul.f32 %v8962, 0.2
    %v9091 = vmul.f32 %v8963, 0.2
    %v9092 = vmul.f32 %v8964, 0.2
    %v9093 = vmul.f32 %v8965, 0.2
    %v9094 = vmul.f32 %v8966, 0.2
    %v9095 = vmul.f32 %v8967, 0.2
    %v9096 = vmul.f32 %v8968, 0.2
    %v9097 = vmul.f32 %v8969, 0.2
    %v9098 = vmul.f32 %v8970, 0.2
    %v9099 = vmul.f32 %v8971, 0.2
    %v9100 = vmul.f32 %v8972, 0.2
    %v9101 = vmul.f32 %v8973, 0.2
    %v9102 = vmul.f32 %v8974, 0.2
    %v9103 = vmul.f32 %v8975, 0.2
    %v9104 = vmul.f32 %v8976, 0.2
    %v9105 = vmul.f32 %v8977, 0.2
    %v9106 = vmul.f32 %v8978, 0.2
    %v9107 = vmul.f32 %v8979, 0.2
    %v9108 = vmul.f32 %v8980, 0.2
    %v9109 = vmul.f32 %v8981, 0.2
    %v9110 = vmul.f32 %v8982, 0.2
    %v9111 = vmul.f32 %v8983, 0.2
    %v9112 = vmul.f32 %v8984, 0.2
    %v9113 = vmul.f32 %v8985, 0.2
    %v9114 = vmul.f32 %v8986, 0.2
    %v9115 = vmul.f32 %v8987, 0.2
    %v9116 = vmul.f32 %v8988, 0.2
    %v9117 = vmul.f32 %v8989, 0.2
    %v9118 = vmul.f32 %v8990, 0.2
    %v9119 = vmul.f32 %v8991, 0.2
    %v9120 = vmul.f32 %v8992, 0.2
    %v9121 = vmul.f32 %v8993, 0.2
    %v9122 = vmul.f32 %v8994, 0.2
    %v9123 = vmul.f32 %v8995, 0.2
    %v9124 = vmul.f32 %v8996, 0.2
    %v9125 = vmul.f32 %v8997, 0.2
    %v9126 = vmul.f32 %v8998, 0.2
    %v9127 = vmul.f32 %v8999, 0.2
    %v9128 = vmul.f32 %v9000, 0.2
    %v9129 = vmul.f32 %v9001, 0.2
    %v9130 = vmul.f32 %v9002, 0.2
    %v9131 = vmul.f32 %v9003, 0.2
    %v9132 = vmul.f32 %v9004, 0.2
    %v9133 = vmul.f32 %v9005, 0.2
    %v9134 = vmul.f32 %v9006, 0.2
    %v9135 = vmul.f32 %v9007, 0.2
    %v9136 = vmul.f32 %v9008, 0.2
    %v9137 = vmul.f32 %v9009, 0.2
    %v9138 = vmul.f32 %v9010, 0.2
    %v9139 = vmul.f32 %v9011, 0.2
    %v9140 = vmul.f32 %v9012, 0.2
    %v9141 = vmul.f32 %v9013, 0.2
    %v9142 = vmul.f32 %v9014, 0.2
    %v9143 = vmul.f32 %v9015, 0.2
    %v9144 = vmul.f32 %v9016, 0.2
    %v9145 = vmul.f32 %v9017, 0.2
    %v9146 = vmul.f32 %v9018, 0.2
    %v9147 = vmul.f32 %v9019, 0.2
    %v9148 = vmul.f32 %v9020, 0.2
    %v9149 = vmul.f32 %v9021, 0.2
    %v9150 = vmul.f32 %v9022, 0.2
    %v9151 = vmul.f32 %v9023, 0.2
    %v9152 = vmul.f32 %v9024, 0.2
    %v9153 = vmul.f32 %v9025, 0.2
    %v9154 = vmul.f32 %v9026, 0.2
    %v9155 = vmul.f32 %v9027, 0.2
    %v9156 = vmul.f32 %v9028, 0.2
    %v9157 = vmul.f32 %v9029, 0.2
    %v9158 = vmul.f32 %v9030, 0.2
    %v9159 = vmul.f32 %v9031, 0.2
    %v9160 = vmul.f32 %v9032, 0.2
    %v9161 = vmul.f32 %v9033, 0.2
    %v9162 = vmul.f32 %v9034, 0.2
    %v9163 = vmul.f32 %v9035, 0.2
    %v9164 = vmul.f32 %v9036, 0.2
    %v9165 = vmul.f32 %v9037, 0.2
    %v9166 = vmul.f32 %v9038, 0.2
    %v9167 = vmul.f32 %v9039, 0.2
    %v9168 = vmul.f32 %v9040, 0.2
    %v9169 = vmul.f32 %v9041, 0.2
    %v9170 = vmul.f32 %v9042, 0.2
    %v9171 = vmul.f32 %v9043, 0.2
    %v9172 = vmul.f32 %v9044, 0.2
    %v9173 = vmul.f32 %v9045, 0.2
    %v9174 = vmul.f32 %v9046, 0.2
    %v9175 = vmul.f32 %v9047, 0.2
    %v9176 = vmul.f32 %v9048, 0.2
    %v9177 = vmul.f32 %v9049, 0.2
    %v9178 = vmul.f32 %v9050, 0.2
    %v9179 = vmul.f32 %v9051, 0.2
    %v9180 = vmul.f32 %v9052, 0.2
    %v9181 = vmul.f32 %v9053, 0.2
    %v9182 = vmul.f32 %v9054, 0.2
    %v9183 = vmul.f32 %v9055, 0.2
    %v9184 = vmul.f32 %v9056, 0.2
    %v9185 = vmul.f32 %v9057, 0.2
    %v9186 = vmul.f32 %v9058, 0.2
    %v9187 = vmax.f32 %v8931, %v9059
    %v9188 = vmax.f32 %v8932, %v9060
    %v9189 = vmax.f32 %v8933, %v9061
    %v9190 = vmax.f32 %v8934, %v9062
    %v9191 = vmax.f32 %v8935, %v9063
    %v9192 = vmax.f32 %v8936, %v9064
    %v9193 = vmax.f32 %v8937, %v9065
    %v9194 = vmax.f32 %v8938, %v9066
    %v9195 = vmax.f32 %v8939, %v9067
    %v9196 = vmax.f32 %v8940, %v9068
    %v9197 = vmax.f32 %v8941, %v9069
    %v9198 = vmax.f32 %v8942, %v9070
    %v9199 = vmax.f32 %v8943, %v9071
    %v9200 = vmax.f32 %v8944, %v9072
    %v9201 = vmax.f32 %v8945, %v9073
    %v9202 = vmax.f32 %v8946, %v9074
    %v9203 = vmax.f32 %v8947, %v9075
    %v9204 = vmax.f32 %v8948, %v9076
    %v9205 = vmax.f32 %v8949, %v9077
    %v9206 = vmax.f32 %v8950, %v9078
    %v9207 = vmax.f32 %v8951, %v9079
    %v9208 = vmax.f32 %v8952, %v9080
    %v9209 = vmax.f32 %v8953, %v9081
    %v9210 = vmax.f32 %v8954, %v9082
    %v9211 = vmax.f32 %v8955, %v9083
    %v9212 = vmax.f32 %v8956, %v9084
    %v9213 = vmax.f32 %v8957, %v9085
    %v9214 = vmax.f32 %v8958, %v9086
    %v9215 = vmax.f32 %v8959, %v9087
    %v9216 = vmax.f32 %v8960, %v9088
    %v9217 = vmax.f32 %v8961, %v9089
    %v9218 = vmax.f32 %v8962, %v9090
    %v9219 = vmax.f32 %v8963, %v9091
    %v9220 = vmax.f32 %v8964, %v9092
    %v9221 = vmax.f32 %v8965, %v9093
    %v9222 = vmax.f32 %v8966, %v9094
    %v9223 = vmax.f32 %v8967, %v9095
    %v9224 = vmax.f32 %v8968, %v9096
    %v9225 = vmax.f32 %v8969, %v9097
    %v9226 = vmax.f32 %v8970, %v9098
    %v9227 = vmax.f32 %v8971, %v9099
    %v9228 = vmax.f32 %v8972, %v9100
    %v9229 = vmax.f32 %v8973, %v9101
    %v9230 = vmax.f32 %v8974, %v9102
    %v9231 = vmax.f32 %v8975, %v9103
    %v9232 = vmax.f32 %v8976, %v9104
    %v9233 = vmax.f32 %v8977, %v9105
    %v9234 = vmax.f32 %v8978, %v9106
    %v9235 = vmax.f32 %v8979, %v9107
    %v9236 = vmax.f32 %v8980, %v9108
    %v9237 = vmax.f32 %v8981, %v9109
    %v9238 = vmax.f32 %v8982, %v9110
    %v9239 = vmax.f32 %v8983, %v9111
    %v9240 = vmax.f32 %v8984, %v9112
    %v9241 = vmax.f32 %v8985, %v9113
    %v9242 = vmax.f32 %v8986, %v9114
    %v9243 = vmax.f32 %v8987, %v9115
    %v9244 = vmax.f32 %v8988, %v9116
    %v9245 = vmax.f32 %v8989, %v9117
    %v9246 = vmax.f32 %v8990, %v9118
    %v9247 = vmax.f32 %v8991, %v9119
    %v9248 = vmax.f32 %v8992, %v9120
    %v9249 = vmax.f32 %v8993, %v9121
    %v9250 = vmax.f32 %v8994, %v9122
    %v9251 = vmax.f32 %v8995, %v9123
    %v9252 = vmax.f32 %v8996, %v9124
    %v9253 = vmax.f32 %v8997, %v9125
    %v9254 = vmax.f32 %v8998, %v9126
    %v9255 = vmax.f32 %v8999, %v9127
    %v9256 = vmax.f32 %v9000, %v9128
    %v9257 = vmax.f32 %v9001, %v9129
    %v9258 = vmax.f32 %v9002, %v9130
    %v9259 = vmax.f32 %v9003, %v9131
    %v9260 = vmax.f32 %v9004, %v9132
    %v9261 = vmax.f32 %v9005, %v9133
    %v9262 = vmax.f32 %v9006, %v9134
    %v9263 = vmax.f32 %v9007, %v9135
    %v9264 = vmax.f32 %v9008, %v9136
    %v9265 = vmax.f32 %v9009, %v9137
    %v9266 = vmax.f32 %v9010, %v9138
    %v9267 = vmax.f32 %v9011, %v9139
    %v9268 = vmax.f32 %v9012, %v9140
    %v9269 = vmax.f32 %v9013, %v9141
    %v9270 = vmax.f32 %v9014, %v9142
    %v9271 = vmax.f32 %v9015, %v9143
    %v9272 = vmax.f32 %v9016, %v9144
    %v9273 = vmax.f32 %v9017, %v9145
    %v9274 = vmax.f32 %v9018, %v9146
    %v9275 = vmax.f32 %v9019, %v9147
    %v9276 = vmax.f32 %v9020, %v9148
    %v9277 = vmax.f32 %v9021, %v9149
    %v9278 = vmax.f32 %v9022, %v9150
    %v9279 = vmax.f32 %v9023, %v9151
    %v9280 = vmax.f32 %v9024, %v9152
    %v9281 = vmax.f32 %v9025, %v9153
    %v9282 = vmax.f32 %v9026, %v9154
    %v9283 = vmax.f32 %v9027, %v9155
    %v9284 = vmax.f32 %v9028, %v9156
    %v9285 = vmax.f32 %v9029, %v9157
    %v9286 = vmax.f32 %v9030, %v9158
    %v9287 = vmax.f32 %v9031, %v9159
    %v9288 = vmax.f32 %v9032, %v9160
    %v9289 = vmax.f32 %v9033, %v9161
    %v9290 = vmax.f32 %v9034, %v9162
    %v9291 = vmax.f32 %v9035, %v9163
    %v9292 = vmax.f32 %v9036, %v9164
    %v9293 = vmax.f32 %v9037, %v9165
    %v9294 = vmax.f32 %v9038, %v9166
    %v9295 = vmax.f32 %v9039, %v9167
    %v9296 = vmax.f32 %v9040, %v9168
    %v9297 = vmax.f32 %v9041, %v9169
    %v9298 = vmax.f32 %v9042, %v9170
    %v9299 = vmax.f32 %v9043, %v9171
    %v9300 = vmax.f32 %v9044, %v9172
    %v9301 = vmax.f32 %v9045, %v9173
    %v9302 = vmax.f32 %v9046, %v9174
    %v9303 = vmax.f32 %v9047, %v9175
    %v9304 = vmax.f32 %v9048, %v9176
    %v9305 = vmax.f32 %v9049, %v9177
    %v9306 = vmax.f32 %v9050, %v9178
    %v9307 = vmax.f32 %v9051, %v9179
    %v9308 = vmax.f32 %v9052, %v9180
    %v9309 = vmax.f32 %v9053, %v9181
    %v9310 = vmax.f32 %v9054, %v9182
    %v9311 = vmax.f32 %v9055, %v9183
    %v9312 = vmax.f32 %v9056, %v9184
    %v9313 = vmax.f32 %v9057, %v9185
    %v9314 = vmax.f32 %v9058, %v9186
    %v9315 = vpack.c.bf16 %v9191, %v9187
    %v9316 = vpack.c.bf16 %v9192, %v9188
    %v9317 = vpack.c.bf16 %v9193, %v9189
    %v9318 = vpack.c.bf16 %v9194, %v9190
    %v9319 = vpack.c.bf16 %v9199, %v9195
    %v9320 = vpack.c.bf16 %v9200, %v9196
    %v9321 = vpack.c.bf16 %v9201, %v9197
    %v9322 = vpack.c.bf16 %v9202, %v9198
    %v9323 = vpack.c.bf16 %v9207, %v9203
    %v9324 = vpack.c.bf16 %v9208, %v9204
    %v9325 = vpack.c.bf16 %v9209, %v9205
    %v9326 = vpack.c.bf16 %v9210, %v9206
    %v9327 = vpack.c.bf16 %v9215, %v9211
    %v9328 = vpack.c.bf16 %v9216, %v9212
    %v9329 = vpack.c.bf16 %v9217, %v9213
    %v9330 = vpack.c.bf16 %v9218, %v9214
    %v9331 = vpack.c.bf16 %v9223, %v9219
    %v9332 = vpack.c.bf16 %v9224, %v9220
    %v9333 = vpack.c.bf16 %v9225, %v9221
    %v9334 = vpack.c.bf16 %v9226, %v9222
    %v9335 = vpack.c.bf16 %v9231, %v9227
    %v9336 = vpack.c.bf16 %v9232, %v9228
    %v9337 = vpack.c.bf16 %v9233, %v9229
    %v9338 = vpack.c.bf16 %v9234, %v9230
    %v9339 = vpack.c.bf16 %v9239, %v9235
    %v9340 = vpack.c.bf16 %v9240, %v9236
    %v9341 = vpack.c.bf16 %v9241, %v9237
    %v9342 = vpack.c.bf16 %v9242, %v9238
    %v9343 = vpack.c.bf16 %v9247, %v9243
    %v9344 = vpack.c.bf16 %v9248, %v9244
    %v9345 = vpack.c.bf16 %v9249, %v9245
    %v9346 = vpack.c.bf16 %v9250, %v9246
    %v9347 = vpack.c.bf16 %v9255, %v9251
    %v9348 = vpack.c.bf16 %v9256, %v9252
    %v9349 = vpack.c.bf16 %v9257, %v9253
    %v9350 = vpack.c.bf16 %v9258, %v9254
    %v9351 = vpack.c.bf16 %v9263, %v9259
    %v9352 = vpack.c.bf16 %v9264, %v9260
    %v9353 = vpack.c.bf16 %v9265, %v9261
    %v9354 = vpack.c.bf16 %v9266, %v9262
    %v9355 = vpack.c.bf16 %v9271, %v9267
    %v9356 = vpack.c.bf16 %v9272, %v9268
    %v9357 = vpack.c.bf16 %v9273, %v9269
    %v9358 = vpack.c.bf16 %v9274, %v9270
    %v9359 = vpack.c.bf16 %v9279, %v9275
    %v9360 = vpack.c.bf16 %v9280, %v9276
    %v9361 = vpack.c.bf16 %v9281, %v9277
    %v9362 = vpack.c.bf16 %v9282, %v9278
    %v9363 = vpack.c.bf16 %v9287, %v9283
    %v9364 = vpack.c.bf16 %v9288, %v9284
    %v9365 = vpack.c.bf16 %v9289, %v9285
    %v9366 = vpack.c.bf16 %v9290, %v9286
    %v9367 = vpack.c.bf16 %v9295, %v9291
    %v9368 = vpack.c.bf16 %v9296, %v9292
    %v9369 = vpack.c.bf16 %v9297, %v9293
    %v9370 = vpack.c.bf16 %v9298, %v9294
    %v9371 = vpack.c.bf16 %v9303, %v9299
    %v9372 = vpack.c.bf16 %v9304, %v9300
    %v9373 = vpack.c.bf16 %v9305, %v9301
    %v9374 = vpack.c.bf16 %v9306, %v9302
    %v9375 = vpack.c.bf16 %v9311, %v9307
    %v9376 = vpack.c.bf16 %v9312, %v9308
    %v9377 = vpack.c.bf16 %v9313, %v9309
    %v9378 = vpack.c.bf16 %v9314, %v9310
    %v9379 = vld [vmem:[#allocation4] sm:$0xff]
    %v9380 = vld [vmem:[#allocation4 + $0x8] sm:$0xff]
    %v9381 = vld [vmem:[#allocation4 + $0x10] sm:$0xff]
    %v9382 = vld [vmem:[#allocation4 + $0x18] sm:$0xff]
    %v9383 = vld [vmem:[#allocation4 + $0x20] sm:$0xff]
    %v9384 = vld [vmem:[#allocation4 + $0x28] sm:$0xff]
    %v9385 = vld [vmem:[#allocation4 + $0x30] sm:$0xff]
    %v9386 = vld [vmem:[#allocation4 + $0x38] sm:$0xff]
    %v9387 = vld [vmem:[#allocation4 + $0x40] sm:$0xff]
    %v9388 = vld [vmem:[#allocation4 + $0x48] sm:$0xff]
    %v9389 = vld [vmem:[#allocation4 + $0x50] sm:$0xff]
    %v9390 = vld [vmem:[#allocation4 + $0x58] sm:$0xff]
    %v9391 = vld [vmem:[#allocation4 + $0x60] sm:$0xff]
    %v9392 = vld [vmem:[#allocation4 + $0x68] sm:$0xff]
    %v9393 = vld [vmem:[#allocation4 + $0x70] sm:$0xff]
    %v9394 = vld [vmem:[#allocation4 + $0x78] sm:$0xff]
    %v9395 = vld [vmem:[#allocation4 + $0x80] sm:$0xff]
    %v9396 = vld [vmem:[#allocation4 + $0x88] sm:$0xff]
    %v9397 = vld [vmem:[#allocation4 + $0x90] sm:$0xff]
    %v9398 = vld [vmem:[#allocation4 + $0x98] sm:$0xff]
    %v9399 = vld [vmem:[#allocation4 + $0xa0] sm:$0xff]
    %v9400 = vld [vmem:[#allocation4 + $0xa8] sm:$0xff]
    %v9401 = vld [vmem:[#allocation4 + $0xb0] sm:$0xff]
    %v9402 = vld [vmem:[#allocation4 + $0xb8] sm:$0xff]
    %v9403 = vld [vmem:[#allocation4 + $0xc0] sm:$0xff]
    %v9404 = vld [vmem:[#allocation4 + $0xc8] sm:$0xff]
    %v9405 = vld [vmem:[#allocation4 + $0xd0] sm:$0xff]
    %v9406 = vld [vmem:[#allocation4 + $0xd8] sm:$0xff]
    %v9407 = vld [vmem:[#allocation4 + $0xe0] sm:$0xff]
    %v9408 = vld [vmem:[#allocation4 + $0xe8] sm:$0xff]
    %v9409 = vld [vmem:[#allocation4 + $0xf0] sm:$0xff]
    %v9410 = vld [vmem:[#allocation4 + $0xf8] sm:$0xff]
    %v9411 = vld [vmem:[#allocation4 + $0x100] sm:$0xff]
    %v9412 = vld [vmem:[#allocation4 + $0x108] sm:$0xff]
    %v9413 = vld [vmem:[#allocation4 + $0x110] sm:$0xff]
    %v9414 = vld [vmem:[#allocation4 + $0x118] sm:$0xff]
    %v9415 = vld [vmem:[#allocation4 + $0x120] sm:$0xff]
    %v9416 = vld [vmem:[#allocation4 + $0x128] sm:$0xff]
    %v9417 = vld [vmem:[#allocation4 + $0x130] sm:$0xff]
    %v9418 = vld [vmem:[#allocation4 + $0x138] sm:$0xff]
    %v9419 = vld [vmem:[#allocation4 + $0x140] sm:$0xff]
    %v9420 = vld [vmem:[#allocation4 + $0x148] sm:$0xff]
    %v9421 = vld [vmem:[#allocation4 + $0x150] sm:$0xff]
    %v9422 = vld [vmem:[#allocation4 + $0x158] sm:$0xff]
    %v9423 = vld [vmem:[#allocation4 + $0x160] sm:$0xff]
    %v9424 = vld [vmem:[#allocation4 + $0x168] sm:$0xff]
    %v9425 = vld [vmem:[#allocation4 + $0x170] sm:$0xff]
    %v9426 = vld [vmem:[#allocation4 + $0x178] sm:$0xff]
    %v9427 = vld [vmem:[#allocation4 + $0x180] sm:$0xff]
    %v9428 = vld [vmem:[#allocation4 + $0x188] sm:$0xff]
    %v9429 = vld [vmem:[#allocation4 + $0x190] sm:$0xff]
    %v9430 = vld [vmem:[#allocation4 + $0x198] sm:$0xff]
    %v9431 = vld [vmem:[#allocation4 + $0x1a0] sm:$0xff]
    %v9432 = vld [vmem:[#allocation4 + $0x1a8] sm:$0xff]
    %v9433 = vld [vmem:[#allocation4 + $0x1b0] sm:$0xff]
    %v9434 = vld [vmem:[#allocation4 + $0x1b8] sm:$0xff]
    %v9435 = vld [vmem:[#allocation4 + $0x1c0] sm:$0xff]
    %v9436 = vld [vmem:[#allocation4 + $0x1c8] sm:$0xff]
    %v9437 = vld [vmem:[#allocation4 + $0x1d0] sm:$0xff]
    %v9438 = vld [vmem:[#allocation4 + $0x1d8] sm:$0xff]
    %v9439 = vld [vmem:[#allocation4 + $0x1e0] sm:$0xff]
    %v9440 = vld [vmem:[#allocation4 + $0x1e8] sm:$0xff]
    %v9441 = vld [vmem:[#allocation4 + $0x1f0] sm:$0xff]
    %v9442 = vld [vmem:[#allocation4 + $0x1f8] sm:$0xff]
    %v9507 = vunpack.c.l.b16 %v9379
    %v9508 = vunpack.c.h.b16 %v9379
    %v9509 = vunpack.c.l.b16 %v9380
    %v9510 = vunpack.c.h.b16 %v9380
    %v9511 = vunpack.c.l.b16 %v9381
    %v9512 = vunpack.c.h.b16 %v9381
    %v9513 = vunpack.c.l.b16 %v9382
    %v9514 = vunpack.c.h.b16 %v9382
    %v9515 = vunpack.c.l.b16 %v9383
    %v9516 = vunpack.c.h.b16 %v9383
    %v9517 = vunpack.c.l.b16 %v9384
    %v9518 = vunpack.c.h.b16 %v9384
    %v9519 = vunpack.c.l.b16 %v9385
    %v9520 = vunpack.c.h.b16 %v9385
    %v9521 = vunpack.c.l.b16 %v9386
    %v9522 = vunpack.c.h.b16 %v9386
    %v9523 = vunpack.c.l.b16 %v9387
    %v9524 = vunpack.c.h.b16 %v9387
    %v9525 = vunpack.c.l.b16 %v9388
    %v9526 = vunpack.c.h.b16 %v9388
    %v9527 = vunpack.c.l.b16 %v9389
    %v9528 = vunpack.c.h.b16 %v9389
    %v9529 = vunpack.c.l.b16 %v9390
    %v9530 = vunpack.c.h.b16 %v9390
    %v9531 = vunpack.c.l.b16 %v9391
    %v9532 = vunpack.c.h.b16 %v9391
    %v9533 = vunpack.c.l.b16 %v9392
    %v9534 = vunpack.c.h.b16 %v9392
    %v9535 = vunpack.c.l.b16 %v9393
    %v9536 = vunpack.c.h.b16 %v9393
    %v9537 = vunpack.c.l.b16 %v9394
    %v9538 = vunpack.c.h.b16 %v9394
    %v9539 = vunpack.c.l.b16 %v9395
    %v9540 = vunpack.c.h.b16 %v9395
    %v9541 = vunpack.c.l.b16 %v9396
    %v9542 = vunpack.c.h.b16 %v9396
    %v9543 = vunpack.c.l.b16 %v9397
    %v9544 = vunpack.c.h.b16 %v9397
    %v9545 = vunpack.c.l.b16 %v9398
    %v9546 = vunpack.c.h.b16 %v9398
    %v9547 = vunpack.c.l.b16 %v9399
    %v9548 = vunpack.c.h.b16 %v9399
    %v9549 = vunpack.c.l.b16 %v9400
    %v9550 = vunpack.c.h.b16 %v9400
    %v9551 = vunpack.c.l.b16 %v9401
    %v9552 = vunpack.c.h.b16 %v9401
    %v9553 = vunpack.c.l.b16 %v9402
    %v9554 = vunpack.c.h.b16 %v9402
    %v9555 = vunpack.c.l.b16 %v9403
    %v9556 = vunpack.c.h.b16 %v9403
    %v9557 = vunpack.c.l.b16 %v9404
    %v9558 = vunpack.c.h.b16 %v9404
    %v9559 = vunpack.c.l.b16 %v9405
    %v9560 = vunpack.c.h.b16 %v9405
    %v9561 = vunpack.c.l.b16 %v9406
    %v9562 = vunpack.c.h.b16 %v9406
    %v9563 = vunpack.c.l.b16 %v9407
    %v9564 = vunpack.c.h.b16 %v9407
    %v9565 = vunpack.c.l.b16 %v9408
    %v9566 = vunpack.c.h.b16 %v9408
    %v9567 = vunpack.c.l.b16 %v9409
    %v9568 = vunpack.c.h.b16 %v9409
    %v9569 = vunpack.c.l.b16 %v9410
    %v9570 = vunpack.c.h.b16 %v9410
    %v9571 = vunpack.c.l.b16 %v9411
    %v9572 = vunpack.c.h.b16 %v9411
    %v9573 = vunpack.c.l.b16 %v9412
    %v9574 = vunpack.c.h.b16 %v9412
    %v9575 = vunpack.c.l.b16 %v9413
    %v9576 = vunpack.c.h.b16 %v9413
    %v9577 = vunpack.c.l.b16 %v9414
    %v9578 = vunpack.c.h.b16 %v9414
    %v9579 = vunpack.c.l.b16 %v9415
    %v9580 = vunpack.c.h.b16 %v9415
    %v9581 = vunpack.c.l.b16 %v9416
    %v9582 = vunpack.c.h.b16 %v9416
    %v9583 = vunpack.c.l.b16 %v9417
    %v9584 = vunpack.c.h.b16 %v9417
    %v9585 = vunpack.c.l.b16 %v9418
    %v9586 = vunpack.c.h.b16 %v9418
    %v9587 = vunpack.c.l.b16 %v9419
    %v9588 = vunpack.c.h.b16 %v9419
    %v9589 = vunpack.c.l.b16 %v9420
    %v9590 = vunpack.c.h.b16 %v9420
    %v9591 = vunpack.c.l.b16 %v9421
    %v9592 = vunpack.c.h.b16 %v9421
    %v9593 = vunpack.c.l.b16 %v9422
    %v9594 = vunpack.c.h.b16 %v9422
    %v9595 = vunpack.c.l.b16 %v9423
    %v9596 = vunpack.c.h.b16 %v9423
    %v9597 = vunpack.c.l.b16 %v9424
    %v9598 = vunpack.c.h.b16 %v9424
    %v9599 = vunpack.c.l.b16 %v9425
    %v9600 = vunpack.c.h.b16 %v9425
    %v9601 = vunpack.c.l.b16 %v9426
    %v9602 = vunpack.c.h.b16 %v9426
    %v9603 = vunpack.c.l.b16 %v9427
    %v9604 = vunpack.c.h.b16 %v9427
    %v9605 = vunpack.c.l.b16 %v9428
    %v9606 = vunpack.c.h.b16 %v9428
    %v9607 = vunpack.c.l.b16 %v9429
    %v9608 = vunpack.c.h.b16 %v9429
    %v9609 = vunpack.c.l.b16 %v9430
    %v9610 = vunpack.c.h.b16 %v9430
    %v9611 = vunpack.c.l.b16 %v9431
    %v9612 = vunpack.c.h.b16 %v9431
    %v9613 = vunpack.c.l.b16 %v9432
    %v9614 = vunpack.c.h.b16 %v9432
    %v9615 = vunpack.c.l.b16 %v9433
    %v9616 = vunpack.c.h.b16 %v9433
    %v9617 = vunpack.c.l.b16 %v9434
    %v9618 = vunpack.c.h.b16 %v9434
    %v9619 = vunpack.c.l.b16 %v9435
    %v9620 = vunpack.c.h.b16 %v9435
    %v9621 = vunpack.c.l.b16 %v9436
    %v9622 = vunpack.c.h.b16 %v9436
    %v9623 = vunpack.c.l.b16 %v9437
    %v9624 = vunpack.c.h.b16 %v9437
    %v9625 = vunpack.c.l.b16 %v9438
    %v9626 = vunpack.c.h.b16 %v9438
    %v9627 = vunpack.c.l.b16 %v9439
    %v9628 = vunpack.c.h.b16 %v9439
    %v9629 = vunpack.c.l.b16 %v9440
    %v9630 = vunpack.c.h.b16 %v9440
    %v9631 = vunpack.c.l.b16 %v9441
    %v9632 = vunpack.c.h.b16 %v9441
    %v9633 = vunpack.c.l.b16 %v9442
    %v9634 = vunpack.c.h.b16 %v9442
    %v9635 = vpack.c.b16 %v9509, %v9507
    %v9636 = vpack.c.b16 %v9510, %v9508
    %v9637 = vpack.c.b16 %v9513, %v9511
    %v9638 = vpack.c.b16 %v9514, %v9512
    %v9639 = vpack.c.b16 %v9517, %v9515
    %v9640 = vpack.c.b16 %v9518, %v9516
    %v9641 = vpack.c.b16 %v9521, %v9519
    %v9642 = vpack.c.b16 %v9522, %v9520
    %v9643 = vpack.c.b16 %v9525, %v9523
    %v9644 = vpack.c.b16 %v9526, %v9524
    %v9645 = vpack.c.b16 %v9529, %v9527
    %v9646 = vpack.c.b16 %v9530, %v9528
    %v9647 = vpack.c.b16 %v9533, %v9531
    %v9648 = vpack.c.b16 %v9534, %v9532
    %v9649 = vpack.c.b16 %v9537, %v9535
    %v9650 = vpack.c.b16 %v9538, %v9536
    %v9651 = vpack.c.b16 %v9541, %v9539
    %v9652 = vpack.c.b16 %v9542, %v9540
    %v9653 = vpack.c.b16 %v9545, %v9543
    %v9654 = vpack.c.b16 %v9546, %v9544
    %v9655 = vpack.c.b16 %v9549, %v9547
    %v9656 = vpack.c.b16 %v9550, %v9548
    %v9657 = vpack.c.b16 %v9553, %v9551
    %v9658 = vpack.c.b16 %v9554, %v9552
    %v9659 = vpack.c.b16 %v9557, %v9555
    %v9660 = vpack.c.b16 %v9558, %v9556
    %v9661 = vpack.c.b16 %v9561, %v9559
    %v9662 = vpack.c.b16 %v9562, %v9560
    %v9663 = vpack.c.b16 %v9565, %v9563
    %v9664 = vpack.c.b16 %v9566, %v9564
    %v9665 = vpack.c.b16 %v9569, %v9567
    %v9666 = vpack.c.b16 %v9570, %v9568
    %v9667 = vpack.c.b16 %v9573, %v9571
    %v9668 = vpack.c.b16 %v9574, %v9572
    %v9669 = vpack.c.b16 %v9577, %v9575
    %v9670 = vpack.c.b16 %v9578, %v9576
    %v9671 = vpack.c.b16 %v9581, %v9579
    %v9672 = vpack.c.b16 %v9582, %v9580
    %v9673 = vpack.c.b16 %v9585, %v9583
    %v9674 = vpack.c.b16 %v9586, %v9584
    %v9675 = vpack.c.b16 %v9589, %v9587
    %v9676 = vpack.c.b16 %v9590, %v9588
    %v9677 = vpack.c.b16 %v9593, %v9591
    %v9678 = vpack.c.b16 %v9594, %v9592
    %v9679 = vpack.c.b16 %v9597, %v9595
    %v9680 = vpack.c.b16 %v9598, %v9596
    %v9681 = vpack.c.b16 %v9601, %v9599
    %v9682 = vpack.c.b16 %v9602, %v9600
    %v9683 = vpack.c.b16 %v9605, %v9603
    %v9684 = vpack.c.b16 %v9606, %v9604
    %v9685 = vpack.c.b16 %v9609, %v9607
    %v9686 = vpack.c.b16 %v9610, %v9608
    %v9687 = vpack.c.b16 %v9613, %v9611
    %v9688 = vpack.c.b16 %v9614, %v9612
    %v9689 = vpack.c.b16 %v9617, %v9615
    %v9690 = vpack.c.b16 %v9618, %v9616
    %v9691 = vpack.c.b16 %v9621, %v9619
    %v9692 = vpack.c.b16 %v9622, %v9620
    %v9693 = vpack.c.b16 %v9625, %v9623
    %v9694 = vpack.c.b16 %v9626, %v9624
    %v9695 = vpack.c.b16 %v9629, %v9627
    %v9696 = vpack.c.b16 %v9630, %v9628
    %v9697 = vpack.c.b16 %v9633, %v9631
    %v9698 = vpack.c.b16 %v9634, %v9632
    %9763 = vmatpush.bf16.msra.mxu0 %v9649
    %9764 = vmatpush.bf16.msra.mxu0 %v9647
    %9765 = vmatpush.bf16.msra.mxu0 %v9645
    %9766 = vmatpush.bf16.msra.mxu0 %v9643
    %9767 = vmatpush.bf16.msra.mxu0 %v9641
    %9768 = vmatpush.bf16.msra.mxu0 %v9639
    %9769 = vmatpush.bf16.msra.mxu0 %v9637
    %9770 = vmatpush.bf16.msra.mxu0 %v9635
    %9771 = vmatmul.bf16.gmra.mxu0 %v9315
    %v9772 = vpop.f32.mrf.mxu0
    %v9773 = vadd.f32 0.0, %v9772
    %v9774 = vpop.f32.mrf.mxu0
    %v9775 = vadd.f32 0.0, %v9774
    %9776 = vmatmul.bf16.gmra.mxu0 %v9319
    %v9777 = vpop.f32.mrf.mxu0
    %v9778 = vadd.f32 0.0, %v9777
    %v9779 = vpop.f32.mrf.mxu0
    %v9780 = vadd.f32 0.0, %v9779
    %9781 = vmatmul.bf16.gmra.mxu0 %v9323
    %v9782 = vpop.f32.mrf.mxu0
    %v9783 = vadd.f32 0.0, %v9782
    %v9784 = vpop.f32.mrf.mxu0
    %v9785 = vadd.f32 0.0, %v9784
    %9786 = vmatmul.bf16.gmra.mxu0 %v9327
    %v9787 = vpop.f32.mrf.mxu0
    %v9788 = vadd.f32 0.0, %v9787
    %v9789 = vpop.f32.mrf.mxu0
    %v9790 = vadd.f32 0.0, %v9789
    %9791 = vmatmul.bf16.gmra.mxu0 %v9331
    %v9792 = vpop.f32.mrf.mxu0
    %v9793 = vadd.f32 0.0, %v9792
    %v9794 = vpop.f32.mrf.mxu0
    %v9795 = vadd.f32 0.0, %v9794
    %9796 = vmatmul.bf16.gmra.mxu0 %v9335
    %v9797 = vpop.f32.mrf.mxu0
    %v9798 = vadd.f32 0.0, %v9797
    %v9799 = vpop.f32.mrf.mxu0
    %v9800 = vadd.f32 0.0, %v9799
    %9801 = vmatmul.bf16.gmra.mxu0 %v9339
    %v9802 = vpop.f32.mrf.mxu0
    %v9803 = vadd.f32 0.0, %v9802
    %v9804 = vpop.f32.mrf.mxu0
    %v9805 = vadd.f32 0.0, %v9804
    %9806 = vmatmul.bf16.gmra.mxu0 %v9343
    %v9807 = vpop.f32.mrf.mxu0
    %v9808 = vadd.f32 0.0, %v9807
    %v9809 = vpop.f32.mrf.mxu0
    %v9810 = vadd.f32 0.0, %v9809
    %9811 = vmatmul.bf16.gmra.mxu0 %v9347
    %v9812 = vpop.f32.mrf.mxu0
    %v9813 = vadd.f32 0.0, %v9812
    %v9814 = vpop.f32.mrf.mxu0
    %v9815 = vadd.f32 0.0, %v9814
    %9816 = vmatmul.bf16.gmra.mxu0 %v9351
    %v9817 = vpop.f32.mrf.mxu0
    %v9818 = vadd.f32 0.0, %v9817
    %v9819 = vpop.f32.mrf.mxu0
    %v9820 = vadd.f32 0.0, %v9819
    %9821 = vmatmul.bf16.gmra.mxu0 %v9355
    %v9822 = vpop.f32.mrf.mxu0
    %v9823 = vadd.f32 0.0, %v9822
    %v9824 = vpop.f32.mrf.mxu0
    %v9825 = vadd.f32 0.0, %v9824
    %9826 = vmatmul.bf16.gmra.mxu0 %v9359
    %v9827 = vpop.f32.mrf.mxu0
    %v9828 = vadd.f32 0.0, %v9827
    %v9829 = vpop.f32.mrf.mxu0
    %v9830 = vadd.f32 0.0, %v9829
    %9831 = vmatmul.bf16.gmra.mxu0 %v9363
    %v9832 = vpop.f32.mrf.mxu0
    %v9833 = vadd.f32 0.0, %v9832
    %v9834 = vpop.f32.mrf.mxu0
    %v9835 = vadd.f32 0.0, %v9834
    %9836 = vmatmul.bf16.gmra.mxu0 %v9367
    %v9837 = vpop.f32.mrf.mxu0
    %v9838 = vadd.f32 0.0, %v9837
    %v9839 = vpop.f32.mrf.mxu0
    %v9840 = vadd.f32 0.0, %v9839
    %9841 = vmatmul.bf16.gmra.mxu0 %v9371
    %v9842 = vpop.f32.mrf.mxu0
    %v9843 = vadd.f32 0.0, %v9842
    %v9844 = vpop.f32.mrf.mxu0
    %v9845 = vadd.f32 0.0, %v9844
    %9846 = vmatmul.bf16.gmra.mxu0 %v9375
    %v9847 = vpop.f32.mrf.mxu0
    %v9848 = vadd.f32 0.0, %v9847
    %v9849 = vpop.f32.mrf.mxu0
    %v9850 = vadd.f32 0.0, %v9849
    %9851 = vdwg.mxu0
    %9852 = vmatpush.bf16.msra.mxu0 %v9665
    %9853 = vmatpush.bf16.msra.mxu0 %v9663
    %9854 = vmatpush.bf16.msra.mxu0 %v9661
    %9855 = vmatpush.bf16.msra.mxu0 %v9659
    %9856 = vmatpush.bf16.msra.mxu0 %v9657
    %9857 = vmatpush.bf16.msra.mxu0 %v9655
    %9858 = vmatpush.bf16.msra.mxu0 %v9653
    %9859 = vmatpush.bf16.msra.mxu0 %v9651
    %9860 = vmatmul.bf16.gmra.mxu0 %v9316
    %v9861 = vpop.f32.mrf.mxu0
    %v9862 = vadd.f32 %v9773, %v9861
    %v9863 = vpop.f32.mrf.mxu0
    %v9864 = vadd.f32 %v9775, %v9863
    %9865 = vmatmul.bf16.gmra.mxu0 %v9320
    %v9866 = vpop.f32.mrf.mxu0
    %v9867 = vadd.f32 %v9778, %v9866
    %v9868 = vpop.f32.mrf.mxu0
    %v9869 = vadd.f32 %v9780, %v9868
    %9870 = vmatmul.bf16.gmra.mxu0 %v9324
    %v9871 = vpop.f32.mrf.mxu0
    %v9872 = vadd.f32 %v9783, %v9871
    %v9873 = vpop.f32.mrf.mxu0
    %v9874 = vadd.f32 %v9785, %v9873
    %9875 = vmatmul.bf16.gmra.mxu0 %v9328
    %v9876 = vpop.f32.mrf.mxu0
    %v9877 = vadd.f32 %v9788, %v9876
    %v9878 = vpop.f32.mrf.mxu0
    %v9879 = vadd.f32 %v9790, %v9878
    %9880 = vmatmul.bf16.gmra.mxu0 %v9332
    %v9881 = vpop.f32.mrf.mxu0
    %v9882 = vadd.f32 %v9793, %v9881
    %v9883 = vpop.f32.mrf.mxu0
    %v9884 = vadd.f32 %v9795, %v9883
    %9885 = vmatmul.bf16.gmra.mxu0 %v9336
    %v9886 = vpop.f32.mrf.mxu0
    %v9887 = vadd.f32 %v9798, %v9886
    %v9888 = vpop.f32.mrf.mxu0
    %v9889 = vadd.f32 %v9800, %v9888
    %9890 = vmatmul.bf16.gmra.mxu0 %v9340
    %v9891 = vpop.f32.mrf.mxu0
    %v9892 = vadd.f32 %v9803, %v9891
    %v9893 = vpop.f32.mrf.mxu0
    %v9894 = vadd.f32 %v9805, %v9893
    %9895 = vmatmul.bf16.gmra.mxu0 %v9344
    %v9896 = vpop.f32.mrf.mxu0
    %v9897 = vadd.f32 %v9808, %v9896
    %v9898 = vpop.f32.mrf.mxu0
    %v9899 = vadd.f32 %v9810, %v9898
    %9900 = vmatmul.bf16.gmra.mxu0 %v9348
    %v9901 = vpop.f32.mrf.mxu0
    %v9902 = vadd.f32 %v9813, %v9901
    %v9903 = vpop.f32.mrf.mxu0
    %v9904 = vadd.f32 %v9815, %v9903
    %9905 = vmatmul.bf16.gmra.mxu0 %v9352
    %v9906 = vpop.f32.mrf.mxu0
    %v9907 = vadd.f32 %v9818, %v9906
    %v9908 = vpop.f32.mrf.mxu0
    %v9909 = vadd.f32 %v9820, %v9908
    %9910 = vmatmul.bf16.gmra.mxu0 %v9356
    %v9911 = vpop.f32.mrf.mxu0
    %v9912 = vadd.f32 %v9823, %v9911
    %v9913 = vpop.f32.mrf.mxu0
    %v9914 = vadd.f32 %v9825, %v9913
    %9915 = vmatmul.bf16.gmra.mxu0 %v9360
    %v9916 = vpop.f32.mrf.mxu0
    %v9917 = vadd.f32 %v9828, %v9916
    %v9918 = vpop.f32.mrf.mxu0
    %v9919 = vadd.f32 %v9830, %v9918
    %9920 = vmatmul.bf16.gmra.mxu0 %v9364
    %v9921 = vpop.f32.mrf.mxu0
    %v9922 = vadd.f32 %v9833, %v9921
    %v9923 = vpop.f32.mrf.mxu0
    %v9924 = vadd.f32 %v9835, %v9923
    %9925 = vmatmul.bf16.gmra.mxu0 %v9368
    %v9926 = vpop.f32.mrf.mxu0
    %v9927 = vadd.f32 %v9838, %v9926
    %v9928 = vpop.f32.mrf.mxu0
    %v9929 = vadd.f32 %v9840, %v9928
    %9930 = vmatmul.bf16.gmra.mxu0 %v9372
    %v9931 = vpop.f32.mrf.mxu0
    %v9932 = vadd.f32 %v9843, %v9931
    %v9933 = vpop.f32.mrf.mxu0
    %v9934 = vadd.f32 %v9845, %v9933
    %9935 = vmatmul.bf16.gmra.mxu0 %v9376
    %v9936 = vpop.f32.mrf.mxu0
    %v9937 = vadd.f32 %v9848, %v9936
    %v9938 = vpop.f32.mrf.mxu0
    %v9939 = vadd.f32 %v9850, %v9938
    %9940 = vdwg.mxu0
    %9941 = vmatpush.bf16.msra.mxu0 %v9681
    %9942 = vmatpush.bf16.msra.mxu0 %v9679
    %9943 = vmatpush.bf16.msra.mxu0 %v9677
    %9944 = vmatpush.bf16.msra.mxu0 %v9675
    %9945 = vmatpush.bf16.msra.mxu0 %v9673
    %9946 = vmatpush.bf16.msra.mxu0 %v9671
    %9947 = vmatpush.bf16.msra.mxu0 %v9669
    %9948 = vmatpush.bf16.msra.mxu0 %v9667
    %9949 = vmatmul.bf16.gmra.mxu0 %v9317
    %v9950 = vpop.f32.mrf.mxu0
    %v9951 = vadd.f32 %v9862, %v9950
    %v9952 = vpop.f32.mrf.mxu0
    %v9953 = vadd.f32 %v9864, %v9952
    %9954 = vmatmul.bf16.gmra.mxu0 %v9321
    %v9955 = vpop.f32.mrf.mxu0
    %v9956 = vadd.f32 %v9867, %v9955
    %v9957 = vpop.f32.mrf.mxu0
    %v9958 = vadd.f32 %v9869, %v9957
    %9959 = vmatmul.bf16.gmra.mxu0 %v9325
    %v9960 = vpop.f32.mrf.mxu0
    %v9961 = vadd.f32 %v9872, %v9960
    %v9962 = vpop.f32.mrf.mxu0
    %v9963 = vadd.f32 %v9874, %v9962
    %9964 = vmatmul.bf16.gmra.mxu0 %v9329
    %v9965 = vpop.f32.mrf.mxu0
    %v9966 = vadd.f32 %v9877, %v9965
    %v9967 = vpop.f32.mrf.mxu0
    %v9968 = vadd.f32 %v9879, %v9967
    %9969 = vmatmul.bf16.gmra.mxu0 %v9333
    %v9970 = vpop.f32.mrf.mxu0
    %v9971 = vadd.f32 %v9882, %v9970
    %v9972 = vpop.f32.mrf.mxu0
    %v9973 = vadd.f32 %v9884, %v9972
    %9974 = vmatmul.bf16.gmra.mxu0 %v9337
    %v9975 = vpop.f32.mrf.mxu0
    %v9976 = vadd.f32 %v9887, %v9975
    %v9977 = vpop.f32.mrf.mxu0
    %v9978 = vadd.f32 %v9889, %v9977
    %9979 = vmatmul.bf16.gmra.mxu0 %v9341
    %v9980 = vpop.f32.mrf.mxu0
    %v9981 = vadd.f32 %v9892, %v9980
    %v9982 = vpop.f32.mrf.mxu0
    %v9983 = vadd.f32 %v9894, %v9982
    %9984 = vmatmul.bf16.gmra.mxu0 %v9345
    %v9985 = vpop.f32.mrf.mxu0
    %v9986 = vadd.f32 %v9897, %v9985
    %v9987 = vpop.f32.mrf.mxu0
    %v9988 = vadd.f32 %v9899, %v9987
    %9989 = vmatmul.bf16.gmra.mxu0 %v9349
    %v9990 = vpop.f32.mrf.mxu0
    %v9991 = vadd.f32 %v9902, %v9990
    %v9992 = vpop.f32.mrf.mxu0
    %v9993 = vadd.f32 %v9904, %v9992
    %9994 = vmatmul.bf16.gmra.mxu0 %v9353
    %v9995 = vpop.f32.mrf.mxu0
    %v9996 = vadd.f32 %v9907, %v9995
    %v9997 = vpop.f32.mrf.mxu0
    %v9998 = vadd.f32 %v9909, %v9997
    %9999 = vmatmul.bf16.gmra.mxu0 %v9357
    %v10000 = vpop.f32.mrf.mxu0
    %v10001 = vadd.f32 %v9912, %v10000
    %v10002 = vpop.f32.mrf.mxu0
    %v10003 = vadd.f32 %v9914, %v10002
    %10004 = vmatmul.bf16.gmra.mxu0 %v9361
    %v10005 = vpop.f32.mrf.mxu0
    %v10006 = vadd.f32 %v9917, %v10005
    %v10007 = vpop.f32.mrf.mxu0
    %v10008 = vadd.f32 %v9919, %v10007
    %10009 = vmatmul.bf16.gmra.mxu0 %v9365
    %v10010 = vpop.f32.mrf.mxu0
    %v10011 = vadd.f32 %v9922, %v10010
    %v10012 = vpop.f32.mrf.mxu0
    %v10013 = vadd.f32 %v9924, %v10012
    %10014 = vmatmul.bf16.gmra.mxu0 %v9369
    %v10015 = vpop.f32.mrf.mxu0
    %v10016 = vadd.f32 %v9927, %v10015
    %v10017 = vpop.f32.mrf.mxu0
    %v10018 = vadd.f32 %v9929, %v10017
    %10019 = vmatmul.bf16.gmra.mxu0 %v9373
    %v10020 = vpop.f32.mrf.mxu0
    %v10021 = vadd.f32 %v9932, %v10020
    %v10022 = vpop.f32.mrf.mxu0
    %v10023 = vadd.f32 %v9934, %v10022
    %10024 = vmatmul.bf16.gmra.mxu0 %v9377
    %v10025 = vpop.f32.mrf.mxu0
    %v10026 = vadd.f32 %v9937, %v10025
    %v10027 = vpop.f32.mrf.mxu0
    %v10028 = vadd.f32 %v9939, %v10027
    %10029 = vdwg.mxu0
    %10030 = vmatpush.bf16.msra.mxu0 %v9697
    %10031 = vmatpush.bf16.msra.mxu0 %v9695
    %10032 = vmatpush.bf16.msra.mxu0 %v9693
    %10033 = vmatpush.bf16.msra.mxu0 %v9691
    %10034 = vmatpush.bf16.msra.mxu0 %v9689
    %10035 = vmatpush.bf16.msra.mxu0 %v9687
    %10036 = vmatpush.bf16.msra.mxu0 %v9685
    %10037 = vmatpush.bf16.msra.mxu0 %v9683
    %10038 = vmatmul.bf16.gmra.mxu0 %v9318
    %v10039 = vpop.f32.mrf.mxu0
    %v10040 = vadd.f32 %v9951, %v10039
    %v10041 = vpop.f32.mrf.mxu0
    %v10042 = vadd.f32 %v9953, %v10041
    %10043 = vmatmul.bf16.gmra.mxu0 %v9322
    %v10044 = vpop.f32.mrf.mxu0
    %v10045 = vadd.f32 %v9956, %v10044
    %v10046 = vpop.f32.mrf.mxu0
    %v10047 = vadd.f32 %v9958, %v10046
    %10048 = vmatmul.bf16.gmra.mxu0 %v9326
    %v10049 = vpop.f32.mrf.mxu0
    %v10050 = vadd.f32 %v9961, %v10049
    %v10051 = vpop.f32.mrf.mxu0
    %v10052 = vadd.f32 %v9963, %v10051
    %10053 = vmatmul.bf16.gmra.mxu0 %v9330
    %v10054 = vpop.f32.mrf.mxu0
    %v10055 = vadd.f32 %v9966, %v10054
    %v10056 = vpop.f32.mrf.mxu0
    %v10057 = vadd.f32 %v9968, %v10056
    %10058 = vmatmul.bf16.gmra.mxu0 %v9334
    %v10059 = vpop.f32.mrf.mxu0
    %v10060 = vadd.f32 %v9971, %v10059
    %v10061 = vpop.f32.mrf.mxu0
    %v10062 = vadd.f32 %v9973, %v10061
    %10063 = vmatmul.bf16.gmra.mxu0 %v9338
    %v10064 = vpop.f32.mrf.mxu0
    %v10065 = vadd.f32 %v9976, %v10064
    %v10066 = vpop.f32.mrf.mxu0
    %v10067 = vadd.f32 %v9978, %v10066
    %10068 = vmatmul.bf16.gmra.mxu0 %v9342
    %v10069 = vpop.f32.mrf.mxu0
    %v10070 = vadd.f32 %v9981, %v10069
    %v10071 = vpop.f32.mrf.mxu0
    %v10072 = vadd.f32 %v9983, %v10071
    %10073 = vmatmul.bf16.gmra.mxu0 %v9346
    %v10074 = vpop.f32.mrf.mxu0
    %v10075 = vadd.f32 %v9986, %v10074
    %v10076 = vpop.f32.mrf.mxu0
    %v10077 = vadd.f32 %v9988, %v10076
    %10078 = vmatmul.bf16.gmra.mxu0 %v9350
    %v10079 = vpop.f32.mrf.mxu0
    %v10080 = vadd.f32 %v9991, %v10079
    %v10081 = vpop.f32.mrf.mxu0
    %v10082 = vadd.f32 %v9993, %v10081
    %10083 = vmatmul.bf16.gmra.mxu0 %v9354
    %v10084 = vpop.f32.mrf.mxu0
    %v10085 = vadd.f32 %v9996, %v10084
    %v10086 = vpop.f32.mrf.mxu0
    %v10087 = vadd.f32 %v9998, %v10086
    %10088 = vmatmul.bf16.gmra.mxu0 %v9358
    %v10089 = vpop.f32.mrf.mxu0
    %v10090 = vadd.f32 %v10001, %v10089
    %v10091 = vpop.f32.mrf.mxu0
    %v10092 = vadd.f32 %v10003, %v10091
    %10093 = vmatmul.bf16.gmra.mxu0 %v9362
    %v10094 = vpop.f32.mrf.mxu0
    %v10095 = vadd.f32 %v10006, %v10094
    %v10096 = vpop.f32.mrf.mxu0
    %v10097 = vadd.f32 %v10008, %v10096
    %10098 = vmatmul.bf16.gmra.mxu0 %v9366
    %v10099 = vpop.f32.mrf.mxu0
    %v10100 = vadd.f32 %v10011, %v10099
    %v10101 = vpop.f32.mrf.mxu0
    %v10102 = vadd.f32 %v10013, %v10101
    %10103 = vmatmul.bf16.gmra.mxu0 %v9370
    %v10104 = vpop.f32.mrf.mxu0
    %v10105 = vadd.f32 %v10016, %v10104
    %v10106 = vpop.f32.mrf.mxu0
    %v10107 = vadd.f32 %v10018, %v10106
    %10108 = vmatmul.bf16.gmra.mxu0 %v9374
    %v10109 = vpop.f32.mrf.mxu0
    %v10110 = vadd.f32 %v10021, %v10109
    %v10111 = vpop.f32.mrf.mxu0
    %v10112 = vadd.f32 %v10023, %v10111
    %10113 = vmatmul.bf16.gmra.mxu0 %v9378
    %v10114 = vpop.f32.mrf.mxu0
    %v10115 = vadd.f32 %v10026, %v10114
    %v10116 = vpop.f32.mrf.mxu0
    %v10117 = vadd.f32 %v10028, %v10116
    %10118 = vdwg.mxu0
    %10119 = vmatpush.bf16.msra.mxu0 %v9650
    %10120 = vmatpush.bf16.msra.mxu0 %v9648
    %10121 = vmatpush.bf16.msra.mxu0 %v9646
    %10122 = vmatpush.bf16.msra.mxu0 %v9644
    %10123 = vmatpush.bf16.msra.mxu0 %v9642
    %10124 = vmatpush.bf16.msra.mxu0 %v9640
    %10125 = vmatpush.bf16.msra.mxu0 %v9638
    %10126 = vmatpush.bf16.msra.mxu0 %v9636
    %10127 = vmatmul.bf16.gmra.mxu0 %v9315
    %v10128 = vpop.f32.mrf.mxu0
    %v10129 = vadd.f32 0.0, %v10128
    %v10130 = vpop.f32.mrf.mxu0
    %v10131 = vadd.f32 0.0, %v10130
    %10132 = vmatmul.bf16.gmra.mxu0 %v9319
    %v10133 = vpop.f32.mrf.mxu0
    %v10134 = vadd.f32 0.0, %v10133
    %v10135 = vpop.f32.mrf.mxu0
    %v10136 = vadd.f32 0.0, %v10135
    %10137 = vmatmul.bf16.gmra.mxu0 %v9323
    %v10138 = vpop.f32.mrf.mxu0
    %v10139 = vadd.f32 0.0, %v10138
    %v10140 = vpop.f32.mrf.mxu0
    %v10141 = vadd.f32 0.0, %v10140
    %10142 = vmatmul.bf16.gmra.mxu0 %v9327
    %v10143 = vpop.f32.mrf.mxu0
    %v10144 = vadd.f32 0.0, %v10143
    %v10145 = vpop.f32.mrf.mxu0
    %v10146 = vadd.f32 0.0, %v10145
    %10147 = vmatmul.bf16.gmra.mxu0 %v9331
    %v10148 = vpop.f32.mrf.mxu0
    %v10149 = vadd.f32 0.0, %v10148
    %v10150 = vpop.f32.mrf.mxu0
    %v10151 = vadd.f32 0.0, %v10150
    %10152 = vmatmul.bf16.gmra.mxu0 %v9335
    %v10153 = vpop.f32.mrf.mxu0
    %v10154 = vadd.f32 0.0, %v10153
    %v10155 = vpop.f32.mrf.mxu0
    %v10156 = vadd.f32 0.0, %v10155
    %10157 = vmatmul.bf16.gmra.mxu0 %v9339
    %v10158 = vpop.f32.mrf.mxu0
    %v10159 = vadd.f32 0.0, %v10158
    %v10160 = vpop.f32.mrf.mxu0
    %v10161 = vadd.f32 0.0, %v10160
    %10162 = vmatmul.bf16.gmra.mxu0 %v9343
    %v10163 = vpop.f32.mrf.mxu0
    %v10164 = vadd.f32 0.0, %v10163
    %v10165 = vpop.f32.mrf.mxu0
    %v10166 = vadd.f32 0.0, %v10165
    %10167 = vmatmul.bf16.gmra.mxu0 %v9347
    %v10168 = vpop.f32.mrf.mxu0
    %v10169 = vadd.f32 0.0, %v10168
    %v10170 = vpop.f32.mrf.mxu0
    %v10171 = vadd.f32 0.0, %v10170
    %10172 = vmatmul.bf16.gmra.mxu0 %v9351
    %v10173 = vpop.f32.mrf.mxu0
    %v10174 = vadd.f32 0.0, %v10173
    %v10175 = vpop.f32.mrf.mxu0
    %v10176 = vadd.f32 0.0, %v10175
    %10177 = vmatmul.bf16.gmra.mxu0 %v9355
    %v10178 = vpop.f32.mrf.mxu0
    %v10179 = vadd.f32 0.0, %v10178
    %v10180 = vpop.f32.mrf.mxu0
    %v10181 = vadd.f32 0.0, %v10180
    %10182 = vmatmul.bf16.gmra.mxu0 %v9359
    %v10183 = vpop.f32.mrf.mxu0
    %v10184 = vadd.f32 0.0, %v10183
    %v10185 = vpop.f32.mrf.mxu0
    %v10186 = vadd.f32 0.0, %v10185
    %10187 = vmatmul.bf16.gmra.mxu0 %v9363
    %v10188 = vpop.f32.mrf.mxu0
    %v10189 = vadd.f32 0.0, %v10188
    %v10190 = vpop.f32.mrf.mxu0
    %v10191 = vadd.f32 0.0, %v10190
    %10192 = vmatmul.bf16.gmra.mxu0 %v9367
    %v10193 = vpop.f32.mrf.mxu0
    %v10194 = vadd.f32 0.0, %v10193
    %v10195 = vpop.f32.mrf.mxu0
    %v10196 = vadd.f32 0.0, %v10195
    %10197 = vmatmul.bf16.gmra.mxu0 %v9371
    %v10198 = vpop.f32.mrf.mxu0
    %v10199 = vadd.f32 0.0, %v10198
    %v10200 = vpop.f32.mrf.mxu0
    %v10201 = vadd.f32 0.0, %v10200
    %10202 = vmatmul.bf16.gmra.mxu0 %v9375
    %v10203 = vpop.f32.mrf.mxu0
    %v10204 = vadd.f32 0.0, %v10203
    %v10205 = vpop.f32.mrf.mxu0
    %v10206 = vadd.f32 0.0, %v10205
    %10207 = vdwg.mxu0
    %10208 = vmatpush.bf16.msra.mxu0 %v9666
    %10209 = vmatpush.bf16.msra.mxu0 %v9664
    %10210 = vmatpush.bf16.msra.mxu0 %v9662
    %10211 = vmatpush.bf16.msra.mxu0 %v9660
    %10212 = vmatpush.bf16.msra.mxu0 %v9658
    %10213 = vmatpush.bf16.msra.mxu0 %v9656
    %10214 = vmatpush.bf16.msra.mxu0 %v9654
    %10215 = vmatpush.bf16.msra.mxu0 %v9652
    %10216 = vmatmul.bf16.gmra.mxu0 %v9316
    %v10217 = vpop.f32.mrf.mxu0
    %v10218 = vadd.f32 %v10129, %v10217
    %v10219 = vpop.f32.mrf.mxu0
    %v10220 = vadd.f32 %v10131, %v10219
    %10221 = vmatmul.bf16.gmra.mxu0 %v9320
    %v10222 = vpop.f32.mrf.mxu0
    %v10223 = vadd.f32 %v10134, %v10222
    %v10224 = vpop.f32.mrf.mxu0
    %v10225 = vadd.f32 %v10136, %v10224
    %10226 = vmatmul.bf16.gmra.mxu0 %v9324
    %v10227 = vpop.f32.mrf.mxu0
    %v10228 = vadd.f32 %v10139, %v10227
    %v10229 = vpop.f32.mrf.mxu0
    %v10230 = vadd.f32 %v10141, %v10229
    %10231 = vmatmul.bf16.gmra.mxu0 %v9328
    %v10232 = vpop.f32.mrf.mxu0
    %v10233 = vadd.f32 %v10144, %v10232
    %v10234 = vpop.f32.mrf.mxu0
    %v10235 = vadd.f32 %v10146, %v10234
    %10236 = vmatmul.bf16.gmra.mxu0 %v9332
    %v10237 = vpop.f32.mrf.mxu0
    %v10238 = vadd.f32 %v10149, %v10237
    %v10239 = vpop.f32.mrf.mxu0
    %v10240 = vadd.f32 %v10151, %v10239
    %10241 = vmatmul.bf16.gmra.mxu0 %v9336
    %v10242 = vpop.f32.mrf.mxu0
    %v10243 = vadd.f32 %v10154, %v10242
    %v10244 = vpop.f32.mrf.mxu0
    %v10245 = vadd.f32 %v10156, %v10244
    %10246 = vmatmul.bf16.gmra.mxu0 %v9340
    %v10247 = vpop.f32.mrf.mxu0
    %v10248 = vadd.f32 %v10159, %v10247
    %v10249 = vpop.f32.mrf.mxu0
    %v10250 = vadd.f32 %v10161, %v10249
    %10251 = vmatmul.bf16.gmra.mxu0 %v9344
    %v10252 = vpop.f32.mrf.mxu0
    %v10253 = vadd.f32 %v10164, %v10252
    %v10254 = vpop.f32.mrf.mxu0
    %v10255 = vadd.f32 %v10166, %v10254
    %10256 = vmatmul.bf16.gmra.mxu0 %v9348
    %v10257 = vpop.f32.mrf.mxu0
    %v10258 = vadd.f32 %v10169, %v10257
    %v10259 = vpop.f32.mrf.mxu0
    %v10260 = vadd.f32 %v10171, %v10259
    %10261 = vmatmul.bf16.gmra.mxu0 %v9352
    %v10262 = vpop.f32.mrf.mxu0
    %v10263 = vadd.f32 %v10174, %v10262
    %v10264 = vpop.f32.mrf.mxu0
    %v10265 = vadd.f32 %v10176, %v10264
    %10266 = vmatmul.bf16.gmra.mxu0 %v9356
    %v10267 = vpop.f32.mrf.mxu0
    %v10268 = vadd.f32 %v10179, %v10267
    %v10269 = vpop.f32.mrf.mxu0
    %v10270 = vadd.f32 %v10181, %v10269
    %10271 = vmatmul.bf16.gmra.mxu0 %v9360
    %v10272 = vpop.f32.mrf.mxu0
    %v10273 = vadd.f32 %v10184, %v10272
    %v10274 = vpop.f32.mrf.mxu0
    %v10275 = vadd.f32 %v10186, %v10274
    %10276 = vmatmul.bf16.gmra.mxu0 %v9364
    %v10277 = vpop.f32.mrf.mxu0
    %v10278 = vadd.f32 %v10189, %v10277
    %v10279 = vpop.f32.mrf.mxu0
    %v10280 = vadd.f32 %v10191, %v10279
    %10281 = vmatmul.bf16.gmra.mxu0 %v9368
    %v10282 = vpop.f32.mrf.mxu0
    %v10283 = vadd.f32 %v10194, %v10282
    %v10284 = vpop.f32.mrf.mxu0
    %v10285 = vadd.f32 %v10196, %v10284
    %10286 = vmatmul.bf16.gmra.mxu0 %v9372
    %v10287 = vpop.f32.mrf.mxu0
    %v10288 = vadd.f32 %v10199, %v10287
    %v10289 = vpop.f32.mrf.mxu0
    %v10290 = vadd.f32 %v10201, %v10289
    %10291 = vmatmul.bf16.gmra.mxu0 %v9376
    %v10292 = vpop.f32.mrf.mxu0
    %v10293 = vadd.f32 %v10204, %v10292
    %v10294 = vpop.f32.mrf.mxu0
    %v10295 = vadd.f32 %v10206, %v10294
    %10296 = vdwg.mxu0
    %10297 = vmatpush.bf16.msra.mxu0 %v9682
    %10298 = vmatpush.bf16.msra.mxu0 %v9680
    %10299 = vmatpush.bf16.msra.mxu0 %v9678
    %10300 = vmatpush.bf16.msra.mxu0 %v9676
    %10301 = vmatpush.bf16.msra.mxu0 %v9674
    %10302 = vmatpush.bf16.msra.mxu0 %v9672
    %10303 = vmatpush.bf16.msra.mxu0 %v9670
    %10304 = vmatpush.bf16.msra.mxu0 %v9668
    %10305 = vmatmul.bf16.gmra.mxu0 %v9317
    %v10306 = vpop.f32.mrf.mxu0
    %v10307 = vadd.f32 %v10218, %v10306
    %v10308 = vpop.f32.mrf.mxu0
    %v10309 = vadd.f32 %v10220, %v10308
    %10310 = vmatmul.bf16.gmra.mxu0 %v9321
    %v10311 = vpop.f32.mrf.mxu0
    %v10312 = vadd.f32 %v10223, %v10311
    %v10313 = vpop.f32.mrf.mxu0
    %v10314 = vadd.f32 %v10225, %v10313
    %10315 = vmatmul.bf16.gmra.mxu0 %v9325
    %v10316 = vpop.f32.mrf.mxu0
    %v10317 = vadd.f32 %v10228, %v10316
    %v10318 = vpop.f32.mrf.mxu0
    %v10319 = vadd.f32 %v10230, %v10318
    %10320 = vmatmul.bf16.gmra.mxu0 %v9329
    %v10321 = vpop.f32.mrf.mxu0
    %v10322 = vadd.f32 %v10233, %v10321
    %v10323 = vpop.f32.mrf.mxu0
    %v10324 = vadd.f32 %v10235, %v10323
    %10325 = vmatmul.bf16.gmra.mxu0 %v9333
    %v10326 = vpop.f32.mrf.mxu0
    %v10327 = vadd.f32 %v10238, %v10326
    %v10328 = vpop.f32.mrf.mxu0
    %v10329 = vadd.f32 %v10240, %v10328
    %10330 = vmatmul.bf16.gmra.mxu0 %v9337
    %v10331 = vpop.f32.mrf.mxu0
    %v10332 = vadd.f32 %v10243, %v10331
    %v10333 = vpop.f32.mrf.mxu0
    %v10334 = vadd.f32 %v10245, %v10333
    %10335 = vmatmul.bf16.gmra.mxu0 %v9341
    %v10336 = vpop.f32.mrf.mxu0
    %v10337 = vadd.f32 %v10248, %v10336
    %v10338 = vpop.f32.mrf.mxu0
    %v10339 = vadd.f32 %v10250, %v10338
    %10340 = vmatmul.bf16.gmra.mxu0 %v9345
    %v10341 = vpop.f32.mrf.mxu0
    %v10342 = vadd.f32 %v10253, %v10341
    %v10343 = vpop.f32.mrf.mxu0
    %v10344 = vadd.f32 %v10255, %v10343
    %10345 = vmatmul.bf16.gmra.mxu0 %v9349
    %v10346 = vpop.f32.mrf.mxu0
    %v10347 = vadd.f32 %v10258, %v10346
    %v10348 = vpop.f32.mrf.mxu0
    %v10349 = vadd.f32 %v10260, %v10348
    %10350 = vmatmul.bf16.gmra.mxu0 %v9353
    %v10351 = vpop.f32.mrf.mxu0
    %v10352 = vadd.f32 %v10263, %v10351
    %v10353 = vpop.f32.mrf.mxu0
    %v10354 = vadd.f32 %v10265, %v10353
    %10355 = vmatmul.bf16.gmra.mxu0 %v9357
    %v10356 = vpop.f32.mrf.mxu0
    %v10357 = vadd.f32 %v10268, %v10356
    %v10358 = vpop.f32.mrf.mxu0
    %v10359 = vadd.f32 %v10270, %v10358
    %10360 = vmatmul.bf16.gmra.mxu0 %v9361
    %v10361 = vpop.f32.mrf.mxu0
    %v10362 = vadd.f32 %v10273, %v10361
    %v10363 = vpop.f32.mrf.mxu0
    %v10364 = vadd.f32 %v10275, %v10363
    %10365 = vmatmul.bf16.gmra.mxu0 %v9365
    %v10366 = vpop.f32.mrf.mxu0
    %v10367 = vadd.f32 %v10278, %v10366
    %v10368 = vpop.f32.mrf.mxu0
    %v10369 = vadd.f32 %v10280, %v10368
    %10370 = vmatmul.bf16.gmra.mxu0 %v9369
    %v10371 = vpop.f32.mrf.mxu0
    %v10372 = vadd.f32 %v10283, %v10371
    %v10373 = vpop.f32.mrf.mxu0
    %v10374 = vadd.f32 %v10285, %v10373
    %10375 = vmatmul.bf16.gmra.mxu0 %v9373
    %v10376 = vpop.f32.mrf.mxu0
    %v10377 = vadd.f32 %v10288, %v10376
    %v10378 = vpop.f32.mrf.mxu0
    %v10379 = vadd.f32 %v10290, %v10378
    %10380 = vmatmul.bf16.gmra.mxu0 %v9377
    %v10381 = vpop.f32.mrf.mxu0
    %v10382 = vadd.f32 %v10293, %v10381
    %v10383 = vpop.f32.mrf.mxu0
    %v10384 = vadd.f32 %v10295, %v10383
    %10385 = vdwg.mxu0
    %10386 = vmatpush.bf16.msra.mxu0 %v9698
    %10387 = vmatpush.bf16.msra.mxu0 %v9696
    %10388 = vmatpush.bf16.msra.mxu0 %v9694
    %10389 = vmatpush.bf16.msra.mxu0 %v9692
    %10390 = vmatpush.bf16.msra.mxu0 %v9690
    %10391 = vmatpush.bf16.msra.mxu0 %v9688
    %10392 = vmatpush.bf16.msra.mxu0 %v9686
    %10393 = vmatpush.bf16.msra.mxu0 %v9684
    %10394 = vmatmul.bf16.gmra.mxu0 %v9318
    %v10395 = vpop.f32.mrf.mxu0
    %v10396 = vadd.f32 %v10307, %v10395
    %v10397 = vpop.f32.mrf.mxu0
    %v10398 = vadd.f32 %v10309, %v10397
    %10399 = vmatmul.bf16.gmra.mxu0 %v9322
    %v10400 = vpop.f32.mrf.mxu0
    %v10401 = vadd.f32 %v10312, %v10400
    %v10402 = vpop.f32.mrf.mxu0
    %v10403 = vadd.f32 %v10314, %v10402
    %10404 = vmatmul.bf16.gmra.mxu0 %v9326
    %v10405 = vpop.f32.mrf.mxu0
    %v10406 = vadd.f32 %v10317, %v10405
    %v10407 = vpop.f32.mrf.mxu0
    %v10408 = vadd.f32 %v10319, %v10407
    %10409 = vmatmul.bf16.gmra.mxu0 %v9330
    %v10410 = vpop.f32.mrf.mxu0
    %v10411 = vadd.f32 %v10322, %v10410
    %v10412 = vpop.f32.mrf.mxu0
    %v10413 = vadd.f32 %v10324, %v10412
    %10414 = vmatmul.bf16.gmra.mxu0 %v9334
    %v10415 = vpop.f32.mrf.mxu0
    %v10416 = vadd.f32 %v10327, %v10415
    %v10417 = vpop.f32.mrf.mxu0
    %v10418 = vadd.f32 %v10329, %v10417
    %10419 = vmatmul.bf16.gmra.mxu0 %v9338
    %v10420 = vpop.f32.mrf.mxu0
    %v10421 = vadd.f32 %v10332, %v10420
    %v10422 = vpop.f32.mrf.mxu0
    %v10423 = vadd.f32 %v10334, %v10422
    %10424 = vmatmul.bf16.gmra.mxu0 %v9342
    %v10425 = vpop.f32.mrf.mxu0
    %v10426 = vadd.f32 %v10337, %v10425
    %v10427 = vpop.f32.mrf.mxu0
    %v10428 = vadd.f32 %v10339, %v10427
    %10429 = vmatmul.bf16.gmra.mxu0 %v9346
    %v10430 = vpop.f32.mrf.mxu0
    %v10431 = vadd.f32 %v10342, %v10430
    %v10432 = vpop.f32.mrf.mxu0
    %v10433 = vadd.f32 %v10344, %v10432
    %10434 = vmatmul.bf16.gmra.mxu0 %v9350
    %v10435 = vpop.f32.mrf.mxu0
    %v10436 = vadd.f32 %v10347, %v10435
    %v10437 = vpop.f32.mrf.mxu0
    %v10438 = vadd.f32 %v10349, %v10437
    %10439 = vmatmul.bf16.gmra.mxu0 %v9354
    %v10440 = vpop.f32.mrf.mxu0
    %v10441 = vadd.f32 %v10352, %v10440
    %v10442 = vpop.f32.mrf.mxu0
    %v10443 = vadd.f32 %v10354, %v10442
    %10444 = vmatmul.bf16.gmra.mxu0 %v9358
    %v10445 = vpop.f32.mrf.mxu0
    %v10446 = vadd.f32 %v10357, %v10445
    %v10447 = vpop.f32.mrf.mxu0
    %v10448 = vadd.f32 %v10359, %v10447
    %10449 = vmatmul.bf16.gmra.mxu0 %v9362
    %v10450 = vpop.f32.mrf.mxu0
    %v10451 = vadd.f32 %v10362, %v10450
    %v10452 = vpop.f32.mrf.mxu0
    %v10453 = vadd.f32 %v10364, %v10452
    %10454 = vmatmul.bf16.gmra.mxu0 %v9366
    %v10455 = vpop.f32.mrf.mxu0
    %v10456 = vadd.f32 %v10367, %v10455
    %v10457 = vpop.f32.mrf.mxu0
    %v10458 = vadd.f32 %v10369, %v10457
    %10459 = vmatmul.bf16.gmra.mxu0 %v9370
    %v10460 = vpop.f32.mrf.mxu0
    %v10461 = vadd.f32 %v10372, %v10460
    %v10462 = vpop.f32.mrf.mxu0
    %v10463 = vadd.f32 %v10374, %v10462
    %10464 = vmatmul.bf16.gmra.mxu0 %v9374
    %v10465 = vpop.f32.mrf.mxu0
    %v10466 = vadd.f32 %v10377, %v10465
    %v10467 = vpop.f32.mrf.mxu0
    %v10468 = vadd.f32 %v10379, %v10467
    %10469 = vmatmul.bf16.gmra.mxu0 %v9378
    %v10470 = vpop.f32.mrf.mxu0
    %v10471 = vadd.f32 %v10382, %v10470
    %v10472 = vpop.f32.mrf.mxu0
    %v10473 = vadd.f32 %v10384, %v10472
    %10474 = vdwg.mxu0
    %v10475 = vadd.f32 %v10040, %v10042
    %v10476 = vadd.f32 %v10475, %v10045
    %v10477 = vadd.f32 %v10476, %v10047
    %v10478 = vadd.f32 %v10477, %v10050
    %v10479 = vadd.f32 %v10478, %v10052
    %v10480 = vadd.f32 %v10479, %v10055
    %v10481 = vadd.f32 %v10480, %v10057
    %v10482 = vadd.f32 %v10481, %v10060
    %v10483 = vadd.f32 %v10482, %v10062
    %v10484 = vadd.f32 %v10483, %v10065
    %v10485 = vadd.f32 %v10484, %v10067
    %v10486 = vadd.f32 %v10485, %v10070
    %v10487 = vadd.f32 %v10486, %v10072
    %v10488 = vadd.f32 %v10487, %v10075
    %v10489 = vadd.f32 %v10488, %v10077
    %v10490 = vadd.f32 %v10489, %v10080
    %v10491 = vadd.f32 %v10490, %v10082
    %v10492 = vadd.f32 %v10491, %v10085
    %v10493 = vadd.f32 %v10492, %v10087
    %v10494 = vadd.f32 %v10493, %v10090
    %v10495 = vadd.f32 %v10494, %v10092
    %v10496 = vadd.f32 %v10495, %v10095
    %v10497 = vadd.f32 %v10496, %v10097
    %v10498 = vadd.f32 %v10497, %v10100
    %v10499 = vadd.f32 %v10498, %v10102
    %v10500 = vadd.f32 %v10499, %v10105
    %v10501 = vadd.f32 %v10500, %v10107
    %v10502 = vadd.f32 %v10501, %v10110
    %v10503 = vadd.f32 %v10502, %v10112
    %v10504 = vadd.f32 %v10503, %v10115
    %v10505 = vadd.f32 %v10504, %v10117
    %v10506 = vrot.slane %v10505, 4
    %v10507 = vadd.f32 %v10505, %v10506
    %v10508 = vrot.slane %v10507, 2
    %v10509 = vadd.f32 %v10507, %v10508
    %v10510 = vrot.slane %v10509, 1
    %v10511 = vadd.f32 %v10509, %v10510
    %v10512 = vadd.f32 %v10396, %v10398
    %v10513 = vadd.f32 %v10512, %v10401
    %v10514 = vadd.f32 %v10513, %v10403
    %v10515 = vadd.f32 %v10514, %v10406
    %v10516 = vadd.f32 %v10515, %v10408
    %v10517 = vadd.f32 %v10516, %v10411
    %v10518 = vadd.f32 %v10517, %v10413
    %v10519 = vadd.f32 %v10518, %v10416
    %v10520 = vadd.f32 %v10519, %v10418
    %v10521 = vadd.f32 %v10520, %v10421
    %v10522 = vadd.f32 %v10521, %v10423
    %v10523 = vadd.f32 %v10522, %v10426
    %v10524 = vadd.f32 %v10523, %v10428
    %v10525 = vadd.f32 %v10524, %v10431
    %v10526 = vadd.f32 %v10525, %v10433
    %v10527 = vadd.f32 %v10526, %v10436
    %v10528 = vadd.f32 %v10527, %v10438
    %v10529 = vadd.f32 %v10528, %v10441
    %v10530 = vadd.f32 %v10529, %v10443
    %v10531 = vadd.f32 %v10530, %v10446
    %v10532 = vadd.f32 %v10531, %v10448
    %v10533 = vadd.f32 %v10532, %v10451
    %v10534 = vadd.f32 %v10533, %v10453
    %v10535 = vadd.f32 %v10534, %v10456
    %v10536 = vadd.f32 %v10535, %v10458
    %v10537 = vadd.f32 %v10536, %v10461
    %v10538 = vadd.f32 %v10537, %v10463
    %v10539 = vadd.f32 %v10538, %v10466
    %v10540 = vadd.f32 %v10539, %v10468
    %v10541 = vadd.f32 %v10540, %v10471
    %v10542 = vadd.f32 %v10541, %v10473
    %v10543 = vrot.slane %v10542, 4
    %v10544 = vadd.f32 %v10542, %v10543
    %v10545 = vrot.slane %v10544, 2
    %v10546 = vadd.f32 %v10544, %v10545
    %v10547 = vrot.slane %v10546, 1
    %v10548 = vadd.f32 %v10546, %v10547
    %v10549 = vmul.f32 %v10511, 0.00390625
    %v10550 = vmul.f32 %v10548, 0.00390625
    %v10551 = vmul.f32 %v10040, %v10040
    %v10552 = vmul.f32 %v10396, %v10396
    %v10553 = vmul.f32 %v10042, %v10042
    %v10554 = vmul.f32 %v10398, %v10398
    %v10555 = vmul.f32 %v10045, %v10045
    %v10556 = vmul.f32 %v10401, %v10401
    %v10557 = vmul.f32 %v10047, %v10047
    %v10558 = vmul.f32 %v10403, %v10403
    %v10559 = vmul.f32 %v10050, %v10050
    %v10560 = vmul.f32 %v10406, %v10406
    %v10561 = vmul.f32 %v10052, %v10052
    %v10562 = vmul.f32 %v10408, %v10408
    %v10563 = vmul.f32 %v10055, %v10055
    %v10564 = vmul.f32 %v10411, %v10411
    %v10565 = vmul.f32 %v10057, %v10057
    %v10566 = vmul.f32 %v10413, %v10413
    %v10567 = vmul.f32 %v10060, %v10060
    %v10568 = vmul.f32 %v10416, %v10416
    %v10569 = vmul.f32 %v10062, %v10062
    %v10570 = vmul.f32 %v10418, %v10418
    %v10571 = vmul.f32 %v10065, %v10065
    %v10572 = vmul.f32 %v10421, %v10421
    %v10573 = vmul.f32 %v10067, %v10067
    %v10574 = vmul.f32 %v10423, %v10423
    %v10575 = vmul.f32 %v10070, %v10070
    %v10576 = vmul.f32 %v10426, %v10426
    %v10577 = vmul.f32 %v10072, %v10072
    %v10578 = vmul.f32 %v10428, %v10428
    %v10579 = vmul.f32 %v10075, %v10075
    %v10580 = vmul.f32 %v10431, %v10431
    %v10581 = vmul.f32 %v10077, %v10077
    %v10582 = vmul.f32 %v10433, %v10433
    %v10583 = vmul.f32 %v10080, %v10080
    %v10584 = vmul.f32 %v10436, %v10436
    %v10585 = vmul.f32 %v10082, %v10082
    %v10586 = vmul.f32 %v10438, %v10438
    %v10587 = vmul.f32 %v10085, %v10085
    %v10588 = vmul.f32 %v10441, %v10441
    %v10589 = vmul.f32 %v10087, %v10087
    %v10590 = vmul.f32 %v10443, %v10443
    %v10591 = vmul.f32 %v10090, %v10090
    %v10592 = vmul.f32 %v10446, %v10446
    %v10593 = vmul.f32 %v10092, %v10092
    %v10594 = vmul.f32 %v10448, %v10448
    %v10595 = vmul.f32 %v10095, %v10095
    %v10596 = vmul.f32 %v10451, %v10451
    %v10597 = vmul.f32 %v10097, %v10097
    %v10598 = vmul.f32 %v10453, %v10453
    %v10599 = vmul.f32 %v10100, %v10100
    %v10600 = vmul.f32 %v10456, %v10456
    %v10601 = vmul.f32 %v10102, %v10102
    %v10602 = vmul.f32 %v10458, %v10458
    %v10603 = vmul.f32 %v10105, %v10105
    %v10604 = vmul.f32 %v10461, %v10461
    %v10605 = vmul.f32 %v10107, %v10107
    %v10606 = vmul.f32 %v10463, %v10463
    %v10607 = vmul.f32 %v10110, %v10110
    %v10608 = vmul.f32 %v10466, %v10466
    %v10609 = vmul.f32 %v10112, %v10112
    %v10610 = vmul.f32 %v10468, %v10468
    %v10611 = vmul.f32 %v10115, %v10115
    %v10612 = vmul.f32 %v10471, %v10471
    %v10613 = vmul.f32 %v10117, %v10117
    %v10614 = vmul.f32 %v10473, %v10473
    %v10615 = vadd.f32 %v10551, %v10553
    %v10616 = vadd.f32 %v10615, %v10555
    %v10617 = vadd.f32 %v10616, %v10557
    %v10618 = vadd.f32 %v10617, %v10559
    %v10619 = vadd.f32 %v10618, %v10561
    %v10620 = vadd.f32 %v10619, %v10563
    %v10621 = vadd.f32 %v10620, %v10565
    %v10622 = vadd.f32 %v10621, %v10567
    %v10623 = vadd.f32 %v10622, %v10569
    %v10624 = vadd.f32 %v10623, %v10571
    %v10625 = vadd.f32 %v10624, %v10573
    %v10626 = vadd.f32 %v10625, %v10575
    %v10627 = vadd.f32 %v10626, %v10577
    %v10628 = vadd.f32 %v10627, %v10579
    %v10629 = vadd.f32 %v10628, %v10581
    %v10630 = vadd.f32 %v10629, %v10583
    %v10631 = vadd.f32 %v10630, %v10585
    %v10632 = vadd.f32 %v10631, %v10587
    %v10633 = vadd.f32 %v10632, %v10589
    %v10634 = vadd.f32 %v10633, %v10591
    %v10635 = vadd.f32 %v10634, %v10593
    %v10636 = vadd.f32 %v10635, %v10595
    %v10637 = vadd.f32 %v10636, %v10597
    %v10638 = vadd.f32 %v10637, %v10599
    %v10639 = vadd.f32 %v10638, %v10601
    %v10640 = vadd.f32 %v10639, %v10603
    %v10641 = vadd.f32 %v10640, %v10605
    %v10642 = vadd.f32 %v10641, %v10607
    %v10643 = vadd.f32 %v10642, %v10609
    %v10644 = vadd.f32 %v10643, %v10611
    %v10645 = vadd.f32 %v10644, %v10613
    %v10646 = vrot.slane %v10645, 4
    %v10647 = vadd.f32 %v10645, %v10646
    %v10648 = vrot.slane %v10647, 2
    %v10649 = vadd.f32 %v10647, %v10648
    %v10650 = vrot.slane %v10649, 1
    %v10651 = vadd.f32 %v10649, %v10650
    %v10652 = vadd.f32 %v10552, %v10554
    %v10653 = vadd.f32 %v10652, %v10556
    %v10654 = vadd.f32 %v10653, %v10558
    %v10655 = vadd.f32 %v10654, %v10560
    %v10656 = vadd.f32 %v10655, %v10562
    %v10657 = vadd.f32 %v10656, %v10564
    %v10658 = vadd.f32 %v10657, %v10566
    %v10659 = vadd.f32 %v10658, %v10568
    %v10660 = vadd.f32 %v10659, %v10570
    %v10661 = vadd.f32 %v10660, %v10572
    %v10662 = vadd.f32 %v10661, %v10574
    %v10663 = vadd.f32 %v10662, %v10576
    %v10664 = vadd.f32 %v10663, %v10578
    %v10665 = vadd.f32 %v10664, %v10580
    %v10666 = vadd.f32 %v10665, %v10582
    %v10667 = vadd.f32 %v10666, %v10584
    %v10668 = vadd.f32 %v10667, %v10586
    %v10669 = vadd.f32 %v10668, %v10588
    %v10670 = vadd.f32 %v10669, %v10590
    %v10671 = vadd.f32 %v10670, %v10592
    %v10672 = vadd.f32 %v10671, %v10594
    %v10673 = vadd.f32 %v10672, %v10596
    %v10674 = vadd.f32 %v10673, %v10598
    %v10675 = vadd.f32 %v10674, %v10600
    %v10676 = vadd.f32 %v10675, %v10602
    %v10677 = vadd.f32 %v10676, %v10604
    %v10678 = vadd.f32 %v10677, %v10606
    %v10679 = vadd.f32 %v10678, %v10608
    %v10680 = vadd.f32 %v10679, %v10610
    %v10681 = vadd.f32 %v10680, %v10612
    %v10682 = vadd.f32 %v10681, %v10614
    %v10683 = vrot.slane %v10682, 4
    %v10684 = vadd.f32 %v10682, %v10683
    %v10685 = vrot.slane %v10684, 2
    %v10686 = vadd.f32 %v10684, %v10685
    %v10687 = vrot.slane %v10686, 1
    %v10688 = vadd.f32 %v10686, %v10687
    %v10689 = vmul.f32 %v10651, 0.00390625
    %v10690 = vmul.f32 %v10688, 0.00390625
    %v10691 = vmul.f32 %v10549, %v10549
    %v10692 = vmul.f32 %v10550, %v10550
    %v10693 = vsub.f32 %v10689, %v10691
    %v10694 = vsub.f32 %v10690, %v10692
    %v10695 = vmax.f32 %v10693, 0.0
    %v10696 = vmax.f32 %v10694, 0.0
    %v10697 = vsub.f32 %v10040, %v10549
    %v10698 = vsub.f32 %v10396, %v10550
    %v10699 = vsub.f32 %v10042, %v10549
    %v10700 = vsub.f32 %v10398, %v10550
    %v10701 = vsub.f32 %v10045, %v10549
    %v10702 = vsub.f32 %v10401, %v10550
    %v10703 = vsub.f32 %v10047, %v10549
    %v10704 = vsub.f32 %v10403, %v10550
    %v10705 = vsub.f32 %v10050, %v10549
    %v10706 = vsub.f32 %v10406, %v10550
    %v10707 = vsub.f32 %v10052, %v10549
    %v10708 = vsub.f32 %v10408, %v10550
    %v10709 = vsub.f32 %v10055, %v10549
    %v10710 = vsub.f32 %v10411, %v10550
    %v10711 = vsub.f32 %v10057, %v10549
    %v10712 = vsub.f32 %v10413, %v10550
    %v10713 = vsub.f32 %v10060, %v10549
    %v10714 = vsub.f32 %v10416, %v10550
    %v10715 = vsub.f32 %v10062, %v10549
    %v10716 = vsub.f32 %v10418, %v10550
    %v10717 = vsub.f32 %v10065, %v10549
    %v10718 = vsub.f32 %v10421, %v10550
    %v10719 = vsub.f32 %v10067, %v10549
    %v10720 = vsub.f32 %v10423, %v10550
    %v10721 = vsub.f32 %v10070, %v10549
    %v10722 = vsub.f32 %v10426, %v10550
    %v10723 = vsub.f32 %v10072, %v10549
    %v10724 = vsub.f32 %v10428, %v10550
    %v10725 = vsub.f32 %v10075, %v10549
    %v10726 = vsub.f32 %v10431, %v10550
    %v10727 = vsub.f32 %v10077, %v10549
    %v10728 = vsub.f32 %v10433, %v10550
    %v10729 = vsub.f32 %v10080, %v10549
    %v10730 = vsub.f32 %v10436, %v10550
    %v10731 = vsub.f32 %v10082, %v10549
    %v10732 = vsub.f32 %v10438, %v10550
    %v10733 = vsub.f32 %v10085, %v10549
    %v10734 = vsub.f32 %v10441, %v10550
    %v10735 = vsub.f32 %v10087, %v10549
    %v10736 = vsub.f32 %v10443, %v10550
    %v10737 = vsub.f32 %v10090, %v10549
    %v10738 = vsub.f32 %v10446, %v10550
    %v10739 = vsub.f32 %v10092, %v10549
    %v10740 = vsub.f32 %v10448, %v10550
    %v10741 = vsub.f32 %v10095, %v10549
    %v10742 = vsub.f32 %v10451, %v10550
    %v10743 = vsub.f32 %v10097, %v10549
    %v10744 = vsub.f32 %v10453, %v10550
    %v10745 = vsub.f32 %v10100, %v10549
    %v10746 = vsub.f32 %v10456, %v10550
    %v10747 = vsub.f32 %v10102, %v10549
    %v10748 = vsub.f32 %v10458, %v10550
    %v10749 = vsub.f32 %v10105, %v10549
    %v10750 = vsub.f32 %v10461, %v10550
    %v10751 = vsub.f32 %v10107, %v10549
    %v10752 = vsub.f32 %v10463, %v10550
    %v10753 = vsub.f32 %v10110, %v10549
    %v10754 = vsub.f32 %v10466, %v10550
    %v10755 = vsub.f32 %v10112, %v10549
    %v10756 = vsub.f32 %v10468, %v10550
    %v10757 = vsub.f32 %v10115, %v10549
    %v10758 = vsub.f32 %v10471, %v10550
    %v10759 = vsub.f32 %v10117, %v10549
    %v10760 = vsub.f32 %v10473, %v10550
    %v10761 = vadd.f32 %v10695, 1e-05
    %v10762 = vadd.f32 %v10696, 1e-05
    %v10763 = vrsqrt.pop %v10761
    %v10764 = vmul.f32 %v10763, %v10761
    %v10765 = vmul.f32 %v10764, %v10763
    %v10766 = vmul.f32 0.5, %v10765
    %v10767 = vsub.f32 1.5, %v10766
    %v10768 = vmul.f32 %v10763, %v10767
    %vm10769 = vweird.f32 %v10761
    %vm10770 = vweird.f32 %v10763
    %vm10771 = vmor %vm10769, %vm10770
    %v10772 = vsel %vm10771, %v10763, %v10768
    %v10773 = vrsqrt.pop %v10762
    %v10774 = vmul.f32 %v10773, %v10762
    %v10775 = vmul.f32 %v10774, %v10773
    %v10776 = vmul.f32 0.5, %v10775
    %v10777 = vsub.f32 1.5, %v10776
    %v10778 = vmul.f32 %v10773, %v10777
    %vm10779 = vweird.f32 %v10762
    %vm10780 = vweird.f32 %v10773
    %vm10781 = vmor %vm10779, %vm10780
    %v10782 = vsel %vm10781, %v10773, %v10778
    %v10783 = vmul.f32 %v10697, %v10772
    %v10784 = vmul.f32 %v10698, %v10782
    %v10785 = vmul.f32 %v10699, %v10772
    %v10786 = vmul.f32 %v10700, %v10782
    %v10787 = vmul.f32 %v10701, %v10772
    %v10788 = vmul.f32 %v10702, %v10782
    %v10789 = vmul.f32 %v10703, %v10772
    %v10790 = vmul.f32 %v10704, %v10782
    %v10791 = vmul.f32 %v10705, %v10772
    %v10792 = vmul.f32 %v10706, %v10782
    %v10793 = vmul.f32 %v10707, %v10772
    %v10794 = vmul.f32 %v10708, %v10782
    %v10795 = vmul.f32 %v10709, %v10772
    %v10796 = vmul.f32 %v10710, %v10782
    %v10797 = vmul.f32 %v10711, %v10772
    %v10798 = vmul.f32 %v10712, %v10782
    %v10799 = vmul.f32 %v10713, %v10772
    %v10800 = vmul.f32 %v10714, %v10782
    %v10801 = vmul.f32 %v10715, %v10772
    %v10802 = vmul.f32 %v10716, %v10782
    %v10803 = vmul.f32 %v10717, %v10772
    %v10804 = vmul.f32 %v10718, %v10782
    %v10805 = vmul.f32 %v10719, %v10772
    %v10806 = vmul.f32 %v10720, %v10782
    %v10807 = vmul.f32 %v10721, %v10772
    %v10808 = vmul.f32 %v10722, %v10782
    %v10809 = vmul.f32 %v10723, %v10772
    %v10810 = vmul.f32 %v10724, %v10782
    %v10811 = vmul.f32 %v10725, %v10772
    %v10812 = vmul.f32 %v10726, %v10782
    %v10813 = vmul.f32 %v10727, %v10772
    %v10814 = vmul.f32 %v10728, %v10782
    %v10815 = vmul.f32 %v10729, %v10772
    %v10816 = vmul.f32 %v10730, %v10782
    %v10817 = vmul.f32 %v10731, %v10772
    %v10818 = vmul.f32 %v10732, %v10782
    %v10819 = vmul.f32 %v10733, %v10772
    %v10820 = vmul.f32 %v10734, %v10782
    %v10821 = vmul.f32 %v10735, %v10772
    %v10822 = vmul.f32 %v10736, %v10782
    %v10823 = vmul.f32 %v10737, %v10772
    %v10824 = vmul.f32 %v10738, %v10782
    %v10825 = vmul.f32 %v10739, %v10772
    %v10826 = vmul.f32 %v10740, %v10782
    %v10827 = vmul.f32 %v10741, %v10772
    %v10828 = vmul.f32 %v10742, %v10782
    %v10829 = vmul.f32 %v10743, %v10772
    %v10830 = vmul.f32 %v10744, %v10782
    %v10831 = vmul.f32 %v10745, %v10772
    %v10832 = vmul.f32 %v10746, %v10782
    %v10833 = vmul.f32 %v10747, %v10772
    %v10834 = vmul.f32 %v10748, %v10782
    %v10835 = vmul.f32 %v10749, %v10772
    %v10836 = vmul.f32 %v10750, %v10782
    %v10837 = vmul.f32 %v10751, %v10772
    %v10838 = vmul.f32 %v10752, %v10782
    %v10839 = vmul.f32 %v10753, %v10772
    %v10840 = vmul.f32 %v10754, %v10782
    %v10841 = vmul.f32 %v10755, %v10772
    %v10842 = vmul.f32 %v10756, %v10782
    %v10843 = vmul.f32 %v10757, %v10772
    %v10844 = vmul.f32 %v10758, %v10782
    %v10845 = vmul.f32 %v10759, %v10772
    %v10846 = vmul.f32 %v10760, %v10782
    %v10847 = vld [vmem:[%s8] sm:$0x3]
    %v10849 = vperm.slane %v10847, 0
    %v10850 = vperm.slane %v10847, 1
    %v10853 = vmul.f32 %v10783, %v10849
    %v10854 = vmul.f32 %v10784, %v10850
    %v10855 = vmul.f32 %v10785, %v10849
    %v10856 = vmul.f32 %v10786, %v10850
    %v10857 = vmul.f32 %v10787, %v10849
    %v10858 = vmul.f32 %v10788, %v10850
    %v10859 = vmul.f32 %v10789, %v10849
    %v10860 = vmul.f32 %v10790, %v10850
    %v10861 = vmul.f32 %v10791, %v10849
    %v10862 = vmul.f32 %v10792, %v10850
    %v10863 = vmul.f32 %v10793, %v10849
    %v10864 = vmul.f32 %v10794, %v10850
    %v10865 = vmul.f32 %v10795, %v10849
    %v10866 = vmul.f32 %v10796, %v10850
    %v10867 = vmul.f32 %v10797, %v10849
    %v10868 = vmul.f32 %v10798, %v10850
    %v10869 = vmul.f32 %v10799, %v10849
    %v10870 = vmul.f32 %v10800, %v10850
    %v10871 = vmul.f32 %v10801, %v10849
    %v10872 = vmul.f32 %v10802, %v10850
    %v10873 = vmul.f32 %v10803, %v10849
    %v10874 = vmul.f32 %v10804, %v10850
    %v10875 = vmul.f32 %v10805, %v10849
    %v10876 = vmul.f32 %v10806, %v10850
    %v10877 = vmul.f32 %v10807, %v10849
    %v10878 = vmul.f32 %v10808, %v10850
    %v10879 = vmul.f32 %v10809, %v10849
    %v10880 = vmul.f32 %v10810, %v10850
    %v10881 = vmul.f32 %v10811, %v10849
    %v10882 = vmul.f32 %v10812, %v10850
    %v10883 = vmul.f32 %v10813, %v10849
    %v10884 = vmul.f32 %v10814, %v10850
    %v10885 = vmul.f32 %v10815, %v10849
    %v10886 = vmul.f32 %v10816, %v10850
    %v10887 = vmul.f32 %v10817, %v10849
    %v10888 = vmul.f32 %v10818, %v10850
    %v10889 = vmul.f32 %v10819, %v10849
    %v10890 = vmul.f32 %v10820, %v10850
    %v10891 = vmul.f32 %v10821, %v10849
    %v10892 = vmul.f32 %v10822, %v10850
    %v10893 = vmul.f32 %v10823, %v10849
    %v10894 = vmul.f32 %v10824, %v10850
    %v10895 = vmul.f32 %v10825, %v10849
    %v10896 = vmul.f32 %v10826, %v10850
    %v10897 = vmul.f32 %v10827, %v10849
    %v10898 = vmul.f32 %v10828, %v10850
    %v10899 = vmul.f32 %v10829, %v10849
    %v10900 = vmul.f32 %v10830, %v10850
    %v10901 = vmul.f32 %v10831, %v10849
    %v10902 = vmul.f32 %v10832, %v10850
    %v10903 = vmul.f32 %v10833, %v10849
    %v10904 = vmul.f32 %v10834, %v10850
    %v10905 = vmul.f32 %v10835, %v10849
    %v10906 = vmul.f32 %v10836, %v10850
    %v10907 = vmul.f32 %v10837, %v10849
    %v10908 = vmul.f32 %v10838, %v10850
    %v10909 = vmul.f32 %v10839, %v10849
    %v10910 = vmul.f32 %v10840, %v10850
    %v10911 = vmul.f32 %v10841, %v10849
    %v10912 = vmul.f32 %v10842, %v10850
    %v10913 = vmul.f32 %v10843, %v10849
    %v10914 = vmul.f32 %v10844, %v10850
    %v10915 = vmul.f32 %v10845, %v10849
    %v10916 = vmul.f32 %v10846, %v10850
    %v10917 = vld [vmem:[%s9] sm:$0x3]
    %v10919 = vperm.slane %v10917, 0
    %v10920 = vperm.slane %v10917, 1
    %v10923 = vadd.f32 %v10853, %v10919
    %v10924 = vadd.f32 %v10854, %v10920
    %v10925 = vadd.f32 %v10855, %v10919
    %v10926 = vadd.f32 %v10856, %v10920
    %v10927 = vadd.f32 %v10857, %v10919
    %v10928 = vadd.f32 %v10858, %v10920
    %v10929 = vadd.f32 %v10859, %v10919
    %v10930 = vadd.f32 %v10860, %v10920
    %v10931 = vadd.f32 %v10861, %v10919
    %v10932 = vadd.f32 %v10862, %v10920
    %v10933 = vadd.f32 %v10863, %v10919
    %v10934 = vadd.f32 %v10864, %v10920
    %v10935 = vadd.f32 %v10865, %v10919
    %v10936 = vadd.f32 %v10866, %v10920
    %v10937 = vadd.f32 %v10867, %v10919
    %v10938 = vadd.f32 %v10868, %v10920
    %v10939 = vadd.f32 %v10869, %v10919
    %v10940 = vadd.f32 %v10870, %v10920
    %v10941 = vadd.f32 %v10871, %v10919
    %v10942 = vadd.f32 %v10872, %v10920
    %v10943 = vadd.f32 %v10873, %v10919
    %v10944 = vadd.f32 %v10874, %v10920
    %v10945 = vadd.f32 %v10875, %v10919
    %v10946 = vadd.f32 %v10876, %v10920
    %v10947 = vadd.f32 %v10877, %v10919
    %v10948 = vadd.f32 %v10878, %v10920
    %v10949 = vadd.f32 %v10879, %v10919
    %v10950 = vadd.f32 %v10880, %v10920
    %v10951 = vadd.f32 %v10881, %v10919
    %v10952 = vadd.f32 %v10882, %v10920
    %v10953 = vadd.f32 %v10883, %v10919
    %v10954 = vadd.f32 %v10884, %v10920
    %v10955 = vadd.f32 %v10885, %v10919
    %v10956 = vadd.f32 %v10886, %v10920
    %v10957 = vadd.f32 %v10887, %v10919
    %v10958 = vadd.f32 %v10888, %v10920
    %v10959 = vadd.f32 %v10889, %v10919
    %v10960 = vadd.f32 %v10890, %v10920
    %v10961 = vadd.f32 %v10891, %v10919
    %v10962 = vadd.f32 %v10892, %v10920
    %v10963 = vadd.f32 %v10893, %v10919
    %v10964 = vadd.f32 %v10894, %v10920
    %v10965 = vadd.f32 %v10895, %v10919
    %v10966 = vadd.f32 %v10896, %v10920
    %v10967 = vadd.f32 %v10897, %v10919
    %v10968 = vadd.f32 %v10898, %v10920
    %v10969 = vadd.f32 %v10899, %v10919
    %v10970 = vadd.f32 %v10900, %v10920
    %v10971 = vadd.f32 %v10901, %v10919
    %v10972 = vadd.f32 %v10902, %v10920
    %v10973 = vadd.f32 %v10903, %v10919
    %v10974 = vadd.f32 %v10904, %v10920
    %v10975 = vadd.f32 %v10905, %v10919
    %v10976 = vadd.f32 %v10906, %v10920
    %v10977 = vadd.f32 %v10907, %v10919
    %v10978 = vadd.f32 %v10908, %v10920
    %v10979 = vadd.f32 %v10909, %v10919
    %v10980 = vadd.f32 %v10910, %v10920
    %v10981 = vadd.f32 %v10911, %v10919
    %v10982 = vadd.f32 %v10912, %v10920
    %v10983 = vadd.f32 %v10913, %v10919
    %v10984 = vadd.f32 %v10914, %v10920
    %v10985 = vadd.f32 %v10915, %v10919
    %v10986 = vadd.f32 %v10916, %v10920
    %v10987 = vmul.f32 %v10923, 0.2
    %v10988 = vmul.f32 %v10924, 0.2
    %v10989 = vmul.f32 %v10925, 0.2
    %v10990 = vmul.f32 %v10926, 0.2
    %v10991 = vmul.f32 %v10927, 0.2
    %v10992 = vmul.f32 %v10928, 0.2
    %v10993 = vmul.f32 %v10929, 0.2
    %v10994 = vmul.f32 %v10930, 0.2
    %v10995 = vmul.f32 %v10931, 0.2
    %v10996 = vmul.f32 %v10932, 0.2
    %v10997 = vmul.f32 %v10933, 0.2
    %v10998 = vmul.f32 %v10934, 0.2
    %v10999 = vmul.f32 %v10935, 0.2
    %v11000 = vmul.f32 %v10936, 0.2
    %v11001 = vmul.f32 %v10937, 0.2
    %v11002 = vmul.f32 %v10938, 0.2
    %v11003 = vmul.f32 %v10939, 0.2
    %v11004 = vmul.f32 %v10940, 0.2
    %v11005 = vmul.f32 %v10941, 0.2
    %v11006 = vmul.f32 %v10942, 0.2
    %v11007 = vmul.f32 %v10943, 0.2
    %v11008 = vmul.f32 %v10944, 0.2
    %v11009 = vmul.f32 %v10945, 0.2
    %v11010 = vmul.f32 %v10946, 0.2
    %v11011 = vmul.f32 %v10947, 0.2
    %v11012 = vmul.f32 %v10948, 0.2
    %v11013 = vmul.f32 %v10949, 0.2
    %v11014 = vmul.f32 %v10950, 0.2
    %v11015 = vmul.f32 %v10951, 0.2
    %v11016 = vmul.f32 %v10952, 0.2
    %v11017 = vmul.f32 %v10953, 0.2
    %v11018 = vmul.f32 %v10954, 0.2
    %v11019 = vmul.f32 %v10955, 0.2
    %v11020 = vmul.f32 %v10956, 0.2
    %v11021 = vmul.f32 %v10957, 0.2
    %v11022 = vmul.f32 %v10958, 0.2
    %v11023 = vmul.f32 %v10959, 0.2
    %v11024 = vmul.f32 %v10960, 0.2
    %v11025 = vmul.f32 %v10961, 0.2
    %v11026 = vmul.f32 %v10962, 0.2
    %v11027 = vmul.f32 %v10963, 0.2
    %v11028 = vmul.f32 %v10964, 0.2
    %v11029 = vmul.f32 %v10965, 0.2
    %v11030 = vmul.f32 %v10966, 0.2
    %v11031 = vmul.f32 %v10967, 0.2
    %v11032 = vmul.f32 %v10968, 0.2
    %v11033 = vmul.f32 %v10969, 0.2
    %v11034 = vmul.f32 %v10970, 0.2
    %v11035 = vmul.f32 %v10971, 0.2
    %v11036 = vmul.f32 %v10972, 0.2
    %v11037 = vmul.f32 %v10973, 0.2
    %v11038 = vmul.f32 %v10974, 0.2
    %v11039 = vmul.f32 %v10975, 0.2
    %v11040 = vmul.f32 %v10976, 0.2
    %v11041 = vmul.f32 %v10977, 0.2
    %v11042 = vmul.f32 %v10978, 0.2
    %v11043 = vmul.f32 %v10979, 0.2
    %v11044 = vmul.f32 %v10980, 0.2
    %v11045 = vmul.f32 %v10981, 0.2
    %v11046 = vmul.f32 %v10982, 0.2
    %v11047 = vmul.f32 %v10983, 0.2
    %v11048 = vmul.f32 %v10984, 0.2
    %v11049 = vmul.f32 %v10985, 0.2
    %v11050 = vmul.f32 %v10986, 0.2
    %v11051 = vmax.f32 %v10923, %v10987
    %v11052 = vmax.f32 %v10924, %v10988
    %v11053 = vmax.f32 %v10925, %v10989
    %v11054 = vmax.f32 %v10926, %v10990
    %v11055 = vmax.f32 %v10927, %v10991
    %v11056 = vmax.f32 %v10928, %v10992
    %v11057 = vmax.f32 %v10929, %v10993
    %v11058 = vmax.f32 %v10930, %v10994
    %v11059 = vmax.f32 %v10931, %v10995
    %v11060 = vmax.f32 %v10932, %v10996
    %v11061 = vmax.f32 %v10933, %v10997
    %v11062 = vmax.f32 %v10934, %v10998
    %v11063 = vmax.f32 %v10935, %v10999
    %v11064 = vmax.f32 %v10936, %v11000
    %v11065 = vmax.f32 %v10937, %v11001
    %v11066 = vmax.f32 %v10938, %v11002
    %v11067 = vmax.f32 %v10939, %v11003
    %v11068 = vmax.f32 %v10940, %v11004
    %v11069 = vmax.f32 %v10941, %v11005
    %v11070 = vmax.f32 %v10942, %v11006
    %v11071 = vmax.f32 %v10943, %v11007
    %v11072 = vmax.f32 %v10944, %v11008
    %v11073 = vmax.f32 %v10945, %v11009
    %v11074 = vmax.f32 %v10946, %v11010
    %v11075 = vmax.f32 %v10947, %v11011
    %v11076 = vmax.f32 %v10948, %v11012
    %v11077 = vmax.f32 %v10949, %v11013
    %v11078 = vmax.f32 %v10950, %v11014
    %v11079 = vmax.f32 %v10951, %v11015
    %v11080 = vmax.f32 %v10952, %v11016
    %v11081 = vmax.f32 %v10953, %v11017
    %v11082 = vmax.f32 %v10954, %v11018
    %v11083 = vmax.f32 %v10955, %v11019
    %v11084 = vmax.f32 %v10956, %v11020
    %v11085 = vmax.f32 %v10957, %v11021
    %v11086 = vmax.f32 %v10958, %v11022
    %v11087 = vmax.f32 %v10959, %v11023
    %v11088 = vmax.f32 %v10960, %v11024
    %v11089 = vmax.f32 %v10961, %v11025
    %v11090 = vmax.f32 %v10962, %v11026
    %v11091 = vmax.f32 %v10963, %v11027
    %v11092 = vmax.f32 %v10964, %v11028
    %v11093 = vmax.f32 %v10965, %v11029
    %v11094 = vmax.f32 %v10966, %v11030
    %v11095 = vmax.f32 %v10967, %v11031
    %v11096 = vmax.f32 %v10968, %v11032
    %v11097 = vmax.f32 %v10969, %v11033
    %v11098 = vmax.f32 %v10970, %v11034
    %v11099 = vmax.f32 %v10971, %v11035
    %v11100 = vmax.f32 %v10972, %v11036
    %v11101 = vmax.f32 %v10973, %v11037
    %v11102 = vmax.f32 %v10974, %v11038
    %v11103 = vmax.f32 %v10975, %v11039
    %v11104 = vmax.f32 %v10976, %v11040
    %v11105 = vmax.f32 %v10977, %v11041
    %v11106 = vmax.f32 %v10978, %v11042
    %v11107 = vmax.f32 %v10979, %v11043
    %v11108 = vmax.f32 %v10980, %v11044
    %v11109 = vmax.f32 %v10981, %v11045
    %v11110 = vmax.f32 %v10982, %v11046
    %v11111 = vmax.f32 %v10983, %v11047
    %v11112 = vmax.f32 %v10984, %v11048
    %v11113 = vmax.f32 %v10985, %v11049
    %v11114 = vmax.f32 %v10986, %v11050
    %v11115 = vpack.c.bf16 %v11053, %v11051
    %v11116 = vpack.c.bf16 %v11054, %v11052
    %v11117 = vpack.c.bf16 %v11057, %v11055
    %v11118 = vpack.c.bf16 %v11058, %v11056
    %v11119 = vpack.c.bf16 %v11061, %v11059
    %v11120 = vpack.c.bf16 %v11062, %v11060
    %v11121 = vpack.c.bf16 %v11065, %v11063
    %v11122 = vpack.c.bf16 %v11066, %v11064
    %v11123 = vpack.c.bf16 %v11069, %v11067
    %v11124 = vpack.c.bf16 %v11070, %v11068
    %v11125 = vpack.c.bf16 %v11073, %v11071
    %v11126 = vpack.c.bf16 %v11074, %v11072
    %v11127 = vpack.c.bf16 %v11077, %v11075
    %v11128 = vpack.c.bf16 %v11078, %v11076
    %v11129 = vpack.c.bf16 %v11081, %v11079
    %v11130 = vpack.c.bf16 %v11082, %v11080
    %v11131 = vpack.c.bf16 %v11085, %v11083
    %v11132 = vpack.c.bf16 %v11086, %v11084
    %v11133 = vpack.c.bf16 %v11089, %v11087
    %v11134 = vpack.c.bf16 %v11090, %v11088
    %v11135 = vpack.c.bf16 %v11093, %v11091
    %v11136 = vpack.c.bf16 %v11094, %v11092
    %v11137 = vpack.c.bf16 %v11097, %v11095
    %v11138 = vpack.c.bf16 %v11098, %v11096
    %v11139 = vpack.c.bf16 %v11101, %v11099
    %v11140 = vpack.c.bf16 %v11102, %v11100
    %v11141 = vpack.c.bf16 %v11105, %v11103
    %v11142 = vpack.c.bf16 %v11106, %v11104
    %v11143 = vpack.c.bf16 %v11109, %v11107
    %v11144 = vpack.c.bf16 %v11110, %v11108
    %v11145 = vpack.c.bf16 %v11113, %v11111
    %v11146 = vpack.c.bf16 %v11114, %v11112
    %v11147 = vld [vmem:[%s10] sm:$0xf]
    %v11148 = vld [vmem:[%s10 + $0x4] sm:$0xf]
    %v11149 = vld [vmem:[%s10 + $0x8] sm:$0xf]
    %v11150 = vld [vmem:[%s10 + $0xc] sm:$0xf]
    %v11151 = vld [vmem:[%s10 + $0x10] sm:$0xf]
    %v11152 = vld [vmem:[%s10 + $0x14] sm:$0xf]
    %v11153 = vld [vmem:[%s10 + $0x18] sm:$0xf]
    %v11154 = vld [vmem:[%s10 + $0x1c] sm:$0xf]
    %v11155 = vld [vmem:[%s10 + $0x20] sm:$0xf]
    %v11156 = vld [vmem:[%s10 + $0x24] sm:$0xf]
    %v11157 = vld [vmem:[%s10 + $0x28] sm:$0xf]
    %v11158 = vld [vmem:[%s10 + $0x2c] sm:$0xf]
    %v11159 = vld [vmem:[%s10 + $0x30] sm:$0xf]
    %v11160 = vld [vmem:[%s10 + $0x34] sm:$0xf]
    %v11161 = vld [vmem:[%s10 + $0x38] sm:$0xf]
    %v11162 = vld [vmem:[%s10 + $0x3c] sm:$0xf]
    %v11163 = vld [vmem:[%s10 + $0x40] sm:$0xf]
    %v11164 = vld [vmem:[%s10 + $0x44] sm:$0xf]
    %v11165 = vld [vmem:[%s10 + $0x48] sm:$0xf]
    %v11166 = vld [vmem:[%s10 + $0x4c] sm:$0xf]
    %v11167 = vld [vmem:[%s10 + $0x50] sm:$0xf]
    %v11168 = vld [vmem:[%s10 + $0x54] sm:$0xf]
    %v11169 = vld [vmem:[%s10 + $0x58] sm:$0xf]
    %v11170 = vld [vmem:[%s10 + $0x5c] sm:$0xf]
    %v11171 = vld [vmem:[%s10 + $0x60] sm:$0xf]
    %v11172 = vld [vmem:[%s10 + $0x64] sm:$0xf]
    %v11173 = vld [vmem:[%s10 + $0x68] sm:$0xf]
    %v11174 = vld [vmem:[%s10 + $0x6c] sm:$0xf]
    %v11175 = vld [vmem:[%s10 + $0x70] sm:$0xf]
    %v11176 = vld [vmem:[%s10 + $0x74] sm:$0xf]
    %v11177 = vld [vmem:[%s10 + $0x78] sm:$0xf]
    %v11178 = vld [vmem:[%s10 + $0x7c] sm:$0xf]
    %v11179 = vld [vmem:[%s11] sm:$0x1]
    %v11181 = vperm.slane %v11179, 0
    %v11215 = vunpack.c.l.b16 %v11147
    %v11216 = vunpack.c.l.b16 %v11148
    %v11217 = vunpack.c.l.b16 %v11149
    %v11218 = vunpack.c.l.b16 %v11150
    %v11219 = vunpack.c.l.b16 %v11151
    %v11220 = vunpack.c.l.b16 %v11152
    %v11221 = vunpack.c.l.b16 %v11153
    %v11222 = vunpack.c.l.b16 %v11154
    %v11223 = vunpack.c.l.b16 %v11155
    %v11224 = vunpack.c.l.b16 %v11156
    %v11225 = vunpack.c.l.b16 %v11157
    %v11226 = vunpack.c.l.b16 %v11158
    %v11227 = vunpack.c.l.b16 %v11159
    %v11228 = vunpack.c.l.b16 %v11160
    %v11229 = vunpack.c.l.b16 %v11161
    %v11230 = vunpack.c.l.b16 %v11162
    %v11231 = vunpack.c.l.b16 %v11163
    %v11232 = vunpack.c.l.b16 %v11164
    %v11233 = vunpack.c.l.b16 %v11165
    %v11234 = vunpack.c.l.b16 %v11166
    %v11235 = vunpack.c.l.b16 %v11167
    %v11236 = vunpack.c.l.b16 %v11168
    %v11237 = vunpack.c.l.b16 %v11169
    %v11238 = vunpack.c.l.b16 %v11170
    %v11239 = vunpack.c.l.b16 %v11171
    %v11240 = vunpack.c.l.b16 %v11172
    %v11241 = vunpack.c.l.b16 %v11173
    %v11242 = vunpack.c.l.b16 %v11174
    %v11243 = vunpack.c.l.b16 %v11175
    %v11244 = vunpack.c.l.b16 %v11176
    %v11245 = vunpack.c.l.b16 %v11177
    %v11246 = vunpack.c.l.b16 %v11178
    %v11247 = vpack.c.b16 %v11216, %v11215
    %v11248 = vpack.c.b16 %v11218, %v11217
    %v11249 = vpack.c.b16 %v11220, %v11219
    %v11250 = vpack.c.b16 %v11222, %v11221
    %v11251 = vpack.c.b16 %v11224, %v11223
    %v11252 = vpack.c.b16 %v11226, %v11225
    %v11253 = vpack.c.b16 %v11228, %v11227
    %v11254 = vpack.c.b16 %v11230, %v11229
    %v11255 = vpack.c.b16 %v11232, %v11231
    %v11256 = vpack.c.b16 %v11234, %v11233
    %v11257 = vpack.c.b16 %v11236, %v11235
    %v11258 = vpack.c.b16 %v11238, %v11237
    %v11259 = vpack.c.b16 %v11240, %v11239
    %v11260 = vpack.c.b16 %v11242, %v11241
    %v11261 = vpack.c.b16 %v11244, %v11243
    %v11262 = vpack.c.b16 %v11246, %v11245
    %11279 = vmatpush.bf16.msra.mxu0 %v11254
    %11280 = vmatpush.bf16.msra.mxu0 %v11253
    %11281 = vmatpush.bf16.msra.mxu0 %v11252
    %11282 = vmatpush.bf16.msra.mxu0 %v11251
    %11283 = vmatpush.bf16.msra.mxu0 %v11250
    %11284 = vmatpush.bf16.msra.mxu0 %v11249
    %11285 = vmatpush.bf16.msra.mxu0 %v11248
    %11286 = vmatpush.bf16.msra.mxu0 %v11247
    %11287 = vmatmul.bf16.gmra.mxu0 %v11115
    %v11288 = vpop.f32.mrf.mxu0
    %v11289 = vadd.f32 %v11181, %v11288
    %v11290 = vpop.f32.mrf.mxu0
    %v11291 = vadd.f32 %v11181, %v11290
    %11292 = vmatmul.bf16.gmra.mxu0 %v11117
    %v11293 = vpop.f32.mrf.mxu0
    %v11294 = vadd.f32 %v11181, %v11293
    %v11295 = vpop.f32.mrf.mxu0
    %v11296 = vadd.f32 %v11181, %v11295
    %11297 = vmatmul.bf16.gmra.mxu0 %v11119
    %v11298 = vpop.f32.mrf.mxu0
    %v11299 = vadd.f32 %v11181, %v11298
    %v11300 = vpop.f32.mrf.mxu0
    %v11301 = vadd.f32 %v11181, %v11300
    %11302 = vmatmul.bf16.gmra.mxu0 %v11121
    %v11303 = vpop.f32.mrf.mxu0
    %v11304 = vadd.f32 %v11181, %v11303
    %v11305 = vpop.f32.mrf.mxu0
    %v11306 = vadd.f32 %v11181, %v11305
    %11307 = vmatmul.bf16.gmra.mxu0 %v11123
    %v11308 = vpop.f32.mrf.mxu0
    %v11309 = vadd.f32 %v11181, %v11308
    %v11310 = vpop.f32.mrf.mxu0
    %v11311 = vadd.f32 %v11181, %v11310
    %11312 = vmatmul.bf16.gmra.mxu0 %v11125
    %v11313 = vpop.f32.mrf.mxu0
    %v11314 = vadd.f32 %v11181, %v11313
    %v11315 = vpop.f32.mrf.mxu0
    %v11316 = vadd.f32 %v11181, %v11315
    %11317 = vmatmul.bf16.gmra.mxu0 %v11127
    %v11318 = vpop.f32.mrf.mxu0
    %v11319 = vadd.f32 %v11181, %v11318
    %v11320 = vpop.f32.mrf.mxu0
    %v11321 = vadd.f32 %v11181, %v11320
    %11322 = vmatmul.bf16.gmra.mxu0 %v11129
    %v11323 = vpop.f32.mrf.mxu0
    %v11324 = vadd.f32 %v11181, %v11323
    %v11325 = vpop.f32.mrf.mxu0
    %v11326 = vadd.f32 %v11181, %v11325
    %11327 = vmatmul.bf16.gmra.mxu0 %v11131
    %v11328 = vpop.f32.mrf.mxu0
    %v11329 = vadd.f32 %v11181, %v11328
    %v11330 = vpop.f32.mrf.mxu0
    %v11331 = vadd.f32 %v11181, %v11330
    %11332 = vmatmul.bf16.gmra.mxu0 %v11133
    %v11333 = vpop.f32.mrf.mxu0
    %v11334 = vadd.f32 %v11181, %v11333
    %v11335 = vpop.f32.mrf.mxu0
    %v11336 = vadd.f32 %v11181, %v11335
    %11337 = vmatmul.bf16.gmra.mxu0 %v11135
    %v11338 = vpop.f32.mrf.mxu0
    %v11339 = vadd.f32 %v11181, %v11338
    %v11340 = vpop.f32.mrf.mxu0
    %v11341 = vadd.f32 %v11181, %v11340
    %11342 = vmatmul.bf16.gmra.mxu0 %v11137
    %v11343 = vpop.f32.mrf.mxu0
    %v11344 = vadd.f32 %v11181, %v11343
    %v11345 = vpop.f32.mrf.mxu0
    %v11346 = vadd.f32 %v11181, %v11345
    %11347 = vmatmul.bf16.gmra.mxu0 %v11139
    %v11348 = vpop.f32.mrf.mxu0
    %v11349 = vadd.f32 %v11181, %v11348
    %v11350 = vpop.f32.mrf.mxu0
    %v11351 = vadd.f32 %v11181, %v11350
    %11352 = vmatmul.bf16.gmra.mxu0 %v11141
    %v11353 = vpop.f32.mrf.mxu0
    %v11354 = vadd.f32 %v11181, %v11353
    %v11355 = vpop.f32.mrf.mxu0
    %v11356 = vadd.f32 %v11181, %v11355
    %11357 = vmatmul.bf16.gmra.mxu0 %v11143
    %v11358 = vpop.f32.mrf.mxu0
    %v11359 = vadd.f32 %v11181, %v11358
    %v11360 = vpop.f32.mrf.mxu0
    %v11361 = vadd.f32 %v11181, %v11360
    %11362 = vmatmul.bf16.gmra.mxu0 %v11145
    %v11363 = vpop.f32.mrf.mxu0
    %v11364 = vadd.f32 %v11181, %v11363
    %v11365 = vpop.f32.mrf.mxu0
    %v11366 = vadd.f32 %v11181, %v11365
    %11367 = vdwg.mxu0
    %11368 = vmatpush.bf16.msra.mxu0 %v11262
    %11369 = vmatpush.bf16.msra.mxu0 %v11261
    %11370 = vmatpush.bf16.msra.mxu0 %v11260
    %11371 = vmatpush.bf16.msra.mxu0 %v11259
    %11372 = vmatpush.bf16.msra.mxu0 %v11258
    %11373 = vmatpush.bf16.msra.mxu0 %v11257
    %11374 = vmatpush.bf16.msra.mxu0 %v11256
    %11375 = vmatpush.bf16.msra.mxu0 %v11255
    %11376 = vmatmul.bf16.gmra.mxu0 %v11116
    %v11377 = vpop.f32.mrf.mxu0
    %v11378 = vadd.f32 %v11289, %v11377
    %v11379 = vpop.f32.mrf.mxu0
    %v11380 = vadd.f32 %v11291, %v11379
    %11381 = vmatmul.bf16.gmra.mxu0 %v11118
    %v11382 = vpop.f32.mrf.mxu0
    %v11383 = vadd.f32 %v11294, %v11382
    %v11384 = vpop.f32.mrf.mxu0
    %v11385 = vadd.f32 %v11296, %v11384
    %11386 = vmatmul.bf16.gmra.mxu0 %v11120
    %v11387 = vpop.f32.mrf.mxu0
    %v11388 = vadd.f32 %v11299, %v11387
    %v11389 = vpop.f32.mrf.mxu0
    %v11390 = vadd.f32 %v11301, %v11389
    %11391 = vmatmul.bf16.gmra.mxu0 %v11122
    %v11392 = vpop.f32.mrf.mxu0
    %v11393 = vadd.f32 %v11304, %v11392
    %v11394 = vpop.f32.mrf.mxu0
    %v11395 = vadd.f32 %v11306, %v11394
    %11396 = vmatmul.bf16.gmra.mxu0 %v11124
    %v11397 = vpop.f32.mrf.mxu0
    %v11398 = vadd.f32 %v11309, %v11397
    %v11399 = vpop.f32.mrf.mxu0
    %v11400 = vadd.f32 %v11311, %v11399
    %11401 = vmatmul.bf16.gmra.mxu0 %v11126
    %v11402 = vpop.f32.mrf.mxu0
    %v11403 = vadd.f32 %v11314, %v11402
    %v11404 = vpop.f32.mrf.mxu0
    %v11405 = vadd.f32 %v11316, %v11404
    %11406 = vmatmul.bf16.gmra.mxu0 %v11128
    %v11407 = vpop.f32.mrf.mxu0
    %v11408 = vadd.f32 %v11319, %v11407
    %v11409 = vpop.f32.mrf.mxu0
    %v11410 = vadd.f32 %v11321, %v11409
    %11411 = vmatmul.bf16.gmra.mxu0 %v11130
    %v11412 = vpop.f32.mrf.mxu0
    %v11413 = vadd.f32 %v11324, %v11412
    %v11414 = vpop.f32.mrf.mxu0
    %v11415 = vadd.f32 %v11326, %v11414
    %11416 = vmatmul.bf16.gmra.mxu0 %v11132
    %v11417 = vpop.f32.mrf.mxu0
    %v11418 = vadd.f32 %v11329, %v11417
    %v11419 = vpop.f32.mrf.mxu0
    %v11420 = vadd.f32 %v11331, %v11419
    %11421 = vmatmul.bf16.gmra.mxu0 %v11134
    %v11422 = vpop.f32.mrf.mxu0
    %v11423 = vadd.f32 %v11334, %v11422
    %v11424 = vpop.f32.mrf.mxu0
    %v11425 = vadd.f32 %v11336, %v11424
    %11426 = vmatmul.bf16.gmra.mxu0 %v11136
    %v11427 = vpop.f32.mrf.mxu0
    %v11428 = vadd.f32 %v11339, %v11427
    %v11429 = vpop.f32.mrf.mxu0
    %v11430 = vadd.f32 %v11341, %v11429
    %11431 = vmatmul.bf16.gmra.mxu0 %v11138
    %v11432 = vpop.f32.mrf.mxu0
    %v11433 = vadd.f32 %v11344, %v11432
    %v11434 = vpop.f32.mrf.mxu0
    %v11435 = vadd.f32 %v11346, %v11434
    %11436 = vmatmul.bf16.gmra.mxu0 %v11140
    %v11437 = vpop.f32.mrf.mxu0
    %v11438 = vadd.f32 %v11349, %v11437
    %v11439 = vpop.f32.mrf.mxu0
    %v11440 = vadd.f32 %v11351, %v11439
    %11441 = vmatmul.bf16.gmra.mxu0 %v11142
    %v11442 = vpop.f32.mrf.mxu0
    %v11443 = vadd.f32 %v11354, %v11442
    %v11444 = vpop.f32.mrf.mxu0
    %v11445 = vadd.f32 %v11356, %v11444
    %11446 = vmatmul.bf16.gmra.mxu0 %v11144
    %v11447 = vpop.f32.mrf.mxu0
    %v11448 = vadd.f32 %v11359, %v11447
    %v11449 = vpop.f32.mrf.mxu0
    %v11450 = vadd.f32 %v11361, %v11449
    %11451 = vmatmul.bf16.gmra.mxu0 %v11146
    %v11452 = vpop.f32.mrf.mxu0
    %v11453 = vadd.f32 %v11364, %v11452
    %v11454 = vpop.f32.mrf.mxu0
    %v11455 = vadd.f32 %v11366, %v11454
    %11456 = vdwg.mxu0
    %v11457 = vtanh.pop %v11378
    %v11458 = vtanh.pop %v11380
    %v11459 = vtanh.pop %v11383
    %v11460 = vtanh.pop %v11385
    %v11461 = vtanh.pop %v11388
    %v11462 = vtanh.pop %v11390
    %v11463 = vtanh.pop %v11393
    %v11464 = vtanh.pop %v11395
    %v11465 = vtanh.pop %v11398
    %v11466 = vtanh.pop %v11400
    %v11467 = vtanh.pop %v11403
    %v11468 = vtanh.pop %v11405
    %v11469 = vtanh.pop %v11408
    %v11470 = vtanh.pop %v11410
    %v11471 = vtanh.pop %v11413
    %v11472 = vtanh.pop %v11415
    %v11473 = vtanh.pop %v11418
    %v11474 = vtanh.pop %v11420
    %v11475 = vtanh.pop %v11423
    %v11476 = vtanh.pop %v11425
    %v11477 = vtanh.pop %v11428
    %v11478 = vtanh.pop %v11430
    %v11479 = vtanh.pop %v11433
    %v11480 = vtanh.pop %v11435
    %v11481 = vtanh.pop %v11438
    %v11482 = vtanh.pop %v11440
    %v11483 = vtanh.pop %v11443
    %v11484 = vtanh.pop %v11445
    %v11485 = vtanh.pop %v11448
    %v11486 = vtanh.pop %v11450
    %v11487 = vtanh.pop %v11453
    %v11488 = vtanh.pop %v11455
    %vm11489 = vcmask 64512
    %11490 = vst.msk [vmem:[%s12] sm:$0xff] %vm11489, %v11457
    %11491 = vst.msk [vmem:[%s12 + $0x8] sm:$0xff] %vm11489, %v11458
    %11492 = vst.msk [vmem:[%s12 + $0x10] sm:$0xff] %vm11489, %v11459
    %11493 = vst.msk [vmem:[%s12 + $0x18] sm:$0xff] %vm11489, %v11460
    %11494 = vst.msk [vmem:[%s12 + $0x20] sm:$0xff] %vm11489, %v11461
    %11495 = vst.msk [vmem:[%s12 + $0x28] sm:$0xff] %vm11489, %v11462
    %11496 = vst.msk [vmem:[%s12 + $0x30] sm:$0xff] %vm11489, %v11463
    %11497 = vst.msk [vmem:[%s12 + $0x38] sm:$0xff] %vm11489, %v11464
    %11498 = vst.msk [vmem:[%s12 + $0x40] sm:$0xff] %vm11489, %v11465
    %11499 = vst.msk [vmem:[%s12 + $0x48] sm:$0xff] %vm11489, %v11466
    %11500 = vst.msk [vmem:[%s12 + $0x50] sm:$0xff] %vm11489, %v11467
    %11501 = vst.msk [vmem:[%s12 + $0x58] sm:$0xff] %vm11489, %v11468
    %11502 = vst.msk [vmem:[%s12 + $0x60] sm:$0xff] %vm11489, %v11469
    %11503 = vst.msk [vmem:[%s12 + $0x68] sm:$0xff] %vm11489, %v11470
    %11504 = vst.msk [vmem:[%s12 + $0x70] sm:$0xff] %vm11489, %v11471
    %11505 = vst.msk [vmem:[%s12 + $0x78] sm:$0xff] %vm11489, %v11472
    %11506 = vst.msk [vmem:[%s12 + $0x80] sm:$0xff] %vm11489, %v11473
    %11507 = vst.msk [vmem:[%s12 + $0x88] sm:$0xff] %vm11489, %v11474
    %11508 = vst.msk [vmem:[%s12 + $0x90] sm:$0xff] %vm11489, %v11475
    %11509 = vst.msk [vmem:[%s12 + $0x98] sm:$0xff] %vm11489, %v11476
    %11510 = vst.msk [vmem:[%s12 + $0xa0] sm:$0xff] %vm11489, %v11477
    %11511 = vst.msk [vmem:[%s12 + $0xa8] sm:$0xff] %vm11489, %v11478
    %11512 = vst.msk [vmem:[%s12 + $0xb0] sm:$0xff] %vm11489, %v11479
    %11513 = vst.msk [vmem:[%s12 + $0xb8] sm:$0xff] %vm11489, %v11480
    %11514 = vst.msk [vmem:[%s12 + $0xc0] sm:$0xff] %vm11489, %v11481
    %11515 = vst.msk [vmem:[%s12 + $0xc8] sm:$0xff] %vm11489, %v11482
    %11516 = vst.msk [vmem:[%s12 + $0xd0] sm:$0xff] %vm11489, %v11483
    %11517 = vst.msk [vmem:[%s12 + $0xd8] sm:$0xff] %vm11489, %v11484
    %11518 = vst.msk [vmem:[%s12 + $0xe0] sm:$0xff] %vm11489, %v11485
    %11519 = vst.msk [vmem:[%s12 + $0xe8] sm:$0xff] %vm11489, %v11486
    %11520 = vst.msk [vmem:[%s12 + $0xf0] sm:$0xff] %vm11489, %v11487
    %11521 = vst.msk [vmem:[%s12 + $0xf8] sm:$0xff] %vm11489, %v11488
    // Predicated region
    $region58: #{tpu_custom_call.1} parent=1 // pred_check
      _
    $region59: #{tpu_custom_call.1} parent=1 // pred_check_branch
      %11523 = sbr.rel (0) target = $region61
    $region60: #{tpu_custom_call.1} parent=1 // pred_region
      _
    $region61: #{tpu_custom_call.1} parent=1 // pred_fallthru
      _
    // Predicated region
    $region62: #{tpu_custom_call.1} parent=1 // pred_check
      _
    $region63: #{tpu_custom_call.1} parent=1 // pred_check_branch
      %11525 = sbr.rel (0) target = $region65
    $region64: #{tpu_custom_call.1} parent=1 // pred_region
      _
    $region65: #{tpu_custom_call.1} parent=1 // pred_fallthru
      _
    %11526 = vsyncpa [#allocation3], 1
    %11527 = vsyncpa [#allocation5], 1

</llo_original>
